<compile_context>
chip_gen: v7x
topology: tpu7x:2x2x1
jax: 0.10.0
libtpu: 0.0.40
codegen_flags: <defaults>
</compile_context>

<pallas_src>
import functools

import jax
import jax.numpy as jnp
from jax import lax
from jax.experimental import pallas as pl
from jax.experimental.pallas import tpu as pltpu

MXU_DTYPE = jnp.bfloat16   # MXU operand dtype; accumulation stays f32.
LANE = 128                 # lane width; pad output feature dims to multiples of this.

_COMPILER_PARAMS = pltpu.CompilerParams(
    dimension_semantics=("arbitrary",),
    vmem_limit_bytes=32 * 1024 * 1024,
)


def _round_up(x, m):
    return (x + m - 1) // m * m


# ----------------------------- Pallas kernels ------------------------------ #

def _conv_relu_pool_kernel(p_ref, w_ref, b_ref, o_ref, *, m2):
    """p:[4*m2,K] (quadrant-major im2col rows), w:[K,Cp], b:[1,Cp] -> o:[m2,Cp].

    Computes relu(p @ w + b) and then the 2x2 max-pool as an elementwise max over
    the 4 contiguous quadrant row-blocks (m2 is a multiple of 8 => sublane-aligned).
    """
    y = jnp.dot(p_ref[...], w_ref[...], preferred_element_type=jnp.float32)
    y = jnp.maximum(y + b_ref[...], 0.0)                     # bias + ReLU in f32
    p01 = jnp.maximum(y[0 * m2:1 * m2], y[1 * m2:2 * m2])
    p23 = jnp.maximum(y[2 * m2:3 * m2], y[3 * m2:4 * m2])
    o_ref[...] = jnp.maximum(p01, p23).astype(o_ref.dtype)   # downcast only at store


def conv_relu_pool(patches, wmat, bias, m2p):
    M, K = patches.shape
    Cp = wmat.shape[1]
    return pl.pallas_call(
        functools.partial(_conv_relu_pool_kernel, m2=m2p),
        out_shape=jax.ShapeDtypeStruct((m2p, Cp), MXU_DTYPE),
        grid=(1,),
        in_specs=[
            pl.BlockSpec((M, K), lambda i: (0, 0)),
            pl.BlockSpec((K, Cp), lambda i: (0, 0)),
            pl.BlockSpec((1, Cp), lambda i: (0, 0)),
        ],
        out_specs=pl.BlockSpec((m2p, Cp), lambda i: (0, 0)),
        compiler_params=_COMPILER_PARAMS,
    )(patches, wmat, bias)


def _fc_fused_kernel(x_ref, w1_ref, b1_ref, w2_ref, b2_ref, o_ref):
    """Fused fc1 + ReLU + fc2; both matmuls on the MXU with f32 accumulation."""
    h = jnp.dot(x_ref[...], w1_ref[...], preferred_element_type=jnp.float32)
    h = jnp.maximum(h + b1_ref[...], 0.0)
    o = jnp.dot(h.astype(w2_ref.dtype), w2_ref[...],
                preferred_element_type=jnp.float32)
    o_ref[...] = (o + b2_ref[...]).astype(o_ref.dtype)


def fc_fused(x, w1, b1, w2, b2):
    N, K1 = x.shape
    H = w1.shape[1]
    Op = w2.shape[1]
    return pl.pallas_call(
        _fc_fused_kernel,
        out_shape=jax.ShapeDtypeStruct((N, Op), jnp.float32),
        grid=(1,),
        in_specs=[
            pl.BlockSpec((N, K1), lambda i: (0, 0)),
            pl.BlockSpec((K1, H), lambda i: (0, 0)),
            pl.BlockSpec((1, H), lambda i: (0, 0)),
            pl.BlockSpec((H, Op), lambda i: (0, 0)),
            pl.BlockSpec((1, Op), lambda i: (0, 0)),
        ],
        out_specs=pl.BlockSpec((N, Op), lambda i: (0, 0)),
        compiler_params=_COMPILER_PARAMS,
    )(x, w1, b1, w2, b2)


# ------------------------------- glue / model ------------------------------ #

def _im2col_pool_ordered(a_nhwc, k, pad):
    """im2col patches with rows ordered [pool-quadrant, n, h//2, w//2].

    Returns (patches [4*m2p, k*k*C] in MXU_DTYPE, m2, m2p) with m2p = m2 rounded up
    to a multiple of 8 so the in-kernel quadrant slices stay sublane-aligned.
    All of this is cheap XLA glue fused under jit.
    """
    N, H, W, C = a_nhwc.shape
    ap = jnp.pad(a_nhwc, ((0, 0), (pad, pad), (pad, pad), (0, 0)))
    cols = [ap[:, di:di + H, dj:dj + W, :] for di in range(k) for dj in range(k)]
    p = jnp.stack(cols, axis=3)                          # [N,H,W,k*k,C], (di,dj)-major
    p = p.reshape(N, H // 2, 2, W // 2, 2, k * k * C)    # split h->(h2,qi), w->(w2,qj)
    p = jnp.transpose(p, (2, 4, 0, 1, 3, 5))             # [qi,qj,N,H2,W2,K]
    m2 = N * (H // 2) * (W // 2)
    p = p.reshape(4, m2, k * k * C)
    m2p = _round_up(m2, 8)
    if m2p != m2:
        p = jnp.pad(p, ((0, 0), (0, m2p - m2), (0, 0)))
    return p.reshape(4 * m2p, k * k * C).astype(MXU_DTYPE), m2, m2p


def prepare_params(params):
    """One-time weight re-layout: matmul-ready, lane-padded, bf16. Not per forward."""
    def conv_mat(w_oihw, b):
        O, I, kh, kw = w_oihw.shape
        wmat = jnp.transpose(w_oihw, (2, 3, 1, 0)).reshape(kh * kw * I, O)  # (di,dj,ci)xO
        wmat = jnp.pad(wmat, ((0, 0), (0, LANE - O))).astype(MXU_DTYPE)     # lane-dense
        bias = jnp.pad(b, (0, LANE - O)).astype(jnp.float32).reshape(1, LANE)
        return wmat, bias

    c1w, c1b = conv_mat(params["conv1_w"], params["conv1_b"])
    c2w, c2b = conv_mat(params["conv2_w"], params["conv2_b"])

    # fc1: [500, 50*7*7] -> [K, 500]; permute K rows from PyTorch's NCHW flatten
    # (c,h,w) to our NHWC flatten (h,w,c); pad hidden 500 -> 512 columns.
    H1 = _round_up(500, LANE)                            # 512
    f1 = params["fc1_w"].T.reshape(50, 7, 7, 500)        # (c,h,w,out)
    f1 = jnp.transpose(f1, (1, 2, 0, 3)).reshape(7 * 7 * 50, 500)
    f1 = jnp.pad(f1, ((0, 0), (0, H1 - 500))).astype(MXU_DTYPE)
    f1b = jnp.pad(params["fc1_b"], (0, H1 - 500)).astype(jnp.float32).reshape(1, H1)

    # fc2: [10, 500] -> [512, 128] with zero-padded rows/cols (sliced off after).
    O2 = _round_up(10, LANE)                             # 128
    f2 = jnp.pad(params["fc2_w"].T,
                 ((0, H1 - 500), (0, O2 - 10))).astype(MXU_DTYPE)
    f2b = jnp.pad(params["fc2_b"], (0, O2 - 10)).astype(jnp.float32).reshape(1, O2)

    return {"c1w": c1w, "c1b": c1b, "c2w": c2w, "c2b": c2b,
            "f1w": f1, "f1b": f1b, "f2w": f2, "f2b": f2b}


@jax.jit
def lenet_forward(x_nchw, prep):
    N = x_nchw.shape[0]
    x = jnp.transpose(x_nchw, (0, 2, 3, 1)).astype(jnp.float32)    # NCHW -> NHWC

    # --- stage 1: conv1(5x5, pad 2) + ReLU + 2x2 max-pool, fused ---
    p1, m2_1, m2p_1 = _im2col_pool_ordered(x, k=5, pad=2)          # [4*m2p, 25]
    y1 = conv_relu_pool(p1, prep["c1w"], prep["c1b"], m2p_1)       # [m2p, 128] bf16
    a1 = y1[:m2_1, :20].reshape(N, 14, 14, 20)                     # drop channel padding

    # --- stage 2: conv2 + ReLU + pool, fused ---
    p2, m2_2, m2p_2 = _im2col_pool_ordered(a1, k=5, pad=2)         # [4*m2p, 500]
    y2 = conv_relu_pool(p2, prep["c2w"], prep["c2b"], m2p_2)       # [m2p, 128] bf16
    a2 = y2[:m2_2, :50].reshape(N, 7 * 7 * 50)                     # NHWC flatten (h,w,c)

    # --- fc1 + ReLU + fc2, fused (fc1 weight rows already permuted for NHWC) ---
    out = fc_fused(a2, prep["f1w"], prep["f1b"], prep["f2w"], prep["f2b"])
    return out[:, :10]                                             # drop logit padding


# Pure-JAX f32 reference (correctness check only).
def lenet_reference(x, params):
    def conv(x, w, b):
        y = lax.conv_general_dilated(
            x, w, window_strides=(1, 1), padding=((2, 2), (2, 2)),
            dimension_numbers=("NCHW", "OIHW", "NCHW"))
        return jax.nn.relu(y + b[None, :, None, None])

    def pool(x):
        return lax.reduce_window(x, -jnp.inf, lax.max,
                                 (1, 1, 2, 2), (1, 1, 2, 2), "VALID")

    y = pool(conv(x, params["conv1_w"], params["conv1_b"]))
    y = pool(conv(y, params["conv2_w"], params["conv2_b"]))
    y = y.reshape(y.shape[0], -1)
    y = jax.nn.relu(y @ params["fc1_w"].T + params["fc1_b"])
    return y @ params["fc2_w"].T + params["fc2_b"]


def make_params(key):
    ks = jax.random.split(key, 8)
    scale = 0.05
    return {
        "conv1_w": jax.random.normal(ks[0], (20, 1, 5, 5), jnp.float32) * scale,
        "conv1_b": jax.random.normal(ks[1], (20,), jnp.float32) * scale,
        "conv2_w": jax.random.normal(ks[2], (50, 20, 5, 5), jnp.float32) * scale,
        "conv2_b": jax.random.normal(ks[3], (50,), jnp.float32) * scale,
        "fc1_w": jax.random.normal(ks[4], (500, 50 * 7 * 7), jnp.float32) * scale,
        "fc1_b": jax.random.normal(ks[5], (500,), jnp.float32) * scale,
        "fc2_w": jax.random.normal(ks[6], (10, 500), jnp.float32) * scale,
        "fc2_b": jax.random.normal(ks[7], (10,), jnp.float32) * scale,
    }


if __name__ == "__main__":
    key = jax.random.PRNGKey(0)
    pkey, xkey = jax.random.split(key)
    params = make_params(pkey)
    prep = prepare_params(params)          # one-time weight re-layout (init time)

    # fc1 expects 50*7*7 features => input must be [N, 1, 28, 28]; small batch N=2.
    x = jax.random.normal(xkey, (2, 1, 28, 28), jnp.float32)

    out = jax.block_until_ready(lenet_forward(x, prep))
    ref = jax.block_until_ready(lenet_reference(x, params))

    assert out.shape == (2, 10), out.shape
    # bf16 MXU inputs (f32 accumulation) vs f32 reference -> loosened tolerance.
    assert jnp.allclose(out, ref, rtol=5e-2, atol=5e-2), (out, ref)
    print("KERNEL_OK")
</pallas_src>

<mosaic_0001>
module attributes {stable_mosaic.version = 11 : i64} {
  func.func @_conv_relu_pool_kernel(%arg0: i32, %arg1: memref<1568x25xbf16, #tpu.memory_space<vmem>>, %arg2: memref<25x128xbf16, #tpu.memory_space<vmem>>, %arg3: memref<1x128xf32, #tpu.memory_space<vmem>>, %arg4: memref<392x128xbf16, #tpu.memory_space<vmem>>) attributes {dimension_semantics = [#tpu.dimension_semantics<arbitrary>], iteration_bounds = array<i64: 1>, scalar_prefetch = 0 : i64, scratch_operands = 0 : i64, tpu.core_type = #tpu.core_type<tc>, window_params = [{pipeline_mode = #tpu.pipeline_mode<synchronous>, transform_indices = @transform_0, window_bounds = array<i64: 1568, 25>}, {pipeline_mode = #tpu.pipeline_mode<synchronous>, transform_indices = @transform_1, window_bounds = array<i64: 25, 128>}, {pipeline_mode = #tpu.pipeline_mode<synchronous>, transform_indices = @transform_2, window_bounds = array<i64: 1, 128>}, {pipeline_mode = #tpu.pipeline_mode<synchronous>, transform_indices = @transform_3, window_bounds = array<i64: 392, 128>}]} {
    %c0 = arith.constant 0 : index
    %c0_0 = arith.constant 0 : index
    %0 = vector.load %arg1[%c0, %c0_0] : memref<1568x25xbf16, #tpu.memory_space<vmem>>, vector<1568x25xbf16>
    %c0_1 = arith.constant 0 : index
    %c0_2 = arith.constant 0 : index
    %1 = vector.load %arg2[%c0_1, %c0_2] : memref<25x128xbf16, #tpu.memory_space<vmem>>, vector<25x128xbf16>
    %cst = arith.constant dense<0.000000e+00> : vector<1568x128xf32>
    %2 = tpu.matmul %0, %1, %cst {dimension_numbers = #tpu.dot_dimension_numbers<[1], [0], [0], [1], [0, 0, 1, 1], [], []>} : vector<1568x25xbf16>, vector<25x128xbf16>, vector<1568x128xf32> -> vector<1568x128xf32>
    %c0_3 = arith.constant 0 : index
    %c0_4 = arith.constant 0 : index
    %3 = vector.load %arg3[%c0_3, %c0_4] : memref<1x128xf32, #tpu.memory_space<vmem>>, vector<1x128xf32>
    %4 = vector.broadcast %3 : vector<1x128xf32> to vector<1568x128xf32>
    %5 = arith.addf %2, %4 : vector<1568x128xf32>
    %cst_5 = arith.constant 0.000000e+00 : f32
    %6 = vector.broadcast %cst_5 : f32 to vector<1568x128xf32>
    %7 = arith.maximumf %5, %6 : vector<1568x128xf32>
    %8 = vector.extract_strided_slice %7 {offsets = [0, 0], sizes = [392, 128], strides = [1, 1]} : vector<1568x128xf32> to vector<392x128xf32>
    %9 = vector.extract_strided_slice %7 {offsets = [392, 0], sizes = [392, 128], strides = [1, 1]} : vector<1568x128xf32> to vector<392x128xf32>
    %10 = arith.maximumf %8, %9 : vector<392x128xf32>
    %11 = vector.extract_strided_slice %7 {offsets = [784, 0], sizes = [392, 128], strides = [1, 1]} : vector<1568x128xf32> to vector<392x128xf32>
    %12 = vector.extract_strided_slice %7 {offsets = [1176, 0], sizes = [392, 128], strides = [1, 1]} : vector<1568x128xf32> to vector<392x128xf32>
    %13 = arith.maximumf %11, %12 : vector<392x128xf32>
    %14 = arith.maximumf %10, %13 : vector<392x128xf32>
    %15 = arith.truncf %14 : vector<392x128xf32> to vector<392x128xbf16>
    %c0_6 = arith.constant 0 : index
    %c0_7 = arith.constant 0 : index
    %16 = vector.load %arg4[%c0_6, %c0_7] : memref<392x128xbf16, #tpu.memory_space<vmem>>, vector<392x128xbf16>
    tpu.vector_store %arg4[%c0_6, %c0_7], %15 {strides = array<i32>} : memref<392x128xbf16, #tpu.memory_space<vmem>>, vector<392x128xbf16>,
    return
  }
  func.func @transform_0(%arg0: i32) -> (i32, i32) {
    %c0_i32 = arith.constant 0 : i32
    %c0_i32_0 = arith.constant 0 : i32
    %c0_i32_1 = arith.constant 0 : i32
    return %c0_i32, %c0_i32_0 : i32, i32
  }
  func.func @transform_1(%arg0: i32) -> (i32, i32) {
    %c0_i32 = arith.constant 0 : i32
    %c0_i32_0 = arith.constant 0 : i32
    %c0_i32_1 = arith.constant 0 : i32
    return %c0_i32, %c0_i32_0 : i32, i32
  }
  func.func @transform_2(%arg0: i32) -> (i32, i32) {
    %c0_i32 = arith.constant 0 : i32
    %c0_i32_0 = arith.constant 0 : i32
    %c0_i32_1 = arith.constant 0 : i32
    return %c0_i32, %c0_i32_0 : i32, i32
  }
  func.func @transform_3(%arg0: i32) -> (i32, i32) {
    %c0_i32 = arith.constant 0 : i32
    %c0_i32_0 = arith.constant 0 : i32
    %c0_i32_1 = arith.constant 0 : i32
    return %c0_i32, %c0_i32_0 : i32, i32
  }
}

module attributes {stable_mosaic.version = 11 : i64} {
  func.func @_conv_relu_pool_kernel(%arg0: i32, %arg1: memref<416x500xbf16, #tpu.memory_space<vmem>>, %arg2: memref<500x128xbf16, #tpu.memory_space<vmem>>, %arg3: memref<1x128xf32, #tpu.memory_space<vmem>>, %arg4: memref<104x128xbf16, #tpu.memory_space<vmem>>) attributes {dimension_semantics = [#tpu.dimension_semantics<arbitrary>], iteration_bounds = array<i64: 1>, scalar_prefetch = 0 : i64, scratch_operands = 0 : i64, tpu.core_type = #tpu.core_type<tc>, window_params = [{pipeline_mode = #tpu.pipeline_mode<synchronous>, transform_indices = @transform_0, window_bounds = array<i64: 416, 500>}, {pipeline_mode = #tpu.pipeline_mode<synchronous>, transform_indices = @transform_1, window_bounds = array<i64: 500, 128>}, {pipeline_mode = #tpu.pipeline_mode<synchronous>, transform_indices = @transform_2, window_bounds = array<i64: 1, 128>}, {pipeline_mode = #tpu.pipeline_mode<synchronous>, transform_indices = @transform_3, window_bounds = array<i64: 104, 128>}]} {
    %c0 = arith.constant 0 : index
    %c0_0 = arith.constant 0 : index
    %0 = vector.load %arg1[%c0, %c0_0] : memref<416x500xbf16, #tpu.memory_space<vmem>>, vector<416x500xbf16>
    %c0_1 = arith.constant 0 : index
    %c0_2 = arith.constant 0 : index
    %1 = vector.load %arg2[%c0_1, %c0_2] : memref<500x128xbf16, #tpu.memory_space<vmem>>, vector<500x128xbf16>
    %cst = arith.constant dense<0.000000e+00> : vector<416x128xf32>
    %2 = tpu.matmul %0, %1, %cst {dimension_numbers = #tpu.dot_dimension_numbers<[1], [0], [0], [1], [0, 0, 1, 1], [], []>} : vector<416x500xbf16>, vector<500x128xbf16>, vector<416x128xf32> -> vector<416x128xf32>
    %c0_3 = arith.constant 0 : index
    %c0_4 = arith.constant 0 : index
    %3 = vector.load %arg3[%c0_3, %c0_4] : memref<1x128xf32, #tpu.memory_space<vmem>>, vector<1x128xf32>
    %4 = vector.broadcast %3 : vector<1x128xf32> to vector<416x128xf32>
    %5 = arith.addf %2, %4 : vector<416x128xf32>
    %cst_5 = arith.constant 0.000000e+00 : f32
    %6 = vector.broadcast %cst_5 : f32 to vector<416x128xf32>
    %7 = arith.maximumf %5, %6 : vector<416x128xf32>
    %8 = vector.extract_strided_slice %7 {offsets = [0, 0], sizes = [104, 128], strides = [1, 1]} : vector<416x128xf32> to vector<104x128xf32>
    %9 = vector.extract_strided_slice %7 {offsets = [104, 0], sizes = [104, 128], strides = [1, 1]} : vector<416x128xf32> to vector<104x128xf32>
    %10 = arith.maximumf %8, %9 : vector<104x128xf32>
    %11 = vector.extract_strided_slice %7 {offsets = [208, 0], sizes = [104, 128], strides = [1, 1]} : vector<416x128xf32> to vector<104x128xf32>
    %12 = vector.extract_strided_slice %7 {offsets = [312, 0], sizes = [104, 128], strides = [1, 1]} : vector<416x128xf32> to vector<104x128xf32>
    %13 = arith.maximumf %11, %12 : vector<104x128xf32>
    %14 = arith.maximumf %10, %13 : vector<104x128xf32>
    %15 = arith.truncf %14 : vector<104x128xf32> to vector<104x128xbf16>
    %c0_6 = arith.constant 0 : index
    %c0_7 = arith.constant 0 : index
    %16 = vector.load %arg4[%c0_6, %c0_7] : memref<104x128xbf16, #tpu.memory_space<vmem>>, vector<104x128xbf16>
    tpu.vector_store %arg4[%c0_6, %c0_7], %15 {strides = array<i32>} : memref<104x128xbf16, #tpu.memory_space<vmem>>, vector<104x128xbf16>,
    return
  }
  func.func @transform_0(%arg0: i32) -> (i32, i32) {
    %c0_i32 = arith.constant 0 : i32
    %c0_i32_0 = arith.constant 0 : i32
    %c0_i32_1 = arith.constant 0 : i32
    return %c0_i32, %c0_i32_0 : i32, i32
  }
  func.func @transform_1(%arg0: i32) -> (i32, i32) {
    %c0_i32 = arith.constant 0 : i32
    %c0_i32_0 = arith.constant 0 : i32
    %c0_i32_1 = arith.constant 0 : i32
    return %c0_i32, %c0_i32_0 : i32, i32
  }
  func.func @transform_2(%arg0: i32) -> (i32, i32) {
    %c0_i32 = arith.constant 0 : i32
    %c0_i32_0 = arith.constant 0 : i32
    %c0_i32_1 = arith.constant 0 : i32
    return %c0_i32, %c0_i32_0 : i32, i32
  }
  func.func @transform_3(%arg0: i32) -> (i32, i32) {
    %c0_i32 = arith.constant 0 : i32
    %c0_i32_0 = arith.constant 0 : i32
    %c0_i32_1 = arith.constant 0 : i32
    return %c0_i32, %c0_i32_0 : i32, i32
  }
}

module attributes {stable_mosaic.version = 11 : i64} {
  func.func @_fc_fused_kernel(%arg0: i32, %arg1: memref<2x2450xbf16, #tpu.memory_space<vmem>>, %arg2: memref<2450x512xbf16, #tpu.memory_space<vmem>>, %arg3: memref<1x512xf32, #tpu.memory_space<vmem>>, %arg4: memref<512x128xbf16, #tpu.memory_space<vmem>>, %arg5: memref<1x128xf32, #tpu.memory_space<vmem>>, %arg6: memref<2x128xf32, #tpu.memory_space<vmem>>) attributes {dimension_semantics = [#tpu.dimension_semantics<arbitrary>], iteration_bounds = array<i64: 1>, scalar_prefetch = 0 : i64, scratch_operands = 0 : i64, tpu.core_type = #tpu.core_type<tc>, window_params = [{pipeline_mode = #tpu.pipeline_mode<synchronous>, transform_indices = @transform_0, window_bounds = array<i64: 2, 2450>}, {pipeline_mode = #tpu.pipeline_mode<synchronous>, transform_indices = @transform_1, window_bounds = array<i64: 2450, 512>}, {pipeline_mode = #tpu.pipeline_mode<synchronous>, transform_indices = @transform_2, window_bounds = array<i64: 1, 512>}, {pipeline_mode = #tpu.pipeline_mode<synchronous>, transform_indices = @transform_3, window_bounds = array<i64: 512, 128>}, {pipeline_mode = #tpu.pipeline_mode<synchronous>, transform_indices = @transform_4, window_bounds = array<i64: 1, 128>}, {pipeline_mode = #tpu.pipeline_mode<synchronous>, transform_indices = @transform_5, window_bounds = array<i64: 2, 128>}]} {
    %c0 = arith.constant 0 : index
    %c0_0 = arith.constant 0 : index
    %0 = vector.load %arg1[%c0, %c0_0] : memref<2x2450xbf16, #tpu.memory_space<vmem>>, vector<2x2450xbf16>
    %c0_1 = arith.constant 0 : index
    %c0_2 = arith.constant 0 : index
    %1 = vector.load %arg2[%c0_1, %c0_2] : memref<2450x512xbf16, #tpu.memory_space<vmem>>, vector<2450x512xbf16>
    %cst = arith.constant dense<0.000000e+00> : vector<2x512xf32>
    %2 = tpu.matmul %0, %1, %cst {dimension_numbers = #tpu.dot_dimension_numbers<[1], [0], [0], [1], [0, 0, 1, 1], [], []>} : vector<2x2450xbf16>, vector<2450x512xbf16>, vector<2x512xf32> -> vector<2x512xf32>
    %c0_3 = arith.constant 0 : index
    %c0_4 = arith.constant 0 : index
    %3 = vector.load %arg3[%c0_3, %c0_4] : memref<1x512xf32, #tpu.memory_space<vmem>>, vector<1x512xf32>
    %4 = vector.broadcast %3 : vector<1x512xf32> to vector<2x512xf32>
    %5 = arith.addf %2, %4 : vector<2x512xf32>
    %cst_5 = arith.constant 0.000000e+00 : f32
    %6 = vector.broadcast %cst_5 : f32 to vector<2x512xf32>
    %7 = arith.maximumf %5, %6 : vector<2x512xf32>
    %8 = arith.truncf %7 : vector<2x512xf32> to vector<2x512xbf16>
    %c0_6 = arith.constant 0 : index
    %c0_7 = arith.constant 0 : index
    %9 = vector.load %arg4[%c0_6, %c0_7] : memref<512x128xbf16, #tpu.memory_space<vmem>>, vector<512x128xbf16>
    %cst_8 = arith.constant dense<0.000000e+00> : vector<2x128xf32>
    %10 = tpu.matmul %8, %9, %cst_8 {dimension_numbers = #tpu.dot_dimension_numbers<[1], [0], [0], [1], [0, 0, 1, 1], [], []>} : vector<2x512xbf16>, vector<512x128xbf16>, vector<2x128xf32> -> vector<2x128xf32>
    %c0_9 = arith.constant 0 : index
    %c0_10 = arith.constant 0 : index
    %11 = vector.load %arg5[%c0_9, %c0_10] : memref<1x128xf32, #tpu.memory_space<vmem>>, vector<1x128xf32>
    %12 = vector.broadcast %11 : vector<1x128xf32> to vector<2x128xf32>
    %13 = arith.addf %10, %12 : vector<2x128xf32>
    %c0_11 = arith.constant 0 : index
    %c0_12 = arith.constant 0 : index
    %14 = vector.load %arg6[%c0_11, %c0_12] : memref<2x128xf32, #tpu.memory_space<vmem>>, vector<2x128xf32>
    tpu.vector_store %arg6[%c0_11, %c0_12], %13 {strides = array<i32>} : memref<2x128xf32, #tpu.memory_space<vmem>>, vector<2x128xf32>,
    return
  }
  func.func @transform_0(%arg0: i32) -> (i32, i32) {
    %c0_i32 = arith.constant 0 : i32
    %c0_i32_0 = arith.constant 0 : i32
    %c0_i32_1 = arith.constant 0 : i32
    return %c0_i32, %c0_i32_0 : i32, i32
  }
  func.func @transform_1(%arg0: i32) -> (i32, i32) {
    %c0_i32 = arith.constant 0 : i32
    %c0_i32_0 = arith.constant 0 : i32
    %c0_i32_1 = arith.constant 0 : i32
    return %c0_i32, %c0_i32_0 : i32, i32
  }
  func.func @transform_2(%arg0: i32) -> (i32, i32) {
    %c0_i32 = arith.constant 0 : i32
    %c0_i32_0 = arith.constant 0 : i32
    %c0_i32_1 = arith.constant 0 : i32
    return %c0_i32, %c0_i32_0 : i32, i32
  }
  func.func @transform_3(%arg0: i32) -> (i32, i32) {
    %c0_i32 = arith.constant 0 : i32
    %c0_i32_0 = arith.constant 0 : i32
    %c0_i32_1 = arith.constant 0 : i32
    return %c0_i32, %c0_i32_0 : i32, i32
  }
  func.func @transform_4(%arg0: i32) -> (i32, i32) {
    %c0_i32 = arith.constant 0 : i32
    %c0_i32_0 = arith.constant 0 : i32
    %c0_i32_1 = arith.constant 0 : i32
    return %c0_i32, %c0_i32_0 : i32, i32
  }
  func.func @transform_5(%arg0: i32) -> (i32, i32) {
    %c0_i32 = arith.constant 0 : i32
    %c0_i32_0 = arith.constant 0 : i32
    %c0_i32_1 = arith.constant 0 : i32
    return %c0_i32, %c0_i32_0 : i32, i32
  }
}

</mosaic_0001>

<llo_original>
// kernel: lenet_forward.3
$region0: #{lenet_forward.3}
  #allocation0 [shape = 'u32[]', space=smem, size = 0x4, offset = 0x4, fixed_abs, tag = 'smem constant byte address 0x4 - core index']
  #allocation1 [shape = 'u32[144,128]{1,0:T(1,128)}', space=vmem, size = 0x12000, scoped, tag = 'internal scratch']
  %s0 = inlined_call_operand.vmem [shape: bf16[1568,25], index: 0, kind: input, shape index: {}]
  %s1 = inlined_call_operand.vmem [shape: bf16[25,128], index: 1, kind: input, shape index: {}]
  %s2 = inlined_call_operand.vmem [shape: f32[1,128], index: 2, kind: input, shape index: {}]
  %s3 = inlined_call_operand.vmem [shape: bf16[392,128], index: 3, kind: output, shape index: {}]
  %s4 = sld [smem:[#allocation0]]
  $region22: #{lenet_forward.3} parent=0
    _
  %s6 = ssub.s32 1, %s4
  %s7 = scalar_select 0, %s6, %s4
  // Predicated region
  $region2: #{lenet_forward.3} parent=0 // pred_check
    _
  $region3: #{lenet_forward.3} parent=0 // pred_check_branch
    %9 = sbr.rel (0) target = $region5
  $region4: #{lenet_forward.3} parent=0 // pred_region
    _
  $region5: #{lenet_forward.3} parent=0 // pred_fallthru
    _
  // Predicated region
  $region6: #{lenet_forward.3} parent=0 // pred_check
    _
  $region7: #{lenet_forward.3} parent=0 // pred_check_branch
    %11 = sbr.rel (0) target = $region9
  $region8: #{lenet_forward.3} parent=0 // pred_region
    _
  $region9: #{lenet_forward.3} parent=0 // pred_fallthru
    _
  // Predicated region
  $region10: #{lenet_forward.3} parent=0 // pred_check
    _
  $region11: #{lenet_forward.3} parent=0 // pred_check_branch
    %13 = sbr.rel (0) target = $region13
  $region12: #{lenet_forward.3} parent=0 // pred_region
    _
  $region13: #{lenet_forward.3} parent=0 // pred_fallthru
    _
  %v15 = vld [vmem:[%s0] sm:$0xf]
  %v16 = vld [vmem:[%s0 + $0x4] sm:$0xf]
  %v17 = vld [vmem:[%s0 + $0x8] sm:$0xf]
  %v18 = vld [vmem:[%s0 + $0xc] sm:$0xf]
  %v19 = vld [vmem:[%s0 + $0x10] sm:$0xf]
  %v20 = vld [vmem:[%s0 + $0x14] sm:$0xf]
  %v21 = vld [vmem:[%s0 + $0x18] sm:$0xf]
  %v22 = vld [vmem:[%s0 + $0x1c] sm:$0xf]
  %v23 = vld [vmem:[%s0 + $0x20] sm:$0xf]
  %v24 = vld [vmem:[%s0 + $0x24] sm:$0xf]
  %v25 = vld [vmem:[%s0 + $0x28] sm:$0xf]
  %v26 = vld [vmem:[%s0 + $0x2c] sm:$0xf]
  %v27 = vld [vmem:[%s0 + $0x30] sm:$0xf]
  %v28 = vld [vmem:[%s0 + $0x34] sm:$0xf]
  %v29 = vld [vmem:[%s0 + $0x38] sm:$0xf]
  %v30 = vld [vmem:[%s0 + $0x3c] sm:$0xf]
  %v31 = vld [vmem:[%s0 + $0x40] sm:$0xf]
  %v32 = vld [vmem:[%s0 + $0x44] sm:$0xf]
  %v33 = vld [vmem:[%s0 + $0x48] sm:$0xf]
  %v34 = vld [vmem:[%s0 + $0x4c] sm:$0xf]
  %v35 = vld [vmem:[%s0 + $0x50] sm:$0xf]
  %v36 = vld [vmem:[%s0 + $0x54] sm:$0xf]
  %v37 = vld [vmem:[%s0 + $0x58] sm:$0xf]
  %v38 = vld [vmem:[%s0 + $0x5c] sm:$0xf]
  %v39 = vld [vmem:[%s0 + $0x60] sm:$0xf]
  %v40 = vld [vmem:[%s0 + $0x64] sm:$0xf]
  %v41 = vld [vmem:[%s0 + $0x68] sm:$0xf]
  %v42 = vld [vmem:[%s0 + $0x6c] sm:$0xf]
  %v43 = vld [vmem:[%s0 + $0x70] sm:$0xf]
  %v44 = vld [vmem:[%s0 + $0x74] sm:$0xf]
  %v45 = vld [vmem:[%s0 + $0x78] sm:$0xf]
  %v46 = vld [vmem:[%s0 + $0x7c] sm:$0xf]
  %v47 = vld [vmem:[%s0 + $0x80] sm:$0xf]
  %v48 = vld [vmem:[%s0 + $0x84] sm:$0xf]
  %v49 = vld [vmem:[%s0 + $0x88] sm:$0xf]
  %v50 = vld [vmem:[%s0 + $0x8c] sm:$0xf]
  %v51 = vld [vmem:[%s0 + $0x90] sm:$0xf]
  %v52 = vld [vmem:[%s0 + $0x94] sm:$0xf]
  %v53 = vld [vmem:[%s0 + $0x98] sm:$0xf]
  %v54 = vld [vmem:[%s0 + $0x9c] sm:$0xf]
  %v55 = vld [vmem:[%s0 + $0xa0] sm:$0xf]
  %v56 = vld [vmem:[%s0 + $0xa4] sm:$0xf]
  %v57 = vld [vmem:[%s0 + $0xa8] sm:$0xf]
  %v58 = vld [vmem:[%s0 + $0xac] sm:$0xf]
  %v59 = vld [vmem:[%s0 + $0xb0] sm:$0xf]
  %v60 = vld [vmem:[%s0 + $0xb4] sm:$0xf]
  %v61 = vld [vmem:[%s0 + $0xb8] sm:$0xf]
  %v62 = vld [vmem:[%s0 + $0xbc] sm:$0xf]
  %v63 = vld [vmem:[%s0 + $0xc0] sm:$0xf]
  %v64 = vld [vmem:[%s0 + $0xc4] sm:$0xf]
  %v65 = vld [vmem:[%s0 + $0xc8] sm:$0xf]
  %v66 = vld [vmem:[%s0 + $0xcc] sm:$0xf]
  %v67 = vld [vmem:[%s0 + $0xd0] sm:$0xf]
  %v68 = vld [vmem:[%s0 + $0xd4] sm:$0xf]
  %v69 = vld [vmem:[%s0 + $0xd8] sm:$0xf]
  %v70 = vld [vmem:[%s0 + $0xdc] sm:$0xf]
  %v71 = vld [vmem:[%s0 + $0xe0] sm:$0xf]
  %v72 = vld [vmem:[%s0 + $0xe4] sm:$0xf]
  %v73 = vld [vmem:[%s0 + $0xe8] sm:$0xf]
  %v74 = vld [vmem:[%s0 + $0xec] sm:$0xf]
  %v75 = vld [vmem:[%s0 + $0xf0] sm:$0xf]
  %v76 = vld [vmem:[%s0 + $0xf4] sm:$0xf]
  %v77 = vld [vmem:[%s0 + $0xf8] sm:$0xf]
  %v78 = vld [vmem:[%s0 + $0xfc] sm:$0xf]
  %v79 = vld [vmem:[%s0 + $0x100] sm:$0xf]
  %v80 = vld [vmem:[%s0 + $0x104] sm:$0xf]
  %v81 = vld [vmem:[%s0 + $0x108] sm:$0xf]
  %v82 = vld [vmem:[%s0 + $0x10c] sm:$0xf]
  %v83 = vld [vmem:[%s0 + $0x110] sm:$0xf]
  %v84 = vld [vmem:[%s0 + $0x114] sm:$0xf]
  %v85 = vld [vmem:[%s0 + $0x118] sm:$0xf]
  %v86 = vld [vmem:[%s0 + $0x11c] sm:$0xf]
  %v87 = vld [vmem:[%s0 + $0x120] sm:$0xf]
  %v88 = vld [vmem:[%s0 + $0x124] sm:$0xf]
  %v89 = vld [vmem:[%s0 + $0x128] sm:$0xf]
  %v90 = vld [vmem:[%s0 + $0x12c] sm:$0xf]
  %v91 = vld [vmem:[%s0 + $0x130] sm:$0xf]
  %v92 = vld [vmem:[%s0 + $0x134] sm:$0xf]
  %v93 = vld [vmem:[%s0 + $0x138] sm:$0xf]
  %v94 = vld [vmem:[%s0 + $0x13c] sm:$0xf]
  %v95 = vld [vmem:[%s0 + $0x140] sm:$0xf]
  %v96 = vld [vmem:[%s0 + $0x144] sm:$0xf]
  %v97 = vld [vmem:[%s0 + $0x148] sm:$0xf]
  %v98 = vld [vmem:[%s0 + $0x14c] sm:$0xf]
  %v99 = vld [vmem:[%s0 + $0x150] sm:$0xf]
  %v100 = vld [vmem:[%s0 + $0x154] sm:$0xf]
  %v101 = vld [vmem:[%s0 + $0x158] sm:$0xf]
  %v102 = vld [vmem:[%s0 + $0x15c] sm:$0xf]
  %v103 = vld [vmem:[%s0 + $0x160] sm:$0xf]
  %v104 = vld [vmem:[%s0 + $0x164] sm:$0xf]
  %v105 = vld [vmem:[%s0 + $0x168] sm:$0xf]
  %v106 = vld [vmem:[%s0 + $0x16c] sm:$0xf]
  %v107 = vld [vmem:[%s0 + $0x170] sm:$0xf]
  %v108 = vld [vmem:[%s0 + $0x174] sm:$0xf]
  %v109 = vld [vmem:[%s0 + $0x178] sm:$0xf]
  %v110 = vld [vmem:[%s0 + $0x17c] sm:$0xf]
  %v111 = vld [vmem:[%s0 + $0x180] sm:$0xf]
  %v112 = vld [vmem:[%s0 + $0x184] sm:$0xf]
  %v113 = vld [vmem:[%s0 + $0x188] sm:$0xf]
  %v114 = vld [vmem:[%s0 + $0x18c] sm:$0xf]
  %v115 = vld [vmem:[%s0 + $0x190] sm:$0xf]
  %v116 = vld [vmem:[%s0 + $0x194] sm:$0xf]
  %v117 = vld [vmem:[%s0 + $0x198] sm:$0xf]
  %v118 = vld [vmem:[%s0 + $0x19c] sm:$0xf]
  %v119 = vld [vmem:[%s0 + $0x1a0] sm:$0xf]
  %v120 = vld [vmem:[%s0 + $0x1a4] sm:$0xf]
  %v121 = vld [vmem:[%s0 + $0x1a8] sm:$0xf]
  %v122 = vld [vmem:[%s0 + $0x1ac] sm:$0xf]
  %v123 = vld [vmem:[%s0 + $0x1b0] sm:$0xf]
  %v124 = vld [vmem:[%s0 + $0x1b4] sm:$0xf]
  %v125 = vld [vmem:[%s0 + $0x1b8] sm:$0xf]
  %v126 = vld [vmem:[%s0 + $0x1bc] sm:$0xf]
  %v127 = vld [vmem:[%s0 + $0x1c0] sm:$0xf]
  %v128 = vld [vmem:[%s0 + $0x1c4] sm:$0xf]
  %v129 = vld [vmem:[%s0 + $0x1c8] sm:$0xf]
  %v130 = vld [vmem:[%s0 + $0x1cc] sm:$0xf]
  %v131 = vld [vmem:[%s0 + $0x1d0] sm:$0xf]
  %v132 = vld [vmem:[%s0 + $0x1d4] sm:$0xf]
  %v133 = vld [vmem:[%s0 + $0x1d8] sm:$0xf]
  %v134 = vld [vmem:[%s0 + $0x1dc] sm:$0xf]
  %v135 = vld [vmem:[%s0 + $0x1e0] sm:$0xf]
  %v136 = vld [vmem:[%s0 + $0x1e4] sm:$0xf]
  %v137 = vld [vmem:[%s0 + $0x1e8] sm:$0xf]
  %v138 = vld [vmem:[%s0 + $0x1ec] sm:$0xf]
  %v139 = vld [vmem:[%s0 + $0x1f0] sm:$0xf]
  %v140 = vld [vmem:[%s0 + $0x1f4] sm:$0xf]
  %v141 = vld [vmem:[%s0 + $0x1f8] sm:$0xf]
  %v142 = vld [vmem:[%s0 + $0x1fc] sm:$0xf]
  %v143 = vld [vmem:[%s0 + $0x200] sm:$0xf]
  %v144 = vld [vmem:[%s0 + $0x204] sm:$0xf]
  %v145 = vld [vmem:[%s0 + $0x208] sm:$0xf]
  %v146 = vld [vmem:[%s0 + $0x20c] sm:$0xf]
  %v147 = vld [vmem:[%s0 + $0x210] sm:$0xf]
  %v148 = vld [vmem:[%s0 + $0x214] sm:$0xf]
  %v149 = vld [vmem:[%s0 + $0x218] sm:$0xf]
  %v150 = vld [vmem:[%s0 + $0x21c] sm:$0xf]
  %v151 = vld [vmem:[%s0 + $0x220] sm:$0xf]
  %v152 = vld [vmem:[%s0 + $0x224] sm:$0xf]
  %v153 = vld [vmem:[%s0 + $0x228] sm:$0xf]
  %v154 = vld [vmem:[%s0 + $0x22c] sm:$0xf]
  %v155 = vld [vmem:[%s0 + $0x230] sm:$0xf]
  %v156 = vld [vmem:[%s0 + $0x234] sm:$0xf]
  %v157 = vld [vmem:[%s0 + $0x238] sm:$0xf]
  %v158 = vld [vmem:[%s0 + $0x23c] sm:$0xf]
  %v159 = vld [vmem:[%s0 + $0x240] sm:$0xf]
  %v160 = vld [vmem:[%s0 + $0x244] sm:$0xf]
  %v161 = vld [vmem:[%s0 + $0x248] sm:$0xf]
  %v162 = vld [vmem:[%s0 + $0x24c] sm:$0xf]
  %v163 = vld [vmem:[%s0 + $0x250] sm:$0xf]
  %v164 = vld [vmem:[%s0 + $0x254] sm:$0xf]
  %v165 = vld [vmem:[%s0 + $0x258] sm:$0xf]
  %v166 = vld [vmem:[%s0 + $0x25c] sm:$0xf]
  %v167 = vld [vmem:[%s0 + $0x260] sm:$0xf]
  %v168 = vld [vmem:[%s0 + $0x264] sm:$0xf]
  %v169 = vld [vmem:[%s0 + $0x268] sm:$0xf]
  %v170 = vld [vmem:[%s0 + $0x26c] sm:$0xf]
  %v171 = vld [vmem:[%s0 + $0x270] sm:$0xf]
  %v172 = vld [vmem:[%s0 + $0x274] sm:$0xf]
  %v173 = vld [vmem:[%s0 + $0x278] sm:$0xf]
  %v174 = vld [vmem:[%s0 + $0x27c] sm:$0xf]
  %v175 = vld [vmem:[%s0 + $0x280] sm:$0xf]
  %v176 = vld [vmem:[%s0 + $0x284] sm:$0xf]
  %v177 = vld [vmem:[%s0 + $0x288] sm:$0xf]
  %v178 = vld [vmem:[%s0 + $0x28c] sm:$0xf]
  %v179 = vld [vmem:[%s0 + $0x290] sm:$0xf]
  %v180 = vld [vmem:[%s0 + $0x294] sm:$0xf]
  %v181 = vld [vmem:[%s0 + $0x298] sm:$0xf]
  %v182 = vld [vmem:[%s0 + $0x29c] sm:$0xf]
  %v183 = vld [vmem:[%s0 + $0x2a0] sm:$0xf]
  %v184 = vld [vmem:[%s0 + $0x2a4] sm:$0xf]
  %v185 = vld [vmem:[%s0 + $0x2a8] sm:$0xf]
  %v186 = vld [vmem:[%s0 + $0x2ac] sm:$0xf]
  %v187 = vld [vmem:[%s0 + $0x2b0] sm:$0xf]
  %v188 = vld [vmem:[%s0 + $0x2b4] sm:$0xf]
  %v189 = vld [vmem:[%s0 + $0x2b8] sm:$0xf]
  %v190 = vld [vmem:[%s0 + $0x2bc] sm:$0xf]
  %v191 = vld [vmem:[%s0 + $0x2c0] sm:$0xf]
  %v192 = vld [vmem:[%s0 + $0x2c4] sm:$0xf]
  %v193 = vld [vmem:[%s0 + $0x2c8] sm:$0xf]
  %v194 = vld [vmem:[%s0 + $0x2cc] sm:$0xf]
  %v195 = vld [vmem:[%s0 + $0x2d0] sm:$0xf]
  %v196 = vld [vmem:[%s0 + $0x2d4] sm:$0xf]
  %v197 = vld [vmem:[%s0 + $0x2d8] sm:$0xf]
  %v198 = vld [vmem:[%s0 + $0x2dc] sm:$0xf]
  %v199 = vld [vmem:[%s0 + $0x2e0] sm:$0xf]
  %v200 = vld [vmem:[%s0 + $0x2e4] sm:$0xf]
  %v201 = vld [vmem:[%s0 + $0x2e8] sm:$0xf]
  %v202 = vld [vmem:[%s0 + $0x2ec] sm:$0xf]
  %v203 = vld [vmem:[%s0 + $0x2f0] sm:$0xf]
  %v204 = vld [vmem:[%s0 + $0x2f4] sm:$0xf]
  %v205 = vld [vmem:[%s0 + $0x2f8] sm:$0xf]
  %v206 = vld [vmem:[%s0 + $0x2fc] sm:$0xf]
  %v207 = vld [vmem:[%s0 + $0x300] sm:$0xf]
  %v208 = vld [vmem:[%s0 + $0x304] sm:$0xf]
  %v209 = vld [vmem:[%s0 + $0x308] sm:$0xf]
  %v210 = vld [vmem:[%s0 + $0x30c] sm:$0xf]
  %v211 = vld [vmem:[%s1] sm:$0xf]
  %v212 = vld [vmem:[%s1 + $0x4] sm:$0xf]
  %v213 = vld [vmem:[%s1 + $0x8] sm:$0xf]
  %v214 = vld [vmem:[%s1 + $0xc] sm:$0x1]
  %v215 = vld [vmem:[%s2] sm:$0x1]
  %v217 = vlaneseq
  %v218 = vshrl.u32 %v217, 7
  %v219 = vsub.s32 0, %v218
  %v220 = vrot.slane %v215, %v219
  %v418 = vunpack.c.l.b16 %v15
  %v419 = vunpack.c.l.b16 %v16
  %v420 = vunpack.c.l.b16 %v17
  %v421 = vunpack.c.l.b16 %v18
  %v422 = vunpack.c.l.b16 %v19
  %v423 = vunpack.c.l.b16 %v20
  %v424 = vunpack.c.l.b16 %v21
  %v425 = vunpack.c.l.b16 %v22
  %v426 = vunpack.c.l.b16 %v23
  %v427 = vunpack.c.l.b16 %v24
  %v428 = vunpack.c.l.b16 %v25
  %v429 = vunpack.c.l.b16 %v26
  %v430 = vunpack.c.l.b16 %v27
  %v431 = vunpack.c.l.b16 %v28
  %v432 = vunpack.c.l.b16 %v29
  %v433 = vunpack.c.l.b16 %v30
  %v434 = vunpack.c.l.b16 %v31
  %v435 = vunpack.c.l.b16 %v32
  %v436 = vunpack.c.l.b16 %v33
  %v437 = vunpack.c.l.b16 %v34
  %v438 = vunpack.c.l.b16 %v35
  %v439 = vunpack.c.l.b16 %v36
  %v440 = vunpack.c.l.b16 %v37
  %v441 = vunpack.c.l.b16 %v38
  %v442 = vunpack.c.l.b16 %v39
  %v443 = vunpack.c.l.b16 %v40
  %v444 = vunpack.c.l.b16 %v41
  %v445 = vunpack.c.l.b16 %v42
  %v446 = vunpack.c.l.b16 %v43
  %v447 = vunpack.c.l.b16 %v44
  %v448 = vunpack.c.l.b16 %v45
  %v449 = vunpack.c.l.b16 %v46
  %v450 = vunpack.c.l.b16 %v47
  %v451 = vunpack.c.l.b16 %v48
  %v452 = vunpack.c.l.b16 %v49
  %v453 = vunpack.c.l.b16 %v50
  %v454 = vunpack.c.l.b16 %v51
  %v455 = vunpack.c.l.b16 %v52
  %v456 = vunpack.c.l.b16 %v53
  %v457 = vunpack.c.l.b16 %v54
  %v458 = vunpack.c.l.b16 %v55
  %v459 = vunpack.c.l.b16 %v56
  %v460 = vunpack.c.l.b16 %v57
  %v461 = vunpack.c.l.b16 %v58
  %v462 = vunpack.c.l.b16 %v59
  %v463 = vunpack.c.l.b16 %v60
  %v464 = vunpack.c.l.b16 %v61
  %v465 = vunpack.c.l.b16 %v62
  %v466 = vunpack.c.l.b16 %v63
  %v467 = vunpack.c.l.b16 %v64
  %v468 = vunpack.c.l.b16 %v65
  %v469 = vunpack.c.l.b16 %v66
  %v470 = vunpack.c.l.b16 %v67
  %v471 = vunpack.c.l.b16 %v68
  %v472 = vunpack.c.l.b16 %v69
  %v473 = vunpack.c.l.b16 %v70
  %v474 = vunpack.c.l.b16 %v71
  %v475 = vunpack.c.l.b16 %v72
  %v476 = vunpack.c.l.b16 %v73
  %v477 = vunpack.c.l.b16 %v74
  %v478 = vunpack.c.l.b16 %v75
  %v479 = vunpack.c.l.b16 %v76
  %v480 = vunpack.c.l.b16 %v77
  %v481 = vunpack.c.l.b16 %v78
  %v482 = vunpack.c.l.b16 %v79
  %v483 = vunpack.c.l.b16 %v80
  %v484 = vunpack.c.l.b16 %v81
  %v485 = vunpack.c.l.b16 %v82
  %v486 = vunpack.c.l.b16 %v83
  %v487 = vunpack.c.l.b16 %v84
  %v488 = vunpack.c.l.b16 %v85
  %v489 = vunpack.c.l.b16 %v86
  %v490 = vunpack.c.l.b16 %v87
  %v491 = vunpack.c.l.b16 %v88
  %v492 = vunpack.c.l.b16 %v89
  %v493 = vunpack.c.l.b16 %v90
  %v494 = vunpack.c.l.b16 %v91
  %v495 = vunpack.c.l.b16 %v92
  %v496 = vunpack.c.l.b16 %v93
  %v497 = vunpack.c.l.b16 %v94
  %v498 = vunpack.c.l.b16 %v95
  %v499 = vunpack.c.l.b16 %v96
  %v500 = vunpack.c.l.b16 %v97
  %v501 = vunpack.c.l.b16 %v98
  %v502 = vunpack.c.l.b16 %v99
  %v503 = vunpack.c.l.b16 %v100
  %v504 = vunpack.c.l.b16 %v101
  %v505 = vunpack.c.l.b16 %v102
  %v506 = vunpack.c.l.b16 %v103
  %v507 = vunpack.c.l.b16 %v104
  %v508 = vunpack.c.l.b16 %v105
  %v509 = vunpack.c.l.b16 %v106
  %v510 = vunpack.c.l.b16 %v107
  %v511 = vunpack.c.l.b16 %v108
  %v512 = vunpack.c.l.b16 %v109
  %v513 = vunpack.c.l.b16 %v110
  %v514 = vunpack.c.l.b16 %v111
  %v515 = vunpack.c.l.b16 %v112
  %v516 = vunpack.c.l.b16 %v113
  %v517 = vunpack.c.l.b16 %v114
  %v518 = vunpack.c.l.b16 %v115
  %v519 = vunpack.c.l.b16 %v116
  %v520 = vunpack.c.l.b16 %v117
  %v521 = vunpack.c.l.b16 %v118
  %v522 = vunpack.c.l.b16 %v119
  %v523 = vunpack.c.l.b16 %v120
  %v524 = vunpack.c.l.b16 %v121
  %v525 = vunpack.c.l.b16 %v122
  %v526 = vunpack.c.l.b16 %v123
  %v527 = vunpack.c.l.b16 %v124
  %v528 = vunpack.c.l.b16 %v125
  %v529 = vunpack.c.l.b16 %v126
  %v530 = vunpack.c.l.b16 %v127
  %v531 = vunpack.c.l.b16 %v128
  %v532 = vunpack.c.l.b16 %v129
  %v533 = vunpack.c.l.b16 %v130
  %v534 = vunpack.c.l.b16 %v131
  %v535 = vunpack.c.l.b16 %v132
  %v536 = vunpack.c.l.b16 %v133
  %v537 = vunpack.c.l.b16 %v134
  %v538 = vunpack.c.l.b16 %v135
  %v539 = vunpack.c.l.b16 %v136
  %v540 = vunpack.c.l.b16 %v137
  %v541 = vunpack.c.l.b16 %v138
  %v542 = vunpack.c.l.b16 %v139
  %v543 = vunpack.c.l.b16 %v140
  %v544 = vunpack.c.l.b16 %v141
  %v545 = vunpack.c.l.b16 %v142
  %v546 = vunpack.c.l.b16 %v143
  %v547 = vunpack.c.l.b16 %v144
  %v548 = vunpack.c.l.b16 %v145
  %v549 = vunpack.c.l.b16 %v146
  %v550 = vunpack.c.l.b16 %v147
  %v551 = vunpack.c.l.b16 %v148
  %v552 = vunpack.c.l.b16 %v149
  %v553 = vunpack.c.l.b16 %v150
  %v554 = vunpack.c.l.b16 %v151
  %v555 = vunpack.c.l.b16 %v152
  %v556 = vunpack.c.l.b16 %v153
  %v557 = vunpack.c.l.b16 %v154
  %v558 = vunpack.c.l.b16 %v155
  %v559 = vunpack.c.l.b16 %v156
  %v560 = vunpack.c.l.b16 %v157
  %v561 = vunpack.c.l.b16 %v158
  %v562 = vunpack.c.l.b16 %v159
  %v563 = vunpack.c.l.b16 %v160
  %v564 = vunpack.c.l.b16 %v161
  %v565 = vunpack.c.l.b16 %v162
  %v566 = vunpack.c.l.b16 %v163
  %v567 = vunpack.c.l.b16 %v164
  %v568 = vunpack.c.l.b16 %v165
  %v569 = vunpack.c.l.b16 %v166
  %v570 = vunpack.c.l.b16 %v167
  %v571 = vunpack.c.l.b16 %v168
  %v572 = vunpack.c.l.b16 %v169
  %v573 = vunpack.c.l.b16 %v170
  %v574 = vunpack.c.l.b16 %v171
  %v575 = vunpack.c.l.b16 %v172
  %v576 = vunpack.c.l.b16 %v173
  %v577 = vunpack.c.l.b16 %v174
  %v578 = vunpack.c.l.b16 %v175
  %v579 = vunpack.c.l.b16 %v176
  %v580 = vunpack.c.l.b16 %v177
  %v581 = vunpack.c.l.b16 %v178
  %v582 = vunpack.c.l.b16 %v179
  %v583 = vunpack.c.l.b16 %v180
  %v584 = vunpack.c.l.b16 %v181
  %v585 = vunpack.c.l.b16 %v182
  %v586 = vunpack.c.l.b16 %v183
  %v587 = vunpack.c.l.b16 %v184
  %v588 = vunpack.c.l.b16 %v185
  %v589 = vunpack.c.l.b16 %v186
  %v590 = vunpack.c.l.b16 %v187
  %v591 = vunpack.c.l.b16 %v188
  %v592 = vunpack.c.l.b16 %v189
  %v593 = vunpack.c.l.b16 %v190
  %v594 = vunpack.c.l.b16 %v191
  %v595 = vunpack.c.l.b16 %v192
  %v596 = vunpack.c.l.b16 %v193
  %v597 = vunpack.c.l.b16 %v194
  %v598 = vunpack.c.l.b16 %v195
  %v599 = vunpack.c.l.b16 %v196
  %v600 = vunpack.c.l.b16 %v197
  %v601 = vunpack.c.l.b16 %v198
  %v602 = vunpack.c.l.b16 %v199
  %v603 = vunpack.c.l.b16 %v200
  %v604 = vunpack.c.l.b16 %v201
  %v605 = vunpack.c.l.b16 %v202
  %v606 = vunpack.c.l.b16 %v203
  %v607 = vunpack.c.l.b16 %v204
  %v608 = vunpack.c.l.b16 %v205
  %v609 = vunpack.c.l.b16 %v206
  %v610 = vunpack.c.l.b16 %v207
  %v611 = vunpack.c.l.b16 %v208
  %v612 = vunpack.c.l.b16 %v209
  %v613 = vunpack.c.l.b16 %v210
  %v614 = vpack.c.b16 %v419, %v418
  %v615 = vpack.c.b16 %v421, %v420
  %v616 = vpack.c.b16 %v423, %v422
  %v617 = vpack.c.b16 %v425, %v424
  %v618 = vpack.c.b16 %v427, %v426
  %v619 = vpack.c.b16 %v429, %v428
  %v620 = vpack.c.b16 %v431, %v430
  %v621 = vpack.c.b16 %v433, %v432
  %v622 = vpack.c.b16 %v435, %v434
  %v623 = vpack.c.b16 %v437, %v436
  %v624 = vpack.c.b16 %v439, %v438
  %v625 = vpack.c.b16 %v441, %v440
  %v626 = vpack.c.b16 %v443, %v442
  %v627 = vpack.c.b16 %v445, %v444
  %v628 = vpack.c.b16 %v447, %v446
  %v629 = vpack.c.b16 %v449, %v448
  %v630 = vpack.c.b16 %v451, %v450
  %v631 = vpack.c.b16 %v453, %v452
  %v632 = vpack.c.b16 %v455, %v454
  %v633 = vpack.c.b16 %v457, %v456
  %v634 = vpack.c.b16 %v459, %v458
  %v635 = vpack.c.b16 %v461, %v460
  %v636 = vpack.c.b16 %v463, %v462
  %v637 = vpack.c.b16 %v465, %v464
  %v638 = vpack.c.b16 %v467, %v466
  %v639 = vpack.c.b16 %v469, %v468
  %v640 = vpack.c.b16 %v471, %v470
  %v641 = vpack.c.b16 %v473, %v472
  %v642 = vpack.c.b16 %v475, %v474
  %v643 = vpack.c.b16 %v477, %v476
  %v644 = vpack.c.b16 %v479, %v478
  %v645 = vpack.c.b16 %v481, %v480
  %v646 = vpack.c.b16 %v483, %v482
  %v647 = vpack.c.b16 %v485, %v484
  %v648 = vpack.c.b16 %v487, %v486
  %v649 = vpack.c.b16 %v489, %v488
  %v650 = vpack.c.b16 %v491, %v490
  %v651 = vpack.c.b16 %v493, %v492
  %v652 = vpack.c.b16 %v495, %v494
  %v653 = vpack.c.b16 %v497, %v496
  %v654 = vpack.c.b16 %v499, %v498
  %v655 = vpack.c.b16 %v501, %v500
  %v656 = vpack.c.b16 %v503, %v502
  %v657 = vpack.c.b16 %v505, %v504
  %v658 = vpack.c.b16 %v507, %v506
  %v659 = vpack.c.b16 %v509, %v508
  %v660 = vpack.c.b16 %v511, %v510
  %v661 = vpack.c.b16 %v513, %v512
  %v662 = vpack.c.b16 %v515, %v514
  %v663 = vpack.c.b16 %v517, %v516
  %v664 = vpack.c.b16 %v519, %v518
  %v665 = vpack.c.b16 %v521, %v520
  %v666 = vpack.c.b16 %v523, %v522
  %v667 = vpack.c.b16 %v525, %v524
  %v668 = vpack.c.b16 %v527, %v526
  %v669 = vpack.c.b16 %v529, %v528
  %v670 = vpack.c.b16 %v531, %v530
  %v671 = vpack.c.b16 %v533, %v532
  %v672 = vpack.c.b16 %v535, %v534
  %v673 = vpack.c.b16 %v537, %v536
  %v674 = vpack.c.b16 %v539, %v538
  %v675 = vpack.c.b16 %v541, %v540
  %v676 = vpack.c.b16 %v543, %v542
  %v677 = vpack.c.b16 %v545, %v544
  %v678 = vpack.c.b16 %v547, %v546
  %v679 = vpack.c.b16 %v549, %v548
  %v680 = vpack.c.b16 %v551, %v550
  %v681 = vpack.c.b16 %v553, %v552
  %v682 = vpack.c.b16 %v555, %v554
  %v683 = vpack.c.b16 %v557, %v556
  %v684 = vpack.c.b16 %v559, %v558
  %v685 = vpack.c.b16 %v561, %v560
  %v686 = vpack.c.b16 %v563, %v562
  %v687 = vpack.c.b16 %v565, %v564
  %v688 = vpack.c.b16 %v567, %v566
  %v689 = vpack.c.b16 %v569, %v568
  %v690 = vpack.c.b16 %v571, %v570
  %v691 = vpack.c.b16 %v573, %v572
  %v692 = vpack.c.b16 %v575, %v574
  %v693 = vpack.c.b16 %v577, %v576
  %v694 = vpack.c.b16 %v579, %v578
  %v695 = vpack.c.b16 %v581, %v580
  %v696 = vpack.c.b16 %v583, %v582
  %v697 = vpack.c.b16 %v585, %v584
  %v698 = vpack.c.b16 %v587, %v586
  %v699 = vpack.c.b16 %v589, %v588
  %v700 = vpack.c.b16 %v591, %v590
  %v701 = vpack.c.b16 %v593, %v592
  %v702 = vpack.c.b16 %v595, %v594
  %v703 = vpack.c.b16 %v597, %v596
  %v704 = vpack.c.b16 %v599, %v598
  %v705 = vpack.c.b16 %v601, %v600
  %v706 = vpack.c.b16 %v603, %v602
  %v707 = vpack.c.b16 %v605, %v604
  %v708 = vpack.c.b16 %v607, %v606
  %v709 = vpack.c.b16 %v609, %v608
  %v710 = vpack.c.b16 %v611, %v610
  %v711 = vpack.c.b16 %v613, %v612
  %v716 = vunpack.c.l.b16 %v211
  %v717 = vunpack.c.l.b16 %v212
  %v718 = vunpack.c.l.b16 %v213
  %v719 = vunpack.c.l.b16 %v214
  %v720 = vpack.c.b16 %v717, %v716
  %v721 = vpack.c.b16 %v719, %v718
  %vm723 = vcmask 203776
  %v725 = vsel %vm723, %v614, 0
  %v728 = vsel %vm723, %v615, 0
  %v731 = vsel %vm723, %v616, 0
  %v734 = vsel %vm723, %v617, 0
  %v737 = vsel %vm723, %v618, 0
  %v740 = vsel %vm723, %v619, 0
  %v743 = vsel %vm723, %v620, 0
  %v746 = vsel %vm723, %v621, 0
  %v749 = vsel %vm723, %v622, 0
  %v752 = vsel %vm723, %v623, 0
  %v755 = vsel %vm723, %v624, 0
  %v758 = vsel %vm723, %v625, 0
  %v761 = vsel %vm723, %v626, 0
  %v764 = vsel %vm723, %v627, 0
  %v767 = vsel %vm723, %v628, 0
  %v770 = vsel %vm723, %v629, 0
  %v773 = vsel %vm723, %v630, 0
  %v776 = vsel %vm723, %v631, 0
  %v779 = vsel %vm723, %v632, 0
  %v782 = vsel %vm723, %v633, 0
  %v785 = vsel %vm723, %v634, 0
  %v788 = vsel %vm723, %v635, 0
  %v791 = vsel %vm723, %v636, 0
  %v794 = vsel %vm723, %v637, 0
  %v797 = vsel %vm723, %v638, 0
  %v800 = vsel %vm723, %v639, 0
  %v803 = vsel %vm723, %v640, 0
  %v806 = vsel %vm723, %v641, 0
  %v809 = vsel %vm723, %v642, 0
  %v812 = vsel %vm723, %v643, 0
  %v815 = vsel %vm723, %v644, 0
  %v818 = vsel %vm723, %v645, 0
  %v821 = vsel %vm723, %v646, 0
  %v824 = vsel %vm723, %v647, 0
  %v827 = vsel %vm723, %v648, 0
  %v830 = vsel %vm723, %v649, 0
  %v833 = vsel %vm723, %v650, 0
  %v836 = vsel %vm723, %v651, 0
  %v839 = vsel %vm723, %v652, 0
  %v842 = vsel %vm723, %v653, 0
  %v845 = vsel %vm723, %v654, 0
  %v848 = vsel %vm723, %v655, 0
  %v851 = vsel %vm723, %v656, 0
  %v854 = vsel %vm723, %v657, 0
  %v857 = vsel %vm723, %v658, 0
  %v860 = vsel %vm723, %v659, 0
  %v863 = vsel %vm723, %v660, 0
  %v866 = vsel %vm723, %v661, 0
  %v869 = vsel %vm723, %v662, 0
  %v872 = vsel %vm723, %v663, 0
  %v875 = vsel %vm723, %v664, 0
  %v878 = vsel %vm723, %v665, 0
  %v881 = vsel %vm723, %v666, 0
  %v884 = vsel %vm723, %v667, 0
  %v887 = vsel %vm723, %v668, 0
  %v890 = vsel %vm723, %v669, 0
  %v893 = vsel %vm723, %v670, 0
  %v896 = vsel %vm723, %v671, 0
  %v899 = vsel %vm723, %v672, 0
  %v902 = vsel %vm723, %v673, 0
  %v905 = vsel %vm723, %v674, 0
  %v908 = vsel %vm723, %v675, 0
  %v911 = vsel %vm723, %v676, 0
  %v914 = vsel %vm723, %v677, 0
  %v917 = vsel %vm723, %v678, 0
  %v920 = vsel %vm723, %v679, 0
  %v923 = vsel %vm723, %v680, 0
  %v926 = vsel %vm723, %v681, 0
  %v929 = vsel %vm723, %v682, 0
  %v932 = vsel %vm723, %v683, 0
  %v935 = vsel %vm723, %v684, 0
  %v938 = vsel %vm723, %v685, 0
  %v941 = vsel %vm723, %v686, 0
  %v944 = vsel %vm723, %v687, 0
  %v947 = vsel %vm723, %v688, 0
  %v950 = vsel %vm723, %v689, 0
  %v953 = vsel %vm723, %v690, 0
  %v956 = vsel %vm723, %v691, 0
  %v959 = vsel %vm723, %v692, 0
  %v962 = vsel %vm723, %v693, 0
  %v965 = vsel %vm723, %v694, 0
  %v968 = vsel %vm723, %v695, 0
  %v971 = vsel %vm723, %v696, 0
  %v974 = vsel %vm723, %v697, 0
  %v977 = vsel %vm723, %v698, 0
  %v980 = vsel %vm723, %v699, 0
  %v983 = vsel %vm723, %v700, 0
  %v986 = vsel %vm723, %v701, 0
  %v989 = vsel %vm723, %v702, 0
  %v992 = vsel %vm723, %v703, 0
  %v995 = vsel %vm723, %v704, 0
  %v998 = vsel %vm723, %v705, 0
  %v1001 = vsel %vm723, %v706, 0
  %v1004 = vsel %vm723, %v707, 0
  %v1007 = vsel %vm723, %v708, 0
  %v1010 = vsel %vm723, %v709, 0
  %v1013 = vsel %vm723, %v710, 0
  %v1016 = vsel %vm723, %v711, 0
  %vm1018 = vcmask 1043456
  %vm1019 = vcmask 1044480
  %v1020 = vsel %vm1018, 4294967295, 65535
  %v1021 = vsel %vm1019, %v1020, 0
  %v1023 = vand.u32 %v721, %v1021
  %1025 = vmatprep.subr.bf16.mxu0 0
  %1026 = vmatpush1.bf16.msra.mxu0 %v720
  %1027 = vmatprep.subr.bf16.mxu0 0
  %1028 = vmatpush1.bf16.msra.mxu0 %v1023
  %1029 = vmatprep.subr.bf16.mxu0 0
  %1030 = vmatpush1.bf16.msra.mxu0 0
  %1031 = vmatprep.subr.bf16.mxu0 0
  %1032 = vmatpush1.bf16.msra.mxu0 0
  %1033 = vmatprep.subr.bf16.mxu0 0
  %1034 = vmatpush1.bf16.msra.mxu0 0
  %1035 = vmatprep.subr.bf16.mxu0 0
  %1036 = vmatpush1.bf16.msra.mxu0 0
  %1037 = vmatprep.subr.bf16.mxu0 0
  %1038 = vmatpush1.bf16.msra.mxu0 0
  %1039 = vmatprep.subr.bf16.mxu0 0
  %1040 = vmatpush1.bf16.msra.mxu0 0
  %1041 = vmatprep.subr.bf16.mxu0 0
  %1042 = vmatpush1.bf16.msra.mxu0 0
  %1043 = vmatprep.subr.bf16.mxu0 0
  %1044 = vmatpush1.bf16.msra.mxu0 0
  %1045 = vmatprep.subr.bf16.mxu0 0
  %1046 = vmatpush1.bf16.msra.mxu0 0
  %1047 = vmatprep.subr.bf16.mxu0 0
  %1048 = vmatpush1.bf16.msra.mxu0 0
  %1049 = vmatprep.subr.bf16.mxu0 0
  %1050 = vmatpush1.bf16.msra.mxu0 0
  %1051 = vmatprep.subr.bf16.mxu0 0
  %1052 = vmatpush1.bf16.msra.mxu0 0
  %1053 = vmatprep.subr.bf16.mxu0 0
  %1054 = vmatpush1.bf16.msra.mxu0 0
  %1055 = vmatprep.subr.bf16.mxu0 0
  %1056 = vmatpush1.bf16.msra.mxu0 0
  %1057 = vmatprep.mubr.bf16.mxu0 0
  %1058 = vmatmul.mubr.bf16.gmra.mrb[0].mxu0 %v725
  %v1059 = vpop.f32.mrb[0].mxu0
  %v1060 = vadd.f32 %v220, %v1059
  %v1061 = vpop.f32.mrb[0].mxu0
  %v1062 = vpop.f32.mrb[0].mxu0
  %v1063 = vadd.f32 %v220, %v1062
  %v1064 = vpop.f32.mrb[0].mxu0
  %1065 = vmatprep.mubr.bf16.mxu0 0
  %1066 = vmatmul.mubr.bf16.gmra.mrb[0].mxu0 %v728
  %v1067 = vpop.f32.mrb[0].mxu0
  %v1068 = vadd.f32 %v220, %v1067
  %v1069 = vpop.f32.mrb[0].mxu0
  %v1070 = vpop.f32.mrb[0].mxu0
  %v1071 = vadd.f32 %v220, %v1070
  %v1072 = vpop.f32.mrb[0].mxu0
  %1073 = vmatprep.mubr.bf16.mxu0 0
  %1074 = vmatmul.mubr.bf16.gmra.mrb[0].mxu0 %v731
  %v1075 = vpop.f32.mrb[0].mxu0
  %v1076 = vadd.f32 %v220, %v1075
  %v1077 = vpop.f32.mrb[0].mxu0
  %v1078 = vpop.f32.mrb[0].mxu0
  %v1079 = vadd.f32 %v220, %v1078
  %v1080 = vpop.f32.mrb[0].mxu0
  %1081 = vmatprep.mubr.bf16.mxu0 0
  %1082 = vmatmul.mubr.bf16.gmra.mrb[0].mxu0 %v734
  %v1083 = vpop.f32.mrb[0].mxu0
  %v1084 = vadd.f32 %v220, %v1083
  %v1085 = vpop.f32.mrb[0].mxu0
  %v1086 = vpop.f32.mrb[0].mxu0
  %v1087 = vadd.f32 %v220, %v1086
  %v1088 = vpop.f32.mrb[0].mxu0
  %1089 = vmatprep.mubr.bf16.mxu0 0
  %1090 = vmatmul.mubr.bf16.gmra.mrb[0].mxu0 %v737
  %v1091 = vpop.f32.mrb[0].mxu0
  %v1092 = vadd.f32 %v220, %v1091
  %v1093 = vpop.f32.mrb[0].mxu0
  %v1094 = vpop.f32.mrb[0].mxu0
  %v1095 = vadd.f32 %v220, %v1094
  %v1096 = vpop.f32.mrb[0].mxu0
  %1097 = vmatprep.mubr.bf16.mxu0 0
  %1098 = vmatmul.mubr.bf16.gmra.mrb[0].mxu0 %v740
  %v1099 = vpop.f32.mrb[0].mxu0
  %v1100 = vadd.f32 %v220, %v1099
  %v1101 = vpop.f32.mrb[0].mxu0
  %v1102 = vpop.f32.mrb[0].mxu0
  %v1103 = vadd.f32 %v220, %v1102
  %v1104 = vpop.f32.mrb[0].mxu0
  %1105 = vmatprep.mubr.bf16.mxu0 0
  %1106 = vmatmul.mubr.bf16.gmra.mrb[0].mxu0 %v743
  %v1107 = vpop.f32.mrb[0].mxu0
  %v1108 = vadd.f32 %v220, %v1107
  %v1109 = vpop.f32.mrb[0].mxu0
  %v1110 = vpop.f32.mrb[0].mxu0
  %v1111 = vadd.f32 %v220, %v1110
  %v1112 = vpop.f32.mrb[0].mxu0
  %1113 = vmatprep.mubr.bf16.mxu0 0
  %1114 = vmatmul.mubr.bf16.gmra.mrb[0].mxu0 %v746
  %v1115 = vpop.f32.mrb[0].mxu0
  %v1116 = vadd.f32 %v220, %v1115
  %v1117 = vpop.f32.mrb[0].mxu0
  %v1118 = vpop.f32.mrb[0].mxu0
  %v1119 = vadd.f32 %v220, %v1118
  %v1120 = vpop.f32.mrb[0].mxu0
  %1121 = vmatprep.mubr.bf16.mxu0 0
  %1122 = vmatmul.mubr.bf16.gmra.mrb[0].mxu0 %v749
  %v1123 = vpop.f32.mrb[0].mxu0
  %v1124 = vadd.f32 %v220, %v1123
  %v1125 = vpop.f32.mrb[0].mxu0
  %v1126 = vpop.f32.mrb[0].mxu0
  %v1127 = vadd.f32 %v220, %v1126
  %v1128 = vpop.f32.mrb[0].mxu0
  %1129 = vmatprep.mubr.bf16.mxu0 0
  %1130 = vmatmul.mubr.bf16.gmra.mrb[0].mxu0 %v752
  %v1131 = vpop.f32.mrb[0].mxu0
  %v1132 = vadd.f32 %v220, %v1131
  %v1133 = vpop.f32.mrb[0].mxu0
  %v1134 = vpop.f32.mrb[0].mxu0
  %v1135 = vadd.f32 %v220, %v1134
  %v1136 = vpop.f32.mrb[0].mxu0
  %1137 = vmatprep.mubr.bf16.mxu0 0
  %1138 = vmatmul.mubr.bf16.gmra.mrb[0].mxu0 %v755
  %v1139 = vpop.f32.mrb[0].mxu0
  %v1140 = vadd.f32 %v220, %v1139
  %v1141 = vpop.f32.mrb[0].mxu0
  %v1142 = vpop.f32.mrb[0].mxu0
  %v1143 = vadd.f32 %v220, %v1142
  %v1144 = vpop.f32.mrb[0].mxu0
  %1145 = vmatprep.mubr.bf16.mxu0 0
  %1146 = vmatmul.mubr.bf16.gmra.mrb[0].mxu0 %v758
  %v1147 = vpop.f32.mrb[0].mxu0
  %v1148 = vadd.f32 %v220, %v1147
  %v1149 = vpop.f32.mrb[0].mxu0
  %v1150 = vpop.f32.mrb[0].mxu0
  %v1151 = vadd.f32 %v220, %v1150
  %v1152 = vpop.f32.mrb[0].mxu0
  %1153 = vmatprep.mubr.bf16.mxu0 0
  %1154 = vmatmul.mubr.bf16.gmra.mrb[0].mxu0 %v761
  %v1155 = vpop.f32.mrb[0].mxu0
  %v1156 = vadd.f32 %v220, %v1155
  %v1157 = vpop.f32.mrb[0].mxu0
  %v1158 = vpop.f32.mrb[0].mxu0
  %v1159 = vadd.f32 %v220, %v1158
  %v1160 = vpop.f32.mrb[0].mxu0
  %1161 = vmatprep.mubr.bf16.mxu0 0
  %1162 = vmatmul.mubr.bf16.gmra.mrb[0].mxu0 %v764
  %v1163 = vpop.f32.mrb[0].mxu0
  %v1164 = vadd.f32 %v220, %v1163
  %v1165 = vpop.f32.mrb[0].mxu0
  %v1166 = vpop.f32.mrb[0].mxu0
  %v1167 = vadd.f32 %v220, %v1166
  %v1168 = vpop.f32.mrb[0].mxu0
  %1169 = vmatprep.mubr.bf16.mxu0 0
  %1170 = vmatmul.mubr.bf16.gmra.mrb[0].mxu0 %v767
  %v1171 = vpop.f32.mrb[0].mxu0
  %v1172 = vadd.f32 %v220, %v1171
  %v1173 = vpop.f32.mrb[0].mxu0
  %v1174 = vpop.f32.mrb[0].mxu0
  %v1175 = vadd.f32 %v220, %v1174
  %v1176 = vpop.f32.mrb[0].mxu0
  %1177 = vmatprep.mubr.bf16.mxu0 0
  %1178 = vmatmul.mubr.bf16.gmra.mrb[0].mxu0 %v770
  %v1179 = vpop.f32.mrb[0].mxu0
  %v1180 = vadd.f32 %v220, %v1179
  %v1181 = vpop.f32.mrb[0].mxu0
  %v1182 = vpop.f32.mrb[0].mxu0
  %v1183 = vadd.f32 %v220, %v1182
  %v1184 = vpop.f32.mrb[0].mxu0
  %1185 = vmatprep.mubr.bf16.mxu0 0
  %1186 = vmatmul.mubr.bf16.gmra.mrb[0].mxu0 %v773
  %v1187 = vpop.f32.mrb[0].mxu0
  %v1188 = vadd.f32 %v220, %v1187
  %v1189 = vpop.f32.mrb[0].mxu0
  %v1190 = vpop.f32.mrb[0].mxu0
  %v1191 = vadd.f32 %v220, %v1190
  %v1192 = vpop.f32.mrb[0].mxu0
  %1193 = vmatprep.mubr.bf16.mxu0 0
  %1194 = vmatmul.mubr.bf16.gmra.mrb[0].mxu0 %v776
  %v1195 = vpop.f32.mrb[0].mxu0
  %v1196 = vadd.f32 %v220, %v1195
  %v1197 = vpop.f32.mrb[0].mxu0
  %v1198 = vpop.f32.mrb[0].mxu0
  %v1199 = vadd.f32 %v220, %v1198
  %v1200 = vpop.f32.mrb[0].mxu0
  %1201 = vmatprep.mubr.bf16.mxu0 0
  %1202 = vmatmul.mubr.bf16.gmra.mrb[0].mxu0 %v779
  %v1203 = vpop.f32.mrb[0].mxu0
  %v1204 = vadd.f32 %v220, %v1203
  %v1205 = vpop.f32.mrb[0].mxu0
  %v1206 = vpop.f32.mrb[0].mxu0
  %v1207 = vadd.f32 %v220, %v1206
  %v1208 = vpop.f32.mrb[0].mxu0
  %1209 = vmatprep.mubr.bf16.mxu0 0
  %1210 = vmatmul.mubr.bf16.gmra.mrb[0].mxu0 %v782
  %v1211 = vpop.f32.mrb[0].mxu0
  %v1212 = vadd.f32 %v220, %v1211
  %v1213 = vpop.f32.mrb[0].mxu0
  %v1214 = vpop.f32.mrb[0].mxu0
  %v1215 = vadd.f32 %v220, %v1214
  %v1216 = vpop.f32.mrb[0].mxu0
  %1217 = vmatprep.mubr.bf16.mxu0 0
  %1218 = vmatmul.mubr.bf16.gmra.mrb[0].mxu0 %v785
  %v1219 = vpop.f32.mrb[0].mxu0
  %v1220 = vadd.f32 %v220, %v1219
  %v1221 = vpop.f32.mrb[0].mxu0
  %v1222 = vpop.f32.mrb[0].mxu0
  %v1223 = vadd.f32 %v220, %v1222
  %v1224 = vpop.f32.mrb[0].mxu0
  %1225 = vmatprep.mubr.bf16.mxu0 0
  %1226 = vmatmul.mubr.bf16.gmra.mrb[0].mxu0 %v788
  %v1227 = vpop.f32.mrb[0].mxu0
  %v1228 = vadd.f32 %v220, %v1227
  %v1229 = vpop.f32.mrb[0].mxu0
  %v1230 = vpop.f32.mrb[0].mxu0
  %v1231 = vadd.f32 %v220, %v1230
  %v1232 = vpop.f32.mrb[0].mxu0
  %1233 = vmatprep.mubr.bf16.mxu0 0
  %1234 = vmatmul.mubr.bf16.gmra.mrb[0].mxu0 %v791
  %v1235 = vpop.f32.mrb[0].mxu0
  %v1236 = vadd.f32 %v220, %v1235
  %v1237 = vpop.f32.mrb[0].mxu0
  %v1238 = vpop.f32.mrb[0].mxu0
  %v1239 = vadd.f32 %v220, %v1238
  %v1240 = vpop.f32.mrb[0].mxu0
  %1241 = vmatprep.mubr.bf16.mxu0 0
  %1242 = vmatmul.mubr.bf16.gmra.mrb[0].mxu0 %v794
  %v1243 = vpop.f32.mrb[0].mxu0
  %v1244 = vadd.f32 %v220, %v1243
  %v1245 = vpop.f32.mrb[0].mxu0
  %v1246 = vpop.f32.mrb[0].mxu0
  %v1247 = vadd.f32 %v220, %v1246
  %v1248 = vpop.f32.mrb[0].mxu0
  %1249 = vmatprep.mubr.bf16.mxu0 0
  %1250 = vmatmul.mubr.bf16.gmra.mrb[0].mxu0 %v797
  %v1251 = vpop.f32.mrb[0].mxu0
  %v1252 = vadd.f32 %v220, %v1251
  %v1253 = vpop.f32.mrb[0].mxu0
  %v1254 = vpop.f32.mrb[0].mxu0
  %v1255 = vadd.f32 %v220, %v1254
  %v1256 = vpop.f32.mrb[0].mxu0
  %1257 = vmatprep.mubr.bf16.mxu0 0
  %1258 = vmatmul.mubr.bf16.gmra.mrb[0].mxu0 %v800
  %v1259 = vpop.f32.mrb[0].mxu0
  %v1260 = vadd.f32 %v220, %v1259
  %v1261 = vpop.f32.mrb[0].mxu0
  %v1262 = vpop.f32.mrb[0].mxu0
  %v1263 = vadd.f32 %v220, %v1262
  %v1264 = vpop.f32.mrb[0].mxu0
  %1265 = vmatprep.mubr.bf16.mxu0 0
  %1266 = vmatmul.mubr.bf16.gmra.mrb[0].mxu0 %v803
  %v1267 = vpop.f32.mrb[0].mxu0
  %v1268 = vadd.f32 %v220, %v1267
  %v1269 = vpop.f32.mrb[0].mxu0
  %v1270 = vpop.f32.mrb[0].mxu0
  %v1271 = vadd.f32 %v220, %v1270
  %v1272 = vpop.f32.mrb[0].mxu0
  %1273 = vmatprep.mubr.bf16.mxu0 0
  %1274 = vmatmul.mubr.bf16.gmra.mrb[0].mxu0 %v806
  %v1275 = vpop.f32.mrb[0].mxu0
  %v1276 = vadd.f32 %v220, %v1275
  %v1277 = vpop.f32.mrb[0].mxu0
  %v1278 = vpop.f32.mrb[0].mxu0
  %v1279 = vadd.f32 %v220, %v1278
  %v1280 = vpop.f32.mrb[0].mxu0
  %1281 = vmatprep.mubr.bf16.mxu0 0
  %1282 = vmatmul.mubr.bf16.gmra.mrb[0].mxu0 %v809
  %v1283 = vpop.f32.mrb[0].mxu0
  %v1284 = vadd.f32 %v220, %v1283
  %v1285 = vpop.f32.mrb[0].mxu0
  %v1286 = vpop.f32.mrb[0].mxu0
  %v1287 = vadd.f32 %v220, %v1286
  %v1288 = vpop.f32.mrb[0].mxu0
  %1289 = vmatprep.mubr.bf16.mxu0 0
  %1290 = vmatmul.mubr.bf16.gmra.mrb[0].mxu0 %v812
  %v1291 = vpop.f32.mrb[0].mxu0
  %v1292 = vadd.f32 %v220, %v1291
  %v1293 = vpop.f32.mrb[0].mxu0
  %v1294 = vpop.f32.mrb[0].mxu0
  %v1295 = vadd.f32 %v220, %v1294
  %v1296 = vpop.f32.mrb[0].mxu0
  %1297 = vmatprep.mubr.bf16.mxu0 0
  %1298 = vmatmul.mubr.bf16.gmra.mrb[0].mxu0 %v815
  %v1299 = vpop.f32.mrb[0].mxu0
  %v1300 = vadd.f32 %v220, %v1299
  %v1301 = vpop.f32.mrb[0].mxu0
  %v1302 = vpop.f32.mrb[0].mxu0
  %v1303 = vadd.f32 %v220, %v1302
  %v1304 = vpop.f32.mrb[0].mxu0
  %1305 = vmatprep.mubr.bf16.mxu0 0
  %1306 = vmatmul.mubr.bf16.gmra.mrb[0].mxu0 %v818
  %v1307 = vpop.f32.mrb[0].mxu0
  %v1308 = vadd.f32 %v220, %v1307
  %v1309 = vpop.f32.mrb[0].mxu0
  %v1310 = vpop.f32.mrb[0].mxu0
  %v1311 = vadd.f32 %v220, %v1310
  %v1312 = vpop.f32.mrb[0].mxu0
  %1313 = vmatprep.mubr.bf16.mxu0 0
  %1314 = vmatmul.mubr.bf16.gmra.mrb[0].mxu0 %v821
  %v1315 = vpop.f32.mrb[0].mxu0
  %v1316 = vadd.f32 %v220, %v1315
  %v1317 = vpop.f32.mrb[0].mxu0
  %v1318 = vpop.f32.mrb[0].mxu0
  %v1319 = vadd.f32 %v220, %v1318
  %v1320 = vpop.f32.mrb[0].mxu0
  %1321 = vmatprep.mubr.bf16.mxu0 0
  %1322 = vmatmul.mubr.bf16.gmra.mrb[0].mxu0 %v824
  %v1323 = vpop.f32.mrb[0].mxu0
  %v1324 = vadd.f32 %v220, %v1323
  %v1325 = vpop.f32.mrb[0].mxu0
  %v1326 = vpop.f32.mrb[0].mxu0
  %v1327 = vadd.f32 %v220, %v1326
  %v1328 = vpop.f32.mrb[0].mxu0
  %1329 = vmatprep.mubr.bf16.mxu0 0
  %1330 = vmatmul.mubr.bf16.gmra.mrb[0].mxu0 %v827
  %v1331 = vpop.f32.mrb[0].mxu0
  %v1332 = vadd.f32 %v220, %v1331
  %v1333 = vpop.f32.mrb[0].mxu0
  %v1334 = vpop.f32.mrb[0].mxu0
  %v1335 = vadd.f32 %v220, %v1334
  %v1336 = vpop.f32.mrb[0].mxu0
  %1337 = vmatprep.mubr.bf16.mxu0 0
  %1338 = vmatmul.mubr.bf16.gmra.mrb[0].mxu0 %v830
  %v1339 = vpop.f32.mrb[0].mxu0
  %v1340 = vadd.f32 %v220, %v1339
  %v1341 = vpop.f32.mrb[0].mxu0
  %v1342 = vpop.f32.mrb[0].mxu0
  %v1343 = vadd.f32 %v220, %v1342
  %v1344 = vpop.f32.mrb[0].mxu0
  %1345 = vmatprep.mubr.bf16.mxu0 0
  %1346 = vmatmul.mubr.bf16.gmra.mrb[0].mxu0 %v833
  %v1347 = vpop.f32.mrb[0].mxu0
  %v1348 = vadd.f32 %v220, %v1347
  %v1349 = vpop.f32.mrb[0].mxu0
  %v1350 = vpop.f32.mrb[0].mxu0
  %v1351 = vadd.f32 %v220, %v1350
  %v1352 = vpop.f32.mrb[0].mxu0
  %1353 = vmatprep.mubr.bf16.mxu0 0
  %1354 = vmatmul.mubr.bf16.gmra.mrb[0].mxu0 %v836
  %v1355 = vpop.f32.mrb[0].mxu0
  %v1356 = vadd.f32 %v220, %v1355
  %v1357 = vpop.f32.mrb[0].mxu0
  %v1358 = vpop.f32.mrb[0].mxu0
  %v1359 = vadd.f32 %v220, %v1358
  %v1360 = vpop.f32.mrb[0].mxu0
  %1361 = vmatprep.mubr.bf16.mxu0 0
  %1362 = vmatmul.mubr.bf16.gmra.mrb[0].mxu0 %v839
  %v1363 = vpop.f32.mrb[0].mxu0
  %v1364 = vadd.f32 %v220, %v1363
  %v1365 = vpop.f32.mrb[0].mxu0
  %v1366 = vpop.f32.mrb[0].mxu0
  %v1367 = vadd.f32 %v220, %v1366
  %v1368 = vpop.f32.mrb[0].mxu0
  %1369 = vmatprep.mubr.bf16.mxu0 0
  %1370 = vmatmul.mubr.bf16.gmra.mrb[0].mxu0 %v842
  %v1371 = vpop.f32.mrb[0].mxu0
  %v1372 = vadd.f32 %v220, %v1371
  %v1373 = vpop.f32.mrb[0].mxu0
  %v1374 = vpop.f32.mrb[0].mxu0
  %v1375 = vadd.f32 %v220, %v1374
  %v1376 = vpop.f32.mrb[0].mxu0
  %1377 = vmatprep.mubr.bf16.mxu0 0
  %1378 = vmatmul.mubr.bf16.gmra.mrb[0].mxu0 %v845
  %v1379 = vpop.f32.mrb[0].mxu0
  %v1380 = vadd.f32 %v220, %v1379
  %v1381 = vpop.f32.mrb[0].mxu0
  %v1382 = vpop.f32.mrb[0].mxu0
  %v1383 = vadd.f32 %v220, %v1382
  %v1384 = vpop.f32.mrb[0].mxu0
  %1385 = vmatprep.mubr.bf16.mxu0 0
  %1386 = vmatmul.mubr.bf16.gmra.mrb[0].mxu0 %v848
  %v1387 = vpop.f32.mrb[0].mxu0
  %v1388 = vadd.f32 %v220, %v1387
  %v1389 = vpop.f32.mrb[0].mxu0
  %v1390 = vpop.f32.mrb[0].mxu0
  %v1391 = vadd.f32 %v220, %v1390
  %v1392 = vpop.f32.mrb[0].mxu0
  %1393 = vmatprep.mubr.bf16.mxu0 0
  %1394 = vmatmul.mubr.bf16.gmra.mrb[0].mxu0 %v851
  %v1395 = vpop.f32.mrb[0].mxu0
  %v1396 = vadd.f32 %v220, %v1395
  %v1397 = vpop.f32.mrb[0].mxu0
  %v1398 = vpop.f32.mrb[0].mxu0
  %v1399 = vadd.f32 %v220, %v1398
  %v1400 = vpop.f32.mrb[0].mxu0
  %1401 = vmatprep.mubr.bf16.mxu0 0
  %1402 = vmatmul.mubr.bf16.gmra.mrb[0].mxu0 %v854
  %v1403 = vpop.f32.mrb[0].mxu0
  %v1404 = vadd.f32 %v220, %v1403
  %v1405 = vpop.f32.mrb[0].mxu0
  %v1406 = vpop.f32.mrb[0].mxu0
  %v1407 = vadd.f32 %v220, %v1406
  %v1408 = vpop.f32.mrb[0].mxu0
  %1409 = vmatprep.mubr.bf16.mxu0 0
  %1410 = vmatmul.mubr.bf16.gmra.mrb[0].mxu0 %v857
  %v1411 = vpop.f32.mrb[0].mxu0
  %v1412 = vadd.f32 %v220, %v1411
  %v1413 = vpop.f32.mrb[0].mxu0
  %v1414 = vpop.f32.mrb[0].mxu0
  %v1415 = vadd.f32 %v220, %v1414
  %v1416 = vpop.f32.mrb[0].mxu0
  %1417 = vmatprep.mubr.bf16.mxu0 0
  %1418 = vmatmul.mubr.bf16.gmra.mrb[0].mxu0 %v860
  %v1419 = vpop.f32.mrb[0].mxu0
  %v1420 = vadd.f32 %v220, %v1419
  %v1421 = vpop.f32.mrb[0].mxu0
  %v1422 = vpop.f32.mrb[0].mxu0
  %v1423 = vadd.f32 %v220, %v1422
  %v1424 = vpop.f32.mrb[0].mxu0
  %1425 = vmatprep.mubr.bf16.mxu0 0
  %1426 = vmatmul.mubr.bf16.gmra.mrb[0].mxu0 %v863
  %v1427 = vpop.f32.mrb[0].mxu0
  %v1428 = vadd.f32 %v220, %v1427
  %v1429 = vpop.f32.mrb[0].mxu0
  %v1430 = vpop.f32.mrb[0].mxu0
  %v1431 = vadd.f32 %v220, %v1430
  %v1432 = vpop.f32.mrb[0].mxu0
  %1433 = vmatprep.mubr.bf16.mxu0 0
  %1434 = vmatmul.mubr.bf16.gmra.mrb[0].mxu0 %v866
  %v1435 = vpop.f32.mrb[0].mxu0
  %v1436 = vadd.f32 %v220, %v1435
  %v1437 = vpop.f32.mrb[0].mxu0
  %v1438 = vpop.f32.mrb[0].mxu0
  %v1439 = vadd.f32 %v220, %v1438
  %v1440 = vpop.f32.mrb[0].mxu0
  %1441 = vmatprep.mubr.bf16.mxu0 0
  %1442 = vmatmul.mubr.bf16.gmra.mrb[0].mxu0 %v869
  %v1443 = vpop.f32.mrb[0].mxu0
  %v1444 = vadd.f32 %v220, %v1443
  %v1445 = vpop.f32.mrb[0].mxu0
  %v1446 = vpop.f32.mrb[0].mxu0
  %v1447 = vadd.f32 %v220, %v1446
  %v1448 = vpop.f32.mrb[0].mxu0
  %1449 = vmatprep.mubr.bf16.mxu0 0
  %1450 = vmatmul.mubr.bf16.gmra.mrb[0].mxu0 %v872
  %v1451 = vpop.f32.mrb[0].mxu0
  %v1452 = vadd.f32 %v220, %v1451
  %v1453 = vpop.f32.mrb[0].mxu0
  %v1454 = vpop.f32.mrb[0].mxu0
  %v1455 = vadd.f32 %v220, %v1454
  %v1456 = vpop.f32.mrb[0].mxu0
  %1457 = vmatprep.mubr.bf16.mxu0 0
  %1458 = vmatmul.mubr.bf16.gmra.mrb[0].mxu0 %v875
  %v1459 = vpop.f32.mrb[0].mxu0
  %v1460 = vadd.f32 %v220, %v1459
  %v1461 = vpop.f32.mrb[0].mxu0
  %v1462 = vpop.f32.mrb[0].mxu0
  %v1463 = vadd.f32 %v220, %v1462
  %v1464 = vpop.f32.mrb[0].mxu0
  %1465 = vmatprep.mubr.bf16.mxu0 0
  %1466 = vmatmul.mubr.bf16.gmra.mrb[0].mxu0 %v878
  %v1467 = vpop.f32.mrb[0].mxu0
  %v1468 = vadd.f32 %v220, %v1467
  %v1469 = vpop.f32.mrb[0].mxu0
  %v1470 = vpop.f32.mrb[0].mxu0
  %v1471 = vadd.f32 %v220, %v1470
  %v1472 = vpop.f32.mrb[0].mxu0
  %1473 = vmatprep.mubr.bf16.mxu0 0
  %1474 = vmatmul.mubr.bf16.gmra.mrb[0].mxu0 %v881
  %v1475 = vpop.f32.mrb[0].mxu0
  %v1476 = vadd.f32 %v220, %v1475
  %v1477 = vpop.f32.mrb[0].mxu0
  %v1478 = vpop.f32.mrb[0].mxu0
  %v1479 = vadd.f32 %v220, %v1478
  %v1480 = vpop.f32.mrb[0].mxu0
  %1481 = vmatprep.mubr.bf16.mxu0 0
  %1482 = vmatmul.mubr.bf16.gmra.mrb[0].mxu0 %v884
  %v1483 = vpop.f32.mrb[0].mxu0
  %v1484 = vadd.f32 %v220, %v1483
  %v1485 = vpop.f32.mrb[0].mxu0
  %v1486 = vpop.f32.mrb[0].mxu0
  %v1487 = vadd.f32 %v220, %v1486
  %v1488 = vpop.f32.mrb[0].mxu0
  %1489 = vmatprep.mubr.bf16.mxu0 0
  %1490 = vmatmul.mubr.bf16.gmra.mrb[0].mxu0 %v887
  %v1491 = vpop.f32.mrb[0].mxu0
  %v1492 = vadd.f32 %v220, %v1491
  %v1493 = vpop.f32.mrb[0].mxu0
  %v1494 = vpop.f32.mrb[0].mxu0
  %v1495 = vadd.f32 %v220, %v1494
  %v1496 = vpop.f32.mrb[0].mxu0
  %1497 = vmatprep.mubr.bf16.mxu0 0
  %1498 = vmatmul.mubr.bf16.gmra.mrb[0].mxu0 %v890
  %v1499 = vpop.f32.mrb[0].mxu0
  %v1500 = vadd.f32 %v220, %v1499
  %v1501 = vpop.f32.mrb[0].mxu0
  %v1502 = vpop.f32.mrb[0].mxu0
  %v1503 = vadd.f32 %v220, %v1502
  %v1504 = vpop.f32.mrb[0].mxu0
  %1505 = vmatprep.mubr.bf16.mxu0 0
  %1506 = vmatmul.mubr.bf16.gmra.mrb[0].mxu0 %v893
  %v1507 = vpop.f32.mrb[0].mxu0
  %v1508 = vadd.f32 %v220, %v1507
  %v1509 = vpop.f32.mrb[0].mxu0
  %v1510 = vpop.f32.mrb[0].mxu0
  %v1511 = vadd.f32 %v220, %v1510
  %v1512 = vpop.f32.mrb[0].mxu0
  %1513 = vmatprep.mubr.bf16.mxu0 0
  %1514 = vmatmul.mubr.bf16.gmra.mrb[0].mxu0 %v896
  %v1515 = vpop.f32.mrb[0].mxu0
  %v1516 = vadd.f32 %v220, %v1515
  %v1517 = vpop.f32.mrb[0].mxu0
  %v1518 = vpop.f32.mrb[0].mxu0
  %v1519 = vadd.f32 %v220, %v1518
  %v1520 = vpop.f32.mrb[0].mxu0
  %1521 = vmatprep.mubr.bf16.mxu0 0
  %1522 = vmatmul.mubr.bf16.gmra.mrb[0].mxu0 %v899
  %v1523 = vpop.f32.mrb[0].mxu0
  %v1524 = vadd.f32 %v220, %v1523
  %v1525 = vpop.f32.mrb[0].mxu0
  %v1526 = vpop.f32.mrb[0].mxu0
  %v1527 = vadd.f32 %v220, %v1526
  %v1528 = vpop.f32.mrb[0].mxu0
  %1529 = vmatprep.mubr.bf16.mxu0 0
  %1530 = vmatmul.mubr.bf16.gmra.mrb[0].mxu0 %v902
  %v1531 = vpop.f32.mrb[0].mxu0
  %v1532 = vadd.f32 %v220, %v1531
  %v1533 = vpop.f32.mrb[0].mxu0
  %v1534 = vpop.f32.mrb[0].mxu0
  %v1535 = vadd.f32 %v220, %v1534
  %v1536 = vpop.f32.mrb[0].mxu0
  %1537 = vmatprep.mubr.bf16.mxu0 0
  %1538 = vmatmul.mubr.bf16.gmra.mrb[0].mxu0 %v905
  %v1539 = vpop.f32.mrb[0].mxu0
  %v1540 = vadd.f32 %v220, %v1539
  %v1541 = vpop.f32.mrb[0].mxu0
  %v1542 = vpop.f32.mrb[0].mxu0
  %v1543 = vadd.f32 %v220, %v1542
  %v1544 = vpop.f32.mrb[0].mxu0
  %1545 = vmatprep.mubr.bf16.mxu0 0
  %1546 = vmatmul.mubr.bf16.gmra.mrb[0].mxu0 %v908
  %v1547 = vpop.f32.mrb[0].mxu0
  %v1548 = vadd.f32 %v220, %v1547
  %v1549 = vpop.f32.mrb[0].mxu0
  %v1550 = vpop.f32.mrb[0].mxu0
  %v1551 = vadd.f32 %v220, %v1550
  %v1552 = vpop.f32.mrb[0].mxu0
  %1553 = vmatprep.mubr.bf16.mxu0 0
  %1554 = vmatmul.mubr.bf16.gmra.mrb[0].mxu0 %v911
  %v1555 = vpop.f32.mrb[0].mxu0
  %v1556 = vadd.f32 %v220, %v1555
  %v1557 = vpop.f32.mrb[0].mxu0
  %v1558 = vpop.f32.mrb[0].mxu0
  %v1559 = vadd.f32 %v220, %v1558
  %v1560 = vpop.f32.mrb[0].mxu0
  %1561 = vmatprep.mubr.bf16.mxu0 0
  %1562 = vmatmul.mubr.bf16.gmra.mrb[0].mxu0 %v914
  %v1563 = vpop.f32.mrb[0].mxu0
  %v1564 = vadd.f32 %v220, %v1563
  %v1565 = vpop.f32.mrb[0].mxu0
  %v1566 = vpop.f32.mrb[0].mxu0
  %v1567 = vadd.f32 %v220, %v1566
  %v1568 = vpop.f32.mrb[0].mxu0
  %1569 = vmatprep.mubr.bf16.mxu0 0
  %1570 = vmatmul.mubr.bf16.gmra.mrb[0].mxu0 %v917
  %v1571 = vpop.f32.mrb[0].mxu0
  %v1572 = vadd.f32 %v220, %v1571
  %v1573 = vpop.f32.mrb[0].mxu0
  %v1574 = vpop.f32.mrb[0].mxu0
  %v1575 = vadd.f32 %v220, %v1574
  %v1576 = vpop.f32.mrb[0].mxu0
  %1577 = vmatprep.mubr.bf16.mxu0 0
  %1578 = vmatmul.mubr.bf16.gmra.mrb[0].mxu0 %v920
  %v1579 = vpop.f32.mrb[0].mxu0
  %v1580 = vadd.f32 %v220, %v1579
  %v1581 = vpop.f32.mrb[0].mxu0
  %v1582 = vpop.f32.mrb[0].mxu0
  %v1583 = vadd.f32 %v220, %v1582
  %v1584 = vpop.f32.mrb[0].mxu0
  %1585 = vmatprep.mubr.bf16.mxu0 0
  %1586 = vmatmul.mubr.bf16.gmra.mrb[0].mxu0 %v923
  %v1587 = vpop.f32.mrb[0].mxu0
  %v1588 = vadd.f32 %v220, %v1587
  %v1589 = vpop.f32.mrb[0].mxu0
  %v1590 = vpop.f32.mrb[0].mxu0
  %v1591 = vadd.f32 %v220, %v1590
  %v1592 = vpop.f32.mrb[0].mxu0
  %1593 = vmatprep.mubr.bf16.mxu0 0
  %1594 = vmatmul.mubr.bf16.gmra.mrb[0].mxu0 %v926
  %v1595 = vpop.f32.mrb[0].mxu0
  %v1596 = vadd.f32 %v220, %v1595
  %v1597 = vpop.f32.mrb[0].mxu0
  %v1598 = vpop.f32.mrb[0].mxu0
  %v1599 = vadd.f32 %v220, %v1598
  %v1600 = vpop.f32.mrb[0].mxu0
  %1601 = vmatprep.mubr.bf16.mxu0 0
  %1602 = vmatmul.mubr.bf16.gmra.mrb[0].mxu0 %v929
  %v1603 = vpop.f32.mrb[0].mxu0
  %v1604 = vadd.f32 %v220, %v1603
  %v1605 = vpop.f32.mrb[0].mxu0
  %v1606 = vpop.f32.mrb[0].mxu0
  %v1607 = vadd.f32 %v220, %v1606
  %v1608 = vpop.f32.mrb[0].mxu0
  %1609 = vmatprep.mubr.bf16.mxu0 0
  %1610 = vmatmul.mubr.bf16.gmra.mrb[0].mxu0 %v932
  %v1611 = vpop.f32.mrb[0].mxu0
  %v1612 = vadd.f32 %v220, %v1611
  %v1613 = vpop.f32.mrb[0].mxu0
  %v1614 = vpop.f32.mrb[0].mxu0
  %v1615 = vadd.f32 %v220, %v1614
  %v1616 = vpop.f32.mrb[0].mxu0
  %1617 = vmatprep.mubr.bf16.mxu0 0
  %1618 = vmatmul.mubr.bf16.gmra.mrb[0].mxu0 %v935
  %v1619 = vpop.f32.mrb[0].mxu0
  %v1620 = vadd.f32 %v220, %v1619
  %v1621 = vpop.f32.mrb[0].mxu0
  %v1622 = vpop.f32.mrb[0].mxu0
  %v1623 = vadd.f32 %v220, %v1622
  %v1624 = vpop.f32.mrb[0].mxu0
  %1625 = vmatprep.mubr.bf16.mxu0 0
  %1626 = vmatmul.mubr.bf16.gmra.mrb[0].mxu0 %v938
  %v1627 = vpop.f32.mrb[0].mxu0
  %v1628 = vadd.f32 %v220, %v1627
  %v1629 = vpop.f32.mrb[0].mxu0
  %v1630 = vpop.f32.mrb[0].mxu0
  %v1631 = vadd.f32 %v220, %v1630
  %v1632 = vpop.f32.mrb[0].mxu0
  %1633 = vmatprep.mubr.bf16.mxu0 0
  %1634 = vmatmul.mubr.bf16.gmra.mrb[0].mxu0 %v941
  %v1635 = vpop.f32.mrb[0].mxu0
  %v1636 = vadd.f32 %v220, %v1635
  %v1637 = vpop.f32.mrb[0].mxu0
  %v1638 = vpop.f32.mrb[0].mxu0
  %v1639 = vadd.f32 %v220, %v1638
  %v1640 = vpop.f32.mrb[0].mxu0
  %1641 = vmatprep.mubr.bf16.mxu0 0
  %1642 = vmatmul.mubr.bf16.gmra.mrb[0].mxu0 %v944
  %v1643 = vpop.f32.mrb[0].mxu0
  %v1644 = vadd.f32 %v220, %v1643
  %v1645 = vpop.f32.mrb[0].mxu0
  %v1646 = vpop.f32.mrb[0].mxu0
  %v1647 = vadd.f32 %v220, %v1646
  %v1648 = vpop.f32.mrb[0].mxu0
  %1649 = vmatprep.mubr.bf16.mxu0 0
  %1650 = vmatmul.mubr.bf16.gmra.mrb[0].mxu0 %v947
  %v1651 = vpop.f32.mrb[0].mxu0
  %v1652 = vadd.f32 %v220, %v1651
  %v1653 = vpop.f32.mrb[0].mxu0
  %v1654 = vpop.f32.mrb[0].mxu0
  %v1655 = vadd.f32 %v220, %v1654
  %v1656 = vpop.f32.mrb[0].mxu0
  %1657 = vmatprep.mubr.bf16.mxu0 0
  %1658 = vmatmul.mubr.bf16.gmra.mrb[0].mxu0 %v950
  %v1659 = vpop.f32.mrb[0].mxu0
  %v1660 = vadd.f32 %v220, %v1659
  %v1661 = vpop.f32.mrb[0].mxu0
  %v1662 = vpop.f32.mrb[0].mxu0
  %v1663 = vadd.f32 %v220, %v1662
  %v1664 = vpop.f32.mrb[0].mxu0
  %1665 = vmatprep.mubr.bf16.mxu0 0
  %1666 = vmatmul.mubr.bf16.gmra.mrb[0].mxu0 %v953
  %v1667 = vpop.f32.mrb[0].mxu0
  %v1668 = vadd.f32 %v220, %v1667
  %v1669 = vpop.f32.mrb[0].mxu0
  %v1670 = vpop.f32.mrb[0].mxu0
  %v1671 = vadd.f32 %v220, %v1670
  %v1672 = vpop.f32.mrb[0].mxu0
  %1673 = vmatprep.mubr.bf16.mxu0 0
  %1674 = vmatmul.mubr.bf16.gmra.mrb[0].mxu0 %v956
  %v1675 = vpop.f32.mrb[0].mxu0
  %v1676 = vadd.f32 %v220, %v1675
  %v1677 = vpop.f32.mrb[0].mxu0
  %v1678 = vpop.f32.mrb[0].mxu0
  %v1679 = vadd.f32 %v220, %v1678
  %v1680 = vpop.f32.mrb[0].mxu0
  %1681 = vmatprep.mubr.bf16.mxu0 0
  %1682 = vmatmul.mubr.bf16.gmra.mrb[0].mxu0 %v959
  %v1683 = vpop.f32.mrb[0].mxu0
  %v1684 = vadd.f32 %v220, %v1683
  %v1685 = vpop.f32.mrb[0].mxu0
  %v1686 = vpop.f32.mrb[0].mxu0
  %v1687 = vadd.f32 %v220, %v1686
  %v1688 = vpop.f32.mrb[0].mxu0
  %1689 = vmatprep.mubr.bf16.mxu0 0
  %1690 = vmatmul.mubr.bf16.gmra.mrb[0].mxu0 %v962
  %v1691 = vpop.f32.mrb[0].mxu0
  %v1692 = vadd.f32 %v220, %v1691
  %v1693 = vpop.f32.mrb[0].mxu0
  %v1694 = vpop.f32.mrb[0].mxu0
  %v1695 = vadd.f32 %v220, %v1694
  %v1696 = vpop.f32.mrb[0].mxu0
  %1697 = vmatprep.mubr.bf16.mxu0 0
  %1698 = vmatmul.mubr.bf16.gmra.mrb[0].mxu0 %v965
  %v1699 = vpop.f32.mrb[0].mxu0
  %v1700 = vadd.f32 %v220, %v1699
  %v1701 = vpop.f32.mrb[0].mxu0
  %v1702 = vpop.f32.mrb[0].mxu0
  %v1703 = vadd.f32 %v220, %v1702
  %v1704 = vpop.f32.mrb[0].mxu0
  %1705 = vmatprep.mubr.bf16.mxu0 0
  %1706 = vmatmul.mubr.bf16.gmra.mrb[0].mxu0 %v968
  %v1707 = vpop.f32.mrb[0].mxu0
  %v1708 = vadd.f32 %v220, %v1707
  %v1709 = vpop.f32.mrb[0].mxu0
  %v1710 = vpop.f32.mrb[0].mxu0
  %v1711 = vadd.f32 %v220, %v1710
  %v1712 = vpop.f32.mrb[0].mxu0
  %1713 = vmatprep.mubr.bf16.mxu0 0
  %1714 = vmatmul.mubr.bf16.gmra.mrb[0].mxu0 %v971
  %v1715 = vpop.f32.mrb[0].mxu0
  %v1716 = vadd.f32 %v220, %v1715
  %v1717 = vpop.f32.mrb[0].mxu0
  %v1718 = vpop.f32.mrb[0].mxu0
  %v1719 = vadd.f32 %v220, %v1718
  %v1720 = vpop.f32.mrb[0].mxu0
  %1721 = vmatprep.mubr.bf16.mxu0 0
  %1722 = vmatmul.mubr.bf16.gmra.mrb[0].mxu0 %v974
  %v1723 = vpop.f32.mrb[0].mxu0
  %v1724 = vadd.f32 %v220, %v1723
  %v1725 = vpop.f32.mrb[0].mxu0
  %v1726 = vpop.f32.mrb[0].mxu0
  %v1727 = vadd.f32 %v220, %v1726
  %v1728 = vpop.f32.mrb[0].mxu0
  %1729 = vmatprep.mubr.bf16.mxu0 0
  %1730 = vmatmul.mubr.bf16.gmra.mrb[0].mxu0 %v977
  %v1731 = vpop.f32.mrb[0].mxu0
  %v1732 = vadd.f32 %v220, %v1731
  %v1733 = vpop.f32.mrb[0].mxu0
  %v1734 = vpop.f32.mrb[0].mxu0
  %v1735 = vadd.f32 %v220, %v1734
  %v1736 = vpop.f32.mrb[0].mxu0
  %1737 = vmatprep.mubr.bf16.mxu0 0
  %1738 = vmatmul.mubr.bf16.gmra.mrb[0].mxu0 %v980
  %v1739 = vpop.f32.mrb[0].mxu0
  %v1740 = vadd.f32 %v220, %v1739
  %v1741 = vpop.f32.mrb[0].mxu0
  %v1742 = vpop.f32.mrb[0].mxu0
  %v1743 = vadd.f32 %v220, %v1742
  %v1744 = vpop.f32.mrb[0].mxu0
  %1745 = vmatprep.mubr.bf16.mxu0 0
  %1746 = vmatmul.mubr.bf16.gmra.mrb[0].mxu0 %v983
  %v1747 = vpop.f32.mrb[0].mxu0
  %v1748 = vadd.f32 %v220, %v1747
  %v1749 = vpop.f32.mrb[0].mxu0
  %v1750 = vpop.f32.mrb[0].mxu0
  %v1751 = vadd.f32 %v220, %v1750
  %v1752 = vpop.f32.mrb[0].mxu0
  %1753 = vmatprep.mubr.bf16.mxu0 0
  %1754 = vmatmul.mubr.bf16.gmra.mrb[0].mxu0 %v986
  %v1755 = vpop.f32.mrb[0].mxu0
  %v1756 = vadd.f32 %v220, %v1755
  %v1757 = vpop.f32.mrb[0].mxu0
  %v1758 = vpop.f32.mrb[0].mxu0
  %v1759 = vadd.f32 %v220, %v1758
  %v1760 = vpop.f32.mrb[0].mxu0
  %1761 = vmatprep.mubr.bf16.mxu0 0
  %1762 = vmatmul.mubr.bf16.gmra.mrb[0].mxu0 %v989
  %v1763 = vpop.f32.mrb[0].mxu0
  %v1764 = vadd.f32 %v220, %v1763
  %v1765 = vpop.f32.mrb[0].mxu0
  %v1766 = vpop.f32.mrb[0].mxu0
  %v1767 = vadd.f32 %v220, %v1766
  %v1768 = vpop.f32.mrb[0].mxu0
  %1769 = vmatprep.mubr.bf16.mxu0 0
  %1770 = vmatmul.mubr.bf16.gmra.mrb[0].mxu0 %v992
  %v1771 = vpop.f32.mrb[0].mxu0
  %v1772 = vadd.f32 %v220, %v1771
  %v1773 = vpop.f32.mrb[0].mxu0
  %v1774 = vpop.f32.mrb[0].mxu0
  %v1775 = vadd.f32 %v220, %v1774
  %v1776 = vpop.f32.mrb[0].mxu0
  %1777 = vmatprep.mubr.bf16.mxu0 0
  %1778 = vmatmul.mubr.bf16.gmra.mrb[0].mxu0 %v995
  %v1779 = vpop.f32.mrb[0].mxu0
  %v1780 = vadd.f32 %v220, %v1779
  %v1781 = vpop.f32.mrb[0].mxu0
  %v1782 = vpop.f32.mrb[0].mxu0
  %v1783 = vadd.f32 %v220, %v1782
  %v1784 = vpop.f32.mrb[0].mxu0
  %1785 = vmatprep.mubr.bf16.mxu0 0
  %1786 = vmatmul.mubr.bf16.gmra.mrb[0].mxu0 %v998
  %v1787 = vpop.f32.mrb[0].mxu0
  %v1788 = vadd.f32 %v220, %v1787
  %v1789 = vpop.f32.mrb[0].mxu0
  %v1790 = vpop.f32.mrb[0].mxu0
  %v1791 = vadd.f32 %v220, %v1790
  %v1792 = vpop.f32.mrb[0].mxu0
  %1793 = vmatprep.mubr.bf16.mxu0 0
  %1794 = vmatmul.mubr.bf16.gmra.mrb[0].mxu0 %v1001
  %v1795 = vpop.f32.mrb[0].mxu0
  %v1796 = vadd.f32 %v220, %v1795
  %v1797 = vpop.f32.mrb[0].mxu0
  %v1798 = vpop.f32.mrb[0].mxu0
  %v1799 = vadd.f32 %v220, %v1798
  %v1800 = vpop.f32.mrb[0].mxu0
  %1801 = vmatprep.mubr.bf16.mxu0 0
  %1802 = vmatmul.mubr.bf16.gmra.mrb[0].mxu0 %v1004
  %v1803 = vpop.f32.mrb[0].mxu0
  %v1804 = vadd.f32 %v220, %v1803
  %v1805 = vpop.f32.mrb[0].mxu0
  %v1806 = vpop.f32.mrb[0].mxu0
  %v1807 = vadd.f32 %v220, %v1806
  %v1808 = vpop.f32.mrb[0].mxu0
  %1809 = vmatprep.mubr.bf16.mxu0 0
  %1810 = vmatmul.mubr.bf16.gmra.mrb[0].mxu0 %v1007
  %v1811 = vpop.f32.mrb[0].mxu0
  %v1812 = vadd.f32 %v220, %v1811
  %v1813 = vpop.f32.mrb[0].mxu0
  %v1814 = vpop.f32.mrb[0].mxu0
  %v1815 = vadd.f32 %v220, %v1814
  %v1816 = vpop.f32.mrb[0].mxu0
  %1817 = vmatprep.mubr.bf16.mxu0 0
  %1818 = vmatmul.mubr.bf16.gmra.mrb[0].mxu0 %v1010
  %v1819 = vpop.f32.mrb[0].mxu0
  %v1820 = vadd.f32 %v220, %v1819
  %v1821 = vpop.f32.mrb[0].mxu0
  %v1822 = vpop.f32.mrb[0].mxu0
  %v1823 = vadd.f32 %v220, %v1822
  %v1824 = vpop.f32.mrb[0].mxu0
  %1825 = vmatprep.mubr.bf16.mxu0 0
  %1826 = vmatmul.mubr.bf16.gmra.mrb[0].mxu0 %v1013
  %v1827 = vpop.f32.mrb[0].mxu0
  %v1828 = vadd.f32 %v220, %v1827
  %v1829 = vpop.f32.mrb[0].mxu0
  %v1830 = vpop.f32.mrb[0].mxu0
  %v1831 = vadd.f32 %v220, %v1830
  %v1832 = vpop.f32.mrb[0].mxu0
  %1833 = vmatprep.mubr.bf16.mxu0 0
  %1834 = vmatmul.mubr.bf16.gmra.mrb[0].mxu0 %v1016
  %v1835 = vpop.f32.mrb[0].mxu0
  %v1836 = vadd.f32 %v220, %v1835
  %v1837 = vpop.f32.mrb[0].mxu0
  %v1838 = vpop.f32.mrb[0].mxu0
  %v1839 = vadd.f32 %v220, %v1838
  %v1840 = vpop.f32.mrb[0].mxu0
  %1841 = vdwg.mxu0
  %v1842 = vmax.f32 %v1060, 0.0
  %v1843 = vmax.f32 %v1063, 0.0
  %v1844 = vmax.f32 %v1068, 0.0
  %v1845 = vmax.f32 %v1071, 0.0
  %v1846 = vmax.f32 %v1076, 0.0
  %v1847 = vmax.f32 %v1079, 0.0
  %v1848 = vmax.f32 %v1084, 0.0
  %v1849 = vmax.f32 %v1087, 0.0
  %v1850 = vmax.f32 %v1092, 0.0
  %v1851 = vmax.f32 %v1095, 0.0
  %v1852 = vmax.f32 %v1100, 0.0
  %v1853 = vmax.f32 %v1103, 0.0
  %v1854 = vmax.f32 %v1108, 0.0
  %v1855 = vmax.f32 %v1111, 0.0
  %v1856 = vmax.f32 %v1116, 0.0
  %v1857 = vmax.f32 %v1119, 0.0
  %v1858 = vmax.f32 %v1124, 0.0
  %v1859 = vmax.f32 %v1127, 0.0
  %v1860 = vmax.f32 %v1132, 0.0
  %v1861 = vmax.f32 %v1135, 0.0
  %v1862 = vmax.f32 %v1140, 0.0
  %v1863 = vmax.f32 %v1143, 0.0
  %v1864 = vmax.f32 %v1148, 0.0
  %v1865 = vmax.f32 %v1151, 0.0
  %v1866 = vmax.f32 %v1156, 0.0
  %v1867 = vmax.f32 %v1159, 0.0
  %v1868 = vmax.f32 %v1164, 0.0
  %v1869 = vmax.f32 %v1167, 0.0
  %v1870 = vmax.f32 %v1172, 0.0
  %v1871 = vmax.f32 %v1175, 0.0
  %v1872 = vmax.f32 %v1180, 0.0
  %v1873 = vmax.f32 %v1183, 0.0
  %v1874 = vmax.f32 %v1188, 0.0
  %v1875 = vmax.f32 %v1191, 0.0
  %v1876 = vmax.f32 %v1196, 0.0
  %v1877 = vmax.f32 %v1199, 0.0
  %v1878 = vmax.f32 %v1204, 0.0
  %v1879 = vmax.f32 %v1207, 0.0
  %v1880 = vmax.f32 %v1212, 0.0
  %v1881 = vmax.f32 %v1215, 0.0
  %v1882 = vmax.f32 %v1220, 0.0
  %v1883 = vmax.f32 %v1223, 0.0
  %v1884 = vmax.f32 %v1228, 0.0
  %v1885 = vmax.f32 %v1231, 0.0
  %v1886 = vmax.f32 %v1236, 0.0
  %v1887 = vmax.f32 %v1239, 0.0
  %v1888 = vmax.f32 %v1244, 0.0
  %v1889 = vmax.f32 %v1247, 0.0
  %v1890 = vmax.f32 %v1252, 0.0
  %v1891 = vmax.f32 %v1255, 0.0
  %v1892 = vmax.f32 %v1260, 0.0
  %v1893 = vmax.f32 %v1263, 0.0
  %v1894 = vmax.f32 %v1268, 0.0
  %v1895 = vmax.f32 %v1271, 0.0
  %v1896 = vmax.f32 %v1276, 0.0
  %v1897 = vmax.f32 %v1279, 0.0
  %v1898 = vmax.f32 %v1284, 0.0
  %v1899 = vmax.f32 %v1287, 0.0
  %v1900 = vmax.f32 %v1292, 0.0
  %v1901 = vmax.f32 %v1295, 0.0
  %v1902 = vmax.f32 %v1300, 0.0
  %v1903 = vmax.f32 %v1303, 0.0
  %v1904 = vmax.f32 %v1308, 0.0
  %v1905 = vmax.f32 %v1311, 0.0
  %v1906 = vmax.f32 %v1316, 0.0
  %v1907 = vmax.f32 %v1319, 0.0
  %v1908 = vmax.f32 %v1324, 0.0
  %v1909 = vmax.f32 %v1327, 0.0
  %v1910 = vmax.f32 %v1332, 0.0
  %v1911 = vmax.f32 %v1335, 0.0
  %v1912 = vmax.f32 %v1340, 0.0
  %v1913 = vmax.f32 %v1343, 0.0
  %v1914 = vmax.f32 %v1348, 0.0
  %v1915 = vmax.f32 %v1351, 0.0
  %v1916 = vmax.f32 %v1356, 0.0
  %v1917 = vmax.f32 %v1359, 0.0
  %v1918 = vmax.f32 %v1364, 0.0
  %v1919 = vmax.f32 %v1367, 0.0
  %v1920 = vmax.f32 %v1372, 0.0
  %v1921 = vmax.f32 %v1375, 0.0
  %v1922 = vmax.f32 %v1380, 0.0
  %v1923 = vmax.f32 %v1383, 0.0
  %v1924 = vmax.f32 %v1388, 0.0
  %v1925 = vmax.f32 %v1391, 0.0
  %v1926 = vmax.f32 %v1396, 0.0
  %v1927 = vmax.f32 %v1399, 0.0
  %v1928 = vmax.f32 %v1404, 0.0
  %v1929 = vmax.f32 %v1407, 0.0
  %v1930 = vmax.f32 %v1412, 0.0
  %v1931 = vmax.f32 %v1415, 0.0
  %v1932 = vmax.f32 %v1420, 0.0
  %v1933 = vmax.f32 %v1423, 0.0
  %v1934 = vmax.f32 %v1428, 0.0
  %v1935 = vmax.f32 %v1431, 0.0
  %v1936 = vmax.f32 %v1436, 0.0
  %v1937 = vmax.f32 %v1439, 0.0
  %v1938 = vmax.f32 %v1444, 0.0
  %v1939 = vmax.f32 %v1447, 0.0
  %v1940 = vmax.f32 %v1452, 0.0
  %v1941 = vmax.f32 %v1455, 0.0
  %v1942 = vmax.f32 %v1460, 0.0
  %v1943 = vmax.f32 %v1463, 0.0
  %v1944 = vmax.f32 %v1468, 0.0
  %v1945 = vmax.f32 %v1471, 0.0
  %v1946 = vmax.f32 %v1476, 0.0
  %v1947 = vmax.f32 %v1479, 0.0
  %v1948 = vmax.f32 %v1484, 0.0
  %v1949 = vmax.f32 %v1487, 0.0
  %v1950 = vmax.f32 %v1492, 0.0
  %v1951 = vmax.f32 %v1495, 0.0
  %v1952 = vmax.f32 %v1500, 0.0
  %v1953 = vmax.f32 %v1503, 0.0
  %v1954 = vmax.f32 %v1508, 0.0
  %v1955 = vmax.f32 %v1511, 0.0
  %v1956 = vmax.f32 %v1516, 0.0
  %v1957 = vmax.f32 %v1519, 0.0
  %v1958 = vmax.f32 %v1524, 0.0
  %v1959 = vmax.f32 %v1527, 0.0
  %v1960 = vmax.f32 %v1532, 0.0
  %v1961 = vmax.f32 %v1535, 0.0
  %v1962 = vmax.f32 %v1540, 0.0
  %v1963 = vmax.f32 %v1543, 0.0
  %v1964 = vmax.f32 %v1548, 0.0
  %v1965 = vmax.f32 %v1551, 0.0
  %v1966 = vmax.f32 %v1556, 0.0
  %v1967 = vmax.f32 %v1559, 0.0
  %v1968 = vmax.f32 %v1564, 0.0
  %v1969 = vmax.f32 %v1567, 0.0
  %v1970 = vmax.f32 %v1572, 0.0
  %v1971 = vmax.f32 %v1575, 0.0
  %v1972 = vmax.f32 %v1580, 0.0
  %v1973 = vmax.f32 %v1583, 0.0
  %v1974 = vmax.f32 %v1588, 0.0
  %v1975 = vmax.f32 %v1591, 0.0
  %v1976 = vmax.f32 %v1596, 0.0
  %v1977 = vmax.f32 %v1599, 0.0
  %v1978 = vmax.f32 %v1604, 0.0
  %v1979 = vmax.f32 %v1607, 0.0
  %v1980 = vmax.f32 %v1612, 0.0
  %v1981 = vmax.f32 %v1615, 0.0
  %v1982 = vmax.f32 %v1620, 0.0
  %v1983 = vmax.f32 %v1623, 0.0
  %v1984 = vmax.f32 %v1628, 0.0
  %v1985 = vmax.f32 %v1631, 0.0
  %v1986 = vmax.f32 %v1636, 0.0
  %v1987 = vmax.f32 %v1639, 0.0
  %v1988 = vmax.f32 %v1644, 0.0
  %v1989 = vmax.f32 %v1647, 0.0
  %v1990 = vmax.f32 %v1652, 0.0
  %v1991 = vmax.f32 %v1655, 0.0
  %v1992 = vmax.f32 %v1660, 0.0
  %v1993 = vmax.f32 %v1663, 0.0
  %v1994 = vmax.f32 %v1668, 0.0
  %v1995 = vmax.f32 %v1671, 0.0
  %v1996 = vmax.f32 %v1676, 0.0
  %v1997 = vmax.f32 %v1679, 0.0
  %v1998 = vmax.f32 %v1684, 0.0
  %v1999 = vmax.f32 %v1687, 0.0
  %v2000 = vmax.f32 %v1692, 0.0
  %v2001 = vmax.f32 %v1695, 0.0
  %v2002 = vmax.f32 %v1700, 0.0
  %v2003 = vmax.f32 %v1703, 0.0
  %v2004 = vmax.f32 %v1708, 0.0
  %v2005 = vmax.f32 %v1711, 0.0
  %v2006 = vmax.f32 %v1716, 0.0
  %v2007 = vmax.f32 %v1719, 0.0
  %v2008 = vmax.f32 %v1724, 0.0
  %v2009 = vmax.f32 %v1727, 0.0
  %v2010 = vmax.f32 %v1732, 0.0
  %v2011 = vmax.f32 %v1735, 0.0
  %v2012 = vmax.f32 %v1740, 0.0
  %v2013 = vmax.f32 %v1743, 0.0
  %v2014 = vmax.f32 %v1748, 0.0
  %v2015 = vmax.f32 %v1751, 0.0
  %v2016 = vmax.f32 %v1756, 0.0
  %v2017 = vmax.f32 %v1759, 0.0
  %v2018 = vmax.f32 %v1764, 0.0
  %v2019 = vmax.f32 %v1767, 0.0
  %v2020 = vmax.f32 %v1772, 0.0
  %v2021 = vmax.f32 %v1775, 0.0
  %v2022 = vmax.f32 %v1780, 0.0
  %v2023 = vmax.f32 %v1783, 0.0
  %v2024 = vmax.f32 %v1788, 0.0
  %v2025 = vmax.f32 %v1791, 0.0
  %v2026 = vmax.f32 %v1796, 0.0
  %v2027 = vmax.f32 %v1799, 0.0
  %v2028 = vmax.f32 %v1804, 0.0
  %v2029 = vmax.f32 %v1807, 0.0
  %v2030 = vmax.f32 %v1812, 0.0
  %v2031 = vmax.f32 %v1815, 0.0
  %v2032 = vmax.f32 %v1820, 0.0
  %v2033 = vmax.f32 %v1823, 0.0
  %v2034 = vmax.f32 %v1828, 0.0
  %v2035 = vmax.f32 %v1831, 0.0
  %v2036 = vmax.f32 %v1836, 0.0
  %v2037 = vmax.f32 %v1839, 0.0
  %v2038 = vmax.f32 %v1842, %v1891
  %v2039 = vmax.f32 %v1843, %v1892
  %v2040 = vmax.f32 %v1844, %v1893
  %v2041 = vmax.f32 %v1845, %v1894
  %v2042 = vmax.f32 %v1846, %v1895
  %v2043 = vmax.f32 %v1847, %v1896
  %v2044 = vmax.f32 %v1848, %v1897
  %v2045 = vmax.f32 %v1849, %v1898
  %v2046 = vmax.f32 %v1850, %v1899
  %v2047 = vmax.f32 %v1851, %v1900
  %v2048 = vmax.f32 %v1852, %v1901
  %v2049 = vmax.f32 %v1853, %v1902
  %v2050 = vmax.f32 %v1854, %v1903
  %v2051 = vmax.f32 %v1855, %v1904
  %v2052 = vmax.f32 %v1856, %v1905
  %v2053 = vmax.f32 %v1857, %v1906
  %v2054 = vmax.f32 %v1858, %v1907
  %v2055 = vmax.f32 %v1859, %v1908
  %v2056 = vmax.f32 %v1860, %v1909
  %v2057 = vmax.f32 %v1861, %v1910
  %v2058 = vmax.f32 %v1862, %v1911
  %v2059 = vmax.f32 %v1863, %v1912
  %v2060 = vmax.f32 %v1864, %v1913
  %v2061 = vmax.f32 %v1865, %v1914
  %v2062 = vmax.f32 %v1866, %v1915
  %v2063 = vmax.f32 %v1867, %v1916
  %v2064 = vmax.f32 %v1868, %v1917
  %v2065 = vmax.f32 %v1869, %v1918
  %v2066 = vmax.f32 %v1870, %v1919
  %v2067 = vmax.f32 %v1871, %v1920
  %v2068 = vmax.f32 %v1872, %v1921
  %v2069 = vmax.f32 %v1873, %v1922
  %v2070 = vmax.f32 %v1874, %v1923
  %v2071 = vmax.f32 %v1875, %v1924
  %v2072 = vmax.f32 %v1876, %v1925
  %v2073 = vmax.f32 %v1877, %v1926
  %v2074 = vmax.f32 %v1878, %v1927
  %v2075 = vmax.f32 %v1879, %v1928
  %v2076 = vmax.f32 %v1880, %v1929
  %v2077 = vmax.f32 %v1881, %v1930
  %v2078 = vmax.f32 %v1882, %v1931
  %v2079 = vmax.f32 %v1883, %v1932
  %v2080 = vmax.f32 %v1884, %v1933
  %v2081 = vmax.f32 %v1885, %v1934
  %v2082 = vmax.f32 %v1886, %v1935
  %v2083 = vmax.f32 %v1887, %v1936
  %v2084 = vmax.f32 %v1888, %v1937
  %v2085 = vmax.f32 %v1889, %v1938
  %v2086 = vmax.f32 %v1890, %v1939
  %v2087 = vmax.f32 %v1940, %v1989
  %v2088 = vmax.f32 %v1941, %v1990
  %v2089 = vmax.f32 %v1942, %v1991
  %v2090 = vmax.f32 %v1943, %v1992
  %v2091 = vmax.f32 %v1944, %v1993
  %v2092 = vmax.f32 %v1945, %v1994
  %v2093 = vmax.f32 %v1946, %v1995
  %v2094 = vmax.f32 %v1947, %v1996
  %v2095 = vmax.f32 %v1948, %v1997
  %v2096 = vmax.f32 %v1949, %v1998
  %v2097 = vmax.f32 %v1950, %v1999
  %v2098 = vmax.f32 %v1951, %v2000
  %v2099 = vmax.f32 %v1952, %v2001
  %v2100 = vmax.f32 %v1953, %v2002
  %v2101 = vmax.f32 %v1954, %v2003
  %v2102 = vmax.f32 %v1955, %v2004
  %v2103 = vmax.f32 %v1956, %v2005
  %v2104 = vmax.f32 %v1957, %v2006
  %v2105 = vmax.f32 %v1958, %v2007
  %v2106 = vmax.f32 %v1959, %v2008
  %v2107 = vmax.f32 %v1960, %v2009
  %v2108 = vmax.f32 %v1961, %v2010
  %v2109 = vmax.f32 %v1962, %v2011
  %v2110 = vmax.f32 %v1963, %v2012
  %v2111 = vmax.f32 %v1964, %v2013
  %v2112 = vmax.f32 %v1965, %v2014
  %v2113 = vmax.f32 %v1966, %v2015
  %v2114 = vmax.f32 %v1967, %v2016
  %v2115 = vmax.f32 %v1968, %v2017
  %v2116 = vmax.f32 %v1969, %v2018
  %v2117 = vmax.f32 %v1970, %v2019
  %v2118 = vmax.f32 %v1971, %v2020
  %v2119 = vmax.f32 %v1972, %v2021
  %v2120 = vmax.f32 %v1973, %v2022
  %v2121 = vmax.f32 %v1974, %v2023
  %v2122 = vmax.f32 %v1975, %v2024
  %v2123 = vmax.f32 %v1976, %v2025
  %v2124 = vmax.f32 %v1977, %v2026
  %v2125 = vmax.f32 %v1978, %v2027
  %v2126 = vmax.f32 %v1979, %v2028
  %v2127 = vmax.f32 %v1980, %v2029
  %v2128 = vmax.f32 %v1981, %v2030
  %v2129 = vmax.f32 %v1982, %v2031
  %v2130 = vmax.f32 %v1983, %v2032
  %v2131 = vmax.f32 %v1984, %v2033
  %v2132 = vmax.f32 %v1985, %v2034
  %v2133 = vmax.f32 %v1986, %v2035
  %v2134 = vmax.f32 %v1987, %v2036
  %v2135 = vmax.f32 %v1988, %v2037
  %v2136 = vmax.f32 %v2038, %v2087
  %v2137 = vmax.f32 %v2039, %v2088
  %v2138 = vmax.f32 %v2040, %v2089
  %v2139 = vmax.f32 %v2041, %v2090
  %v2140 = vmax.f32 %v2042, %v2091
  %v2141 = vmax.f32 %v2043, %v2092
  %v2142 = vmax.f32 %v2044, %v2093
  %v2143 = vmax.f32 %v2045, %v2094
  %v2144 = vmax.f32 %v2046, %v2095
  %v2145 = vmax.f32 %v2047, %v2096
  %v2146 = vmax.f32 %v2048, %v2097
  %v2147 = vmax.f32 %v2049, %v2098
  %v2148 = vmax.f32 %v2050, %v2099
  %v2149 = vmax.f32 %v2051, %v2100
  %v2150 = vmax.f32 %v2052, %v2101
  %v2151 = vmax.f32 %v2053, %v2102
  %v2152 = vmax.f32 %v2054, %v2103
  %v2153 = vmax.f32 %v2055, %v2104
  %v2154 = vmax.f32 %v2056, %v2105
  %v2155 = vmax.f32 %v2057, %v2106
  %v2156 = vmax.f32 %v2058, %v2107
  %v2157 = vmax.f32 %v2059, %v2108
  %v2158 = vmax.f32 %v2060, %v2109
  %v2159 = vmax.f32 %v2061, %v2110
  %v2160 = vmax.f32 %v2062, %v2111
  %v2161 = vmax.f32 %v2063, %v2112
  %v2162 = vmax.f32 %v2064, %v2113
  %v2163 = vmax.f32 %v2065, %v2114
  %v2164 = vmax.f32 %v2066, %v2115
  %v2165 = vmax.f32 %v2067, %v2116
  %v2166 = vmax.f32 %v2068, %v2117
  %v2167 = vmax.f32 %v2069, %v2118
  %v2168 = vmax.f32 %v2070, %v2119
  %v2169 = vmax.f32 %v2071, %v2120
  %v2170 = vmax.f32 %v2072, %v2121
  %v2171 = vmax.f32 %v2073, %v2122
  %v2172 = vmax.f32 %v2074, %v2123
  %v2173 = vmax.f32 %v2075, %v2124
  %v2174 = vmax.f32 %v2076, %v2125
  %v2175 = vmax.f32 %v2077, %v2126
  %v2176 = vmax.f32 %v2078, %v2127
  %v2177 = vmax.f32 %v2079, %v2128
  %v2178 = vmax.f32 %v2080, %v2129
  %v2179 = vmax.f32 %v2081, %v2130
  %v2180 = vmax.f32 %v2082, %v2131
  %v2181 = vmax.f32 %v2083, %v2132
  %v2182 = vmax.f32 %v2084, %v2133
  %v2183 = vmax.f32 %v2085, %v2134
  %v2184 = vmax.f32 %v2086, %v2135
  %v2185 = vpack.c.bf16 %v2137, %v2136
  %v2186 = vpack.c.bf16 %v2139, %v2138
  %v2187 = vpack.c.bf16 %v2141, %v2140
  %v2188 = vpack.c.bf16 %v2143, %v2142
  %v2189 = vpack.c.bf16 %v2145, %v2144
  %v2190 = vpack.c.bf16 %v2147, %v2146
  %v2191 = vpack.c.bf16 %v2149, %v2148
  %v2192 = vpack.c.bf16 %v2151, %v2150
  %v2193 = vpack.c.bf16 %v2153, %v2152
  %v2194 = vpack.c.bf16 %v2155, %v2154
  %v2195 = vpack.c.bf16 %v2157, %v2156
  %v2196 = vpack.c.bf16 %v2159, %v2158
  %v2197 = vpack.c.bf16 %v2161, %v2160
  %v2198 = vpack.c.bf16 %v2163, %v2162
  %v2199 = vpack.c.bf16 %v2165, %v2164
  %v2200 = vpack.c.bf16 %v2167, %v2166
  %v2201 = vpack.c.bf16 %v2169, %v2168
  %v2202 = vpack.c.bf16 %v2171, %v2170
  %v2203 = vpack.c.bf16 %v2173, %v2172
  %v2204 = vpack.c.bf16 %v2175, %v2174
  %v2205 = vpack.c.bf16 %v2177, %v2176
  %v2206 = vpack.c.bf16 %v2179, %v2178
  %v2207 = vpack.c.bf16 %v2181, %v2180
  %v2208 = vpack.c.bf16 %v2183, %v2182
  %v2209 = vpack.c.bf16 %v2184, %v2184
  %v2235 = vunpack.c.l.b16 %v2185
  %v2236 = vunpack.c.h.b16 %v2185
  %v2237 = vunpack.c.l.b16 %v2186
  %v2238 = vunpack.c.h.b16 %v2186
  %v2239 = vunpack.c.l.b16 %v2187
  %v2240 = vunpack.c.h.b16 %v2187
  %v2241 = vunpack.c.l.b16 %v2188
  %v2242 = vunpack.c.h.b16 %v2188
  %v2243 = vunpack.c.l.b16 %v2189
  %v2244 = vunpack.c.h.b16 %v2189
  %v2245 = vunpack.c.l.b16 %v2190
  %v2246 = vunpack.c.h.b16 %v2190
  %v2247 = vunpack.c.l.b16 %v2191
  %v2248 = vunpack.c.h.b16 %v2191
  %v2249 = vunpack.c.l.b16 %v2192
  %v2250 = vunpack.c.h.b16 %v2192
  %v2251 = vunpack.c.l.b16 %v2193
  %v2252 = vunpack.c.h.b16 %v2193
  %v2253 = vunpack.c.l.b16 %v2194
  %v2254 = vunpack.c.h.b16 %v2194
  %v2255 = vunpack.c.l.b16 %v2195
  %v2256 = vunpack.c.h.b16 %v2195
  %v2257 = vunpack.c.l.b16 %v2196
  %v2258 = vunpack.c.h.b16 %v2196
  %v2259 = vunpack.c.l.b16 %v2197
  %v2260 = vunpack.c.h.b16 %v2197
  %v2261 = vunpack.c.l.b16 %v2198
  %v2262 = vunpack.c.h.b16 %v2198
  %v2263 = vunpack.c.l.b16 %v2199
  %v2264 = vunpack.c.h.b16 %v2199
  %v2265 = vunpack.c.l.b16 %v2200
  %v2266 = vunpack.c.h.b16 %v2200
  %v2267 = vunpack.c.l.b16 %v2201
  %v2268 = vunpack.c.h.b16 %v2201
  %v2269 = vunpack.c.l.b16 %v2202
  %v2270 = vunpack.c.h.b16 %v2202
  %v2271 = vunpack.c.l.b16 %v2203
  %v2272 = vunpack.c.h.b16 %v2203
  %v2273 = vunpack.c.l.b16 %v2204
  %v2274 = vunpack.c.h.b16 %v2204
  %v2275 = vunpack.c.l.b16 %v2205
  %v2276 = vunpack.c.h.b16 %v2205
  %v2277 = vunpack.c.l.b16 %v2206
  %v2278 = vunpack.c.h.b16 %v2206
  %v2279 = vunpack.c.l.b16 %v2207
  %v2280 = vunpack.c.h.b16 %v2207
  %v2281 = vunpack.c.l.b16 %v2208
  %v2282 = vunpack.c.h.b16 %v2208
  %v2283 = vunpack.c.l.b16 %v2209
  %v2284 = vpack.c.b16 %v2235, %v2235
  %v2285 = vpack.c.b16 %v2236, %v2236
  %v2286 = vpack.c.b16 %v2237, %v2237
  %v2287 = vpack.c.b16 %v2238, %v2238
  %v2288 = vpack.c.b16 %v2239, %v2239
  %v2289 = vpack.c.b16 %v2240, %v2240
  %v2290 = vpack.c.b16 %v2241, %v2241
  %v2291 = vpack.c.b16 %v2242, %v2242
  %v2292 = vpack.c.b16 %v2243, %v2243
  %v2293 = vpack.c.b16 %v2244, %v2244
  %v2294 = vpack.c.b16 %v2245, %v2245
  %v2295 = vpack.c.b16 %v2246, %v2246
  %v2296 = vpack.c.b16 %v2247, %v2247
  %v2297 = vpack.c.b16 %v2248, %v2248
  %v2298 = vpack.c.b16 %v2249, %v2249
  %v2299 = vpack.c.b16 %v2250, %v2250
  %v2300 = vpack.c.b16 %v2251, %v2251
  %v2301 = vpack.c.b16 %v2252, %v2252
  %v2302 = vpack.c.b16 %v2253, %v2253
  %v2303 = vpack.c.b16 %v2254, %v2254
  %v2304 = vpack.c.b16 %v2255, %v2255
  %v2305 = vpack.c.b16 %v2256, %v2256
  %v2306 = vpack.c.b16 %v2257, %v2257
  %v2307 = vpack.c.b16 %v2258, %v2258
  %v2308 = vpack.c.b16 %v2259, %v2259
  %v2309 = vpack.c.b16 %v2260, %v2260
  %v2310 = vpack.c.b16 %v2261, %v2261
  %v2311 = vpack.c.b16 %v2262, %v2262
  %v2312 = vpack.c.b16 %v2263, %v2263
  %v2313 = vpack.c.b16 %v2264, %v2264
  %v2314 = vpack.c.b16 %v2265, %v2265
  %v2315 = vpack.c.b16 %v2266, %v2266
  %v2316 = vpack.c.b16 %v2267, %v2267
  %v2317 = vpack.c.b16 %v2268, %v2268
  %v2318 = vpack.c.b16 %v2269, %v2269
  %v2319 = vpack.c.b16 %v2270, %v2270
  %v2320 = vpack.c.b16 %v2271, %v2271
  %v2321 = vpack.c.b16 %v2272, %v2272
  %v2322 = vpack.c.b16 %v2273, %v2273
  %v2323 = vpack.c.b16 %v2274, %v2274
  %v2324 = vpack.c.b16 %v2275, %v2275
  %v2325 = vpack.c.b16 %v2276, %v2276
  %v2326 = vpack.c.b16 %v2277, %v2277
  %v2327 = vpack.c.b16 %v2278, %v2278
  %v2328 = vpack.c.b16 %v2279, %v2279
  %v2329 = vpack.c.b16 %v2280, %v2280
  %v2330 = vpack.c.b16 %v2281, %v2281
  %v2331 = vpack.c.b16 %v2282, %v2282
  %v2332 = vpack.c.b16 %v2283, %v2283
  %2382 = vst [vmem:[%s3] sm:$0xf] %v2284
  %2383 = vst [vmem:[%s3 + $0x4] sm:$0xf] %v2285
  %2384 = vst [vmem:[%s3 + $0x8] sm:$0xf] %v2286
  %2385 = vst [vmem:[%s3 + $0xc] sm:$0xf] %v2287
  %2386 = vst [vmem:[%s3 + $0x10] sm:$0xf] %v2288
  %2387 = vst [vmem:[%s3 + $0x14] sm:$0xf] %v2289
  %2388 = vst [vmem:[%s3 + $0x18] sm:$0xf] %v2290
  %2389 = vst [vmem:[%s3 + $0x1c] sm:$0xf] %v2291
  %2390 = vst [vmem:[%s3 + $0x20] sm:$0xf] %v2292
  %2391 = vst [vmem:[%s3 + $0x24] sm:$0xf] %v2293
  %2392 = vst [vmem:[%s3 + $0x28] sm:$0xf] %v2294
  %2393 = vst [vmem:[%s3 + $0x2c] sm:$0xf] %v2295
  %2394 = vst [vmem:[%s3 + $0x30] sm:$0xf] %v2296
  %2395 = vst [vmem:[%s3 + $0x34] sm:$0xf] %v2297
  %2396 = vst [vmem:[%s3 + $0x38] sm:$0xf] %v2298
  %2397 = vst [vmem:[%s3 + $0x3c] sm:$0xf] %v2299
  %2398 = vst [vmem:[%s3 + $0x40] sm:$0xf] %v2300
  %2399 = vst [vmem:[%s3 + $0x44] sm:$0xf] %v2301
  %2400 = vst [vmem:[%s3 + $0x48] sm:$0xf] %v2302
  %2401 = vst [vmem:[%s3 + $0x4c] sm:$0xf] %v2303
  %2402 = vst [vmem:[%s3 + $0x50] sm:$0xf] %v2304
  %2403 = vst [vmem:[%s3 + $0x54] sm:$0xf] %v2305
  %2404 = vst [vmem:[%s3 + $0x58] sm:$0xf] %v2306
  %2405 = vst [vmem:[%s3 + $0x5c] sm:$0xf] %v2307
  %2406 = vst [vmem:[%s3 + $0x60] sm:$0xf] %v2308
  %2407 = vst [vmem:[%s3 + $0x64] sm:$0xf] %v2309
  %2408 = vst [vmem:[%s3 + $0x68] sm:$0xf] %v2310
  %2409 = vst [vmem:[%s3 + $0x6c] sm:$0xf] %v2311
  %2410 = vst [vmem:[%s3 + $0x70] sm:$0xf] %v2312
  %2411 = vst [vmem:[%s3 + $0x74] sm:$0xf] %v2313
  %2412 = vst [vmem:[%s3 + $0x78] sm:$0xf] %v2314
  %2413 = vst [vmem:[%s3 + $0x7c] sm:$0xf] %v2315
  %2414 = vst [vmem:[%s3 + $0x80] sm:$0xf] %v2316
  %2415 = vst [vmem:[%s3 + $0x84] sm:$0xf] %v2317
  %2416 = vst [vmem:[%s3 + $0x88] sm:$0xf] %v2318
  %2417 = vst [vmem:[%s3 + $0x8c] sm:$0xf] %v2319
  %2418 = vst [vmem:[%s3 + $0x90] sm:$0xf] %v2320
  %2419 = vst [vmem:[%s3 + $0x94] sm:$0xf] %v2321
  %2420 = vst [vmem:[%s3 + $0x98] sm:$0xf] %v2322
  %2421 = vst [vmem:[%s3 + $0x9c] sm:$0xf] %v2323
  %2422 = vst [vmem:[%s3 + $0xa0] sm:$0xf] %v2324
  %2423 = vst [vmem:[%s3 + $0xa4] sm:$0xf] %v2325
  %2424 = vst [vmem:[%s3 + $0xa8] sm:$0xf] %v2326
  %2425 = vst [vmem:[%s3 + $0xac] sm:$0xf] %v2327
  %2426 = vst [vmem:[%s3 + $0xb0] sm:$0xf] %v2328
  %2427 = vst [vmem:[%s3 + $0xb4] sm:$0xf] %v2329
  %2428 = vst [vmem:[%s3 + $0xb8] sm:$0xf] %v2330
  %2429 = vst [vmem:[%s3 + $0xbc] sm:$0xf] %v2331
  %2430 = vst [vmem:[%s3 + $0xc0] sm:$0xf] %v2332
  // Predicated region
  $region14: #{lenet_forward.3} parent=0 // pred_check
    _
  $region15: #{lenet_forward.3} parent=0 // pred_check_branch
    %2432 = sbr.rel (0) target = $region17
  $region16: #{lenet_forward.3} parent=0 // pred_region
    _
  $region17: #{lenet_forward.3} parent=0 // pred_fallthru
    _
  // Predicated region
  $region18: #{lenet_forward.3} parent=0 // pred_check
    _
  $region19: #{lenet_forward.3} parent=0 // pred_check_branch
    %2434 = sbr.rel (0) target = $region21
  $region20: #{lenet_forward.3} parent=0 // pred_region
    _
  $region21: #{lenet_forward.3} parent=0 // pred_fallthru
    _

// kernel: lenet_forward.4
$region0: #{lenet_forward.4}
  #allocation0 [shape = 'u32[]', space=smem, size = 0x4, offset = 0x4, fixed_abs, tag = 'smem constant byte address 0x4 - core index']
  #allocation1 [shape = 'u32[144,128]{1,0:T(1,128)}', space=vmem, size = 0x12000, scoped, tag = 'internal scratch']
  %s0 = inlined_call_operand.vmem [shape: bf16[416,500], index: 0, kind: input, shape index: {}]
  %s1 = inlined_call_operand.vmem [shape: bf16[500,128], index: 1, kind: input, shape index: {}]
  %s2 = inlined_call_operand.vmem [shape: f32[1,128], index: 2, kind: input, shape index: {}]
  %s3 = inlined_call_operand.vmem [shape: bf16[104,128], index: 3, kind: output, shape index: {}]
  %s4 = sld [smem:[#allocation0]]
  $region22: #{lenet_forward.4} parent=0
    _
  %s6 = ssub.s32 1, %s4
  %s7 = scalar_select 0, %s6, %s4
  // Predicated region
  $region2: #{lenet_forward.4} parent=0 // pred_check
    _
  $region3: #{lenet_forward.4} parent=0 // pred_check_branch
    %9 = sbr.rel (0) target = $region5
  $region4: #{lenet_forward.4} parent=0 // pred_region
    _
  $region5: #{lenet_forward.4} parent=0 // pred_fallthru
    _
  // Predicated region
  $region6: #{lenet_forward.4} parent=0 // pred_check
    _
  $region7: #{lenet_forward.4} parent=0 // pred_check_branch
    %11 = sbr.rel (0) target = $region9
  $region8: #{lenet_forward.4} parent=0 // pred_region
    _
  $region9: #{lenet_forward.4} parent=0 // pred_fallthru
    _
  // Predicated region
  $region10: #{lenet_forward.4} parent=0 // pred_check
    _
  $region11: #{lenet_forward.4} parent=0 // pred_check_branch
    %13 = sbr.rel (0) target = $region13
  $region12: #{lenet_forward.4} parent=0 // pred_region
    _
  $region13: #{lenet_forward.4} parent=0 // pred_fallthru
    _
  %v15 = vld [vmem:[%s0] sm:$0xff]
  %v16 = vld [vmem:[%s0 + $0x8] sm:$0xff]
  %v17 = vld [vmem:[%s0 + $0x10] sm:$0xff]
  %v18 = vld [vmem:[%s0 + $0x18] sm:$0xff]
  %v19 = vld [vmem:[%s0 + $0x20] sm:$0xff]
  %v20 = vld [vmem:[%s0 + $0x28] sm:$0xff]
  %v21 = vld [vmem:[%s0 + $0x30] sm:$0xff]
  %v22 = vld [vmem:[%s0 + $0x38] sm:$0xff]
  %v23 = vld [vmem:[%s0 + $0x40] sm:$0xff]
  %v24 = vld [vmem:[%s0 + $0x48] sm:$0xff]
  %v25 = vld [vmem:[%s0 + $0x50] sm:$0xff]
  %v26 = vld [vmem:[%s0 + $0x58] sm:$0xff]
  %v27 = vld [vmem:[%s0 + $0x60] sm:$0xff]
  %v28 = vld [vmem:[%s0 + $0x68] sm:$0xff]
  %v29 = vld [vmem:[%s0 + $0x70] sm:$0xff]
  %v30 = vld [vmem:[%s0 + $0x78] sm:$0xff]
  %v31 = vld [vmem:[%s0 + $0x80] sm:$0xff]
  %v32 = vld [vmem:[%s0 + $0x88] sm:$0xff]
  %v33 = vld [vmem:[%s0 + $0x90] sm:$0xff]
  %v34 = vld [vmem:[%s0 + $0x98] sm:$0xff]
  %v35 = vld [vmem:[%s0 + $0xa0] sm:$0xff]
  %v36 = vld [vmem:[%s0 + $0xa8] sm:$0xff]
  %v37 = vld [vmem:[%s0 + $0xb0] sm:$0xff]
  %v38 = vld [vmem:[%s0 + $0xb8] sm:$0xff]
  %v39 = vld [vmem:[%s0 + $0xc0] sm:$0xff]
  %v40 = vld [vmem:[%s0 + $0xc8] sm:$0xff]
  %v41 = vld [vmem:[%s0 + $0xd0] sm:$0xff]
  %v42 = vld [vmem:[%s0 + $0xd8] sm:$0xff]
  %v43 = vld [vmem:[%s0 + $0xe0] sm:$0xff]
  %v44 = vld [vmem:[%s0 + $0xe8] sm:$0xff]
  %v45 = vld [vmem:[%s0 + $0xf0] sm:$0xff]
  %v46 = vld [vmem:[%s0 + $0xf8] sm:$0xff]
  %v47 = vld [vmem:[%s0 + $0x100] sm:$0xff]
  %v48 = vld [vmem:[%s0 + $0x108] sm:$0xff]
  %v49 = vld [vmem:[%s0 + $0x110] sm:$0xff]
  %v50 = vld [vmem:[%s0 + $0x118] sm:$0xff]
  %v51 = vld [vmem:[%s0 + $0x120] sm:$0xff]
  %v52 = vld [vmem:[%s0 + $0x128] sm:$0xff]
  %v53 = vld [vmem:[%s0 + $0x130] sm:$0xff]
  %v54 = vld [vmem:[%s0 + $0x138] sm:$0xff]
  %v55 = vld [vmem:[%s0 + $0x140] sm:$0xff]
  %v56 = vld [vmem:[%s0 + $0x148] sm:$0xff]
  %v57 = vld [vmem:[%s0 + $0x150] sm:$0xff]
  %v58 = vld [vmem:[%s0 + $0x158] sm:$0xff]
  %v59 = vld [vmem:[%s0 + $0x160] sm:$0xff]
  %v60 = vld [vmem:[%s0 + $0x168] sm:$0xff]
  %v61 = vld [vmem:[%s0 + $0x170] sm:$0xff]
  %v62 = vld [vmem:[%s0 + $0x178] sm:$0xff]
  %v63 = vld [vmem:[%s0 + $0x180] sm:$0xff]
  %v64 = vld [vmem:[%s0 + $0x188] sm:$0xff]
  %v65 = vld [vmem:[%s0 + $0x190] sm:$0xff]
  %v66 = vld [vmem:[%s0 + $0x198] sm:$0xff]
  %v67 = vld [vmem:[%s0 + $0x1a0] sm:$0xff]
  %v68 = vld [vmem:[%s0 + $0x1a8] sm:$0xff]
  %v69 = vld [vmem:[%s0 + $0x1b0] sm:$0xff]
  %v70 = vld [vmem:[%s0 + $0x1b8] sm:$0xff]
  %v71 = vld [vmem:[%s0 + $0x1c0] sm:$0xff]
  %v72 = vld [vmem:[%s0 + $0x1c8] sm:$0xff]
  %v73 = vld [vmem:[%s0 + $0x1d0] sm:$0xff]
  %v74 = vld [vmem:[%s0 + $0x1d8] sm:$0xff]
  %v75 = vld [vmem:[%s0 + $0x1e0] sm:$0xff]
  %v76 = vld [vmem:[%s0 + $0x1e8] sm:$0xff]
  %v77 = vld [vmem:[%s0 + $0x1f0] sm:$0xff]
  %v78 = vld [vmem:[%s0 + $0x1f8] sm:$0xff]
  %v79 = vld [vmem:[%s0 + $0x200] sm:$0xff]
  %v80 = vld [vmem:[%s0 + $0x208] sm:$0xff]
  %v81 = vld [vmem:[%s0 + $0x210] sm:$0xff]
  %v82 = vld [vmem:[%s0 + $0x218] sm:$0xff]
  %v83 = vld [vmem:[%s0 + $0x220] sm:$0xff]
  %v84 = vld [vmem:[%s0 + $0x228] sm:$0xff]
  %v85 = vld [vmem:[%s0 + $0x230] sm:$0xff]
  %v86 = vld [vmem:[%s0 + $0x238] sm:$0xff]
  %v87 = vld [vmem:[%s0 + $0x240] sm:$0xff]
  %v88 = vld [vmem:[%s0 + $0x248] sm:$0xff]
  %v89 = vld [vmem:[%s0 + $0x250] sm:$0xff]
  %v90 = vld [vmem:[%s0 + $0x258] sm:$0xff]
  %v91 = vld [vmem:[%s0 + $0x260] sm:$0xff]
  %v92 = vld [vmem:[%s0 + $0x268] sm:$0xff]
  %v93 = vld [vmem:[%s0 + $0x270] sm:$0xff]
  %v94 = vld [vmem:[%s0 + $0x278] sm:$0xff]
  %v95 = vld [vmem:[%s0 + $0x280] sm:$0xff]
  %v96 = vld [vmem:[%s0 + $0x288] sm:$0xff]
  %v97 = vld [vmem:[%s0 + $0x290] sm:$0xff]
  %v98 = vld [vmem:[%s0 + $0x298] sm:$0xff]
  %v99 = vld [vmem:[%s0 + $0x2a0] sm:$0xff]
  %v100 = vld [vmem:[%s0 + $0x2a8] sm:$0xff]
  %v101 = vld [vmem:[%s0 + $0x2b0] sm:$0xff]
  %v102 = vld [vmem:[%s0 + $0x2b8] sm:$0xff]
  %v103 = vld [vmem:[%s0 + $0x2c0] sm:$0xff]
  %v104 = vld [vmem:[%s0 + $0x2c8] sm:$0xff]
  %v105 = vld [vmem:[%s0 + $0x2d0] sm:$0xff]
  %v106 = vld [vmem:[%s0 + $0x2d8] sm:$0xff]
  %v107 = vld [vmem:[%s0 + $0x2e0] sm:$0xff]
  %v108 = vld [vmem:[%s0 + $0x2e8] sm:$0xff]
  %v109 = vld [vmem:[%s0 + $0x2f0] sm:$0xff]
  %v110 = vld [vmem:[%s0 + $0x2f8] sm:$0xff]
  %v111 = vld [vmem:[%s0 + $0x300] sm:$0xff]
  %v112 = vld [vmem:[%s0 + $0x308] sm:$0xff]
  %v113 = vld [vmem:[%s0 + $0x310] sm:$0xff]
  %v114 = vld [vmem:[%s0 + $0x318] sm:$0xff]
  %v115 = vld [vmem:[%s0 + $0x320] sm:$0xff]
  %v116 = vld [vmem:[%s0 + $0x328] sm:$0xff]
  %v117 = vld [vmem:[%s0 + $0x330] sm:$0xff]
  %v118 = vld [vmem:[%s0 + $0x338] sm:$0xff]
  %v119 = vld [vmem:[%s1] sm:$0xf]
  %v120 = vld [vmem:[%s1 + $0x4] sm:$0xf]
  %v121 = vld [vmem:[%s1 + $0x8] sm:$0xf]
  %v122 = vld [vmem:[%s1 + $0xc] sm:$0xf]
  %v123 = vld [vmem:[%s1 + $0x10] sm:$0xf]
  %v124 = vld [vmem:[%s1 + $0x14] sm:$0xf]
  %v125 = vld [vmem:[%s1 + $0x18] sm:$0xf]
  %v126 = vld [vmem:[%s1 + $0x1c] sm:$0xf]
  %v127 = vld [vmem:[%s1 + $0x20] sm:$0xf]
  %v128 = vld [vmem:[%s1 + $0x24] sm:$0xf]
  %v129 = vld [vmem:[%s1 + $0x28] sm:$0xf]
  %v130 = vld [vmem:[%s1 + $0x2c] sm:$0xf]
  %v131 = vld [vmem:[%s1 + $0x30] sm:$0xf]
  %v132 = vld [vmem:[%s1 + $0x34] sm:$0xf]
  %v133 = vld [vmem:[%s1 + $0x38] sm:$0xf]
  %v134 = vld [vmem:[%s1 + $0x3c] sm:$0xf]
  %v135 = vld [vmem:[%s1 + $0x40] sm:$0xf]
  %v136 = vld [vmem:[%s1 + $0x44] sm:$0xf]
  %v137 = vld [vmem:[%s1 + $0x48] sm:$0xf]
  %v138 = vld [vmem:[%s1 + $0x4c] sm:$0xf]
  %v139 = vld [vmem:[%s1 + $0x50] sm:$0xf]
  %v140 = vld [vmem:[%s1 + $0x54] sm:$0xf]
  %v141 = vld [vmem:[%s1 + $0x58] sm:$0xf]
  %v142 = vld [vmem:[%s1 + $0x5c] sm:$0xf]
  %v143 = vld [vmem:[%s1 + $0x60] sm:$0xf]
  %v144 = vld [vmem:[%s1 + $0x64] sm:$0xf]
  %v145 = vld [vmem:[%s1 + $0x68] sm:$0xf]
  %v146 = vld [vmem:[%s1 + $0x6c] sm:$0xf]
  %v147 = vld [vmem:[%s1 + $0x70] sm:$0xf]
  %v148 = vld [vmem:[%s1 + $0x74] sm:$0xf]
  %v149 = vld [vmem:[%s1 + $0x78] sm:$0xf]
  %v150 = vld [vmem:[%s1 + $0x7c] sm:$0xf]
  %v151 = vld [vmem:[%s1 + $0x80] sm:$0xf]
  %v152 = vld [vmem:[%s1 + $0x84] sm:$0xf]
  %v153 = vld [vmem:[%s1 + $0x88] sm:$0xf]
  %v154 = vld [vmem:[%s1 + $0x8c] sm:$0xf]
  %v155 = vld [vmem:[%s1 + $0x90] sm:$0xf]
  %v156 = vld [vmem:[%s1 + $0x94] sm:$0xf]
  %v157 = vld [vmem:[%s1 + $0x98] sm:$0xf]
  %v158 = vld [vmem:[%s1 + $0x9c] sm:$0xf]
  %v159 = vld [vmem:[%s1 + $0xa0] sm:$0xf]
  %v160 = vld [vmem:[%s1 + $0xa4] sm:$0xf]
  %v161 = vld [vmem:[%s1 + $0xa8] sm:$0xf]
  %v162 = vld [vmem:[%s1 + $0xac] sm:$0xf]
  %v163 = vld [vmem:[%s1 + $0xb0] sm:$0xf]
  %v164 = vld [vmem:[%s1 + $0xb4] sm:$0xf]
  %v165 = vld [vmem:[%s1 + $0xb8] sm:$0xf]
  %v166 = vld [vmem:[%s1 + $0xbc] sm:$0xf]
  %v167 = vld [vmem:[%s1 + $0xc0] sm:$0xf]
  %v168 = vld [vmem:[%s1 + $0xc4] sm:$0xf]
  %v169 = vld [vmem:[%s1 + $0xc8] sm:$0xf]
  %v170 = vld [vmem:[%s1 + $0xcc] sm:$0xf]
  %v171 = vld [vmem:[%s1 + $0xd0] sm:$0xf]
  %v172 = vld [vmem:[%s1 + $0xd4] sm:$0xf]
  %v173 = vld [vmem:[%s1 + $0xd8] sm:$0xf]
  %v174 = vld [vmem:[%s1 + $0xdc] sm:$0xf]
  %v175 = vld [vmem:[%s1 + $0xe0] sm:$0xf]
  %v176 = vld [vmem:[%s1 + $0xe4] sm:$0xf]
  %v177 = vld [vmem:[%s1 + $0xe8] sm:$0xf]
  %v178 = vld [vmem:[%s1 + $0xec] sm:$0xf]
  %v179 = vld [vmem:[%s1 + $0xf0] sm:$0xf]
  %v180 = vld [vmem:[%s1 + $0xf4] sm:$0xf]
  %v181 = vld [vmem:[%s1 + $0xf8] sm:$0x3]
  %v182 = vld [vmem:[%s2] sm:$0x1]
  %v184 = vlaneseq
  %v185 = vshrl.u32 %v184, 7
  %v186 = vsub.s32 0, %v185
  %v187 = vrot.slane %v182, %v186
  %v293 = vunpack.c.l.b16 %v15
  %v294 = vunpack.c.h.b16 %v15
  %v295 = vunpack.c.l.b16 %v16
  %v296 = vunpack.c.h.b16 %v16
  %v297 = vunpack.c.l.b16 %v17
  %v298 = vunpack.c.h.b16 %v17
  %v299 = vunpack.c.l.b16 %v18
  %v300 = vunpack.c.h.b16 %v18
  %v301 = vunpack.c.l.b16 %v19
  %v302 = vunpack.c.h.b16 %v19
  %v303 = vunpack.c.l.b16 %v20
  %v304 = vunpack.c.h.b16 %v20
  %v305 = vunpack.c.l.b16 %v21
  %v306 = vunpack.c.h.b16 %v21
  %v307 = vunpack.c.l.b16 %v22
  %v308 = vunpack.c.h.b16 %v22
  %v309 = vunpack.c.l.b16 %v23
  %v310 = vunpack.c.h.b16 %v23
  %v311 = vunpack.c.l.b16 %v24
  %v312 = vunpack.c.h.b16 %v24
  %v313 = vunpack.c.l.b16 %v25
  %v314 = vunpack.c.h.b16 %v25
  %v315 = vunpack.c.l.b16 %v26
  %v316 = vunpack.c.h.b16 %v26
  %v317 = vunpack.c.l.b16 %v27
  %v318 = vunpack.c.h.b16 %v27
  %v319 = vunpack.c.l.b16 %v28
  %v320 = vunpack.c.h.b16 %v28
  %v321 = vunpack.c.l.b16 %v29
  %v322 = vunpack.c.h.b16 %v29
  %v323 = vunpack.c.l.b16 %v30
  %v324 = vunpack.c.h.b16 %v30
  %v325 = vunpack.c.l.b16 %v31
  %v326 = vunpack.c.h.b16 %v31
  %v327 = vunpack.c.l.b16 %v32
  %v328 = vunpack.c.h.b16 %v32
  %v329 = vunpack.c.l.b16 %v33
  %v330 = vunpack.c.h.b16 %v33
  %v331 = vunpack.c.l.b16 %v34
  %v332 = vunpack.c.h.b16 %v34
  %v333 = vunpack.c.l.b16 %v35
  %v334 = vunpack.c.h.b16 %v35
  %v335 = vunpack.c.l.b16 %v36
  %v336 = vunpack.c.h.b16 %v36
  %v337 = vunpack.c.l.b16 %v37
  %v338 = vunpack.c.h.b16 %v37
  %v339 = vunpack.c.l.b16 %v38
  %v340 = vunpack.c.h.b16 %v38
  %v341 = vunpack.c.l.b16 %v39
  %v342 = vunpack.c.h.b16 %v39
  %v343 = vunpack.c.l.b16 %v40
  %v344 = vunpack.c.h.b16 %v40
  %v345 = vunpack.c.l.b16 %v41
  %v346 = vunpack.c.h.b16 %v41
  %v347 = vunpack.c.l.b16 %v42
  %v348 = vunpack.c.h.b16 %v42
  %v349 = vunpack.c.l.b16 %v43
  %v350 = vunpack.c.h.b16 %v43
  %v351 = vunpack.c.l.b16 %v44
  %v352 = vunpack.c.h.b16 %v44
  %v353 = vunpack.c.l.b16 %v45
  %v354 = vunpack.c.h.b16 %v45
  %v355 = vunpack.c.l.b16 %v46
  %v356 = vunpack.c.h.b16 %v46
  %v357 = vunpack.c.l.b16 %v47
  %v358 = vunpack.c.h.b16 %v47
  %v359 = vunpack.c.l.b16 %v48
  %v360 = vunpack.c.h.b16 %v48
  %v361 = vunpack.c.l.b16 %v49
  %v362 = vunpack.c.h.b16 %v49
  %v363 = vunpack.c.l.b16 %v50
  %v364 = vunpack.c.h.b16 %v50
  %v365 = vunpack.c.l.b16 %v51
  %v366 = vunpack.c.h.b16 %v51
  %v367 = vunpack.c.l.b16 %v52
  %v368 = vunpack.c.h.b16 %v52
  %v369 = vunpack.c.l.b16 %v53
  %v370 = vunpack.c.h.b16 %v53
  %v371 = vunpack.c.l.b16 %v54
  %v372 = vunpack.c.h.b16 %v54
  %v373 = vunpack.c.l.b16 %v55
  %v374 = vunpack.c.h.b16 %v55
  %v375 = vunpack.c.l.b16 %v56
  %v376 = vunpack.c.h.b16 %v56
  %v377 = vunpack.c.l.b16 %v57
  %v378 = vunpack.c.h.b16 %v57
  %v379 = vunpack.c.l.b16 %v58
  %v380 = vunpack.c.h.b16 %v58
  %v381 = vunpack.c.l.b16 %v59
  %v382 = vunpack.c.h.b16 %v59
  %v383 = vunpack.c.l.b16 %v60
  %v384 = vunpack.c.h.b16 %v60
  %v385 = vunpack.c.l.b16 %v61
  %v386 = vunpack.c.h.b16 %v61
  %v387 = vunpack.c.l.b16 %v62
  %v388 = vunpack.c.h.b16 %v62
  %v389 = vunpack.c.l.b16 %v63
  %v390 = vunpack.c.h.b16 %v63
  %v391 = vunpack.c.l.b16 %v64
  %v392 = vunpack.c.h.b16 %v64
  %v393 = vunpack.c.l.b16 %v65
  %v394 = vunpack.c.h.b16 %v65
  %v395 = vunpack.c.l.b16 %v66
  %v396 = vunpack.c.h.b16 %v66
  %v397 = vunpack.c.l.b16 %v67
  %v398 = vunpack.c.h.b16 %v67
  %v399 = vunpack.c.l.b16 %v68
  %v400 = vunpack.c.h.b16 %v68
  %v401 = vunpack.c.l.b16 %v69
  %v402 = vunpack.c.h.b16 %v69
  %v403 = vunpack.c.l.b16 %v70
  %v404 = vunpack.c.h.b16 %v70
  %v405 = vunpack.c.l.b16 %v71
  %v406 = vunpack.c.h.b16 %v71
  %v407 = vunpack.c.l.b16 %v72
  %v408 = vunpack.c.h.b16 %v72
  %v409 = vunpack.c.l.b16 %v73
  %v410 = vunpack.c.h.b16 %v73
  %v411 = vunpack.c.l.b16 %v74
  %v412 = vunpack.c.h.b16 %v74
  %v413 = vunpack.c.l.b16 %v75
  %v414 = vunpack.c.h.b16 %v75
  %v415 = vunpack.c.l.b16 %v76
  %v416 = vunpack.c.h.b16 %v76
  %v417 = vunpack.c.l.b16 %v77
  %v418 = vunpack.c.h.b16 %v77
  %v419 = vunpack.c.l.b16 %v78
  %v420 = vunpack.c.h.b16 %v78
  %v421 = vunpack.c.l.b16 %v79
  %v422 = vunpack.c.h.b16 %v79
  %v423 = vunpack.c.l.b16 %v80
  %v424 = vunpack.c.h.b16 %v80
  %v425 = vunpack.c.l.b16 %v81
  %v426 = vunpack.c.h.b16 %v81
  %v427 = vunpack.c.l.b16 %v82
  %v428 = vunpack.c.h.b16 %v82
  %v429 = vunpack.c.l.b16 %v83
  %v430 = vunpack.c.h.b16 %v83
  %v431 = vunpack.c.l.b16 %v84
  %v432 = vunpack.c.h.b16 %v84
  %v433 = vunpack.c.l.b16 %v85
  %v434 = vunpack.c.h.b16 %v85
  %v435 = vunpack.c.l.b16 %v86
  %v436 = vunpack.c.h.b16 %v86
  %v437 = vunpack.c.l.b16 %v87
  %v438 = vunpack.c.h.b16 %v87
  %v439 = vunpack.c.l.b16 %v88
  %v440 = vunpack.c.h.b16 %v88
  %v441 = vunpack.c.l.b16 %v89
  %v442 = vunpack.c.h.b16 %v89
  %v443 = vunpack.c.l.b16 %v90
  %v444 = vunpack.c.h.b16 %v90
  %v445 = vunpack.c.l.b16 %v91
  %v446 = vunpack.c.h.b16 %v91
  %v447 = vunpack.c.l.b16 %v92
  %v448 = vunpack.c.h.b16 %v92
  %v449 = vunpack.c.l.b16 %v93
  %v450 = vunpack.c.h.b16 %v93
  %v451 = vunpack.c.l.b16 %v94
  %v452 = vunpack.c.h.b16 %v94
  %v453 = vunpack.c.l.b16 %v95
  %v454 = vunpack.c.h.b16 %v95
  %v455 = vunpack.c.l.b16 %v96
  %v456 = vunpack.c.h.b16 %v96
  %v457 = vunpack.c.l.b16 %v97
  %v458 = vunpack.c.h.b16 %v97
  %v459 = vunpack.c.l.b16 %v98
  %v460 = vunpack.c.h.b16 %v98
  %v461 = vunpack.c.l.b16 %v99
  %v462 = vunpack.c.h.b16 %v99
  %v463 = vunpack.c.l.b16 %v100
  %v464 = vunpack.c.h.b16 %v100
  %v465 = vunpack.c.l.b16 %v101
  %v466 = vunpack.c.h.b16 %v101
  %v467 = vunpack.c.l.b16 %v102
  %v468 = vunpack.c.h.b16 %v102
  %v469 = vunpack.c.l.b16 %v103
  %v470 = vunpack.c.h.b16 %v103
  %v471 = vunpack.c.l.b16 %v104
  %v472 = vunpack.c.h.b16 %v104
  %v473 = vunpack.c.l.b16 %v105
  %v474 = vunpack.c.h.b16 %v105
  %v475 = vunpack.c.l.b16 %v106
  %v476 = vunpack.c.h.b16 %v106
  %v477 = vunpack.c.l.b16 %v107
  %v478 = vunpack.c.h.b16 %v107
  %v479 = vunpack.c.l.b16 %v108
  %v480 = vunpack.c.h.b16 %v108
  %v481 = vunpack.c.l.b16 %v109
  %v482 = vunpack.c.h.b16 %v109
  %v483 = vunpack.c.l.b16 %v110
  %v484 = vunpack.c.h.b16 %v110
  %v485 = vunpack.c.l.b16 %v111
  %v486 = vunpack.c.h.b16 %v111
  %v487 = vunpack.c.l.b16 %v112
  %v488 = vunpack.c.h.b16 %v112
  %v489 = vunpack.c.l.b16 %v113
  %v490 = vunpack.c.h.b16 %v113
  %v491 = vunpack.c.l.b16 %v114
  %v492 = vunpack.c.h.b16 %v114
  %v493 = vunpack.c.l.b16 %v115
  %v494 = vunpack.c.h.b16 %v115
  %v495 = vunpack.c.l.b16 %v116
  %v496 = vunpack.c.h.b16 %v116
  %v497 = vunpack.c.l.b16 %v117
  %v498 = vunpack.c.h.b16 %v117
  %v499 = vunpack.c.l.b16 %v118
  %v500 = vunpack.c.h.b16 %v118
  %v501 = vpack.c.b16 %v297, %v293
  %v502 = vpack.c.b16 %v298, %v294
  %v503 = vpack.c.b16 %v299, %v295
  %v504 = vpack.c.b16 %v300, %v296
  %v505 = vpack.c.b16 %v305, %v301
  %v506 = vpack.c.b16 %v306, %v302
  %v507 = vpack.c.b16 %v307, %v303
  %v508 = vpack.c.b16 %v308, %v304
  %v509 = vpack.c.b16 %v313, %v309
  %v510 = vpack.c.b16 %v314, %v310
  %v511 = vpack.c.b16 %v315, %v311
  %v512 = vpack.c.b16 %v316, %v312
  %v513 = vpack.c.b16 %v321, %v317
  %v514 = vpack.c.b16 %v322, %v318
  %v515 = vpack.c.b16 %v323, %v319
  %v516 = vpack.c.b16 %v324, %v320
  %v517 = vpack.c.b16 %v329, %v325
  %v518 = vpack.c.b16 %v330, %v326
  %v519 = vpack.c.b16 %v331, %v327
  %v520 = vpack.c.b16 %v332, %v328
  %v521 = vpack.c.b16 %v337, %v333
  %v522 = vpack.c.b16 %v338, %v334
  %v523 = vpack.c.b16 %v339, %v335
  %v524 = vpack.c.b16 %v340, %v336
  %v525 = vpack.c.b16 %v345, %v341
  %v526 = vpack.c.b16 %v346, %v342
  %v527 = vpack.c.b16 %v347, %v343
  %v528 = vpack.c.b16 %v348, %v344
  %v529 = vpack.c.b16 %v353, %v349
  %v530 = vpack.c.b16 %v354, %v350
  %v531 = vpack.c.b16 %v355, %v351
  %v532 = vpack.c.b16 %v356, %v352
  %v533 = vpack.c.b16 %v361, %v357
  %v534 = vpack.c.b16 %v362, %v358
  %v535 = vpack.c.b16 %v363, %v359
  %v536 = vpack.c.b16 %v364, %v360
  %v537 = vpack.c.b16 %v369, %v365
  %v538 = vpack.c.b16 %v370, %v366
  %v539 = vpack.c.b16 %v371, %v367
  %v540 = vpack.c.b16 %v372, %v368
  %v541 = vpack.c.b16 %v377, %v373
  %v542 = vpack.c.b16 %v378, %v374
  %v543 = vpack.c.b16 %v379, %v375
  %v544 = vpack.c.b16 %v380, %v376
  %v545 = vpack.c.b16 %v385, %v381
  %v546 = vpack.c.b16 %v386, %v382
  %v547 = vpack.c.b16 %v387, %v383
  %v548 = vpack.c.b16 %v388, %v384
  %v549 = vpack.c.b16 %v393, %v389
  %v550 = vpack.c.b16 %v394, %v390
  %v551 = vpack.c.b16 %v395, %v391
  %v552 = vpack.c.b16 %v396, %v392
  %v553 = vpack.c.b16 %v401, %v397
  %v554 = vpack.c.b16 %v402, %v398
  %v555 = vpack.c.b16 %v403, %v399
  %v556 = vpack.c.b16 %v404, %v400
  %v557 = vpack.c.b16 %v409, %v405
  %v558 = vpack.c.b16 %v410, %v406
  %v559 = vpack.c.b16 %v411, %v407
  %v560 = vpack.c.b16 %v412, %v408
  %v561 = vpack.c.b16 %v417, %v413
  %v562 = vpack.c.b16 %v418, %v414
  %v563 = vpack.c.b16 %v419, %v415
  %v564 = vpack.c.b16 %v420, %v416
  %v565 = vpack.c.b16 %v425, %v421
  %v566 = vpack.c.b16 %v426, %v422
  %v567 = vpack.c.b16 %v427, %v423
  %v568 = vpack.c.b16 %v428, %v424
  %v569 = vpack.c.b16 %v433, %v429
  %v570 = vpack.c.b16 %v434, %v430
  %v571 = vpack.c.b16 %v435, %v431
  %v572 = vpack.c.b16 %v436, %v432
  %v573 = vpack.c.b16 %v441, %v437
  %v574 = vpack.c.b16 %v442, %v438
  %v575 = vpack.c.b16 %v443, %v439
  %v576 = vpack.c.b16 %v444, %v440
  %v577 = vpack.c.b16 %v449, %v445
  %v578 = vpack.c.b16 %v450, %v446
  %v579 = vpack.c.b16 %v451, %v447
  %v580 = vpack.c.b16 %v452, %v448
  %v581 = vpack.c.b16 %v457, %v453
  %v582 = vpack.c.b16 %v458, %v454
  %v583 = vpack.c.b16 %v459, %v455
  %v584 = vpack.c.b16 %v460, %v456
  %v585 = vpack.c.b16 %v465, %v461
  %v586 = vpack.c.b16 %v466, %v462
  %v587 = vpack.c.b16 %v467, %v463
  %v588 = vpack.c.b16 %v468, %v464
  %v589 = vpack.c.b16 %v473, %v469
  %v590 = vpack.c.b16 %v474, %v470
  %v591 = vpack.c.b16 %v475, %v471
  %v592 = vpack.c.b16 %v476, %v472
  %v593 = vpack.c.b16 %v481, %v477
  %v594 = vpack.c.b16 %v482, %v478
  %v595 = vpack.c.b16 %v483, %v479
  %v596 = vpack.c.b16 %v484, %v480
  %v597 = vpack.c.b16 %v489, %v485
  %v598 = vpack.c.b16 %v490, %v486
  %v599 = vpack.c.b16 %v491, %v487
  %v600 = vpack.c.b16 %v492, %v488
  %v601 = vpack.c.b16 %v497, %v493
  %v602 = vpack.c.b16 %v498, %v494
  %v603 = vpack.c.b16 %v499, %v495
  %v604 = vpack.c.b16 %v500, %v496
  %v746 = vunpack.c.l.b16 %v119
  %v747 = vunpack.c.l.b16 %v120
  %v748 = vunpack.c.l.b16 %v121
  %v749 = vunpack.c.l.b16 %v122
  %v750 = vunpack.c.l.b16 %v123
  %v751 = vunpack.c.l.b16 %v124
  %v752 = vunpack.c.l.b16 %v125
  %v753 = vunpack.c.l.b16 %v126
  %v754 = vunpack.c.l.b16 %v127
  %v755 = vunpack.c.l.b16 %v128
  %v756 = vunpack.c.l.b16 %v129
  %v757 = vunpack.c.l.b16 %v130
  %v758 = vunpack.c.l.b16 %v131
  %v759 = vunpack.c.l.b16 %v132
  %v760 = vunpack.c.l.b16 %v133
  %v761 = vunpack.c.l.b16 %v134
  %v762 = vunpack.c.l.b16 %v135
  %v763 = vunpack.c.l.b16 %v136
  %v764 = vunpack.c.l.b16 %v137
  %v765 = vunpack.c.l.b16 %v138
  %v766 = vunpack.c.l.b16 %v139
  %v767 = vunpack.c.l.b16 %v140
  %v768 = vunpack.c.l.b16 %v141
  %v769 = vunpack.c.l.b16 %v142
  %v770 = vunpack.c.l.b16 %v143
  %v771 = vunpack.c.l.b16 %v144
  %v772 = vunpack.c.l.b16 %v145
  %v773 = vunpack.c.l.b16 %v146
  %v774 = vunpack.c.l.b16 %v147
  %v775 = vunpack.c.l.b16 %v148
  %v776 = vunpack.c.l.b16 %v149
  %v777 = vunpack.c.l.b16 %v150
  %v778 = vunpack.c.l.b16 %v151
  %v779 = vunpack.c.l.b16 %v152
  %v780 = vunpack.c.l.b16 %v153
  %v781 = vunpack.c.l.b16 %v154
  %v782 = vunpack.c.l.b16 %v155
  %v783 = vunpack.c.l.b16 %v156
  %v784 = vunpack.c.l.b16 %v157
  %v785 = vunpack.c.l.b16 %v158
  %v786 = vunpack.c.l.b16 %v159
  %v787 = vunpack.c.l.b16 %v160
  %v788 = vunpack.c.l.b16 %v161
  %v789 = vunpack.c.l.b16 %v162
  %v790 = vunpack.c.l.b16 %v163
  %v791 = vunpack.c.l.b16 %v164
  %v792 = vunpack.c.l.b16 %v165
  %v793 = vunpack.c.l.b16 %v166
  %v794 = vunpack.c.l.b16 %v167
  %v795 = vunpack.c.l.b16 %v168
  %v796 = vunpack.c.l.b16 %v169
  %v797 = vunpack.c.l.b16 %v170
  %v798 = vunpack.c.l.b16 %v171
  %v799 = vunpack.c.l.b16 %v172
  %v800 = vunpack.c.l.b16 %v173
  %v801 = vunpack.c.l.b16 %v174
  %v802 = vunpack.c.l.b16 %v175
  %v803 = vunpack.c.l.b16 %v176
  %v804 = vunpack.c.l.b16 %v177
  %v805 = vunpack.c.l.b16 %v178
  %v806 = vunpack.c.l.b16 %v179
  %v807 = vunpack.c.l.b16 %v180
  %v808 = vunpack.c.l.b16 %v181
  %v809 = vpack.c.b16 %v747, %v746
  %v810 = vpack.c.b16 %v749, %v748
  %v811 = vpack.c.b16 %v751, %v750
  %v812 = vpack.c.b16 %v753, %v752
  %v813 = vpack.c.b16 %v755, %v754
  %v814 = vpack.c.b16 %v757, %v756
  %v815 = vpack.c.b16 %v759, %v758
  %v816 = vpack.c.b16 %v761, %v760
  %v817 = vpack.c.b16 %v763, %v762
  %v818 = vpack.c.b16 %v765, %v764
  %v819 = vpack.c.b16 %v767, %v766
  %v820 = vpack.c.b16 %v769, %v768
  %v821 = vpack.c.b16 %v771, %v770
  %v822 = vpack.c.b16 %v773, %v772
  %v823 = vpack.c.b16 %v775, %v774
  %v824 = vpack.c.b16 %v777, %v776
  %v825 = vpack.c.b16 %v779, %v778
  %v826 = vpack.c.b16 %v781, %v780
  %v827 = vpack.c.b16 %v783, %v782
  %v828 = vpack.c.b16 %v785, %v784
  %v829 = vpack.c.b16 %v787, %v786
  %v830 = vpack.c.b16 %v789, %v788
  %v831 = vpack.c.b16 %v791, %v790
  %v832 = vpack.c.b16 %v793, %v792
  %v833 = vpack.c.b16 %v795, %v794
  %v834 = vpack.c.b16 %v797, %v796
  %v835 = vpack.c.b16 %v799, %v798
  %v836 = vpack.c.b16 %v801, %v800
  %v837 = vpack.c.b16 %v803, %v802
  %v838 = vpack.c.b16 %v805, %v804
  %v839 = vpack.c.b16 %v807, %v806
  %v840 = vpack.c.b16 %v808, %v808
  %vm872 = vcmask 949248
  %v874 = vsel %vm872, %v504, 0
  %v877 = vsel %vm872, %v508, 0
  %v880 = vsel %vm872, %v512, 0
  %v883 = vsel %vm872, %v516, 0
  %v886 = vsel %vm872, %v520, 0
  %v889 = vsel %vm872, %v524, 0
  %v892 = vsel %vm872, %v528, 0
  %v895 = vsel %vm872, %v532, 0
  %v898 = vsel %vm872, %v536, 0
  %v901 = vsel %vm872, %v540, 0
  %v904 = vsel %vm872, %v544, 0
  %v907 = vsel %vm872, %v548, 0
  %v910 = vsel %vm872, %v552, 0
  %v913 = vsel %vm872, %v556, 0
  %v916 = vsel %vm872, %v560, 0
  %v919 = vsel %vm872, %v564, 0
  %v922 = vsel %vm872, %v568, 0
  %v925 = vsel %vm872, %v572, 0
  %v928 = vsel %vm872, %v576, 0
  %v931 = vsel %vm872, %v580, 0
  %v934 = vsel %vm872, %v584, 0
  %v937 = vsel %vm872, %v588, 0
  %v940 = vsel %vm872, %v592, 0
  %v943 = vsel %vm872, %v596, 0
  %v946 = vsel %vm872, %v600, 0
  %v949 = vsel %vm872, %v604, 0
  %vm951 = vcmask 1041408
  %v953 = vsel %vm951, %v840, 0
  %955 = vmatprep.subr.bf16.mxu0 0
  %956 = vmatpush1.bf16.msra.mxu0 %v809
  %957 = vmatprep.subr.bf16.mxu0 0
  %958 = vmatpush1.bf16.msra.mxu0 %v810
  %959 = vmatprep.subr.bf16.mxu0 0
  %960 = vmatpush1.bf16.msra.mxu0 %v811
  %961 = vmatprep.subr.bf16.mxu0 0
  %962 = vmatpush1.bf16.msra.mxu0 %v812
  %963 = vmatprep.subr.bf16.mxu0 0
  %964 = vmatpush1.bf16.msra.mxu0 %v813
  %965 = vmatprep.subr.bf16.mxu0 0
  %966 = vmatpush1.bf16.msra.mxu0 %v814
  %967 = vmatprep.subr.bf16.mxu0 0
  %968 = vmatpush1.bf16.msra.mxu0 %v815
  %969 = vmatprep.subr.bf16.mxu0 0
  %970 = vmatpush1.bf16.msra.mxu0 %v816
  %971 = vmatprep.subr.bf16.mxu0 0
  %972 = vmatpush1.bf16.msra.mxu0 %v817
  %973 = vmatprep.subr.bf16.mxu0 0
  %974 = vmatpush1.bf16.msra.mxu0 %v818
  %975 = vmatprep.subr.bf16.mxu0 0
  %976 = vmatpush1.bf16.msra.mxu0 %v819
  %977 = vmatprep.subr.bf16.mxu0 0
  %978 = vmatpush1.bf16.msra.mxu0 %v820
  %979 = vmatprep.subr.bf16.mxu0 0
  %980 = vmatpush1.bf16.msra.mxu0 %v821
  %981 = vmatprep.subr.bf16.mxu0 0
  %982 = vmatpush1.bf16.msra.mxu0 %v822
  %983 = vmatprep.subr.bf16.mxu0 0
  %984 = vmatpush1.bf16.msra.mxu0 %v823
  %985 = vmatprep.subr.bf16.mxu0 0
  %986 = vmatpush1.bf16.msra.mxu0 %v824
  %987 = vmatprep.mubr.bf16.mxu0 %v502
  %988 = vmatmul.mubr.bf16.gmra.mrb[0].mxu0 %v501
  %v989 = vpop.f32.mrb[0].mxu0
  %v990 = vadd.f32 %v187, %v989
  %v991 = vpop.f32.mrb[0].mxu0
  %v992 = vpop.f32.mrb[0].mxu0
  %v993 = vadd.f32 %v187, %v992
  %v994 = vpop.f32.mrb[0].mxu0
  %995 = vmatprep.mubr.bf16.mxu0 %v506
  %996 = vmatmul.mubr.bf16.gmra.mrb[0].mxu0 %v505
  %v997 = vpop.f32.mrb[0].mxu0
  %v998 = vadd.f32 %v187, %v997
  %v999 = vpop.f32.mrb[0].mxu0
  %v1000 = vpop.f32.mrb[0].mxu0
  %v1001 = vadd.f32 %v187, %v1000
  %v1002 = vpop.f32.mrb[0].mxu0
  %1003 = vmatprep.mubr.bf16.mxu0 %v510
  %1004 = vmatmul.mubr.bf16.gmra.mrb[0].mxu0 %v509
  %v1005 = vpop.f32.mrb[0].mxu0
  %v1006 = vadd.f32 %v187, %v1005
  %v1007 = vpop.f32.mrb[0].mxu0
  %v1008 = vpop.f32.mrb[0].mxu0
  %v1009 = vadd.f32 %v187, %v1008
  %v1010 = vpop.f32.mrb[0].mxu0
  %1011 = vmatprep.mubr.bf16.mxu0 %v514
  %1012 = vmatmul.mubr.bf16.gmra.mrb[0].mxu0 %v513
  %v1013 = vpop.f32.mrb[0].mxu0
  %v1014 = vadd.f32 %v187, %v1013
  %v1015 = vpop.f32.mrb[0].mxu0
  %v1016 = vpop.f32.mrb[0].mxu0
  %v1017 = vadd.f32 %v187, %v1016
  %v1018 = vpop.f32.mrb[0].mxu0
  %1019 = vmatprep.mubr.bf16.mxu0 %v518
  %1020 = vmatmul.mubr.bf16.gmra.mrb[0].mxu0 %v517
  %v1021 = vpop.f32.mrb[0].mxu0
  %v1022 = vadd.f32 %v187, %v1021
  %v1023 = vpop.f32.mrb[0].mxu0
  %v1024 = vpop.f32.mrb[0].mxu0
  %v1025 = vadd.f32 %v187, %v1024
  %v1026 = vpop.f32.mrb[0].mxu0
  %1027 = vmatprep.mubr.bf16.mxu0 %v522
  %1028 = vmatmul.mubr.bf16.gmra.mrb[0].mxu0 %v521
  %v1029 = vpop.f32.mrb[0].mxu0
  %v1030 = vadd.f32 %v187, %v1029
  %v1031 = vpop.f32.mrb[0].mxu0
  %v1032 = vpop.f32.mrb[0].mxu0
  %v1033 = vadd.f32 %v187, %v1032
  %v1034 = vpop.f32.mrb[0].mxu0
  %1035 = vmatprep.mubr.bf16.mxu0 %v526
  %1036 = vmatmul.mubr.bf16.gmra.mrb[0].mxu0 %v525
  %v1037 = vpop.f32.mrb[0].mxu0
  %v1038 = vadd.f32 %v187, %v1037
  %v1039 = vpop.f32.mrb[0].mxu0
  %v1040 = vpop.f32.mrb[0].mxu0
  %v1041 = vadd.f32 %v187, %v1040
  %v1042 = vpop.f32.mrb[0].mxu0
  %1043 = vmatprep.mubr.bf16.mxu0 %v530
  %1044 = vmatmul.mubr.bf16.gmra.mrb[0].mxu0 %v529
  %v1045 = vpop.f32.mrb[0].mxu0
  %v1046 = vadd.f32 %v187, %v1045
  %v1047 = vpop.f32.mrb[0].mxu0
  %v1048 = vpop.f32.mrb[0].mxu0
  %v1049 = vadd.f32 %v187, %v1048
  %v1050 = vpop.f32.mrb[0].mxu0
  %1051 = vmatprep.mubr.bf16.mxu0 %v534
  %1052 = vmatmul.mubr.bf16.gmra.mrb[0].mxu0 %v533
  %v1053 = vpop.f32.mrb[0].mxu0
  %v1054 = vadd.f32 %v187, %v1053
  %v1055 = vpop.f32.mrb[0].mxu0
  %v1056 = vpop.f32.mrb[0].mxu0
  %v1057 = vadd.f32 %v187, %v1056
  %v1058 = vpop.f32.mrb[0].mxu0
  %1059 = vmatprep.mubr.bf16.mxu0 %v538
  %1060 = vmatmul.mubr.bf16.gmra.mrb[0].mxu0 %v537
  %v1061 = vpop.f32.mrb[0].mxu0
  %v1062 = vadd.f32 %v187, %v1061
  %v1063 = vpop.f32.mrb[0].mxu0
  %v1064 = vpop.f32.mrb[0].mxu0
  %v1065 = vadd.f32 %v187, %v1064
  %v1066 = vpop.f32.mrb[0].mxu0
  %1067 = vmatprep.mubr.bf16.mxu0 %v542
  %1068 = vmatmul.mubr.bf16.gmra.mrb[0].mxu0 %v541
  %v1069 = vpop.f32.mrb[0].mxu0
  %v1070 = vadd.f32 %v187, %v1069
  %v1071 = vpop.f32.mrb[0].mxu0
  %v1072 = vpop.f32.mrb[0].mxu0
  %v1073 = vadd.f32 %v187, %v1072
  %v1074 = vpop.f32.mrb[0].mxu0
  %1075 = vmatprep.mubr.bf16.mxu0 %v546
  %1076 = vmatmul.mubr.bf16.gmra.mrb[0].mxu0 %v545
  %v1077 = vpop.f32.mrb[0].mxu0
  %v1078 = vadd.f32 %v187, %v1077
  %v1079 = vpop.f32.mrb[0].mxu0
  %v1080 = vpop.f32.mrb[0].mxu0
  %v1081 = vadd.f32 %v187, %v1080
  %v1082 = vpop.f32.mrb[0].mxu0
  %1083 = vmatprep.mubr.bf16.mxu0 %v550
  %1084 = vmatmul.mubr.bf16.gmra.mrb[0].mxu0 %v549
  %v1085 = vpop.f32.mrb[0].mxu0
  %v1086 = vadd.f32 %v187, %v1085
  %v1087 = vpop.f32.mrb[0].mxu0
  %v1088 = vpop.f32.mrb[0].mxu0
  %v1089 = vadd.f32 %v187, %v1088
  %v1090 = vpop.f32.mrb[0].mxu0
  %1091 = vmatprep.mubr.bf16.mxu0 %v554
  %1092 = vmatmul.mubr.bf16.gmra.mrb[0].mxu0 %v553
  %v1093 = vpop.f32.mrb[0].mxu0
  %v1094 = vadd.f32 %v187, %v1093
  %v1095 = vpop.f32.mrb[0].mxu0
  %v1096 = vpop.f32.mrb[0].mxu0
  %v1097 = vadd.f32 %v187, %v1096
  %v1098 = vpop.f32.mrb[0].mxu0
  %1099 = vmatprep.mubr.bf16.mxu0 %v558
  %1100 = vmatmul.mubr.bf16.gmra.mrb[0].mxu0 %v557
  %v1101 = vpop.f32.mrb[0].mxu0
  %v1102 = vadd.f32 %v187, %v1101
  %v1103 = vpop.f32.mrb[0].mxu0
  %v1104 = vpop.f32.mrb[0].mxu0
  %v1105 = vadd.f32 %v187, %v1104
  %v1106 = vpop.f32.mrb[0].mxu0
  %1107 = vmatprep.mubr.bf16.mxu0 %v562
  %1108 = vmatmul.mubr.bf16.gmra.mrb[0].mxu0 %v561
  %v1109 = vpop.f32.mrb[0].mxu0
  %v1110 = vadd.f32 %v187, %v1109
  %v1111 = vpop.f32.mrb[0].mxu0
  %v1112 = vpop.f32.mrb[0].mxu0
  %v1113 = vadd.f32 %v187, %v1112
  %v1114 = vpop.f32.mrb[0].mxu0
  %1115 = vmatprep.mubr.bf16.mxu0 %v566
  %1116 = vmatmul.mubr.bf16.gmra.mrb[0].mxu0 %v565
  %v1117 = vpop.f32.mrb[0].mxu0
  %v1118 = vadd.f32 %v187, %v1117
  %v1119 = vpop.f32.mrb[0].mxu0
  %v1120 = vpop.f32.mrb[0].mxu0
  %v1121 = vadd.f32 %v187, %v1120
  %v1122 = vpop.f32.mrb[0].mxu0
  %1123 = vmatprep.mubr.bf16.mxu0 %v570
  %1124 = vmatmul.mubr.bf16.gmra.mrb[0].mxu0 %v569
  %v1125 = vpop.f32.mrb[0].mxu0
  %v1126 = vadd.f32 %v187, %v1125
  %v1127 = vpop.f32.mrb[0].mxu0
  %v1128 = vpop.f32.mrb[0].mxu0
  %v1129 = vadd.f32 %v187, %v1128
  %v1130 = vpop.f32.mrb[0].mxu0
  %1131 = vmatprep.mubr.bf16.mxu0 %v574
  %1132 = vmatmul.mubr.bf16.gmra.mrb[0].mxu0 %v573
  %v1133 = vpop.f32.mrb[0].mxu0
  %v1134 = vadd.f32 %v187, %v1133
  %v1135 = vpop.f32.mrb[0].mxu0
  %v1136 = vpop.f32.mrb[0].mxu0
  %v1137 = vadd.f32 %v187, %v1136
  %v1138 = vpop.f32.mrb[0].mxu0
  %1139 = vmatprep.mubr.bf16.mxu0 %v578
  %1140 = vmatmul.mubr.bf16.gmra.mrb[0].mxu0 %v577
  %v1141 = vpop.f32.mrb[0].mxu0
  %v1142 = vadd.f32 %v187, %v1141
  %v1143 = vpop.f32.mrb[0].mxu0
  %v1144 = vpop.f32.mrb[0].mxu0
  %v1145 = vadd.f32 %v187, %v1144
  %v1146 = vpop.f32.mrb[0].mxu0
  %1147 = vmatprep.mubr.bf16.mxu0 %v582
  %1148 = vmatmul.mubr.bf16.gmra.mrb[0].mxu0 %v581
  %v1149 = vpop.f32.mrb[0].mxu0
  %v1150 = vadd.f32 %v187, %v1149
  %v1151 = vpop.f32.mrb[0].mxu0
  %v1152 = vpop.f32.mrb[0].mxu0
  %v1153 = vadd.f32 %v187, %v1152
  %v1154 = vpop.f32.mrb[0].mxu0
  %1155 = vmatprep.mubr.bf16.mxu0 %v586
  %1156 = vmatmul.mubr.bf16.gmra.mrb[0].mxu0 %v585
  %v1157 = vpop.f32.mrb[0].mxu0
  %v1158 = vadd.f32 %v187, %v1157
  %v1159 = vpop.f32.mrb[0].mxu0
  %v1160 = vpop.f32.mrb[0].mxu0
  %v1161 = vadd.f32 %v187, %v1160
  %v1162 = vpop.f32.mrb[0].mxu0
  %1163 = vmatprep.mubr.bf16.mxu0 %v590
  %1164 = vmatmul.mubr.bf16.gmra.mrb[0].mxu0 %v589
  %v1165 = vpop.f32.mrb[0].mxu0
  %v1166 = vadd.f32 %v187, %v1165
  %v1167 = vpop.f32.mrb[0].mxu0
  %v1168 = vpop.f32.mrb[0].mxu0
  %v1169 = vadd.f32 %v187, %v1168
  %v1170 = vpop.f32.mrb[0].mxu0
  %1171 = vmatprep.mubr.bf16.mxu0 %v594
  %1172 = vmatmul.mubr.bf16.gmra.mrb[0].mxu0 %v593
  %v1173 = vpop.f32.mrb[0].mxu0
  %v1174 = vadd.f32 %v187, %v1173
  %v1175 = vpop.f32.mrb[0].mxu0
  %v1176 = vpop.f32.mrb[0].mxu0
  %v1177 = vadd.f32 %v187, %v1176
  %v1178 = vpop.f32.mrb[0].mxu0
  %1179 = vmatprep.mubr.bf16.mxu0 %v598
  %1180 = vmatmul.mubr.bf16.gmra.mrb[0].mxu0 %v597
  %v1181 = vpop.f32.mrb[0].mxu0
  %v1182 = vadd.f32 %v187, %v1181
  %v1183 = vpop.f32.mrb[0].mxu0
  %v1184 = vpop.f32.mrb[0].mxu0
  %v1185 = vadd.f32 %v187, %v1184
  %v1186 = vpop.f32.mrb[0].mxu0
  %1187 = vmatprep.mubr.bf16.mxu0 %v602
  %1188 = vmatmul.mubr.bf16.gmra.mrb[0].mxu0 %v601
  %v1189 = vpop.f32.mrb[0].mxu0
  %v1190 = vadd.f32 %v187, %v1189
  %v1191 = vpop.f32.mrb[0].mxu0
  %v1192 = vpop.f32.mrb[0].mxu0
  %v1193 = vadd.f32 %v187, %v1192
  %v1194 = vpop.f32.mrb[0].mxu0
  %1195 = vdwg.mxu0
  %1196 = vmatprep.subr.bf16.mxu0 0
  %1197 = vmatpush1.bf16.msra.mxu0 %v825
  %1198 = vmatprep.subr.bf16.mxu0 0
  %1199 = vmatpush1.bf16.msra.mxu0 %v826
  %1200 = vmatprep.subr.bf16.mxu0 0
  %1201 = vmatpush1.bf16.msra.mxu0 %v827
  %1202 = vmatprep.subr.bf16.mxu0 0
  %1203 = vmatpush1.bf16.msra.mxu0 %v828
  %1204 = vmatprep.subr.bf16.mxu0 0
  %1205 = vmatpush1.bf16.msra.mxu0 %v829
  %1206 = vmatprep.subr.bf16.mxu0 0
  %1207 = vmatpush1.bf16.msra.mxu0 %v830
  %1208 = vmatprep.subr.bf16.mxu0 0
  %1209 = vmatpush1.bf16.msra.mxu0 %v831
  %1210 = vmatprep.subr.bf16.mxu0 0
  %1211 = vmatpush1.bf16.msra.mxu0 %v832
  %1212 = vmatprep.subr.bf16.mxu0 0
  %1213 = vmatpush1.bf16.msra.mxu0 %v833
  %1214 = vmatprep.subr.bf16.mxu0 0
  %1215 = vmatpush1.bf16.msra.mxu0 %v834
  %1216 = vmatprep.subr.bf16.mxu0 0
  %1217 = vmatpush1.bf16.msra.mxu0 %v835
  %1218 = vmatprep.subr.bf16.mxu0 0
  %1219 = vmatpush1.bf16.msra.mxu0 %v836
  %1220 = vmatprep.subr.bf16.mxu0 0
  %1221 = vmatpush1.bf16.msra.mxu0 %v837
  %1222 = vmatprep.subr.bf16.mxu0 0
  %1223 = vmatpush1.bf16.msra.mxu0 %v838
  %1224 = vmatprep.subr.bf16.mxu0 0
  %1225 = vmatpush1.bf16.msra.mxu0 %v839
  %1226 = vmatprep.subr.bf16.mxu0 0
  %1227 = vmatpush1.bf16.msra.mxu0 %v953
  %1228 = vmatprep.mubr.bf16.mxu0 %v874
  %1229 = vmatmul.mubr.bf16.gmra.mrb[0].mxu0 %v503
  %v1230 = vpop.f32.mrb[0].mxu0
  %v1231 = vadd.f32 %v990, %v1230
  %v1232 = vpop.f32.mrb[0].mxu0
  %v1233 = vpop.f32.mrb[0].mxu0
  %v1234 = vadd.f32 %v993, %v1233
  %v1235 = vpop.f32.mrb[0].mxu0
  %1236 = vmatprep.mubr.bf16.mxu0 %v877
  %1237 = vmatmul.mubr.bf16.gmra.mrb[0].mxu0 %v507
  %v1238 = vpop.f32.mrb[0].mxu0
  %v1239 = vadd.f32 %v998, %v1238
  %v1240 = vpop.f32.mrb[0].mxu0
  %v1241 = vpop.f32.mrb[0].mxu0
  %v1242 = vadd.f32 %v1001, %v1241
  %v1243 = vpop.f32.mrb[0].mxu0
  %1244 = vmatprep.mubr.bf16.mxu0 %v880
  %1245 = vmatmul.mubr.bf16.gmra.mrb[0].mxu0 %v511
  %v1246 = vpop.f32.mrb[0].mxu0
  %v1247 = vadd.f32 %v1006, %v1246
  %v1248 = vpop.f32.mrb[0].mxu0
  %v1249 = vpop.f32.mrb[0].mxu0
  %v1250 = vadd.f32 %v1009, %v1249
  %v1251 = vpop.f32.mrb[0].mxu0
  %1252 = vmatprep.mubr.bf16.mxu0 %v883
  %1253 = vmatmul.mubr.bf16.gmra.mrb[0].mxu0 %v515
  %v1254 = vpop.f32.mrb[0].mxu0
  %v1255 = vadd.f32 %v1014, %v1254
  %v1256 = vpop.f32.mrb[0].mxu0
  %v1257 = vpop.f32.mrb[0].mxu0
  %v1258 = vadd.f32 %v1017, %v1257
  %v1259 = vpop.f32.mrb[0].mxu0
  %1260 = vmatprep.mubr.bf16.mxu0 %v886
  %1261 = vmatmul.mubr.bf16.gmra.mrb[0].mxu0 %v519
  %v1262 = vpop.f32.mrb[0].mxu0
  %v1263 = vadd.f32 %v1022, %v1262
  %v1264 = vpop.f32.mrb[0].mxu0
  %v1265 = vpop.f32.mrb[0].mxu0
  %v1266 = vadd.f32 %v1025, %v1265
  %v1267 = vpop.f32.mrb[0].mxu0
  %1268 = vmatprep.mubr.bf16.mxu0 %v889
  %1269 = vmatmul.mubr.bf16.gmra.mrb[0].mxu0 %v523
  %v1270 = vpop.f32.mrb[0].mxu0
  %v1271 = vadd.f32 %v1030, %v1270
  %v1272 = vpop.f32.mrb[0].mxu0
  %v1273 = vpop.f32.mrb[0].mxu0
  %v1274 = vadd.f32 %v1033, %v1273
  %v1275 = vpop.f32.mrb[0].mxu0
  %1276 = vmatprep.mubr.bf16.mxu0 %v892
  %1277 = vmatmul.mubr.bf16.gmra.mrb[0].mxu0 %v527
  %v1278 = vpop.f32.mrb[0].mxu0
  %v1279 = vadd.f32 %v1038, %v1278
  %v1280 = vpop.f32.mrb[0].mxu0
  %v1281 = vpop.f32.mrb[0].mxu0
  %v1282 = vadd.f32 %v1041, %v1281
  %v1283 = vpop.f32.mrb[0].mxu0
  %1284 = vmatprep.mubr.bf16.mxu0 %v895
  %1285 = vmatmul.mubr.bf16.gmra.mrb[0].mxu0 %v531
  %v1286 = vpop.f32.mrb[0].mxu0
  %v1287 = vadd.f32 %v1046, %v1286
  %v1288 = vpop.f32.mrb[0].mxu0
  %v1289 = vpop.f32.mrb[0].mxu0
  %v1290 = vadd.f32 %v1049, %v1289
  %v1291 = vpop.f32.mrb[0].mxu0
  %1292 = vmatprep.mubr.bf16.mxu0 %v898
  %1293 = vmatmul.mubr.bf16.gmra.mrb[0].mxu0 %v535
  %v1294 = vpop.f32.mrb[0].mxu0
  %v1295 = vadd.f32 %v1054, %v1294
  %v1296 = vpop.f32.mrb[0].mxu0
  %v1297 = vpop.f32.mrb[0].mxu0
  %v1298 = vadd.f32 %v1057, %v1297
  %v1299 = vpop.f32.mrb[0].mxu0
  %1300 = vmatprep.mubr.bf16.mxu0 %v901
  %1301 = vmatmul.mubr.bf16.gmra.mrb[0].mxu0 %v539
  %v1302 = vpop.f32.mrb[0].mxu0
  %v1303 = vadd.f32 %v1062, %v1302
  %v1304 = vpop.f32.mrb[0].mxu0
  %v1305 = vpop.f32.mrb[0].mxu0
  %v1306 = vadd.f32 %v1065, %v1305
  %v1307 = vpop.f32.mrb[0].mxu0
  %1308 = vmatprep.mubr.bf16.mxu0 %v904
  %1309 = vmatmul.mubr.bf16.gmra.mrb[0].mxu0 %v543
  %v1310 = vpop.f32.mrb[0].mxu0
  %v1311 = vadd.f32 %v1070, %v1310
  %v1312 = vpop.f32.mrb[0].mxu0
  %v1313 = vpop.f32.mrb[0].mxu0
  %v1314 = vadd.f32 %v1073, %v1313
  %v1315 = vpop.f32.mrb[0].mxu0
  %1316 = vmatprep.mubr.bf16.mxu0 %v907
  %1317 = vmatmul.mubr.bf16.gmra.mrb[0].mxu0 %v547
  %v1318 = vpop.f32.mrb[0].mxu0
  %v1319 = vadd.f32 %v1078, %v1318
  %v1320 = vpop.f32.mrb[0].mxu0
  %v1321 = vpop.f32.mrb[0].mxu0
  %v1322 = vadd.f32 %v1081, %v1321
  %v1323 = vpop.f32.mrb[0].mxu0
  %1324 = vmatprep.mubr.bf16.mxu0 %v910
  %1325 = vmatmul.mubr.bf16.gmra.mrb[0].mxu0 %v551
  %v1326 = vpop.f32.mrb[0].mxu0
  %v1327 = vadd.f32 %v1086, %v1326
  %v1328 = vpop.f32.mrb[0].mxu0
  %v1329 = vpop.f32.mrb[0].mxu0
  %v1330 = vadd.f32 %v1089, %v1329
  %v1331 = vpop.f32.mrb[0].mxu0
  %1332 = vmatprep.mubr.bf16.mxu0 %v913
  %1333 = vmatmul.mubr.bf16.gmra.mrb[0].mxu0 %v555
  %v1334 = vpop.f32.mrb[0].mxu0
  %v1335 = vadd.f32 %v1094, %v1334
  %v1336 = vpop.f32.mrb[0].mxu0
  %v1337 = vpop.f32.mrb[0].mxu0
  %v1338 = vadd.f32 %v1097, %v1337
  %v1339 = vpop.f32.mrb[0].mxu0
  %1340 = vmatprep.mubr.bf16.mxu0 %v916
  %1341 = vmatmul.mubr.bf16.gmra.mrb[0].mxu0 %v559
  %v1342 = vpop.f32.mrb[0].mxu0
  %v1343 = vadd.f32 %v1102, %v1342
  %v1344 = vpop.f32.mrb[0].mxu0
  %v1345 = vpop.f32.mrb[0].mxu0
  %v1346 = vadd.f32 %v1105, %v1345
  %v1347 = vpop.f32.mrb[0].mxu0
  %1348 = vmatprep.mubr.bf16.mxu0 %v919
  %1349 = vmatmul.mubr.bf16.gmra.mrb[0].mxu0 %v563
  %v1350 = vpop.f32.mrb[0].mxu0
  %v1351 = vadd.f32 %v1110, %v1350
  %v1352 = vpop.f32.mrb[0].mxu0
  %v1353 = vpop.f32.mrb[0].mxu0
  %v1354 = vadd.f32 %v1113, %v1353
  %v1355 = vpop.f32.mrb[0].mxu0
  %1356 = vmatprep.mubr.bf16.mxu0 %v922
  %1357 = vmatmul.mubr.bf16.gmra.mrb[0].mxu0 %v567
  %v1358 = vpop.f32.mrb[0].mxu0
  %v1359 = vadd.f32 %v1118, %v1358
  %v1360 = vpop.f32.mrb[0].mxu0
  %v1361 = vpop.f32.mrb[0].mxu0
  %v1362 = vadd.f32 %v1121, %v1361
  %v1363 = vpop.f32.mrb[0].mxu0
  %1364 = vmatprep.mubr.bf16.mxu0 %v925
  %1365 = vmatmul.mubr.bf16.gmra.mrb[0].mxu0 %v571
  %v1366 = vpop.f32.mrb[0].mxu0
  %v1367 = vadd.f32 %v1126, %v1366
  %v1368 = vpop.f32.mrb[0].mxu0
  %v1369 = vpop.f32.mrb[0].mxu0
  %v1370 = vadd.f32 %v1129, %v1369
  %v1371 = vpop.f32.mrb[0].mxu0
  %1372 = vmatprep.mubr.bf16.mxu0 %v928
  %1373 = vmatmul.mubr.bf16.gmra.mrb[0].mxu0 %v575
  %v1374 = vpop.f32.mrb[0].mxu0
  %v1375 = vadd.f32 %v1134, %v1374
  %v1376 = vpop.f32.mrb[0].mxu0
  %v1377 = vpop.f32.mrb[0].mxu0
  %v1378 = vadd.f32 %v1137, %v1377
  %v1379 = vpop.f32.mrb[0].mxu0
  %1380 = vmatprep.mubr.bf16.mxu0 %v931
  %1381 = vmatmul.mubr.bf16.gmra.mrb[0].mxu0 %v579
  %v1382 = vpop.f32.mrb[0].mxu0
  %v1383 = vadd.f32 %v1142, %v1382
  %v1384 = vpop.f32.mrb[0].mxu0
  %v1385 = vpop.f32.mrb[0].mxu0
  %v1386 = vadd.f32 %v1145, %v1385
  %v1387 = vpop.f32.mrb[0].mxu0
  %1388 = vmatprep.mubr.bf16.mxu0 %v934
  %1389 = vmatmul.mubr.bf16.gmra.mrb[0].mxu0 %v583
  %v1390 = vpop.f32.mrb[0].mxu0
  %v1391 = vadd.f32 %v1150, %v1390
  %v1392 = vpop.f32.mrb[0].mxu0
  %v1393 = vpop.f32.mrb[0].mxu0
  %v1394 = vadd.f32 %v1153, %v1393
  %v1395 = vpop.f32.mrb[0].mxu0
  %1396 = vmatprep.mubr.bf16.mxu0 %v937
  %1397 = vmatmul.mubr.bf16.gmra.mrb[0].mxu0 %v587
  %v1398 = vpop.f32.mrb[0].mxu0
  %v1399 = vadd.f32 %v1158, %v1398
  %v1400 = vpop.f32.mrb[0].mxu0
  %v1401 = vpop.f32.mrb[0].mxu0
  %v1402 = vadd.f32 %v1161, %v1401
  %v1403 = vpop.f32.mrb[0].mxu0
  %1404 = vmatprep.mubr.bf16.mxu0 %v940
  %1405 = vmatmul.mubr.bf16.gmra.mrb[0].mxu0 %v591
  %v1406 = vpop.f32.mrb[0].mxu0
  %v1407 = vadd.f32 %v1166, %v1406
  %v1408 = vpop.f32.mrb[0].mxu0
  %v1409 = vpop.f32.mrb[0].mxu0
  %v1410 = vadd.f32 %v1169, %v1409
  %v1411 = vpop.f32.mrb[0].mxu0
  %1412 = vmatprep.mubr.bf16.mxu0 %v943
  %1413 = vmatmul.mubr.bf16.gmra.mrb[0].mxu0 %v595
  %v1414 = vpop.f32.mrb[0].mxu0
  %v1415 = vadd.f32 %v1174, %v1414
  %v1416 = vpop.f32.mrb[0].mxu0
  %v1417 = vpop.f32.mrb[0].mxu0
  %v1418 = vadd.f32 %v1177, %v1417
  %v1419 = vpop.f32.mrb[0].mxu0
  %1420 = vmatprep.mubr.bf16.mxu0 %v946
  %1421 = vmatmul.mubr.bf16.gmra.mrb[0].mxu0 %v599
  %v1422 = vpop.f32.mrb[0].mxu0
  %v1423 = vadd.f32 %v1182, %v1422
  %v1424 = vpop.f32.mrb[0].mxu0
  %v1425 = vpop.f32.mrb[0].mxu0
  %v1426 = vadd.f32 %v1185, %v1425
  %v1427 = vpop.f32.mrb[0].mxu0
  %1428 = vmatprep.mubr.bf16.mxu0 %v949
  %1429 = vmatmul.mubr.bf16.gmra.mrb[0].mxu0 %v603
  %v1430 = vpop.f32.mrb[0].mxu0
  %v1431 = vadd.f32 %v1190, %v1430
  %v1432 = vpop.f32.mrb[0].mxu0
  %v1433 = vpop.f32.mrb[0].mxu0
  %v1434 = vadd.f32 %v1193, %v1433
  %v1435 = vpop.f32.mrb[0].mxu0
  %1436 = vdwg.mxu0
  %v1437 = vmax.f32 %v1231, 0.0
  %v1438 = vmax.f32 %v1234, 0.0
  %v1439 = vmax.f32 %v1239, 0.0
  %v1440 = vmax.f32 %v1242, 0.0
  %v1441 = vmax.f32 %v1247, 0.0
  %v1442 = vmax.f32 %v1250, 0.0
  %v1443 = vmax.f32 %v1255, 0.0
  %v1444 = vmax.f32 %v1258, 0.0
  %v1445 = vmax.f32 %v1263, 0.0
  %v1446 = vmax.f32 %v1266, 0.0
  %v1447 = vmax.f32 %v1271, 0.0
  %v1448 = vmax.f32 %v1274, 0.0
  %v1449 = vmax.f32 %v1279, 0.0
  %v1450 = vmax.f32 %v1282, 0.0
  %v1451 = vmax.f32 %v1287, 0.0
  %v1452 = vmax.f32 %v1290, 0.0
  %v1453 = vmax.f32 %v1295, 0.0
  %v1454 = vmax.f32 %v1298, 0.0
  %v1455 = vmax.f32 %v1303, 0.0
  %v1456 = vmax.f32 %v1306, 0.0
  %v1457 = vmax.f32 %v1311, 0.0
  %v1458 = vmax.f32 %v1314, 0.0
  %v1459 = vmax.f32 %v1319, 0.0
  %v1460 = vmax.f32 %v1322, 0.0
  %v1461 = vmax.f32 %v1327, 0.0
  %v1462 = vmax.f32 %v1330, 0.0
  %v1463 = vmax.f32 %v1335, 0.0
  %v1464 = vmax.f32 %v1338, 0.0
  %v1465 = vmax.f32 %v1343, 0.0
  %v1466 = vmax.f32 %v1346, 0.0
  %v1467 = vmax.f32 %v1351, 0.0
  %v1468 = vmax.f32 %v1354, 0.0
  %v1469 = vmax.f32 %v1359, 0.0
  %v1470 = vmax.f32 %v1362, 0.0
  %v1471 = vmax.f32 %v1367, 0.0
  %v1472 = vmax.f32 %v1370, 0.0
  %v1473 = vmax.f32 %v1375, 0.0
  %v1474 = vmax.f32 %v1378, 0.0
  %v1475 = vmax.f32 %v1383, 0.0
  %v1476 = vmax.f32 %v1386, 0.0
  %v1477 = vmax.f32 %v1391, 0.0
  %v1478 = vmax.f32 %v1394, 0.0
  %v1479 = vmax.f32 %v1399, 0.0
  %v1480 = vmax.f32 %v1402, 0.0
  %v1481 = vmax.f32 %v1407, 0.0
  %v1482 = vmax.f32 %v1410, 0.0
  %v1483 = vmax.f32 %v1415, 0.0
  %v1484 = vmax.f32 %v1418, 0.0
  %v1485 = vmax.f32 %v1423, 0.0
  %v1486 = vmax.f32 %v1426, 0.0
  %v1487 = vmax.f32 %v1431, 0.0
  %v1488 = vmax.f32 %v1434, 0.0
  %v1489 = vmax.f32 %v1437, %v1450
  %v1490 = vmax.f32 %v1438, %v1451
  %v1491 = vmax.f32 %v1439, %v1452
  %v1492 = vmax.f32 %v1440, %v1453
  %v1493 = vmax.f32 %v1441, %v1454
  %v1494 = vmax.f32 %v1442, %v1455
  %v1495 = vmax.f32 %v1443, %v1456
  %v1496 = vmax.f32 %v1444, %v1457
  %v1497 = vmax.f32 %v1445, %v1458
  %v1498 = vmax.f32 %v1446, %v1459
  %v1499 = vmax.f32 %v1447, %v1460
  %v1500 = vmax.f32 %v1448, %v1461
  %v1501 = vmax.f32 %v1449, %v1462
  %v1502 = vmax.f32 %v1463, %v1476
  %v1503 = vmax.f32 %v1464, %v1477
  %v1504 = vmax.f32 %v1465, %v1478
  %v1505 = vmax.f32 %v1466, %v1479
  %v1506 = vmax.f32 %v1467, %v1480
  %v1507 = vmax.f32 %v1468, %v1481
  %v1508 = vmax.f32 %v1469, %v1482
  %v1509 = vmax.f32 %v1470, %v1483
  %v1510 = vmax.f32 %v1471, %v1484
  %v1511 = vmax.f32 %v1472, %v1485
  %v1512 = vmax.f32 %v1473, %v1486
  %v1513 = vmax.f32 %v1474, %v1487
  %v1514 = vmax.f32 %v1475, %v1488
  %v1515 = vmax.f32 %v1489, %v1502
  %v1516 = vmax.f32 %v1490, %v1503
  %v1517 = vmax.f32 %v1491, %v1504
  %v1518 = vmax.f32 %v1492, %v1505
  %v1519 = vmax.f32 %v1493, %v1506
  %v1520 = vmax.f32 %v1494, %v1507
  %v1521 = vmax.f32 %v1495, %v1508
  %v1522 = vmax.f32 %v1496, %v1509
  %v1523 = vmax.f32 %v1497, %v1510
  %v1524 = vmax.f32 %v1498, %v1511
  %v1525 = vmax.f32 %v1499, %v1512
  %v1526 = vmax.f32 %v1500, %v1513
  %v1527 = vmax.f32 %v1501, %v1514
  %v1528 = vpack.c.bf16 %v1516, %v1515
  %v1529 = vpack.c.bf16 %v1518, %v1517
  %v1530 = vpack.c.bf16 %v1520, %v1519
  %v1531 = vpack.c.bf16 %v1522, %v1521
  %v1532 = vpack.c.bf16 %v1524, %v1523
  %v1533 = vpack.c.bf16 %v1526, %v1525
  %v1534 = vpack.c.bf16 %v1527, %v1527
  %v1542 = vunpack.c.l.b16 %v1528
  %v1543 = vunpack.c.h.b16 %v1528
  %v1544 = vunpack.c.l.b16 %v1529
  %v1545 = vunpack.c.h.b16 %v1529
  %v1546 = vunpack.c.l.b16 %v1530
  %v1547 = vunpack.c.h.b16 %v1530
  %v1548 = vunpack.c.l.b16 %v1531
  %v1549 = vunpack.c.h.b16 %v1531
  %v1550 = vunpack.c.l.b16 %v1532
  %v1551 = vunpack.c.h.b16 %v1532
  %v1552 = vunpack.c.l.b16 %v1533
  %v1553 = vunpack.c.h.b16 %v1533
  %v1554 = vunpack.c.l.b16 %v1534
  %v1555 = vpack.c.b16 %v1542, %v1542
  %v1556 = vpack.c.b16 %v1543, %v1543
  %v1557 = vpack.c.b16 %v1544, %v1544
  %v1558 = vpack.c.b16 %v1545, %v1545
  %v1559 = vpack.c.b16 %v1546, %v1546
  %v1560 = vpack.c.b16 %v1547, %v1547
  %v1561 = vpack.c.b16 %v1548, %v1548
  %v1562 = vpack.c.b16 %v1549, %v1549
  %v1563 = vpack.c.b16 %v1550, %v1550
  %v1564 = vpack.c.b16 %v1551, %v1551
  %v1565 = vpack.c.b16 %v1552, %v1552
  %v1566 = vpack.c.b16 %v1553, %v1553
  %v1567 = vpack.c.b16 %v1554, %v1554
  %1581 = vst [vmem:[%s3] sm:$0xf] %v1555
  %1582 = vst [vmem:[%s3 + $0x4] sm:$0xf] %v1556
  %1583 = vst [vmem:[%s3 + $0x8] sm:$0xf] %v1557
  %1584 = vst [vmem:[%s3 + $0xc] sm:$0xf] %v1558
  %1585 = vst [vmem:[%s3 + $0x10] sm:$0xf] %v1559
  %1586 = vst [vmem:[%s3 + $0x14] sm:$0xf] %v1560
  %1587 = vst [vmem:[%s3 + $0x18] sm:$0xf] %v1561
  %1588 = vst [vmem:[%s3 + $0x1c] sm:$0xf] %v1562
  %1589 = vst [vmem:[%s3 + $0x20] sm:$0xf] %v1563
  %1590 = vst [vmem:[%s3 + $0x24] sm:$0xf] %v1564
  %1591 = vst [vmem:[%s3 + $0x28] sm:$0xf] %v1565
  %1592 = vst [vmem:[%s3 + $0x2c] sm:$0xf] %v1566
  %1593 = vst [vmem:[%s3 + $0x30] sm:$0xf] %v1567
  // Predicated region
  $region14: #{lenet_forward.4} parent=0 // pred_check
    _
  $region15: #{lenet_forward.4} parent=0 // pred_check_branch
    %1595 = sbr.rel (0) target = $region17
  $region16: #{lenet_forward.4} parent=0 // pred_region
    _
  $region17: #{lenet_forward.4} parent=0 // pred_fallthru
    _
  // Predicated region
  $region18: #{lenet_forward.4} parent=0 // pred_check
    _
  $region19: #{lenet_forward.4} parent=0 // pred_check_branch
    %1597 = sbr.rel (0) target = $region21
  $region20: #{lenet_forward.4} parent=0 // pred_region
    _
  $region21: #{lenet_forward.4} parent=0 // pred_fallthru
    _

// kernel: lenet_forward.5
$region0: #{lenet_forward.5}
  #allocation0 [shape = 'u32[]', space=smem, size = 0x4, offset = 0x4, fixed_abs, tag = 'smem constant byte address 0x4 - core index']
  #allocation1 [shape = 'u32[144,128]{1,0:T(1,128)}', space=vmem, size = 0x12000, scoped, tag = 'internal scratch']
  %s0 = inlined_call_operand.vmem [shape: bf16[2,2450], index: 0, kind: input, shape index: {}]
  %s1 = inlined_call_operand.vmem [shape: bf16[2450,512], index: 1, kind: input, shape index: {}]
  %s2 = inlined_call_operand.vmem [shape: f32[1,512], index: 2, kind: input, shape index: {}]
  %s3 = inlined_call_operand.vmem [shape: bf16[512,128], index: 3, kind: input, shape index: {}]
  %s4 = inlined_call_operand.vmem [shape: f32[1,128], index: 4, kind: input, shape index: {}]
  %s5 = inlined_call_operand.hbm [shape: f32[2,128], index: 5, kind: output, shape index: {}]
  %s6 = sld [smem:[#allocation0]]
  $region30: #{lenet_forward.5} parent=0
    _
  %s8 = ssub.s32 1, %s6
  %s9 = scalar_select 0, %s8, %s6
  $region1: #{lenet_forward.5} parent=0
    #allocation2 [shape = 'u8[1024]{0}', space=vmem, size = 0x400, scoped, tag = 'output window, operand 0, single buffered']
    #allocation3 [shape = 's32[1]{0}', space=sflag, size = 0x4, scoped, tag = 'scoped memory for lenet_forward.5']
    %10 = vsyncpa [#allocation3], 0
    // Predicated region
    $region2: #{lenet_forward.5} parent=1 // pred_check
      _
    $region3: #{lenet_forward.5} parent=1 // pred_check_branch
      %12 = sbr.rel (0) target = $region5
    $region4: #{lenet_forward.5} parent=1 // pred_region
      _
    $region5: #{lenet_forward.5} parent=1 // pred_fallthru
      _
    // Predicated region
    $region6: #{lenet_forward.5} parent=1 // pred_check
      _
    $region7: #{lenet_forward.5} parent=1 // pred_check_branch
      %14 = sbr.rel (0) target = $region9
    $region8: #{lenet_forward.5} parent=1 // pred_region
      _
    $region9: #{lenet_forward.5} parent=1 // pred_fallthru
      _
    // Predicated region
    $region10: #{lenet_forward.5} parent=1 // pred_check
      _
    $region11: #{lenet_forward.5} parent=1 // pred_check_branch
      %16 = sbr.rel (0) target = $region13
    $region12: #{lenet_forward.5} parent=1 // pred_region
      _
    $region13: #{lenet_forward.5} parent=1 // pred_fallthru
      _
    // Predicated region
    $region14: #{lenet_forward.5} parent=1 // pred_check
      _
    $region15: #{lenet_forward.5} parent=1 // pred_check_branch
      %18 = sbr.rel (0) target = $region17
    $region16: #{lenet_forward.5} parent=1 // pred_region
      _
    $region17: #{lenet_forward.5} parent=1 // pred_fallthru
      _
    // Predicated region
    $region18: #{lenet_forward.5} parent=1 // pred_check
      _
    $region19: #{lenet_forward.5} parent=1 // pred_check_branch
      %20 = sbr.rel (0) target = $region21
    $region20: #{lenet_forward.5} parent=1 // pred_region
      _
    $region21: #{lenet_forward.5} parent=1 // pred_fallthru
      _
    %v22 = vld [vmem:[%s0] sm:$0xff]
    %v23 = vld [vmem:[%s0 + $0x8] sm:$0xff]
    %v24 = vld [vmem:[%s0 + $0x10] sm:$0xf]
    %v25 = vld [vmem:[%s1] sm:$0xff]
    %v26 = vld [vmem:[%s1 + $0x8] sm:$0xff]
    %v27 = vld [vmem:[%s1 + $0x10] sm:$0xff]
    %v28 = vld [vmem:[%s1 + $0x18] sm:$0xff]
    %v29 = vld [vmem:[%s1 + $0x20] sm:$0xff]
    %v30 = vld [vmem:[%s1 + $0x28] sm:$0xff]
    %v31 = vld [vmem:[%s1 + $0x30] sm:$0xff]
    %v32 = vld [vmem:[%s1 + $0x38] sm:$0xff]
    %v33 = vld [vmem:[%s1 + $0x40] sm:$0xff]
    %v34 = vld [vmem:[%s1 + $0x48] sm:$0xff]
    %v35 = vld [vmem:[%s1 + $0x50] sm:$0xff]
    %v36 = vld [vmem:[%s1 + $0x58] sm:$0xff]
    %v37 = vld [vmem:[%s1 + $0x60] sm:$0xff]
    %v38 = vld [vmem:[%s1 + $0x68] sm:$0xff]
    %v39 = vld [vmem:[%s1 + $0x70] sm:$0xff]
    %v40 = vld [vmem:[%s1 + $0x78] sm:$0xff]
    %v41 = vld [vmem:[%s1 + $0x80] sm:$0xff]
    %v42 = vld [vmem:[%s1 + $0x88] sm:$0xff]
    %v43 = vld [vmem:[%s1 + $0x90] sm:$0xff]
    %v44 = vld [vmem:[%s1 + $0x98] sm:$0xff]
    %v45 = vld [vmem:[%s1 + $0xa0] sm:$0xff]
    %v46 = vld [vmem:[%s1 + $0xa8] sm:$0xff]
    %v47 = vld [vmem:[%s1 + $0xb0] sm:$0xff]
    %v48 = vld [vmem:[%s1 + $0xb8] sm:$0xff]
    %v49 = vld [vmem:[%s1 + $0xc0] sm:$0xff]
    %v50 = vld [vmem:[%s1 + $0xc8] sm:$0xff]
    %v51 = vld [vmem:[%s1 + $0xd0] sm:$0xff]
    %v52 = vld [vmem:[%s1 + $0xd8] sm:$0xff]
    %v53 = vld [vmem:[%s1 + $0xe0] sm:$0xff]
    %v54 = vld [vmem:[%s1 + $0xe8] sm:$0xff]
    %v55 = vld [vmem:[%s1 + $0xf0] sm:$0xff]
    %v56 = vld [vmem:[%s1 + $0xf8] sm:$0xff]
    %v57 = vld [vmem:[%s1 + $0x100] sm:$0xff]
    %v58 = vld [vmem:[%s1 + $0x108] sm:$0xff]
    %v59 = vld [vmem:[%s1 + $0x110] sm:$0xff]
    %v60 = vld [vmem:[%s1 + $0x118] sm:$0xff]
    %v61 = vld [vmem:[%s1 + $0x120] sm:$0xff]
    %v62 = vld [vmem:[%s1 + $0x128] sm:$0xff]
    %v63 = vld [vmem:[%s1 + $0x130] sm:$0xff]
    %v64 = vld [vmem:[%s1 + $0x138] sm:$0xff]
    %v65 = vld [vmem:[%s1 + $0x140] sm:$0xff]
    %v66 = vld [vmem:[%s1 + $0x148] sm:$0xff]
    %v67 = vld [vmem:[%s1 + $0x150] sm:$0xff]
    %v68 = vld [vmem:[%s1 + $0x158] sm:$0xff]
    %v69 = vld [vmem:[%s1 + $0x160] sm:$0xff]
    %v70 = vld [vmem:[%s1 + $0x168] sm:$0xff]
    %v71 = vld [vmem:[%s1 + $0x170] sm:$0xff]
    %v72 = vld [vmem:[%s1 + $0x178] sm:$0xff]
    %v73 = vld [vmem:[%s1 + $0x180] sm:$0xff]
    %v74 = vld [vmem:[%s1 + $0x188] sm:$0xff]
    %v75 = vld [vmem:[%s1 + $0x190] sm:$0xff]
    %v76 = vld [vmem:[%s1 + $0x198] sm:$0xff]
    %v77 = vld [vmem:[%s1 + $0x1a0] sm:$0xff]
    %v78 = vld [vmem:[%s1 + $0x1a8] sm:$0xff]
    %v79 = vld [vmem:[%s1 + $0x1b0] sm:$0xff]
    %v80 = vld [vmem:[%s1 + $0x1b8] sm:$0xff]
    %v81 = vld [vmem:[%s1 + $0x1c0] sm:$0xff]
    %v82 = vld [vmem:[%s1 + $0x1c8] sm:$0xff]
    %v83 = vld [vmem:[%s1 + $0x1d0] sm:$0xff]
    %v84 = vld [vmem:[%s1 + $0x1d8] sm:$0xff]
    %v85 = vld [vmem:[%s1 + $0x1e0] sm:$0xff]
    %v86 = vld [vmem:[%s1 + $0x1e8] sm:$0xff]
    %v87 = vld [vmem:[%s1 + $0x1f0] sm:$0xff]
    %v88 = vld [vmem:[%s1 + $0x1f8] sm:$0xff]
    %v89 = vld [vmem:[%s1 + $0x200] sm:$0xff]
    %v90 = vld [vmem:[%s1 + $0x208] sm:$0xff]
    %v91 = vld [vmem:[%s1 + $0x210] sm:$0xff]
    %v92 = vld [vmem:[%s1 + $0x218] sm:$0xff]
    %v93 = vld [vmem:[%s1 + $0x220] sm:$0xff]
    %v94 = vld [vmem:[%s1 + $0x228] sm:$0xff]
    %v95 = vld [vmem:[%s1 + $0x230] sm:$0xff]
    %v96 = vld [vmem:[%s1 + $0x238] sm:$0xff]
    %v97 = vld [vmem:[%s1 + $0x240] sm:$0xff]
    %v98 = vld [vmem:[%s1 + $0x248] sm:$0xff]
    %v99 = vld [vmem:[%s1 + $0x250] sm:$0xff]
    %v100 = vld [vmem:[%s1 + $0x258] sm:$0xff]
    %v101 = vld [vmem:[%s1 + $0x260] sm:$0xff]
    %v102 = vld [vmem:[%s1 + $0x268] sm:$0xff]
    %v103 = vld [vmem:[%s1 + $0x270] sm:$0xff]
    %v104 = vld [vmem:[%s1 + $0x278] sm:$0xff]
    %v105 = vld [vmem:[%s1 + $0x280] sm:$0xff]
    %v106 = vld [vmem:[%s1 + $0x288] sm:$0xff]
    %v107 = vld [vmem:[%s1 + $0x290] sm:$0xff]
    %v108 = vld [vmem:[%s1 + $0x298] sm:$0xff]
    %v109 = vld [vmem:[%s1 + $0x2a0] sm:$0xff]
    %v110 = vld [vmem:[%s1 + $0x2a8] sm:$0xff]
    %v111 = vld [vmem:[%s1 + $0x2b0] sm:$0xff]
    %v112 = vld [vmem:[%s1 + $0x2b8] sm:$0xff]
    %v113 = vld [vmem:[%s1 + $0x2c0] sm:$0xff]
    %v114 = vld [vmem:[%s1 + $0x2c8] sm:$0xff]
    %v115 = vld [vmem:[%s1 + $0x2d0] sm:$0xff]
    %v116 = vld [vmem:[%s1 + $0x2d8] sm:$0xff]
    %v117 = vld [vmem:[%s1 + $0x2e0] sm:$0xff]
    %v118 = vld [vmem:[%s1 + $0x2e8] sm:$0xff]
    %v119 = vld [vmem:[%s1 + $0x2f0] sm:$0xff]
    %v120 = vld [vmem:[%s1 + $0x2f8] sm:$0xff]
    %v121 = vld [vmem:[%s1 + $0x300] sm:$0xff]
    %v122 = vld [vmem:[%s1 + $0x308] sm:$0xff]
    %v123 = vld [vmem:[%s1 + $0x310] sm:$0xff]
    %v124 = vld [vmem:[%s1 + $0x318] sm:$0xff]
    %v125 = vld [vmem:[%s1 + $0x320] sm:$0xff]
    %v126 = vld [vmem:[%s1 + $0x328] sm:$0xff]
    %v127 = vld [vmem:[%s1 + $0x330] sm:$0xff]
    %v128 = vld [vmem:[%s1 + $0x338] sm:$0xff]
    %v129 = vld [vmem:[%s1 + $0x340] sm:$0xff]
    %v130 = vld [vmem:[%s1 + $0x348] sm:$0xff]
    %v131 = vld [vmem:[%s1 + $0x350] sm:$0xff]
    %v132 = vld [vmem:[%s1 + $0x358] sm:$0xff]
    %v133 = vld [vmem:[%s1 + $0x360] sm:$0xff]
    %v134 = vld [vmem:[%s1 + $0x368] sm:$0xff]
    %v135 = vld [vmem:[%s1 + $0x370] sm:$0xff]
    %v136 = vld [vmem:[%s1 + $0x378] sm:$0xff]
    %v137 = vld [vmem:[%s1 + $0x380] sm:$0xff]
    %v138 = vld [vmem:[%s1 + $0x388] sm:$0xff]
    %v139 = vld [vmem:[%s1 + $0x390] sm:$0xff]
    %v140 = vld [vmem:[%s1 + $0x398] sm:$0xff]
    %v141 = vld [vmem:[%s1 + $0x3a0] sm:$0xff]
    %v142 = vld [vmem:[%s1 + $0x3a8] sm:$0xff]
    %v143 = vld [vmem:[%s1 + $0x3b0] sm:$0xff]
    %v144 = vld [vmem:[%s1 + $0x3b8] sm:$0xff]
    %v145 = vld [vmem:[%s1 + $0x3c0] sm:$0xff]
    %v146 = vld [vmem:[%s1 + $0x3c8] sm:$0xff]
    %v147 = vld [vmem:[%s1 + $0x3d0] sm:$0xff]
    %v148 = vld [vmem:[%s1 + $0x3d8] sm:$0xff]
    %v149 = vld [vmem:[%s1 + $0x3e0] sm:$0xff]
    %v150 = vld [vmem:[%s1 + $0x3e8] sm:$0xff]
    %v151 = vld [vmem:[%s1 + $0x3f0] sm:$0xff]
    %v152 = vld [vmem:[%s1 + $0x3f8] sm:$0xff]
    %v153 = vld [vmem:[%s1 + $0x400] sm:$0xff]
    %v154 = vld [vmem:[%s1 + $0x408] sm:$0xff]
    %v155 = vld [vmem:[%s1 + $0x410] sm:$0xff]
    %v156 = vld [vmem:[%s1 + $0x418] sm:$0xff]
    %v157 = vld [vmem:[%s1 + $0x420] sm:$0xff]
    %v158 = vld [vmem:[%s1 + $0x428] sm:$0xff]
    %v159 = vld [vmem:[%s1 + $0x430] sm:$0xff]
    %v160 = vld [vmem:[%s1 + $0x438] sm:$0xff]
    %v161 = vld [vmem:[%s1 + $0x440] sm:$0xff]
    %v162 = vld [vmem:[%s1 + $0x448] sm:$0xff]
    %v163 = vld [vmem:[%s1 + $0x450] sm:$0xff]
    %v164 = vld [vmem:[%s1 + $0x458] sm:$0xff]
    %v165 = vld [vmem:[%s1 + $0x460] sm:$0xff]
    %v166 = vld [vmem:[%s1 + $0x468] sm:$0xff]
    %v167 = vld [vmem:[%s1 + $0x470] sm:$0xff]
    %v168 = vld [vmem:[%s1 + $0x478] sm:$0xff]
    %v169 = vld [vmem:[%s1 + $0x480] sm:$0xff]
    %v170 = vld [vmem:[%s1 + $0x488] sm:$0xff]
    %v171 = vld [vmem:[%s1 + $0x490] sm:$0xff]
    %v172 = vld [vmem:[%s1 + $0x498] sm:$0xff]
    %v173 = vld [vmem:[%s1 + $0x4a0] sm:$0xff]
    %v174 = vld [vmem:[%s1 + $0x4a8] sm:$0xff]
    %v175 = vld [vmem:[%s1 + $0x4b0] sm:$0xff]
    %v176 = vld [vmem:[%s1 + $0x4b8] sm:$0xff]
    %v177 = vld [vmem:[%s1 + $0x4c0] sm:$0xff]
    %v178 = vld [vmem:[%s1 + $0x4c8] sm:$0xff]
    %v179 = vld [vmem:[%s1 + $0x4d0] sm:$0xff]
    %v180 = vld [vmem:[%s1 + $0x4d8] sm:$0xff]
    %v181 = vld [vmem:[%s1 + $0x4e0] sm:$0xff]
    %v182 = vld [vmem:[%s1 + $0x4e8] sm:$0xff]
    %v183 = vld [vmem:[%s1 + $0x4f0] sm:$0xff]
    %v184 = vld [vmem:[%s1 + $0x4f8] sm:$0xff]
    %v185 = vld [vmem:[%s1 + $0x500] sm:$0xff]
    %v186 = vld [vmem:[%s1 + $0x508] sm:$0xff]
    %v187 = vld [vmem:[%s1 + $0x510] sm:$0xff]
    %v188 = vld [vmem:[%s1 + $0x518] sm:$0xff]
    %v189 = vld [vmem:[%s1 + $0x520] sm:$0xff]
    %v190 = vld [vmem:[%s1 + $0x528] sm:$0xff]
    %v191 = vld [vmem:[%s1 + $0x530] sm:$0xff]
    %v192 = vld [vmem:[%s1 + $0x538] sm:$0xff]
    %v193 = vld [vmem:[%s1 + $0x540] sm:$0xff]
    %v194 = vld [vmem:[%s1 + $0x548] sm:$0xff]
    %v195 = vld [vmem:[%s1 + $0x550] sm:$0xff]
    %v196 = vld [vmem:[%s1 + $0x558] sm:$0xff]
    %v197 = vld [vmem:[%s1 + $0x560] sm:$0xff]
    %v198 = vld [vmem:[%s1 + $0x568] sm:$0xff]
    %v199 = vld [vmem:[%s1 + $0x570] sm:$0xff]
    %v200 = vld [vmem:[%s1 + $0x578] sm:$0xff]
    %v201 = vld [vmem:[%s1 + $0x580] sm:$0xff]
    %v202 = vld [vmem:[%s1 + $0x588] sm:$0xff]
    %v203 = vld [vmem:[%s1 + $0x590] sm:$0xff]
    %v204 = vld [vmem:[%s1 + $0x598] sm:$0xff]
    %v205 = vld [vmem:[%s1 + $0x5a0] sm:$0xff]
    %v206 = vld [vmem:[%s1 + $0x5a8] sm:$0xff]
    %v207 = vld [vmem:[%s1 + $0x5b0] sm:$0xff]
    %v208 = vld [vmem:[%s1 + $0x5b8] sm:$0xff]
    %v209 = vld [vmem:[%s1 + $0x5c0] sm:$0xff]
    %v210 = vld [vmem:[%s1 + $0x5c8] sm:$0xff]
    %v211 = vld [vmem:[%s1 + $0x5d0] sm:$0xff]
    %v212 = vld [vmem:[%s1 + $0x5d8] sm:$0xff]
    %v213 = vld [vmem:[%s1 + $0x5e0] sm:$0xff]
    %v214 = vld [vmem:[%s1 + $0x5e8] sm:$0xff]
    %v215 = vld [vmem:[%s1 + $0x5f0] sm:$0xff]
    %v216 = vld [vmem:[%s1 + $0x5f8] sm:$0xff]
    %v217 = vld [vmem:[%s1 + $0x600] sm:$0xff]
    %v218 = vld [vmem:[%s1 + $0x608] sm:$0xff]
    %v219 = vld [vmem:[%s1 + $0x610] sm:$0xff]
    %v220 = vld [vmem:[%s1 + $0x618] sm:$0xff]
    %v221 = vld [vmem:[%s1 + $0x620] sm:$0xff]
    %v222 = vld [vmem:[%s1 + $0x628] sm:$0xff]
    %v223 = vld [vmem:[%s1 + $0x630] sm:$0xff]
    %v224 = vld [vmem:[%s1 + $0x638] sm:$0xff]
    %v225 = vld [vmem:[%s1 + $0x640] sm:$0xff]
    %v226 = vld [vmem:[%s1 + $0x648] sm:$0xff]
    %v227 = vld [vmem:[%s1 + $0x650] sm:$0xff]
    %v228 = vld [vmem:[%s1 + $0x658] sm:$0xff]
    %v229 = vld [vmem:[%s1 + $0x660] sm:$0xff]
    %v230 = vld [vmem:[%s1 + $0x668] sm:$0xff]
    %v231 = vld [vmem:[%s1 + $0x670] sm:$0xff]
    %v232 = vld [vmem:[%s1 + $0x678] sm:$0xff]
    %v233 = vld [vmem:[%s1 + $0x680] sm:$0xff]
    %v234 = vld [vmem:[%s1 + $0x688] sm:$0xff]
    %v235 = vld [vmem:[%s1 + $0x690] sm:$0xff]
    %v236 = vld [vmem:[%s1 + $0x698] sm:$0xff]
    %v237 = vld [vmem:[%s1 + $0x6a0] sm:$0xff]
    %v238 = vld [vmem:[%s1 + $0x6a8] sm:$0xff]
    %v239 = vld [vmem:[%s1 + $0x6b0] sm:$0xff]
    %v240 = vld [vmem:[%s1 + $0x6b8] sm:$0xff]
    %v241 = vld [vmem:[%s1 + $0x6c0] sm:$0xff]
    %v242 = vld [vmem:[%s1 + $0x6c8] sm:$0xff]
    %v243 = vld [vmem:[%s1 + $0x6d0] sm:$0xff]
    %v244 = vld [vmem:[%s1 + $0x6d8] sm:$0xff]
    %v245 = vld [vmem:[%s1 + $0x6e0] sm:$0xff]
    %v246 = vld [vmem:[%s1 + $0x6e8] sm:$0xff]
    %v247 = vld [vmem:[%s1 + $0x6f0] sm:$0xff]
    %v248 = vld [vmem:[%s1 + $0x6f8] sm:$0xff]
    %v249 = vld [vmem:[%s1 + $0x700] sm:$0xff]
    %v250 = vld [vmem:[%s1 + $0x708] sm:$0xff]
    %v251 = vld [vmem:[%s1 + $0x710] sm:$0xff]
    %v252 = vld [vmem:[%s1 + $0x718] sm:$0xff]
    %v253 = vld [vmem:[%s1 + $0x720] sm:$0xff]
    %v254 = vld [vmem:[%s1 + $0x728] sm:$0xff]
    %v255 = vld [vmem:[%s1 + $0x730] sm:$0xff]
    %v256 = vld [vmem:[%s1 + $0x738] sm:$0xff]
    %v257 = vld [vmem:[%s1 + $0x740] sm:$0xff]
    %v258 = vld [vmem:[%s1 + $0x748] sm:$0xff]
    %v259 = vld [vmem:[%s1 + $0x750] sm:$0xff]
    %v260 = vld [vmem:[%s1 + $0x758] sm:$0xff]
    %v261 = vld [vmem:[%s1 + $0x760] sm:$0xff]
    %v262 = vld [vmem:[%s1 + $0x768] sm:$0xff]
    %v263 = vld [vmem:[%s1 + $0x770] sm:$0xff]
    %v264 = vld [vmem:[%s1 + $0x778] sm:$0xff]
    %v265 = vld [vmem:[%s1 + $0x780] sm:$0xff]
    %v266 = vld [vmem:[%s1 + $0x788] sm:$0xff]
    %v267 = vld [vmem:[%s1 + $0x790] sm:$0xff]
    %v268 = vld [vmem:[%s1 + $0x798] sm:$0xff]
    %v269 = vld [vmem:[%s1 + $0x7a0] sm:$0xff]
    %v270 = vld [vmem:[%s1 + $0x7a8] sm:$0xff]
    %v271 = vld [vmem:[%s1 + $0x7b0] sm:$0xff]
    %v272 = vld [vmem:[%s1 + $0x7b8] sm:$0xff]
    %v273 = vld [vmem:[%s1 + $0x7c0] sm:$0xff]
    %v274 = vld [vmem:[%s1 + $0x7c8] sm:$0xff]
    %v275 = vld [vmem:[%s1 + $0x7d0] sm:$0xff]
    %v276 = vld [vmem:[%s1 + $0x7d8] sm:$0xff]
    %v277 = vld [vmem:[%s1 + $0x7e0] sm:$0xff]
    %v278 = vld [vmem:[%s1 + $0x7e8] sm:$0xff]
    %v279 = vld [vmem:[%s1 + $0x7f0] sm:$0xff]
    %v280 = vld [vmem:[%s1 + $0x7f8] sm:$0xff]
    %v281 = vld [vmem:[%s1 + $0x800] sm:$0xff]
    %v282 = vld [vmem:[%s1 + $0x808] sm:$0xff]
    %v283 = vld [vmem:[%s1 + $0x810] sm:$0xff]
    %v284 = vld [vmem:[%s1 + $0x818] sm:$0xff]
    %v285 = vld [vmem:[%s1 + $0x820] sm:$0xff]
    %v286 = vld [vmem:[%s1 + $0x828] sm:$0xff]
    %v287 = vld [vmem:[%s1 + $0x830] sm:$0xff]
    %v288 = vld [vmem:[%s1 + $0x838] sm:$0xff]
    %v289 = vld [vmem:[%s1 + $0x840] sm:$0xff]
    %v290 = vld [vmem:[%s1 + $0x848] sm:$0xff]
    %v291 = vld [vmem:[%s1 + $0x850] sm:$0xff]
    %v292 = vld [vmem:[%s1 + $0x858] sm:$0xff]
    %v293 = vld [vmem:[%s1 + $0x860] sm:$0xff]
    %v294 = vld [vmem:[%s1 + $0x868] sm:$0xff]
    %v295 = vld [vmem:[%s1 + $0x870] sm:$0xff]
    %v296 = vld [vmem:[%s1 + $0x878] sm:$0xff]
    %v297 = vld [vmem:[%s1 + $0x880] sm:$0xff]
    %v298 = vld [vmem:[%s1 + $0x888] sm:$0xff]
    %v299 = vld [vmem:[%s1 + $0x890] sm:$0xff]
    %v300 = vld [vmem:[%s1 + $0x898] sm:$0xff]
    %v301 = vld [vmem:[%s1 + $0x8a0] sm:$0xff]
    %v302 = vld [vmem:[%s1 + $0x8a8] sm:$0xff]
    %v303 = vld [vmem:[%s1 + $0x8b0] sm:$0xff]
    %v304 = vld [vmem:[%s1 + $0x8b8] sm:$0xff]
    %v305 = vld [vmem:[%s1 + $0x8c0] sm:$0xff]
    %v306 = vld [vmem:[%s1 + $0x8c8] sm:$0xff]
    %v307 = vld [vmem:[%s1 + $0x8d0] sm:$0xff]
    %v308 = vld [vmem:[%s1 + $0x8d8] sm:$0xff]
    %v309 = vld [vmem:[%s1 + $0x8e0] sm:$0xff]
    %v310 = vld [vmem:[%s1 + $0x8e8] sm:$0xff]
    %v311 = vld [vmem:[%s1 + $0x8f0] sm:$0xff]
    %v312 = vld [vmem:[%s1 + $0x8f8] sm:$0xff]
    %v313 = vld [vmem:[%s1 + $0x900] sm:$0xff]
    %v314 = vld [vmem:[%s1 + $0x908] sm:$0xff]
    %v315 = vld [vmem:[%s1 + $0x910] sm:$0xff]
    %v316 = vld [vmem:[%s1 + $0x918] sm:$0xff]
    %v317 = vld [vmem:[%s1 + $0x920] sm:$0xff]
    %v318 = vld [vmem:[%s1 + $0x928] sm:$0xff]
    %v319 = vld [vmem:[%s1 + $0x930] sm:$0xff]
    %v320 = vld [vmem:[%s1 + $0x938] sm:$0xff]
    %v321 = vld [vmem:[%s1 + $0x940] sm:$0xff]
    %v322 = vld [vmem:[%s1 + $0x948] sm:$0xff]
    %v323 = vld [vmem:[%s1 + $0x950] sm:$0xff]
    %v324 = vld [vmem:[%s1 + $0x958] sm:$0xff]
    %v325 = vld [vmem:[%s1 + $0x960] sm:$0xff]
    %v326 = vld [vmem:[%s1 + $0x968] sm:$0xff]
    %v327 = vld [vmem:[%s1 + $0x970] sm:$0xff]
    %v328 = vld [vmem:[%s1 + $0x978] sm:$0xff]
    %v329 = vld [vmem:[%s1 + $0x980] sm:$0xff]
    %v330 = vld [vmem:[%s1 + $0x988] sm:$0xff]
    %v331 = vld [vmem:[%s1 + $0x990] sm:$0xff]
    %v332 = vld [vmem:[%s1 + $0x998] sm:$0xff]
    %v333 = vld [vmem:[%s1 + $0x9a0] sm:$0xff]
    %v334 = vld [vmem:[%s1 + $0x9a8] sm:$0xff]
    %v335 = vld [vmem:[%s1 + $0x9b0] sm:$0xff]
    %v336 = vld [vmem:[%s1 + $0x9b8] sm:$0xff]
    %v337 = vld [vmem:[%s1 + $0x9c0] sm:$0xff]
    %v338 = vld [vmem:[%s1 + $0x9c8] sm:$0xff]
    %v339 = vld [vmem:[%s1 + $0x9d0] sm:$0xff]
    %v340 = vld [vmem:[%s1 + $0x9d8] sm:$0xff]
    %v341 = vld [vmem:[%s1 + $0x9e0] sm:$0xff]
    %v342 = vld [vmem:[%s1 + $0x9e8] sm:$0xff]
    %v343 = vld [vmem:[%s1 + $0x9f0] sm:$0xff]
    %v344 = vld [vmem:[%s1 + $0x9f8] sm:$0xff]
    %v345 = vld [vmem:[%s1 + $0xa00] sm:$0xff]
    %v346 = vld [vmem:[%s1 + $0xa08] sm:$0xff]
    %v347 = vld [vmem:[%s1 + $0xa10] sm:$0xff]
    %v348 = vld [vmem:[%s1 + $0xa18] sm:$0xff]
    %v349 = vld [vmem:[%s1 + $0xa20] sm:$0xff]
    %v350 = vld [vmem:[%s1 + $0xa28] sm:$0xff]
    %v351 = vld [vmem:[%s1 + $0xa30] sm:$0xff]
    %v352 = vld [vmem:[%s1 + $0xa38] sm:$0xff]
    %v353 = vld [vmem:[%s1 + $0xa40] sm:$0xff]
    %v354 = vld [vmem:[%s1 + $0xa48] sm:$0xff]
    %v355 = vld [vmem:[%s1 + $0xa50] sm:$0xff]
    %v356 = vld [vmem:[%s1 + $0xa58] sm:$0xff]
    %v357 = vld [vmem:[%s1 + $0xa60] sm:$0xff]
    %v358 = vld [vmem:[%s1 + $0xa68] sm:$0xff]
    %v359 = vld [vmem:[%s1 + $0xa70] sm:$0xff]
    %v360 = vld [vmem:[%s1 + $0xa78] sm:$0xff]
    %v361 = vld [vmem:[%s1 + $0xa80] sm:$0xff]
    %v362 = vld [vmem:[%s1 + $0xa88] sm:$0xff]
    %v363 = vld [vmem:[%s1 + $0xa90] sm:$0xff]
    %v364 = vld [vmem:[%s1 + $0xa98] sm:$0xff]
    %v365 = vld [vmem:[%s1 + $0xaa0] sm:$0xff]
    %v366 = vld [vmem:[%s1 + $0xaa8] sm:$0xff]
    %v367 = vld [vmem:[%s1 + $0xab0] sm:$0xff]
    %v368 = vld [vmem:[%s1 + $0xab8] sm:$0xff]
    %v369 = vld [vmem:[%s1 + $0xac0] sm:$0xff]
    %v370 = vld [vmem:[%s1 + $0xac8] sm:$0xff]
    %v371 = vld [vmem:[%s1 + $0xad0] sm:$0xff]
    %v372 = vld [vmem:[%s1 + $0xad8] sm:$0xff]
    %v373 = vld [vmem:[%s1 + $0xae0] sm:$0xff]
    %v374 = vld [vmem:[%s1 + $0xae8] sm:$0xff]
    %v375 = vld [vmem:[%s1 + $0xaf0] sm:$0xff]
    %v376 = vld [vmem:[%s1 + $0xaf8] sm:$0xff]
    %v377 = vld [vmem:[%s1 + $0xb00] sm:$0xff]
    %v378 = vld [vmem:[%s1 + $0xb08] sm:$0xff]
    %v379 = vld [vmem:[%s1 + $0xb10] sm:$0xff]
    %v380 = vld [vmem:[%s1 + $0xb18] sm:$0xff]
    %v381 = vld [vmem:[%s1 + $0xb20] sm:$0xff]
    %v382 = vld [vmem:[%s1 + $0xb28] sm:$0xff]
    %v383 = vld [vmem:[%s1 + $0xb30] sm:$0xff]
    %v384 = vld [vmem:[%s1 + $0xb38] sm:$0xff]
    %v385 = vld [vmem:[%s1 + $0xb40] sm:$0xff]
    %v386 = vld [vmem:[%s1 + $0xb48] sm:$0xff]
    %v387 = vld [vmem:[%s1 + $0xb50] sm:$0xff]
    %v388 = vld [vmem:[%s1 + $0xb58] sm:$0xff]
    %v389 = vld [vmem:[%s1 + $0xb60] sm:$0xff]
    %v390 = vld [vmem:[%s1 + $0xb68] sm:$0xff]
    %v391 = vld [vmem:[%s1 + $0xb70] sm:$0xff]
    %v392 = vld [vmem:[%s1 + $0xb78] sm:$0xff]
    %v393 = vld [vmem:[%s1 + $0xb80] sm:$0xff]
    %v394 = vld [vmem:[%s1 + $0xb88] sm:$0xff]
    %v395 = vld [vmem:[%s1 + $0xb90] sm:$0xff]
    %v396 = vld [vmem:[%s1 + $0xb98] sm:$0xff]
    %v397 = vld [vmem:[%s1 + $0xba0] sm:$0xff]
    %v398 = vld [vmem:[%s1 + $0xba8] sm:$0xff]
    %v399 = vld [vmem:[%s1 + $0xbb0] sm:$0xff]
    %v400 = vld [vmem:[%s1 + $0xbb8] sm:$0xff]
    %v401 = vld [vmem:[%s1 + $0xbc0] sm:$0xff]
    %v402 = vld [vmem:[%s1 + $0xbc8] sm:$0xff]
    %v403 = vld [vmem:[%s1 + $0xbd0] sm:$0xff]
    %v404 = vld [vmem:[%s1 + $0xbd8] sm:$0xff]
    %v405 = vld [vmem:[%s1 + $0xbe0] sm:$0xff]
    %v406 = vld [vmem:[%s1 + $0xbe8] sm:$0xff]
    %v407 = vld [vmem:[%s1 + $0xbf0] sm:$0xff]
    %v408 = vld [vmem:[%s1 + $0xbf8] sm:$0xff]
    %v409 = vld [vmem:[%s1 + $0xc00] sm:$0xff]
    %v410 = vld [vmem:[%s1 + $0xc08] sm:$0xff]
    %v411 = vld [vmem:[%s1 + $0xc10] sm:$0xff]
    %v412 = vld [vmem:[%s1 + $0xc18] sm:$0xff]
    %v413 = vld [vmem:[%s1 + $0xc20] sm:$0xff]
    %v414 = vld [vmem:[%s1 + $0xc28] sm:$0xff]
    %v415 = vld [vmem:[%s1 + $0xc30] sm:$0xff]
    %v416 = vld [vmem:[%s1 + $0xc38] sm:$0xff]
    %v417 = vld [vmem:[%s1 + $0xc40] sm:$0xff]
    %v418 = vld [vmem:[%s1 + $0xc48] sm:$0xff]
    %v419 = vld [vmem:[%s1 + $0xc50] sm:$0xff]
    %v420 = vld [vmem:[%s1 + $0xc58] sm:$0xff]
    %v421 = vld [vmem:[%s1 + $0xc60] sm:$0xff]
    %v422 = vld [vmem:[%s1 + $0xc68] sm:$0xff]
    %v423 = vld [vmem:[%s1 + $0xc70] sm:$0xff]
    %v424 = vld [vmem:[%s1 + $0xc78] sm:$0xff]
    %v425 = vld [vmem:[%s1 + $0xc80] sm:$0xff]
    %v426 = vld [vmem:[%s1 + $0xc88] sm:$0xff]
    %v427 = vld [vmem:[%s1 + $0xc90] sm:$0xff]
    %v428 = vld [vmem:[%s1 + $0xc98] sm:$0xff]
    %v429 = vld [vmem:[%s1 + $0xca0] sm:$0xff]
    %v430 = vld [vmem:[%s1 + $0xca8] sm:$0xff]
    %v431 = vld [vmem:[%s1 + $0xcb0] sm:$0xff]
    %v432 = vld [vmem:[%s1 + $0xcb8] sm:$0xff]
    %v433 = vld [vmem:[%s1 + $0xcc0] sm:$0xff]
    %v434 = vld [vmem:[%s1 + $0xcc8] sm:$0xff]
    %v435 = vld [vmem:[%s1 + $0xcd0] sm:$0xff]
    %v436 = vld [vmem:[%s1 + $0xcd8] sm:$0xff]
    %v437 = vld [vmem:[%s1 + $0xce0] sm:$0xff]
    %v438 = vld [vmem:[%s1 + $0xce8] sm:$0xff]
    %v439 = vld [vmem:[%s1 + $0xcf0] sm:$0xff]
    %v440 = vld [vmem:[%s1 + $0xcf8] sm:$0xff]
    %v441 = vld [vmem:[%s1 + $0xd00] sm:$0xff]
    %v442 = vld [vmem:[%s1 + $0xd08] sm:$0xff]
    %v443 = vld [vmem:[%s1 + $0xd10] sm:$0xff]
    %v444 = vld [vmem:[%s1 + $0xd18] sm:$0xff]
    %v445 = vld [vmem:[%s1 + $0xd20] sm:$0xff]
    %v446 = vld [vmem:[%s1 + $0xd28] sm:$0xff]
    %v447 = vld [vmem:[%s1 + $0xd30] sm:$0xff]
    %v448 = vld [vmem:[%s1 + $0xd38] sm:$0xff]
    %v449 = vld [vmem:[%s1 + $0xd40] sm:$0xff]
    %v450 = vld [vmem:[%s1 + $0xd48] sm:$0xff]
    %v451 = vld [vmem:[%s1 + $0xd50] sm:$0xff]
    %v452 = vld [vmem:[%s1 + $0xd58] sm:$0xff]
    %v453 = vld [vmem:[%s1 + $0xd60] sm:$0xff]
    %v454 = vld [vmem:[%s1 + $0xd68] sm:$0xff]
    %v455 = vld [vmem:[%s1 + $0xd70] sm:$0xff]
    %v456 = vld [vmem:[%s1 + $0xd78] sm:$0xff]
    %v457 = vld [vmem:[%s1 + $0xd80] sm:$0xff]
    %v458 = vld [vmem:[%s1 + $0xd88] sm:$0xff]
    %v459 = vld [vmem:[%s1 + $0xd90] sm:$0xff]
    %v460 = vld [vmem:[%s1 + $0xd98] sm:$0xff]
    %v461 = vld [vmem:[%s1 + $0xda0] sm:$0xff]
    %v462 = vld [vmem:[%s1 + $0xda8] sm:$0xff]
    %v463 = vld [vmem:[%s1 + $0xdb0] sm:$0xff]
    %v464 = vld [vmem:[%s1 + $0xdb8] sm:$0xff]
    %v465 = vld [vmem:[%s1 + $0xdc0] sm:$0xff]
    %v466 = vld [vmem:[%s1 + $0xdc8] sm:$0xff]
    %v467 = vld [vmem:[%s1 + $0xdd0] sm:$0xff]
    %v468 = vld [vmem:[%s1 + $0xdd8] sm:$0xff]
    %v469 = vld [vmem:[%s1 + $0xde0] sm:$0xff]
    %v470 = vld [vmem:[%s1 + $0xde8] sm:$0xff]
    %v471 = vld [vmem:[%s1 + $0xdf0] sm:$0xff]
    %v472 = vld [vmem:[%s1 + $0xdf8] sm:$0xff]
    %v473 = vld [vmem:[%s1 + $0xe00] sm:$0xff]
    %v474 = vld [vmem:[%s1 + $0xe08] sm:$0xff]
    %v475 = vld [vmem:[%s1 + $0xe10] sm:$0xff]
    %v476 = vld [vmem:[%s1 + $0xe18] sm:$0xff]
    %v477 = vld [vmem:[%s1 + $0xe20] sm:$0xff]
    %v478 = vld [vmem:[%s1 + $0xe28] sm:$0xff]
    %v479 = vld [vmem:[%s1 + $0xe30] sm:$0xff]
    %v480 = vld [vmem:[%s1 + $0xe38] sm:$0xff]
    %v481 = vld [vmem:[%s1 + $0xe40] sm:$0xff]
    %v482 = vld [vmem:[%s1 + $0xe48] sm:$0xff]
    %v483 = vld [vmem:[%s1 + $0xe50] sm:$0xff]
    %v484 = vld [vmem:[%s1 + $0xe58] sm:$0xff]
    %v485 = vld [vmem:[%s1 + $0xe60] sm:$0xff]
    %v486 = vld [vmem:[%s1 + $0xe68] sm:$0xff]
    %v487 = vld [vmem:[%s1 + $0xe70] sm:$0xff]
    %v488 = vld [vmem:[%s1 + $0xe78] sm:$0xff]
    %v489 = vld [vmem:[%s1 + $0xe80] sm:$0xff]
    %v490 = vld [vmem:[%s1 + $0xe88] sm:$0xff]
    %v491 = vld [vmem:[%s1 + $0xe90] sm:$0xff]
    %v492 = vld [vmem:[%s1 + $0xe98] sm:$0xff]
    %v493 = vld [vmem:[%s1 + $0xea0] sm:$0xff]
    %v494 = vld [vmem:[%s1 + $0xea8] sm:$0xff]
    %v495 = vld [vmem:[%s1 + $0xeb0] sm:$0xff]
    %v496 = vld [vmem:[%s1 + $0xeb8] sm:$0xff]
    %v497 = vld [vmem:[%s1 + $0xec0] sm:$0xff]
    %v498 = vld [vmem:[%s1 + $0xec8] sm:$0xff]
    %v499 = vld [vmem:[%s1 + $0xed0] sm:$0xff]
    %v500 = vld [vmem:[%s1 + $0xed8] sm:$0xff]
    %v501 = vld [vmem:[%s1 + $0xee0] sm:$0xff]
    %v502 = vld [vmem:[%s1 + $0xee8] sm:$0xff]
    %v503 = vld [vmem:[%s1 + $0xef0] sm:$0xff]
    %v504 = vld [vmem:[%s1 + $0xef8] sm:$0xff]
    %v505 = vld [vmem:[%s1 + $0xf00] sm:$0xff]
    %v506 = vld [vmem:[%s1 + $0xf08] sm:$0xff]
    %v507 = vld [vmem:[%s1 + $0xf10] sm:$0xff]
    %v508 = vld [vmem:[%s1 + $0xf18] sm:$0xff]
    %v509 = vld [vmem:[%s1 + $0xf20] sm:$0xff]
    %v510 = vld [vmem:[%s1 + $0xf28] sm:$0xff]
    %v511 = vld [vmem:[%s1 + $0xf30] sm:$0xff]
    %v512 = vld [vmem:[%s1 + $0xf38] sm:$0xff]
    %v513 = vld [vmem:[%s1 + $0xf40] sm:$0xff]
    %v514 = vld [vmem:[%s1 + $0xf48] sm:$0xff]
    %v515 = vld [vmem:[%s1 + $0xf50] sm:$0xff]
    %v516 = vld [vmem:[%s1 + $0xf58] sm:$0xff]
    %v517 = vld [vmem:[%s1 + $0xf60] sm:$0xff]
    %v518 = vld [vmem:[%s1 + $0xf68] sm:$0xff]
    %v519 = vld [vmem:[%s1 + $0xf70] sm:$0xff]
    %v520 = vld [vmem:[%s1 + $0xf78] sm:$0xff]
    %v521 = vld [vmem:[%s1 + $0xf80] sm:$0xff]
    %v522 = vld [vmem:[%s1 + $0xf88] sm:$0xff]
    %v523 = vld [vmem:[%s1 + $0xf90] sm:$0xff]
    %v524 = vld [vmem:[%s1 + $0xf98] sm:$0xff]
    %v525 = vld [vmem:[%s1 + $0xfa0] sm:$0xff]
    %v526 = vld [vmem:[%s1 + $0xfa8] sm:$0xff]
    %v527 = vld [vmem:[%s1 + $0xfb0] sm:$0xff]
    %v528 = vld [vmem:[%s1 + $0xfb8] sm:$0xff]
    %v529 = vld [vmem:[%s1 + $0xfc0] sm:$0xff]
    %v530 = vld [vmem:[%s1 + $0xfc8] sm:$0xff]
    %v531 = vld [vmem:[%s1 + $0xfd0] sm:$0xff]
    %v532 = vld [vmem:[%s1 + $0xfd8] sm:$0xff]
    %v533 = vld [vmem:[%s1 + $0xfe0] sm:$0xff]
    %v534 = vld [vmem:[%s1 + $0xfe8] sm:$0xff]
    %v535 = vld [vmem:[%s1 + $0xff0] sm:$0xff]
    %v536 = vld [vmem:[%s1 + $0xff8] sm:$0xff]
    %v537 = vld [vmem:[%s1 + $0x1000] sm:$0xff]
    %v538 = vld [vmem:[%s1 + $0x1008] sm:$0xff]
    %v539 = vld [vmem:[%s1 + $0x1010] sm:$0xff]
    %v540 = vld [vmem:[%s1 + $0x1018] sm:$0xff]
    %v541 = vld [vmem:[%s1 + $0x1020] sm:$0xff]
    %v542 = vld [vmem:[%s1 + $0x1028] sm:$0xff]
    %v543 = vld [vmem:[%s1 + $0x1030] sm:$0xff]
    %v544 = vld [vmem:[%s1 + $0x1038] sm:$0xff]
    %v545 = vld [vmem:[%s1 + $0x1040] sm:$0xff]
    %v546 = vld [vmem:[%s1 + $0x1048] sm:$0xff]
    %v547 = vld [vmem:[%s1 + $0x1050] sm:$0xff]
    %v548 = vld [vmem:[%s1 + $0x1058] sm:$0xff]
    %v549 = vld [vmem:[%s1 + $0x1060] sm:$0xff]
    %v550 = vld [vmem:[%s1 + $0x1068] sm:$0xff]
    %v551 = vld [vmem:[%s1 + $0x1070] sm:$0xff]
    %v552 = vld [vmem:[%s1 + $0x1078] sm:$0xff]
    %v553 = vld [vmem:[%s1 + $0x1080] sm:$0xff]
    %v554 = vld [vmem:[%s1 + $0x1088] sm:$0xff]
    %v555 = vld [vmem:[%s1 + $0x1090] sm:$0xff]
    %v556 = vld [vmem:[%s1 + $0x1098] sm:$0xff]
    %v557 = vld [vmem:[%s1 + $0x10a0] sm:$0xff]
    %v558 = vld [vmem:[%s1 + $0x10a8] sm:$0xff]
    %v559 = vld [vmem:[%s1 + $0x10b0] sm:$0xff]
    %v560 = vld [vmem:[%s1 + $0x10b8] sm:$0xff]
    %v561 = vld [vmem:[%s1 + $0x10c0] sm:$0xff]
    %v562 = vld [vmem:[%s1 + $0x10c8] sm:$0xff]
    %v563 = vld [vmem:[%s1 + $0x10d0] sm:$0xff]
    %v564 = vld [vmem:[%s1 + $0x10d8] sm:$0xff]
    %v565 = vld [vmem:[%s1 + $0x10e0] sm:$0xff]
    %v566 = vld [vmem:[%s1 + $0x10e8] sm:$0xff]
    %v567 = vld [vmem:[%s1 + $0x10f0] sm:$0xff]
    %v568 = vld [vmem:[%s1 + $0x10f8] sm:$0xff]
    %v569 = vld [vmem:[%s1 + $0x1100] sm:$0xff]
    %v570 = vld [vmem:[%s1 + $0x1108] sm:$0xff]
    %v571 = vld [vmem:[%s1 + $0x1110] sm:$0xff]
    %v572 = vld [vmem:[%s1 + $0x1118] sm:$0xff]
    %v573 = vld [vmem:[%s1 + $0x1120] sm:$0xff]
    %v574 = vld [vmem:[%s1 + $0x1128] sm:$0xff]
    %v575 = vld [vmem:[%s1 + $0x1130] sm:$0xff]
    %v576 = vld [vmem:[%s1 + $0x1138] sm:$0xff]
    %v577 = vld [vmem:[%s1 + $0x1140] sm:$0xff]
    %v578 = vld [vmem:[%s1 + $0x1148] sm:$0xff]
    %v579 = vld [vmem:[%s1 + $0x1150] sm:$0xff]
    %v580 = vld [vmem:[%s1 + $0x1158] sm:$0xff]
    %v581 = vld [vmem:[%s1 + $0x1160] sm:$0xff]
    %v582 = vld [vmem:[%s1 + $0x1168] sm:$0xff]
    %v583 = vld [vmem:[%s1 + $0x1170] sm:$0xff]
    %v584 = vld [vmem:[%s1 + $0x1178] sm:$0xff]
    %v585 = vld [vmem:[%s1 + $0x1180] sm:$0xff]
    %v586 = vld [vmem:[%s1 + $0x1188] sm:$0xff]
    %v587 = vld [vmem:[%s1 + $0x1190] sm:$0xff]
    %v588 = vld [vmem:[%s1 + $0x1198] sm:$0xff]
    %v589 = vld [vmem:[%s1 + $0x11a0] sm:$0xff]
    %v590 = vld [vmem:[%s1 + $0x11a8] sm:$0xff]
    %v591 = vld [vmem:[%s1 + $0x11b0] sm:$0xff]
    %v592 = vld [vmem:[%s1 + $0x11b8] sm:$0xff]
    %v593 = vld [vmem:[%s1 + $0x11c0] sm:$0xff]
    %v594 = vld [vmem:[%s1 + $0x11c8] sm:$0xff]
    %v595 = vld [vmem:[%s1 + $0x11d0] sm:$0xff]
    %v596 = vld [vmem:[%s1 + $0x11d8] sm:$0xff]
    %v597 = vld [vmem:[%s1 + $0x11e0] sm:$0xff]
    %v598 = vld [vmem:[%s1 + $0x11e8] sm:$0xff]
    %v599 = vld [vmem:[%s1 + $0x11f0] sm:$0xff]
    %v600 = vld [vmem:[%s1 + $0x11f8] sm:$0xff]
    %v601 = vld [vmem:[%s1 + $0x1200] sm:$0xff]
    %v602 = vld [vmem:[%s1 + $0x1208] sm:$0xff]
    %v603 = vld [vmem:[%s1 + $0x1210] sm:$0xff]
    %v604 = vld [vmem:[%s1 + $0x1218] sm:$0xff]
    %v605 = vld [vmem:[%s1 + $0x1220] sm:$0xff]
    %v606 = vld [vmem:[%s1 + $0x1228] sm:$0xff]
    %v607 = vld [vmem:[%s1 + $0x1230] sm:$0xff]
    %v608 = vld [vmem:[%s1 + $0x1238] sm:$0xff]
    %v609 = vld [vmem:[%s1 + $0x1240] sm:$0xff]
    %v610 = vld [vmem:[%s1 + $0x1248] sm:$0xff]
    %v611 = vld [vmem:[%s1 + $0x1250] sm:$0xff]
    %v612 = vld [vmem:[%s1 + $0x1258] sm:$0xff]
    %v613 = vld [vmem:[%s1 + $0x1260] sm:$0xff]
    %v614 = vld [vmem:[%s1 + $0x1268] sm:$0xff]
    %v615 = vld [vmem:[%s1 + $0x1270] sm:$0xff]
    %v616 = vld [vmem:[%s1 + $0x1278] sm:$0xff]
    %v617 = vld [vmem:[%s1 + $0x1280] sm:$0xff]
    %v618 = vld [vmem:[%s1 + $0x1288] sm:$0xff]
    %v619 = vld [vmem:[%s1 + $0x1290] sm:$0xff]
    %v620 = vld [vmem:[%s1 + $0x1298] sm:$0xff]
    %v621 = vld [vmem:[%s1 + $0x12a0] sm:$0xff]
    %v622 = vld [vmem:[%s1 + $0x12a8] sm:$0xff]
    %v623 = vld [vmem:[%s1 + $0x12b0] sm:$0xff]
    %v624 = vld [vmem:[%s1 + $0x12b8] sm:$0xff]
    %v625 = vld [vmem:[%s1 + $0x12c0] sm:$0xff]
    %v626 = vld [vmem:[%s1 + $0x12c8] sm:$0xff]
    %v627 = vld [vmem:[%s1 + $0x12d0] sm:$0xff]
    %v628 = vld [vmem:[%s1 + $0x12d8] sm:$0xff]
    %v629 = vld [vmem:[%s1 + $0x12e0] sm:$0xff]
    %v630 = vld [vmem:[%s1 + $0x12e8] sm:$0xff]
    %v631 = vld [vmem:[%s1 + $0x12f0] sm:$0xff]
    %v632 = vld [vmem:[%s1 + $0x12f8] sm:$0xff]
    %v633 = vld [vmem:[%s1 + $0x1300] sm:$0xff]
    %v634 = vld [vmem:[%s1 + $0x1308] sm:$0xff]
    %v635 = vld [vmem:[%s1 + $0x1310] sm:$0xff]
    %v636 = vld [vmem:[%s1 + $0x1318] sm:$0xff]
    %v637 = vld [vmem:[%s1 + $0x1320] sm:$0x11]
    %v638 = vld [vmem:[%s1 + $0x1328] sm:$0x11]
    %v639 = vld [vmem:[%s2] sm:$0xf]
    %v641 = vlaneseq
    %v642 = vshrl.u32 %v641, 7
    %v643 = vsub.s32 0, %v642
    %v644 = vrot.slane %v639, %v643
    %v645 = vlaneseq
    %v646 = vshrl.u32 %v645, 7
    %v647 = vsub.s32 1, %v646
    %v648 = vrot.slane %v639, %v647
    %v649 = vlaneseq
    %v650 = vshrl.u32 %v649, 7
    %v651 = vsub.s32 2, %v650
    %v652 = vrot.slane %v639, %v651
    %v653 = vlaneseq
    %v654 = vshrl.u32 %v653, 7
    %v655 = vsub.s32 3, %v654
    %v656 = vrot.slane %v639, %v655
    %v664 = vcombine.high %v22, %v22
    %v666 = vunpack.c.l.s4 1966171168
    %v667 = vunpack.c.0.s8 %v666
    %v668 = vlaneseq
    %v669 = vshrl.u32 %v668, 7
    %v670 = vsub.s32 %v667, %v669
    %v671 = vrot.slane %v22, %v670
    %v673 = vunpack.c.l.s4 1966171168
    %v674 = vunpack.c.0.s8 %v673
    %v675 = vlaneseq
    %v676 = vshrl.u32 %v675, 7
    %v677 = vsub.s32 %v674, %v676
    %v678 = vrot.slane %v664, %v677
    %v679 = vcombine.high %v671, %v671
    %v680 = vcombine.high %v678, %v678
    %v682 = vunpack.c.l.s4 1966171168
    %v683 = vunpack.c.0.s8 %v682
    %v684 = vlaneseq
    %v685 = vshrl.u32 %v684, 7
    %v686 = vsub.s32 %v683, %v685
    %v687 = vrot.slane %v671, %v686
    %v689 = vunpack.c.l.s4 1966171168
    %v690 = vunpack.c.0.s8 %v689
    %v691 = vlaneseq
    %v692 = vshrl.u32 %v691, 7
    %v693 = vsub.s32 %v690, %v692
    %v694 = vrot.slane %v678, %v693
    %v696 = vunpack.c.l.s4 1966171168
    %v697 = vunpack.c.0.s8 %v696
    %v698 = vlaneseq
    %v699 = vshrl.u32 %v698, 7
    %v700 = vsub.s32 %v697, %v699
    %v701 = vrot.slane %v679, %v700
    %v703 = vunpack.c.l.s4 1966171168
    %v704 = vunpack.c.0.s8 %v703
    %v705 = vlaneseq
    %v706 = vshrl.u32 %v705, 7
    %v707 = vsub.s32 %v704, %v706
    %v708 = vrot.slane %v680, %v707
    %v709 = vcombine.high %v687, %v687
    %v710 = vcombine.high %v694, %v694
    %v711 = vcombine.high %v701, %v701
    %v712 = vcombine.high %v708, %v708
    %v713 = vcombine.high %v23, %v23
    %v715 = vunpack.c.l.s4 1966171168
    %v716 = vunpack.c.0.s8 %v715
    %v717 = vlaneseq
    %v718 = vshrl.u32 %v717, 7
    %v719 = vsub.s32 %v716, %v718
    %v720 = vrot.slane %v23, %v719
    %v722 = vunpack.c.l.s4 1966171168
    %v723 = vunpack.c.0.s8 %v722
    %v724 = vlaneseq
    %v725 = vshrl.u32 %v724, 7
    %v726 = vsub.s32 %v723, %v725
    %v727 = vrot.slane %v713, %v726
    %v728 = vcombine.high %v720, %v720
    %v729 = vcombine.high %v727, %v727
    %v731 = vunpack.c.l.s4 1966171168
    %v732 = vunpack.c.0.s8 %v731
    %v733 = vlaneseq
    %v734 = vshrl.u32 %v733, 7
    %v735 = vsub.s32 %v732, %v734
    %v736 = vrot.slane %v720, %v735
    %v738 = vunpack.c.l.s4 1966171168
    %v739 = vunpack.c.0.s8 %v738
    %v740 = vlaneseq
    %v741 = vshrl.u32 %v740, 7
    %v742 = vsub.s32 %v739, %v741
    %v743 = vrot.slane %v727, %v742
    %v745 = vunpack.c.l.s4 1966171168
    %v746 = vunpack.c.0.s8 %v745
    %v747 = vlaneseq
    %v748 = vshrl.u32 %v747, 7
    %v749 = vsub.s32 %v746, %v748
    %v750 = vrot.slane %v728, %v749
    %v752 = vunpack.c.l.s4 1966171168
    %v753 = vunpack.c.0.s8 %v752
    %v754 = vlaneseq
    %v755 = vshrl.u32 %v754, 7
    %v756 = vsub.s32 %v753, %v755
    %v757 = vrot.slane %v729, %v756
    %v758 = vcombine.high %v736, %v736
    %v759 = vcombine.high %v743, %v743
    %v760 = vcombine.high %v750, %v750
    %v761 = vcombine.high %v757, %v757
    %v763 = vunpack.c.l.s4 1966171168
    %v764 = vunpack.c.0.s8 %v763
    %v765 = vlaneseq
    %v766 = vshrl.u32 %v765, 7
    %v767 = vsub.s32 %v764, %v766
    %v768 = vrot.slane %v24, %v767
    %v769 = vcombine.high %v768, %v768
    %v771 = vunpack.c.l.s4 1966171168
    %v772 = vunpack.c.0.s8 %v771
    %v773 = vlaneseq
    %v774 = vshrl.u32 %v773, 7
    %v775 = vsub.s32 %v772, %v774
    %v776 = vrot.slane %v768, %v775
    %v778 = vunpack.c.l.s4 1966171168
    %v779 = vunpack.c.0.s8 %v778
    %v780 = vlaneseq
    %v781 = vshrl.u32 %v780, 7
    %v782 = vsub.s32 %v779, %v781
    %v783 = vrot.slane %v769, %v782
    %v784 = vcombine.high %v776, %v776
    %v785 = vcombine.high %v783, %v783
    %v1419 = vunpack.c.l.b16 %v25
    %v1420 = vunpack.c.h.b16 %v25
    %v1421 = vunpack.c.l.b16 %v26
    %v1422 = vunpack.c.h.b16 %v26
    %v1423 = vunpack.c.l.b16 %v27
    %v1424 = vunpack.c.h.b16 %v27
    %v1425 = vunpack.c.l.b16 %v28
    %v1426 = vunpack.c.h.b16 %v28
    %v1427 = vunpack.c.l.b16 %v29
    %v1428 = vunpack.c.h.b16 %v29
    %v1429 = vunpack.c.l.b16 %v30
    %v1430 = vunpack.c.h.b16 %v30
    %v1431 = vunpack.c.l.b16 %v31
    %v1432 = vunpack.c.h.b16 %v31
    %v1433 = vunpack.c.l.b16 %v32
    %v1434 = vunpack.c.h.b16 %v32
    %v1435 = vunpack.c.l.b16 %v33
    %v1436 = vunpack.c.h.b16 %v33
    %v1437 = vunpack.c.l.b16 %v34
    %v1438 = vunpack.c.h.b16 %v34
    %v1439 = vunpack.c.l.b16 %v35
    %v1440 = vunpack.c.h.b16 %v35
    %v1441 = vunpack.c.l.b16 %v36
    %v1442 = vunpack.c.h.b16 %v36
    %v1443 = vunpack.c.l.b16 %v37
    %v1444 = vunpack.c.h.b16 %v37
    %v1445 = vunpack.c.l.b16 %v38
    %v1446 = vunpack.c.h.b16 %v38
    %v1447 = vunpack.c.l.b16 %v39
    %v1448 = vunpack.c.h.b16 %v39
    %v1449 = vunpack.c.l.b16 %v40
    %v1450 = vunpack.c.h.b16 %v40
    %v1451 = vunpack.c.l.b16 %v41
    %v1452 = vunpack.c.h.b16 %v41
    %v1453 = vunpack.c.l.b16 %v42
    %v1454 = vunpack.c.h.b16 %v42
    %v1455 = vunpack.c.l.b16 %v43
    %v1456 = vunpack.c.h.b16 %v43
    %v1457 = vunpack.c.l.b16 %v44
    %v1458 = vunpack.c.h.b16 %v44
    %v1459 = vunpack.c.l.b16 %v45
    %v1460 = vunpack.c.h.b16 %v45
    %v1461 = vunpack.c.l.b16 %v46
    %v1462 = vunpack.c.h.b16 %v46
    %v1463 = vunpack.c.l.b16 %v47
    %v1464 = vunpack.c.h.b16 %v47
    %v1465 = vunpack.c.l.b16 %v48
    %v1466 = vunpack.c.h.b16 %v48
    %v1467 = vunpack.c.l.b16 %v49
    %v1468 = vunpack.c.h.b16 %v49
    %v1469 = vunpack.c.l.b16 %v50
    %v1470 = vunpack.c.h.b16 %v50
    %v1471 = vunpack.c.l.b16 %v51
    %v1472 = vunpack.c.h.b16 %v51
    %v1473 = vunpack.c.l.b16 %v52
    %v1474 = vunpack.c.h.b16 %v52
    %v1475 = vunpack.c.l.b16 %v53
    %v1476 = vunpack.c.h.b16 %v53
    %v1477 = vunpack.c.l.b16 %v54
    %v1478 = vunpack.c.h.b16 %v54
    %v1479 = vunpack.c.l.b16 %v55
    %v1480 = vunpack.c.h.b16 %v55
    %v1481 = vunpack.c.l.b16 %v56
    %v1482 = vunpack.c.h.b16 %v56
    %v1483 = vunpack.c.l.b16 %v57
    %v1484 = vunpack.c.h.b16 %v57
    %v1485 = vunpack.c.l.b16 %v58
    %v1486 = vunpack.c.h.b16 %v58
    %v1487 = vunpack.c.l.b16 %v59
    %v1488 = vunpack.c.h.b16 %v59
    %v1489 = vunpack.c.l.b16 %v60
    %v1490 = vunpack.c.h.b16 %v60
    %v1491 = vunpack.c.l.b16 %v61
    %v1492 = vunpack.c.h.b16 %v61
    %v1493 = vunpack.c.l.b16 %v62
    %v1494 = vunpack.c.h.b16 %v62
    %v1495 = vunpack.c.l.b16 %v63
    %v1496 = vunpack.c.h.b16 %v63
    %v1497 = vunpack.c.l.b16 %v64
    %v1498 = vunpack.c.h.b16 %v64
    %v1499 = vunpack.c.l.b16 %v65
    %v1500 = vunpack.c.h.b16 %v65
    %v1501 = vunpack.c.l.b16 %v66
    %v1502 = vunpack.c.h.b16 %v66
    %v1503 = vunpack.c.l.b16 %v67
    %v1504 = vunpack.c.h.b16 %v67
    %v1505 = vunpack.c.l.b16 %v68
    %v1506 = vunpack.c.h.b16 %v68
    %v1507 = vunpack.c.l.b16 %v69
    %v1508 = vunpack.c.h.b16 %v69
    %v1509 = vunpack.c.l.b16 %v70
    %v1510 = vunpack.c.h.b16 %v70
    %v1511 = vunpack.c.l.b16 %v71
    %v1512 = vunpack.c.h.b16 %v71
    %v1513 = vunpack.c.l.b16 %v72
    %v1514 = vunpack.c.h.b16 %v72
    %v1515 = vunpack.c.l.b16 %v73
    %v1516 = vunpack.c.h.b16 %v73
    %v1517 = vunpack.c.l.b16 %v74
    %v1518 = vunpack.c.h.b16 %v74
    %v1519 = vunpack.c.l.b16 %v75
    %v1520 = vunpack.c.h.b16 %v75
    %v1521 = vunpack.c.l.b16 %v76
    %v1522 = vunpack.c.h.b16 %v76
    %v1523 = vunpack.c.l.b16 %v77
    %v1524 = vunpack.c.h.b16 %v77
    %v1525 = vunpack.c.l.b16 %v78
    %v1526 = vunpack.c.h.b16 %v78
    %v1527 = vunpack.c.l.b16 %v79
    %v1528 = vunpack.c.h.b16 %v79
    %v1529 = vunpack.c.l.b16 %v80
    %v1530 = vunpack.c.h.b16 %v80
    %v1531 = vunpack.c.l.b16 %v81
    %v1532 = vunpack.c.h.b16 %v81
    %v1533 = vunpack.c.l.b16 %v82
    %v1534 = vunpack.c.h.b16 %v82
    %v1535 = vunpack.c.l.b16 %v83
    %v1536 = vunpack.c.h.b16 %v83
    %v1537 = vunpack.c.l.b16 %v84
    %v1538 = vunpack.c.h.b16 %v84
    %v1539 = vunpack.c.l.b16 %v85
    %v1540 = vunpack.c.h.b16 %v85
    %v1541 = vunpack.c.l.b16 %v86
    %v1542 = vunpack.c.h.b16 %v86
    %v1543 = vunpack.c.l.b16 %v87
    %v1544 = vunpack.c.h.b16 %v87
    %v1545 = vunpack.c.l.b16 %v88
    %v1546 = vunpack.c.h.b16 %v88
    %v1547 = vunpack.c.l.b16 %v89
    %v1548 = vunpack.c.h.b16 %v89
    %v1549 = vunpack.c.l.b16 %v90
    %v1550 = vunpack.c.h.b16 %v90
    %v1551 = vunpack.c.l.b16 %v91
    %v1552 = vunpack.c.h.b16 %v91
    %v1553 = vunpack.c.l.b16 %v92
    %v1554 = vunpack.c.h.b16 %v92
    %v1555 = vunpack.c.l.b16 %v93
    %v1556 = vunpack.c.h.b16 %v93
    %v1557 = vunpack.c.l.b16 %v94
    %v1558 = vunpack.c.h.b16 %v94
    %v1559 = vunpack.c.l.b16 %v95
    %v1560 = vunpack.c.h.b16 %v95
    %v1561 = vunpack.c.l.b16 %v96
    %v1562 = vunpack.c.h.b16 %v96
    %v1563 = vunpack.c.l.b16 %v97
    %v1564 = vunpack.c.h.b16 %v97
    %v1565 = vunpack.c.l.b16 %v98
    %v1566 = vunpack.c.h.b16 %v98
    %v1567 = vunpack.c.l.b16 %v99
    %v1568 = vunpack.c.h.b16 %v99
    %v1569 = vunpack.c.l.b16 %v100
    %v1570 = vunpack.c.h.b16 %v100
    %v1571 = vunpack.c.l.b16 %v101
    %v1572 = vunpack.c.h.b16 %v101
    %v1573 = vunpack.c.l.b16 %v102
    %v1574 = vunpack.c.h.b16 %v102
    %v1575 = vunpack.c.l.b16 %v103
    %v1576 = vunpack.c.h.b16 %v103
    %v1577 = vunpack.c.l.b16 %v104
    %v1578 = vunpack.c.h.b16 %v104
    %v1579 = vunpack.c.l.b16 %v105
    %v1580 = vunpack.c.h.b16 %v105
    %v1581 = vunpack.c.l.b16 %v106
    %v1582 = vunpack.c.h.b16 %v106
    %v1583 = vunpack.c.l.b16 %v107
    %v1584 = vunpack.c.h.b16 %v107
    %v1585 = vunpack.c.l.b16 %v108
    %v1586 = vunpack.c.h.b16 %v108
    %v1587 = vunpack.c.l.b16 %v109
    %v1588 = vunpack.c.h.b16 %v109
    %v1589 = vunpack.c.l.b16 %v110
    %v1590 = vunpack.c.h.b16 %v110
    %v1591 = vunpack.c.l.b16 %v111
    %v1592 = vunpack.c.h.b16 %v111
    %v1593 = vunpack.c.l.b16 %v112
    %v1594 = vunpack.c.h.b16 %v112
    %v1595 = vunpack.c.l.b16 %v113
    %v1596 = vunpack.c.h.b16 %v113
    %v1597 = vunpack.c.l.b16 %v114
    %v1598 = vunpack.c.h.b16 %v114
    %v1599 = vunpack.c.l.b16 %v115
    %v1600 = vunpack.c.h.b16 %v115
    %v1601 = vunpack.c.l.b16 %v116
    %v1602 = vunpack.c.h.b16 %v116
    %v1603 = vunpack.c.l.b16 %v117
    %v1604 = vunpack.c.h.b16 %v117
    %v1605 = vunpack.c.l.b16 %v118
    %v1606 = vunpack.c.h.b16 %v118
    %v1607 = vunpack.c.l.b16 %v119
    %v1608 = vunpack.c.h.b16 %v119
    %v1609 = vunpack.c.l.b16 %v120
    %v1610 = vunpack.c.h.b16 %v120
    %v1611 = vunpack.c.l.b16 %v121
    %v1612 = vunpack.c.h.b16 %v121
    %v1613 = vunpack.c.l.b16 %v122
    %v1614 = vunpack.c.h.b16 %v122
    %v1615 = vunpack.c.l.b16 %v123
    %v1616 = vunpack.c.h.b16 %v123
    %v1617 = vunpack.c.l.b16 %v124
    %v1618 = vunpack.c.h.b16 %v124
    %v1619 = vunpack.c.l.b16 %v125
    %v1620 = vunpack.c.h.b16 %v125
    %v1621 = vunpack.c.l.b16 %v126
    %v1622 = vunpack.c.h.b16 %v126
    %v1623 = vunpack.c.l.b16 %v127
    %v1624 = vunpack.c.h.b16 %v127
    %v1625 = vunpack.c.l.b16 %v128
    %v1626 = vunpack.c.h.b16 %v128
    %v1627 = vunpack.c.l.b16 %v129
    %v1628 = vunpack.c.h.b16 %v129
    %v1629 = vunpack.c.l.b16 %v130
    %v1630 = vunpack.c.h.b16 %v130
    %v1631 = vunpack.c.l.b16 %v131
    %v1632 = vunpack.c.h.b16 %v131
    %v1633 = vunpack.c.l.b16 %v132
    %v1634 = vunpack.c.h.b16 %v132
    %v1635 = vunpack.c.l.b16 %v133
    %v1636 = vunpack.c.h.b16 %v133
    %v1637 = vunpack.c.l.b16 %v134
    %v1638 = vunpack.c.h.b16 %v134
    %v1639 = vunpack.c.l.b16 %v135
    %v1640 = vunpack.c.h.b16 %v135
    %v1641 = vunpack.c.l.b16 %v136
    %v1642 = vunpack.c.h.b16 %v136
    %v1643 = vunpack.c.l.b16 %v137
    %v1644 = vunpack.c.h.b16 %v137
    %v1645 = vunpack.c.l.b16 %v138
    %v1646 = vunpack.c.h.b16 %v138
    %v1647 = vunpack.c.l.b16 %v139
    %v1648 = vunpack.c.h.b16 %v139
    %v1649 = vunpack.c.l.b16 %v140
    %v1650 = vunpack.c.h.b16 %v140
    %v1651 = vunpack.c.l.b16 %v141
    %v1652 = vunpack.c.h.b16 %v141
    %v1653 = vunpack.c.l.b16 %v142
    %v1654 = vunpack.c.h.b16 %v142
    %v1655 = vunpack.c.l.b16 %v143
    %v1656 = vunpack.c.h.b16 %v143
    %v1657 = vunpack.c.l.b16 %v144
    %v1658 = vunpack.c.h.b16 %v144
    %v1659 = vunpack.c.l.b16 %v145
    %v1660 = vunpack.c.h.b16 %v145
    %v1661 = vunpack.c.l.b16 %v146
    %v1662 = vunpack.c.h.b16 %v146
    %v1663 = vunpack.c.l.b16 %v147
    %v1664 = vunpack.c.h.b16 %v147
    %v1665 = vunpack.c.l.b16 %v148
    %v1666 = vunpack.c.h.b16 %v148
    %v1667 = vunpack.c.l.b16 %v149
    %v1668 = vunpack.c.h.b16 %v149
    %v1669 = vunpack.c.l.b16 %v150
    %v1670 = vunpack.c.h.b16 %v150
    %v1671 = vunpack.c.l.b16 %v151
    %v1672 = vunpack.c.h.b16 %v151
    %v1673 = vunpack.c.l.b16 %v152
    %v1674 = vunpack.c.h.b16 %v152
    %v1675 = vunpack.c.l.b16 %v153
    %v1676 = vunpack.c.h.b16 %v153
    %v1677 = vunpack.c.l.b16 %v154
    %v1678 = vunpack.c.h.b16 %v154
    %v1679 = vunpack.c.l.b16 %v155
    %v1680 = vunpack.c.h.b16 %v155
    %v1681 = vunpack.c.l.b16 %v156
    %v1682 = vunpack.c.h.b16 %v156
    %v1683 = vunpack.c.l.b16 %v157
    %v1684 = vunpack.c.h.b16 %v157
    %v1685 = vunpack.c.l.b16 %v158
    %v1686 = vunpack.c.h.b16 %v158
    %v1687 = vunpack.c.l.b16 %v159
    %v1688 = vunpack.c.h.b16 %v159
    %v1689 = vunpack.c.l.b16 %v160
    %v1690 = vunpack.c.h.b16 %v160
    %v1691 = vunpack.c.l.b16 %v161
    %v1692 = vunpack.c.h.b16 %v161
    %v1693 = vunpack.c.l.b16 %v162
    %v1694 = vunpack.c.h.b16 %v162
    %v1695 = vunpack.c.l.b16 %v163
    %v1696 = vunpack.c.h.b16 %v163
    %v1697 = vunpack.c.l.b16 %v164
    %v1698 = vunpack.c.h.b16 %v164
    %v1699 = vunpack.c.l.b16 %v165
    %v1700 = vunpack.c.h.b16 %v165
    %v1701 = vunpack.c.l.b16 %v166
    %v1702 = vunpack.c.h.b16 %v166
    %v1703 = vunpack.c.l.b16 %v167
    %v1704 = vunpack.c.h.b16 %v167
    %v1705 = vunpack.c.l.b16 %v168
    %v1706 = vunpack.c.h.b16 %v168
    %v1707 = vunpack.c.l.b16 %v169
    %v1708 = vunpack.c.h.b16 %v169
    %v1709 = vunpack.c.l.b16 %v170
    %v1710 = vunpack.c.h.b16 %v170
    %v1711 = vunpack.c.l.b16 %v171
    %v1712 = vunpack.c.h.b16 %v171
    %v1713 = vunpack.c.l.b16 %v172
    %v1714 = vunpack.c.h.b16 %v172
    %v1715 = vunpack.c.l.b16 %v173
    %v1716 = vunpack.c.h.b16 %v173
    %v1717 = vunpack.c.l.b16 %v174
    %v1718 = vunpack.c.h.b16 %v174
    %v1719 = vunpack.c.l.b16 %v175
    %v1720 = vunpack.c.h.b16 %v175
    %v1721 = vunpack.c.l.b16 %v176
    %v1722 = vunpack.c.h.b16 %v176
    %v1723 = vunpack.c.l.b16 %v177
    %v1724 = vunpack.c.h.b16 %v177
    %v1725 = vunpack.c.l.b16 %v178
    %v1726 = vunpack.c.h.b16 %v178
    %v1727 = vunpack.c.l.b16 %v179
    %v1728 = vunpack.c.h.b16 %v179
    %v1729 = vunpack.c.l.b16 %v180
    %v1730 = vunpack.c.h.b16 %v180
    %v1731 = vunpack.c.l.b16 %v181
    %v1732 = vunpack.c.h.b16 %v181
    %v1733 = vunpack.c.l.b16 %v182
    %v1734 = vunpack.c.h.b16 %v182
    %v1735 = vunpack.c.l.b16 %v183
    %v1736 = vunpack.c.h.b16 %v183
    %v1737 = vunpack.c.l.b16 %v184
    %v1738 = vunpack.c.h.b16 %v184
    %v1739 = vunpack.c.l.b16 %v185
    %v1740 = vunpack.c.h.b16 %v185
    %v1741 = vunpack.c.l.b16 %v186
    %v1742 = vunpack.c.h.b16 %v186
    %v1743 = vunpack.c.l.b16 %v187
    %v1744 = vunpack.c.h.b16 %v187
    %v1745 = vunpack.c.l.b16 %v188
    %v1746 = vunpack.c.h.b16 %v188
    %v1747 = vunpack.c.l.b16 %v189
    %v1748 = vunpack.c.h.b16 %v189
    %v1749 = vunpack.c.l.b16 %v190
    %v1750 = vunpack.c.h.b16 %v190
    %v1751 = vunpack.c.l.b16 %v191
    %v1752 = vunpack.c.h.b16 %v191
    %v1753 = vunpack.c.l.b16 %v192
    %v1754 = vunpack.c.h.b16 %v192
    %v1755 = vunpack.c.l.b16 %v193
    %v1756 = vunpack.c.h.b16 %v193
    %v1757 = vunpack.c.l.b16 %v194
    %v1758 = vunpack.c.h.b16 %v194
    %v1759 = vunpack.c.l.b16 %v195
    %v1760 = vunpack.c.h.b16 %v195
    %v1761 = vunpack.c.l.b16 %v196
    %v1762 = vunpack.c.h.b16 %v196
    %v1763 = vunpack.c.l.b16 %v197
    %v1764 = vunpack.c.h.b16 %v197
    %v1765 = vunpack.c.l.b16 %v198
    %v1766 = vunpack.c.h.b16 %v198
    %v1767 = vunpack.c.l.b16 %v199
    %v1768 = vunpack.c.h.b16 %v199
    %v1769 = vunpack.c.l.b16 %v200
    %v1770 = vunpack.c.h.b16 %v200
    %v1771 = vunpack.c.l.b16 %v201
    %v1772 = vunpack.c.h.b16 %v201
    %v1773 = vunpack.c.l.b16 %v202
    %v1774 = vunpack.c.h.b16 %v202
    %v1775 = vunpack.c.l.b16 %v203
    %v1776 = vunpack.c.h.b16 %v203
    %v1777 = vunpack.c.l.b16 %v204
    %v1778 = vunpack.c.h.b16 %v204
    %v1779 = vunpack.c.l.b16 %v205
    %v1780 = vunpack.c.h.b16 %v205
    %v1781 = vunpack.c.l.b16 %v206
    %v1782 = vunpack.c.h.b16 %v206
    %v1783 = vunpack.c.l.b16 %v207
    %v1784 = vunpack.c.h.b16 %v207
    %v1785 = vunpack.c.l.b16 %v208
    %v1786 = vunpack.c.h.b16 %v208
    %v1787 = vunpack.c.l.b16 %v209
    %v1788 = vunpack.c.h.b16 %v209
    %v1789 = vunpack.c.l.b16 %v210
    %v1790 = vunpack.c.h.b16 %v210
    %v1791 = vunpack.c.l.b16 %v211
    %v1792 = vunpack.c.h.b16 %v211
    %v1793 = vunpack.c.l.b16 %v212
    %v1794 = vunpack.c.h.b16 %v212
    %v1795 = vunpack.c.l.b16 %v213
    %v1796 = vunpack.c.h.b16 %v213
    %v1797 = vunpack.c.l.b16 %v214
    %v1798 = vunpack.c.h.b16 %v214
    %v1799 = vunpack.c.l.b16 %v215
    %v1800 = vunpack.c.h.b16 %v215
    %v1801 = vunpack.c.l.b16 %v216
    %v1802 = vunpack.c.h.b16 %v216
    %v1803 = vunpack.c.l.b16 %v217
    %v1804 = vunpack.c.h.b16 %v217
    %v1805 = vunpack.c.l.b16 %v218
    %v1806 = vunpack.c.h.b16 %v218
    %v1807 = vunpack.c.l.b16 %v219
    %v1808 = vunpack.c.h.b16 %v219
    %v1809 = vunpack.c.l.b16 %v220
    %v1810 = vunpack.c.h.b16 %v220
    %v1811 = vunpack.c.l.b16 %v221
    %v1812 = vunpack.c.h.b16 %v221
    %v1813 = vunpack.c.l.b16 %v222
    %v1814 = vunpack.c.h.b16 %v222
    %v1815 = vunpack.c.l.b16 %v223
    %v1816 = vunpack.c.h.b16 %v223
    %v1817 = vunpack.c.l.b16 %v224
    %v1818 = vunpack.c.h.b16 %v224
    %v1819 = vunpack.c.l.b16 %v225
    %v1820 = vunpack.c.h.b16 %v225
    %v1821 = vunpack.c.l.b16 %v226
    %v1822 = vunpack.c.h.b16 %v226
    %v1823 = vunpack.c.l.b16 %v227
    %v1824 = vunpack.c.h.b16 %v227
    %v1825 = vunpack.c.l.b16 %v228
    %v1826 = vunpack.c.h.b16 %v228
    %v1827 = vunpack.c.l.b16 %v229
    %v1828 = vunpack.c.h.b16 %v229
    %v1829 = vunpack.c.l.b16 %v230
    %v1830 = vunpack.c.h.b16 %v230
    %v1831 = vunpack.c.l.b16 %v231
    %v1832 = vunpack.c.h.b16 %v231
    %v1833 = vunpack.c.l.b16 %v232
    %v1834 = vunpack.c.h.b16 %v232
    %v1835 = vunpack.c.l.b16 %v233
    %v1836 = vunpack.c.h.b16 %v233
    %v1837 = vunpack.c.l.b16 %v234
    %v1838 = vunpack.c.h.b16 %v234
    %v1839 = vunpack.c.l.b16 %v235
    %v1840 = vunpack.c.h.b16 %v235
    %v1841 = vunpack.c.l.b16 %v236
    %v1842 = vunpack.c.h.b16 %v236
    %v1843 = vunpack.c.l.b16 %v237
    %v1844 = vunpack.c.h.b16 %v237
    %v1845 = vunpack.c.l.b16 %v238
    %v1846 = vunpack.c.h.b16 %v238
    %v1847 = vunpack.c.l.b16 %v239
    %v1848 = vunpack.c.h.b16 %v239
    %v1849 = vunpack.c.l.b16 %v240
    %v1850 = vunpack.c.h.b16 %v240
    %v1851 = vunpack.c.l.b16 %v241
    %v1852 = vunpack.c.h.b16 %v241
    %v1853 = vunpack.c.l.b16 %v242
    %v1854 = vunpack.c.h.b16 %v242
    %v1855 = vunpack.c.l.b16 %v243
    %v1856 = vunpack.c.h.b16 %v243
    %v1857 = vunpack.c.l.b16 %v244
    %v1858 = vunpack.c.h.b16 %v244
    %v1859 = vunpack.c.l.b16 %v245
    %v1860 = vunpack.c.h.b16 %v245
    %v1861 = vunpack.c.l.b16 %v246
    %v1862 = vunpack.c.h.b16 %v246
    %v1863 = vunpack.c.l.b16 %v247
    %v1864 = vunpack.c.h.b16 %v247
    %v1865 = vunpack.c.l.b16 %v248
    %v1866 = vunpack.c.h.b16 %v248
    %v1867 = vunpack.c.l.b16 %v249
    %v1868 = vunpack.c.h.b16 %v249
    %v1869 = vunpack.c.l.b16 %v250
    %v1870 = vunpack.c.h.b16 %v250
    %v1871 = vunpack.c.l.b16 %v251
    %v1872 = vunpack.c.h.b16 %v251
    %v1873 = vunpack.c.l.b16 %v252
    %v1874 = vunpack.c.h.b16 %v252
    %v1875 = vunpack.c.l.b16 %v253
    %v1876 = vunpack.c.h.b16 %v253
    %v1877 = vunpack.c.l.b16 %v254
    %v1878 = vunpack.c.h.b16 %v254
    %v1879 = vunpack.c.l.b16 %v255
    %v1880 = vunpack.c.h.b16 %v255
    %v1881 = vunpack.c.l.b16 %v256
    %v1882 = vunpack.c.h.b16 %v256
    %v1883 = vunpack.c.l.b16 %v257
    %v1884 = vunpack.c.h.b16 %v257
    %v1885 = vunpack.c.l.b16 %v258
    %v1886 = vunpack.c.h.b16 %v258
    %v1887 = vunpack.c.l.b16 %v259
    %v1888 = vunpack.c.h.b16 %v259
    %v1889 = vunpack.c.l.b16 %v260
    %v1890 = vunpack.c.h.b16 %v260
    %v1891 = vunpack.c.l.b16 %v261
    %v1892 = vunpack.c.h.b16 %v261
    %v1893 = vunpack.c.l.b16 %v262
    %v1894 = vunpack.c.h.b16 %v262
    %v1895 = vunpack.c.l.b16 %v263
    %v1896 = vunpack.c.h.b16 %v263
    %v1897 = vunpack.c.l.b16 %v264
    %v1898 = vunpack.c.h.b16 %v264
    %v1899 = vunpack.c.l.b16 %v265
    %v1900 = vunpack.c.h.b16 %v265
    %v1901 = vunpack.c.l.b16 %v266
    %v1902 = vunpack.c.h.b16 %v266
    %v1903 = vunpack.c.l.b16 %v267
    %v1904 = vunpack.c.h.b16 %v267
    %v1905 = vunpack.c.l.b16 %v268
    %v1906 = vunpack.c.h.b16 %v268
    %v1907 = vunpack.c.l.b16 %v269
    %v1908 = vunpack.c.h.b16 %v269
    %v1909 = vunpack.c.l.b16 %v270
    %v1910 = vunpack.c.h.b16 %v270
    %v1911 = vunpack.c.l.b16 %v271
    %v1912 = vunpack.c.h.b16 %v271
    %v1913 = vunpack.c.l.b16 %v272
    %v1914 = vunpack.c.h.b16 %v272
    %v1915 = vunpack.c.l.b16 %v273
    %v1916 = vunpack.c.h.b16 %v273
    %v1917 = vunpack.c.l.b16 %v274
    %v1918 = vunpack.c.h.b16 %v274
    %v1919 = vunpack.c.l.b16 %v275
    %v1920 = vunpack.c.h.b16 %v275
    %v1921 = vunpack.c.l.b16 %v276
    %v1922 = vunpack.c.h.b16 %v276
    %v1923 = vunpack.c.l.b16 %v277
    %v1924 = vunpack.c.h.b16 %v277
    %v1925 = vunpack.c.l.b16 %v278
    %v1926 = vunpack.c.h.b16 %v278
    %v1927 = vunpack.c.l.b16 %v279
    %v1928 = vunpack.c.h.b16 %v279
    %v1929 = vunpack.c.l.b16 %v280
    %v1930 = vunpack.c.h.b16 %v280
    %v1931 = vunpack.c.l.b16 %v281
    %v1932 = vunpack.c.h.b16 %v281
    %v1933 = vunpack.c.l.b16 %v282
    %v1934 = vunpack.c.h.b16 %v282
    %v1935 = vunpack.c.l.b16 %v283
    %v1936 = vunpack.c.h.b16 %v283
    %v1937 = vunpack.c.l.b16 %v284
    %v1938 = vunpack.c.h.b16 %v284
    %v1939 = vunpack.c.l.b16 %v285
    %v1940 = vunpack.c.h.b16 %v285
    %v1941 = vunpack.c.l.b16 %v286
    %v1942 = vunpack.c.h.b16 %v286
    %v1943 = vunpack.c.l.b16 %v287
    %v1944 = vunpack.c.h.b16 %v287
    %v1945 = vunpack.c.l.b16 %v288
    %v1946 = vunpack.c.h.b16 %v288
    %v1947 = vunpack.c.l.b16 %v289
    %v1948 = vunpack.c.h.b16 %v289
    %v1949 = vunpack.c.l.b16 %v290
    %v1950 = vunpack.c.h.b16 %v290
    %v1951 = vunpack.c.l.b16 %v291
    %v1952 = vunpack.c.h.b16 %v291
    %v1953 = vunpack.c.l.b16 %v292
    %v1954 = vunpack.c.h.b16 %v292
    %v1955 = vunpack.c.l.b16 %v293
    %v1956 = vunpack.c.h.b16 %v293
    %v1957 = vunpack.c.l.b16 %v294
    %v1958 = vunpack.c.h.b16 %v294
    %v1959 = vunpack.c.l.b16 %v295
    %v1960 = vunpack.c.h.b16 %v295
    %v1961 = vunpack.c.l.b16 %v296
    %v1962 = vunpack.c.h.b16 %v296
    %v1963 = vunpack.c.l.b16 %v297
    %v1964 = vunpack.c.h.b16 %v297
    %v1965 = vunpack.c.l.b16 %v298
    %v1966 = vunpack.c.h.b16 %v298
    %v1967 = vunpack.c.l.b16 %v299
    %v1968 = vunpack.c.h.b16 %v299
    %v1969 = vunpack.c.l.b16 %v300
    %v1970 = vunpack.c.h.b16 %v300
    %v1971 = vunpack.c.l.b16 %v301
    %v1972 = vunpack.c.h.b16 %v301
    %v1973 = vunpack.c.l.b16 %v302
    %v1974 = vunpack.c.h.b16 %v302
    %v1975 = vunpack.c.l.b16 %v303
    %v1976 = vunpack.c.h.b16 %v303
    %v1977 = vunpack.c.l.b16 %v304
    %v1978 = vunpack.c.h.b16 %v304
    %v1979 = vunpack.c.l.b16 %v305
    %v1980 = vunpack.c.h.b16 %v305
    %v1981 = vunpack.c.l.b16 %v306
    %v1982 = vunpack.c.h.b16 %v306
    %v1983 = vunpack.c.l.b16 %v307
    %v1984 = vunpack.c.h.b16 %v307
    %v1985 = vunpack.c.l.b16 %v308
    %v1986 = vunpack.c.h.b16 %v308
    %v1987 = vunpack.c.l.b16 %v309
    %v1988 = vunpack.c.h.b16 %v309
    %v1989 = vunpack.c.l.b16 %v310
    %v1990 = vunpack.c.h.b16 %v310
    %v1991 = vunpack.c.l.b16 %v311
    %v1992 = vunpack.c.h.b16 %v311
    %v1993 = vunpack.c.l.b16 %v312
    %v1994 = vunpack.c.h.b16 %v312
    %v1995 = vunpack.c.l.b16 %v313
    %v1996 = vunpack.c.h.b16 %v313
    %v1997 = vunpack.c.l.b16 %v314
    %v1998 = vunpack.c.h.b16 %v314
    %v1999 = vunpack.c.l.b16 %v315
    %v2000 = vunpack.c.h.b16 %v315
    %v2001 = vunpack.c.l.b16 %v316
    %v2002 = vunpack.c.h.b16 %v316
    %v2003 = vunpack.c.l.b16 %v317
    %v2004 = vunpack.c.h.b16 %v317
    %v2005 = vunpack.c.l.b16 %v318
    %v2006 = vunpack.c.h.b16 %v318
    %v2007 = vunpack.c.l.b16 %v319
    %v2008 = vunpack.c.h.b16 %v319
    %v2009 = vunpack.c.l.b16 %v320
    %v2010 = vunpack.c.h.b16 %v320
    %v2011 = vunpack.c.l.b16 %v321
    %v2012 = vunpack.c.h.b16 %v321
    %v2013 = vunpack.c.l.b16 %v322
    %v2014 = vunpack.c.h.b16 %v322
    %v2015 = vunpack.c.l.b16 %v323
    %v2016 = vunpack.c.h.b16 %v323
    %v2017 = vunpack.c.l.b16 %v324
    %v2018 = vunpack.c.h.b16 %v324
    %v2019 = vunpack.c.l.b16 %v325
    %v2020 = vunpack.c.h.b16 %v325
    %v2021 = vunpack.c.l.b16 %v326
    %v2022 = vunpack.c.h.b16 %v326
    %v2023 = vunpack.c.l.b16 %v327
    %v2024 = vunpack.c.h.b16 %v327
    %v2025 = vunpack.c.l.b16 %v328
    %v2026 = vunpack.c.h.b16 %v328
    %v2027 = vunpack.c.l.b16 %v329
    %v2028 = vunpack.c.h.b16 %v329
    %v2029 = vunpack.c.l.b16 %v330
    %v2030 = vunpack.c.h.b16 %v330
    %v2031 = vunpack.c.l.b16 %v331
    %v2032 = vunpack.c.h.b16 %v331
    %v2033 = vunpack.c.l.b16 %v332
    %v2034 = vunpack.c.h.b16 %v332
    %v2035 = vunpack.c.l.b16 %v333
    %v2036 = vunpack.c.h.b16 %v333
    %v2037 = vunpack.c.l.b16 %v334
    %v2038 = vunpack.c.h.b16 %v334
    %v2039 = vunpack.c.l.b16 %v335
    %v2040 = vunpack.c.h.b16 %v335
    %v2041 = vunpack.c.l.b16 %v336
    %v2042 = vunpack.c.h.b16 %v336
    %v2043 = vunpack.c.l.b16 %v337
    %v2044 = vunpack.c.h.b16 %v337
    %v2045 = vunpack.c.l.b16 %v338
    %v2046 = vunpack.c.h.b16 %v338
    %v2047 = vunpack.c.l.b16 %v339
    %v2048 = vunpack.c.h.b16 %v339
    %v2049 = vunpack.c.l.b16 %v340
    %v2050 = vunpack.c.h.b16 %v340
    %v2051 = vunpack.c.l.b16 %v341
    %v2052 = vunpack.c.h.b16 %v341
    %v2053 = vunpack.c.l.b16 %v342
    %v2054 = vunpack.c.h.b16 %v342
    %v2055 = vunpack.c.l.b16 %v343
    %v2056 = vunpack.c.h.b16 %v343
    %v2057 = vunpack.c.l.b16 %v344
    %v2058 = vunpack.c.h.b16 %v344
    %v2059 = vunpack.c.l.b16 %v345
    %v2060 = vunpack.c.h.b16 %v345
    %v2061 = vunpack.c.l.b16 %v346
    %v2062 = vunpack.c.h.b16 %v346
    %v2063 = vunpack.c.l.b16 %v347
    %v2064 = vunpack.c.h.b16 %v347
    %v2065 = vunpack.c.l.b16 %v348
    %v2066 = vunpack.c.h.b16 %v348
    %v2067 = vunpack.c.l.b16 %v349
    %v2068 = vunpack.c.h.b16 %v349
    %v2069 = vunpack.c.l.b16 %v350
    %v2070 = vunpack.c.h.b16 %v350
    %v2071 = vunpack.c.l.b16 %v351
    %v2072 = vunpack.c.h.b16 %v351
    %v2073 = vunpack.c.l.b16 %v352
    %v2074 = vunpack.c.h.b16 %v352
    %v2075 = vunpack.c.l.b16 %v353
    %v2076 = vunpack.c.h.b16 %v353
    %v2077 = vunpack.c.l.b16 %v354
    %v2078 = vunpack.c.h.b16 %v354
    %v2079 = vunpack.c.l.b16 %v355
    %v2080 = vunpack.c.h.b16 %v355
    %v2081 = vunpack.c.l.b16 %v356
    %v2082 = vunpack.c.h.b16 %v356
    %v2083 = vunpack.c.l.b16 %v357
    %v2084 = vunpack.c.h.b16 %v357
    %v2085 = vunpack.c.l.b16 %v358
    %v2086 = vunpack.c.h.b16 %v358
    %v2087 = vunpack.c.l.b16 %v359
    %v2088 = vunpack.c.h.b16 %v359
    %v2089 = vunpack.c.l.b16 %v360
    %v2090 = vunpack.c.h.b16 %v360
    %v2091 = vunpack.c.l.b16 %v361
    %v2092 = vunpack.c.h.b16 %v361
    %v2093 = vunpack.c.l.b16 %v362
    %v2094 = vunpack.c.h.b16 %v362
    %v2095 = vunpack.c.l.b16 %v363
    %v2096 = vunpack.c.h.b16 %v363
    %v2097 = vunpack.c.l.b16 %v364
    %v2098 = vunpack.c.h.b16 %v364
    %v2099 = vunpack.c.l.b16 %v365
    %v2100 = vunpack.c.h.b16 %v365
    %v2101 = vunpack.c.l.b16 %v366
    %v2102 = vunpack.c.h.b16 %v366
    %v2103 = vunpack.c.l.b16 %v367
    %v2104 = vunpack.c.h.b16 %v367
    %v2105 = vunpack.c.l.b16 %v368
    %v2106 = vunpack.c.h.b16 %v368
    %v2107 = vunpack.c.l.b16 %v369
    %v2108 = vunpack.c.h.b16 %v369
    %v2109 = vunpack.c.l.b16 %v370
    %v2110 = vunpack.c.h.b16 %v370
    %v2111 = vunpack.c.l.b16 %v371
    %v2112 = vunpack.c.h.b16 %v371
    %v2113 = vunpack.c.l.b16 %v372
    %v2114 = vunpack.c.h.b16 %v372
    %v2115 = vunpack.c.l.b16 %v373
    %v2116 = vunpack.c.h.b16 %v373
    %v2117 = vunpack.c.l.b16 %v374
    %v2118 = vunpack.c.h.b16 %v374
    %v2119 = vunpack.c.l.b16 %v375
    %v2120 = vunpack.c.h.b16 %v375
    %v2121 = vunpack.c.l.b16 %v376
    %v2122 = vunpack.c.h.b16 %v376
    %v2123 = vunpack.c.l.b16 %v377
    %v2124 = vunpack.c.h.b16 %v377
    %v2125 = vunpack.c.l.b16 %v378
    %v2126 = vunpack.c.h.b16 %v378
    %v2127 = vunpack.c.l.b16 %v379
    %v2128 = vunpack.c.h.b16 %v379
    %v2129 = vunpack.c.l.b16 %v380
    %v2130 = vunpack.c.h.b16 %v380
    %v2131 = vunpack.c.l.b16 %v381
    %v2132 = vunpack.c.h.b16 %v381
    %v2133 = vunpack.c.l.b16 %v382
    %v2134 = vunpack.c.h.b16 %v382
    %v2135 = vunpack.c.l.b16 %v383
    %v2136 = vunpack.c.h.b16 %v383
    %v2137 = vunpack.c.l.b16 %v384
    %v2138 = vunpack.c.h.b16 %v384
    %v2139 = vunpack.c.l.b16 %v385
    %v2140 = vunpack.c.h.b16 %v385
    %v2141 = vunpack.c.l.b16 %v386
    %v2142 = vunpack.c.h.b16 %v386
    %v2143 = vunpack.c.l.b16 %v387
    %v2144 = vunpack.c.h.b16 %v387
    %v2145 = vunpack.c.l.b16 %v388
    %v2146 = vunpack.c.h.b16 %v388
    %v2147 = vunpack.c.l.b16 %v389
    %v2148 = vunpack.c.h.b16 %v389
    %v2149 = vunpack.c.l.b16 %v390
    %v2150 = vunpack.c.h.b16 %v390
    %v2151 = vunpack.c.l.b16 %v391
    %v2152 = vunpack.c.h.b16 %v391
    %v2153 = vunpack.c.l.b16 %v392
    %v2154 = vunpack.c.h.b16 %v392
    %v2155 = vunpack.c.l.b16 %v393
    %v2156 = vunpack.c.h.b16 %v393
    %v2157 = vunpack.c.l.b16 %v394
    %v2158 = vunpack.c.h.b16 %v394
    %v2159 = vunpack.c.l.b16 %v395
    %v2160 = vunpack.c.h.b16 %v395
    %v2161 = vunpack.c.l.b16 %v396
    %v2162 = vunpack.c.h.b16 %v396
    %v2163 = vunpack.c.l.b16 %v397
    %v2164 = vunpack.c.h.b16 %v397
    %v2165 = vunpack.c.l.b16 %v398
    %v2166 = vunpack.c.h.b16 %v398
    %v2167 = vunpack.c.l.b16 %v399
    %v2168 = vunpack.c.h.b16 %v399
    %v2169 = vunpack.c.l.b16 %v400
    %v2170 = vunpack.c.h.b16 %v400
    %v2171 = vunpack.c.l.b16 %v401
    %v2172 = vunpack.c.h.b16 %v401
    %v2173 = vunpack.c.l.b16 %v402
    %v2174 = vunpack.c.h.b16 %v402
    %v2175 = vunpack.c.l.b16 %v403
    %v2176 = vunpack.c.h.b16 %v403
    %v2177 = vunpack.c.l.b16 %v404
    %v2178 = vunpack.c.h.b16 %v404
    %v2179 = vunpack.c.l.b16 %v405
    %v2180 = vunpack.c.h.b16 %v405
    %v2181 = vunpack.c.l.b16 %v406
    %v2182 = vunpack.c.h.b16 %v406
    %v2183 = vunpack.c.l.b16 %v407
    %v2184 = vunpack.c.h.b16 %v407
    %v2185 = vunpack.c.l.b16 %v408
    %v2186 = vunpack.c.h.b16 %v408
    %v2187 = vunpack.c.l.b16 %v409
    %v2188 = vunpack.c.h.b16 %v409
    %v2189 = vunpack.c.l.b16 %v410
    %v2190 = vunpack.c.h.b16 %v410
    %v2191 = vunpack.c.l.b16 %v411
    %v2192 = vunpack.c.h.b16 %v411
    %v2193 = vunpack.c.l.b16 %v412
    %v2194 = vunpack.c.h.b16 %v412
    %v2195 = vunpack.c.l.b16 %v413
    %v2196 = vunpack.c.h.b16 %v413
    %v2197 = vunpack.c.l.b16 %v414
    %v2198 = vunpack.c.h.b16 %v414
    %v2199 = vunpack.c.l.b16 %v415
    %v2200 = vunpack.c.h.b16 %v415
    %v2201 = vunpack.c.l.b16 %v416
    %v2202 = vunpack.c.h.b16 %v416
    %v2203 = vunpack.c.l.b16 %v417
    %v2204 = vunpack.c.h.b16 %v417
    %v2205 = vunpack.c.l.b16 %v418
    %v2206 = vunpack.c.h.b16 %v418
    %v2207 = vunpack.c.l.b16 %v419
    %v2208 = vunpack.c.h.b16 %v419
    %v2209 = vunpack.c.l.b16 %v420
    %v2210 = vunpack.c.h.b16 %v420
    %v2211 = vunpack.c.l.b16 %v421
    %v2212 = vunpack.c.h.b16 %v421
    %v2213 = vunpack.c.l.b16 %v422
    %v2214 = vunpack.c.h.b16 %v422
    %v2215 = vunpack.c.l.b16 %v423
    %v2216 = vunpack.c.h.b16 %v423
    %v2217 = vunpack.c.l.b16 %v424
    %v2218 = vunpack.c.h.b16 %v424
    %v2219 = vunpack.c.l.b16 %v425
    %v2220 = vunpack.c.h.b16 %v425
    %v2221 = vunpack.c.l.b16 %v426
    %v2222 = vunpack.c.h.b16 %v426
    %v2223 = vunpack.c.l.b16 %v427
    %v2224 = vunpack.c.h.b16 %v427
    %v2225 = vunpack.c.l.b16 %v428
    %v2226 = vunpack.c.h.b16 %v428
    %v2227 = vunpack.c.l.b16 %v429
    %v2228 = vunpack.c.h.b16 %v429
    %v2229 = vunpack.c.l.b16 %v430
    %v2230 = vunpack.c.h.b16 %v430
    %v2231 = vunpack.c.l.b16 %v431
    %v2232 = vunpack.c.h.b16 %v431
    %v2233 = vunpack.c.l.b16 %v432
    %v2234 = vunpack.c.h.b16 %v432
    %v2235 = vunpack.c.l.b16 %v433
    %v2236 = vunpack.c.h.b16 %v433
    %v2237 = vunpack.c.l.b16 %v434
    %v2238 = vunpack.c.h.b16 %v434
    %v2239 = vunpack.c.l.b16 %v435
    %v2240 = vunpack.c.h.b16 %v435
    %v2241 = vunpack.c.l.b16 %v436
    %v2242 = vunpack.c.h.b16 %v436
    %v2243 = vunpack.c.l.b16 %v437
    %v2244 = vunpack.c.h.b16 %v437
    %v2245 = vunpack.c.l.b16 %v438
    %v2246 = vunpack.c.h.b16 %v438
    %v2247 = vunpack.c.l.b16 %v439
    %v2248 = vunpack.c.h.b16 %v439
    %v2249 = vunpack.c.l.b16 %v440
    %v2250 = vunpack.c.h.b16 %v440
    %v2251 = vunpack.c.l.b16 %v441
    %v2252 = vunpack.c.h.b16 %v441
    %v2253 = vunpack.c.l.b16 %v442
    %v2254 = vunpack.c.h.b16 %v442
    %v2255 = vunpack.c.l.b16 %v443
    %v2256 = vunpack.c.h.b16 %v443
    %v2257 = vunpack.c.l.b16 %v444
    %v2258 = vunpack.c.h.b16 %v444
    %v2259 = vunpack.c.l.b16 %v445
    %v2260 = vunpack.c.h.b16 %v445
    %v2261 = vunpack.c.l.b16 %v446
    %v2262 = vunpack.c.h.b16 %v446
    %v2263 = vunpack.c.l.b16 %v447
    %v2264 = vunpack.c.h.b16 %v447
    %v2265 = vunpack.c.l.b16 %v448
    %v2266 = vunpack.c.h.b16 %v448
    %v2267 = vunpack.c.l.b16 %v449
    %v2268 = vunpack.c.h.b16 %v449
    %v2269 = vunpack.c.l.b16 %v450
    %v2270 = vunpack.c.h.b16 %v450
    %v2271 = vunpack.c.l.b16 %v451
    %v2272 = vunpack.c.h.b16 %v451
    %v2273 = vunpack.c.l.b16 %v452
    %v2274 = vunpack.c.h.b16 %v452
    %v2275 = vunpack.c.l.b16 %v453
    %v2276 = vunpack.c.h.b16 %v453
    %v2277 = vunpack.c.l.b16 %v454
    %v2278 = vunpack.c.h.b16 %v454
    %v2279 = vunpack.c.l.b16 %v455
    %v2280 = vunpack.c.h.b16 %v455
    %v2281 = vunpack.c.l.b16 %v456
    %v2282 = vunpack.c.h.b16 %v456
    %v2283 = vunpack.c.l.b16 %v457
    %v2284 = vunpack.c.h.b16 %v457
    %v2285 = vunpack.c.l.b16 %v458
    %v2286 = vunpack.c.h.b16 %v458
    %v2287 = vunpack.c.l.b16 %v459
    %v2288 = vunpack.c.h.b16 %v459
    %v2289 = vunpack.c.l.b16 %v460
    %v2290 = vunpack.c.h.b16 %v460
    %v2291 = vunpack.c.l.b16 %v461
    %v2292 = vunpack.c.h.b16 %v461
    %v2293 = vunpack.c.l.b16 %v462
    %v2294 = vunpack.c.h.b16 %v462
    %v2295 = vunpack.c.l.b16 %v463
    %v2296 = vunpack.c.h.b16 %v463
    %v2297 = vunpack.c.l.b16 %v464
    %v2298 = vunpack.c.h.b16 %v464
    %v2299 = vunpack.c.l.b16 %v465
    %v2300 = vunpack.c.h.b16 %v465
    %v2301 = vunpack.c.l.b16 %v466
    %v2302 = vunpack.c.h.b16 %v466
    %v2303 = vunpack.c.l.b16 %v467
    %v2304 = vunpack.c.h.b16 %v467
    %v2305 = vunpack.c.l.b16 %v468
    %v2306 = vunpack.c.h.b16 %v468
    %v2307 = vunpack.c.l.b16 %v469
    %v2308 = vunpack.c.h.b16 %v469
    %v2309 = vunpack.c.l.b16 %v470
    %v2310 = vunpack.c.h.b16 %v470
    %v2311 = vunpack.c.l.b16 %v471
    %v2312 = vunpack.c.h.b16 %v471
    %v2313 = vunpack.c.l.b16 %v472
    %v2314 = vunpack.c.h.b16 %v472
    %v2315 = vunpack.c.l.b16 %v473
    %v2316 = vunpack.c.h.b16 %v473
    %v2317 = vunpack.c.l.b16 %v474
    %v2318 = vunpack.c.h.b16 %v474
    %v2319 = vunpack.c.l.b16 %v475
    %v2320 = vunpack.c.h.b16 %v475
    %v2321 = vunpack.c.l.b16 %v476
    %v2322 = vunpack.c.h.b16 %v476
    %v2323 = vunpack.c.l.b16 %v477
    %v2324 = vunpack.c.h.b16 %v477
    %v2325 = vunpack.c.l.b16 %v478
    %v2326 = vunpack.c.h.b16 %v478
    %v2327 = vunpack.c.l.b16 %v479
    %v2328 = vunpack.c.h.b16 %v479
    %v2329 = vunpack.c.l.b16 %v480
    %v2330 = vunpack.c.h.b16 %v480
    %v2331 = vunpack.c.l.b16 %v481
    %v2332 = vunpack.c.h.b16 %v481
    %v2333 = vunpack.c.l.b16 %v482
    %v2334 = vunpack.c.h.b16 %v482
    %v2335 = vunpack.c.l.b16 %v483
    %v2336 = vunpack.c.h.b16 %v483
    %v2337 = vunpack.c.l.b16 %v484
    %v2338 = vunpack.c.h.b16 %v484
    %v2339 = vunpack.c.l.b16 %v485
    %v2340 = vunpack.c.h.b16 %v485
    %v2341 = vunpack.c.l.b16 %v486
    %v2342 = vunpack.c.h.b16 %v486
    %v2343 = vunpack.c.l.b16 %v487
    %v2344 = vunpack.c.h.b16 %v487
    %v2345 = vunpack.c.l.b16 %v488
    %v2346 = vunpack.c.h.b16 %v488
    %v2347 = vunpack.c.l.b16 %v489
    %v2348 = vunpack.c.h.b16 %v489
    %v2349 = vunpack.c.l.b16 %v490
    %v2350 = vunpack.c.h.b16 %v490
    %v2351 = vunpack.c.l.b16 %v491
    %v2352 = vunpack.c.h.b16 %v491
    %v2353 = vunpack.c.l.b16 %v492
    %v2354 = vunpack.c.h.b16 %v492
    %v2355 = vunpack.c.l.b16 %v493
    %v2356 = vunpack.c.h.b16 %v493
    %v2357 = vunpack.c.l.b16 %v494
    %v2358 = vunpack.c.h.b16 %v494
    %v2359 = vunpack.c.l.b16 %v495
    %v2360 = vunpack.c.h.b16 %v495
    %v2361 = vunpack.c.l.b16 %v496
    %v2362 = vunpack.c.h.b16 %v496
    %v2363 = vunpack.c.l.b16 %v497
    %v2364 = vunpack.c.h.b16 %v497
    %v2365 = vunpack.c.l.b16 %v498
    %v2366 = vunpack.c.h.b16 %v498
    %v2367 = vunpack.c.l.b16 %v499
    %v2368 = vunpack.c.h.b16 %v499
    %v2369 = vunpack.c.l.b16 %v500
    %v2370 = vunpack.c.h.b16 %v500
    %v2371 = vunpack.c.l.b16 %v501
    %v2372 = vunpack.c.h.b16 %v501
    %v2373 = vunpack.c.l.b16 %v502
    %v2374 = vunpack.c.h.b16 %v502
    %v2375 = vunpack.c.l.b16 %v503
    %v2376 = vunpack.c.h.b16 %v503
    %v2377 = vunpack.c.l.b16 %v504
    %v2378 = vunpack.c.h.b16 %v504
    %v2379 = vunpack.c.l.b16 %v505
    %v2380 = vunpack.c.h.b16 %v505
    %v2381 = vunpack.c.l.b16 %v506
    %v2382 = vunpack.c.h.b16 %v506
    %v2383 = vunpack.c.l.b16 %v507
    %v2384 = vunpack.c.h.b16 %v507
    %v2385 = vunpack.c.l.b16 %v508
    %v2386 = vunpack.c.h.b16 %v508
    %v2387 = vunpack.c.l.b16 %v509
    %v2388 = vunpack.c.h.b16 %v509
    %v2389 = vunpack.c.l.b16 %v510
    %v2390 = vunpack.c.h.b16 %v510
    %v2391 = vunpack.c.l.b16 %v511
    %v2392 = vunpack.c.h.b16 %v511
    %v2393 = vunpack.c.l.b16 %v512
    %v2394 = vunpack.c.h.b16 %v512
    %v2395 = vunpack.c.l.b16 %v513
    %v2396 = vunpack.c.h.b16 %v513
    %v2397 = vunpack.c.l.b16 %v514
    %v2398 = vunpack.c.h.b16 %v514
    %v2399 = vunpack.c.l.b16 %v515
    %v2400 = vunpack.c.h.b16 %v515
    %v2401 = vunpack.c.l.b16 %v516
    %v2402 = vunpack.c.h.b16 %v516
    %v2403 = vunpack.c.l.b16 %v517
    %v2404 = vunpack.c.h.b16 %v517
    %v2405 = vunpack.c.l.b16 %v518
    %v2406 = vunpack.c.h.b16 %v518
    %v2407 = vunpack.c.l.b16 %v519
    %v2408 = vunpack.c.h.b16 %v519
    %v2409 = vunpack.c.l.b16 %v520
    %v2410 = vunpack.c.h.b16 %v520
    %v2411 = vunpack.c.l.b16 %v521
    %v2412 = vunpack.c.h.b16 %v521
    %v2413 = vunpack.c.l.b16 %v522
    %v2414 = vunpack.c.h.b16 %v522
    %v2415 = vunpack.c.l.b16 %v523
    %v2416 = vunpack.c.h.b16 %v523
    %v2417 = vunpack.c.l.b16 %v524
    %v2418 = vunpack.c.h.b16 %v524
    %v2419 = vunpack.c.l.b16 %v525
    %v2420 = vunpack.c.h.b16 %v525
    %v2421 = vunpack.c.l.b16 %v526
    %v2422 = vunpack.c.h.b16 %v526
    %v2423 = vunpack.c.l.b16 %v527
    %v2424 = vunpack.c.h.b16 %v527
    %v2425 = vunpack.c.l.b16 %v528
    %v2426 = vunpack.c.h.b16 %v528
    %v2427 = vunpack.c.l.b16 %v529
    %v2428 = vunpack.c.h.b16 %v529
    %v2429 = vunpack.c.l.b16 %v530
    %v2430 = vunpack.c.h.b16 %v530
    %v2431 = vunpack.c.l.b16 %v531
    %v2432 = vunpack.c.h.b16 %v531
    %v2433 = vunpack.c.l.b16 %v532
    %v2434 = vunpack.c.h.b16 %v532
    %v2435 = vunpack.c.l.b16 %v533
    %v2436 = vunpack.c.h.b16 %v533
    %v2437 = vunpack.c.l.b16 %v534
    %v2438 = vunpack.c.h.b16 %v534
    %v2439 = vunpack.c.l.b16 %v535
    %v2440 = vunpack.c.h.b16 %v535
    %v2441 = vunpack.c.l.b16 %v536
    %v2442 = vunpack.c.h.b16 %v536
    %v2443 = vunpack.c.l.b16 %v537
    %v2444 = vunpack.c.h.b16 %v537
    %v2445 = vunpack.c.l.b16 %v538
    %v2446 = vunpack.c.h.b16 %v538
    %v2447 = vunpack.c.l.b16 %v539
    %v2448 = vunpack.c.h.b16 %v539
    %v2449 = vunpack.c.l.b16 %v540
    %v2450 = vunpack.c.h.b16 %v540
    %v2451 = vunpack.c.l.b16 %v541
    %v2452 = vunpack.c.h.b16 %v541
    %v2453 = vunpack.c.l.b16 %v542
    %v2454 = vunpack.c.h.b16 %v542
    %v2455 = vunpack.c.l.b16 %v543
    %v2456 = vunpack.c.h.b16 %v543
    %v2457 = vunpack.c.l.b16 %v544
    %v2458 = vunpack.c.h.b16 %v544
    %v2459 = vunpack.c.l.b16 %v545
    %v2460 = vunpack.c.h.b16 %v545
    %v2461 = vunpack.c.l.b16 %v546
    %v2462 = vunpack.c.h.b16 %v546
    %v2463 = vunpack.c.l.b16 %v547
    %v2464 = vunpack.c.h.b16 %v547
    %v2465 = vunpack.c.l.b16 %v548
    %v2466 = vunpack.c.h.b16 %v548
    %v2467 = vunpack.c.l.b16 %v549
    %v2468 = vunpack.c.h.b16 %v549
    %v2469 = vunpack.c.l.b16 %v550
    %v2470 = vunpack.c.h.b16 %v550
    %v2471 = vunpack.c.l.b16 %v551
    %v2472 = vunpack.c.h.b16 %v551
    %v2473 = vunpack.c.l.b16 %v552
    %v2474 = vunpack.c.h.b16 %v552
    %v2475 = vunpack.c.l.b16 %v553
    %v2476 = vunpack.c.h.b16 %v553
    %v2477 = vunpack.c.l.b16 %v554
    %v2478 = vunpack.c.h.b16 %v554
    %v2479 = vunpack.c.l.b16 %v555
    %v2480 = vunpack.c.h.b16 %v555
    %v2481 = vunpack.c.l.b16 %v556
    %v2482 = vunpack.c.h.b16 %v556
    %v2483 = vunpack.c.l.b16 %v557
    %v2484 = vunpack.c.h.b16 %v557
    %v2485 = vunpack.c.l.b16 %v558
    %v2486 = vunpack.c.h.b16 %v558
    %v2487 = vunpack.c.l.b16 %v559
    %v2488 = vunpack.c.h.b16 %v559
    %v2489 = vunpack.c.l.b16 %v560
    %v2490 = vunpack.c.h.b16 %v560
    %v2491 = vunpack.c.l.b16 %v561
    %v2492 = vunpack.c.h.b16 %v561
    %v2493 = vunpack.c.l.b16 %v562
    %v2494 = vunpack.c.h.b16 %v562
    %v2495 = vunpack.c.l.b16 %v563
    %v2496 = vunpack.c.h.b16 %v563
    %v2497 = vunpack.c.l.b16 %v564
    %v2498 = vunpack.c.h.b16 %v564
    %v2499 = vunpack.c.l.b16 %v565
    %v2500 = vunpack.c.h.b16 %v565
    %v2501 = vunpack.c.l.b16 %v566
    %v2502 = vunpack.c.h.b16 %v566
    %v2503 = vunpack.c.l.b16 %v567
    %v2504 = vunpack.c.h.b16 %v567
    %v2505 = vunpack.c.l.b16 %v568
    %v2506 = vunpack.c.h.b16 %v568
    %v2507 = vunpack.c.l.b16 %v569
    %v2508 = vunpack.c.h.b16 %v569
    %v2509 = vunpack.c.l.b16 %v570
    %v2510 = vunpack.c.h.b16 %v570
    %v2511 = vunpack.c.l.b16 %v571
    %v2512 = vunpack.c.h.b16 %v571
    %v2513 = vunpack.c.l.b16 %v572
    %v2514 = vunpack.c.h.b16 %v572
    %v2515 = vunpack.c.l.b16 %v573
    %v2516 = vunpack.c.h.b16 %v573
    %v2517 = vunpack.c.l.b16 %v574
    %v2518 = vunpack.c.h.b16 %v574
    %v2519 = vunpack.c.l.b16 %v575
    %v2520 = vunpack.c.h.b16 %v575
    %v2521 = vunpack.c.l.b16 %v576
    %v2522 = vunpack.c.h.b16 %v576
    %v2523 = vunpack.c.l.b16 %v577
    %v2524 = vunpack.c.h.b16 %v577
    %v2525 = vunpack.c.l.b16 %v578
    %v2526 = vunpack.c.h.b16 %v578
    %v2527 = vunpack.c.l.b16 %v579
    %v2528 = vunpack.c.h.b16 %v579
    %v2529 = vunpack.c.l.b16 %v580
    %v2530 = vunpack.c.h.b16 %v580
    %v2531 = vunpack.c.l.b16 %v581
    %v2532 = vunpack.c.h.b16 %v581
    %v2533 = vunpack.c.l.b16 %v582
    %v2534 = vunpack.c.h.b16 %v582
    %v2535 = vunpack.c.l.b16 %v583
    %v2536 = vunpack.c.h.b16 %v583
    %v2537 = vunpack.c.l.b16 %v584
    %v2538 = vunpack.c.h.b16 %v584
    %v2539 = vunpack.c.l.b16 %v585
    %v2540 = vunpack.c.h.b16 %v585
    %v2541 = vunpack.c.l.b16 %v586
    %v2542 = vunpack.c.h.b16 %v586
    %v2543 = vunpack.c.l.b16 %v587
    %v2544 = vunpack.c.h.b16 %v587
    %v2545 = vunpack.c.l.b16 %v588
    %v2546 = vunpack.c.h.b16 %v588
    %v2547 = vunpack.c.l.b16 %v589
    %v2548 = vunpack.c.h.b16 %v589
    %v2549 = vunpack.c.l.b16 %v590
    %v2550 = vunpack.c.h.b16 %v590
    %v2551 = vunpack.c.l.b16 %v591
    %v2552 = vunpack.c.h.b16 %v591
    %v2553 = vunpack.c.l.b16 %v592
    %v2554 = vunpack.c.h.b16 %v592
    %v2555 = vunpack.c.l.b16 %v593
    %v2556 = vunpack.c.h.b16 %v593
    %v2557 = vunpack.c.l.b16 %v594
    %v2558 = vunpack.c.h.b16 %v594
    %v2559 = vunpack.c.l.b16 %v595
    %v2560 = vunpack.c.h.b16 %v595
    %v2561 = vunpack.c.l.b16 %v596
    %v2562 = vunpack.c.h.b16 %v596
    %v2563 = vunpack.c.l.b16 %v597
    %v2564 = vunpack.c.h.b16 %v597
    %v2565 = vunpack.c.l.b16 %v598
    %v2566 = vunpack.c.h.b16 %v598
    %v2567 = vunpack.c.l.b16 %v599
    %v2568 = vunpack.c.h.b16 %v599
    %v2569 = vunpack.c.l.b16 %v600
    %v2570 = vunpack.c.h.b16 %v600
    %v2571 = vunpack.c.l.b16 %v601
    %v2572 = vunpack.c.h.b16 %v601
    %v2573 = vunpack.c.l.b16 %v602
    %v2574 = vunpack.c.h.b16 %v602
    %v2575 = vunpack.c.l.b16 %v603
    %v2576 = vunpack.c.h.b16 %v603
    %v2577 = vunpack.c.l.b16 %v604
    %v2578 = vunpack.c.h.b16 %v604
    %v2579 = vunpack.c.l.b16 %v605
    %v2580 = vunpack.c.h.b16 %v605
    %v2581 = vunpack.c.l.b16 %v606
    %v2582 = vunpack.c.h.b16 %v606
    %v2583 = vunpack.c.l.b16 %v607
    %v2584 = vunpack.c.h.b16 %v607
    %v2585 = vunpack.c.l.b16 %v608
    %v2586 = vunpack.c.h.b16 %v608
    %v2587 = vunpack.c.l.b16 %v609
    %v2588 = vunpack.c.h.b16 %v609
    %v2589 = vunpack.c.l.b16 %v610
    %v2590 = vunpack.c.h.b16 %v610
    %v2591 = vunpack.c.l.b16 %v611
    %v2592 = vunpack.c.h.b16 %v611
    %v2593 = vunpack.c.l.b16 %v612
    %v2594 = vunpack.c.h.b16 %v612
    %v2595 = vunpack.c.l.b16 %v613
    %v2596 = vunpack.c.h.b16 %v613
    %v2597 = vunpack.c.l.b16 %v614
    %v2598 = vunpack.c.h.b16 %v614
    %v2599 = vunpack.c.l.b16 %v615
    %v2600 = vunpack.c.h.b16 %v615
    %v2601 = vunpack.c.l.b16 %v616
    %v2602 = vunpack.c.h.b16 %v616
    %v2603 = vunpack.c.l.b16 %v617
    %v2604 = vunpack.c.h.b16 %v617
    %v2605 = vunpack.c.l.b16 %v618
    %v2606 = vunpack.c.h.b16 %v618
    %v2607 = vunpack.c.l.b16 %v619
    %v2608 = vunpack.c.h.b16 %v619
    %v2609 = vunpack.c.l.b16 %v620
    %v2610 = vunpack.c.h.b16 %v620
    %v2611 = vunpack.c.l.b16 %v621
    %v2612 = vunpack.c.h.b16 %v621
    %v2613 = vunpack.c.l.b16 %v622
    %v2614 = vunpack.c.h.b16 %v622
    %v2615 = vunpack.c.l.b16 %v623
    %v2616 = vunpack.c.h.b16 %v623
    %v2617 = vunpack.c.l.b16 %v624
    %v2618 = vunpack.c.h.b16 %v624
    %v2619 = vunpack.c.l.b16 %v625
    %v2620 = vunpack.c.h.b16 %v625
    %v2621 = vunpack.c.l.b16 %v626
    %v2622 = vunpack.c.h.b16 %v626
    %v2623 = vunpack.c.l.b16 %v627
    %v2624 = vunpack.c.h.b16 %v627
    %v2625 = vunpack.c.l.b16 %v628
    %v2626 = vunpack.c.h.b16 %v628
    %v2627 = vunpack.c.l.b16 %v629
    %v2628 = vunpack.c.h.b16 %v629
    %v2629 = vunpack.c.l.b16 %v630
    %v2630 = vunpack.c.h.b16 %v630
    %v2631 = vunpack.c.l.b16 %v631
    %v2632 = vunpack.c.h.b16 %v631
    %v2633 = vunpack.c.l.b16 %v632
    %v2634 = vunpack.c.h.b16 %v632
    %v2635 = vunpack.c.l.b16 %v633
    %v2636 = vunpack.c.h.b16 %v633
    %v2637 = vunpack.c.l.b16 %v634
    %v2638 = vunpack.c.h.b16 %v634
    %v2639 = vunpack.c.l.b16 %v635
    %v2640 = vunpack.c.h.b16 %v635
    %v2641 = vunpack.c.l.b16 %v636
    %v2642 = vunpack.c.h.b16 %v636
    %v2643 = vunpack.c.l.b16 %v637
    %v2644 = vunpack.c.h.b16 %v637
    %v2645 = vunpack.c.l.b16 %v638
    %v2646 = vunpack.c.h.b16 %v638
    %v2647 = vpack.c.b16 %v1423, %v1419
    %v2648 = vpack.c.b16 %v1424, %v1420
    %v2649 = vpack.c.b16 %v1425, %v1421
    %v2650 = vpack.c.b16 %v1426, %v1422
    %v2651 = vpack.c.b16 %v1431, %v1427
    %v2652 = vpack.c.b16 %v1432, %v1428
    %v2653 = vpack.c.b16 %v1433, %v1429
    %v2654 = vpack.c.b16 %v1434, %v1430
    %v2655 = vpack.c.b16 %v1439, %v1435
    %v2656 = vpack.c.b16 %v1440, %v1436
    %v2657 = vpack.c.b16 %v1441, %v1437
    %v2658 = vpack.c.b16 %v1442, %v1438
    %v2659 = vpack.c.b16 %v1447, %v1443
    %v2660 = vpack.c.b16 %v1448, %v1444
    %v2661 = vpack.c.b16 %v1449, %v1445
    %v2662 = vpack.c.b16 %v1450, %v1446
    %v2663 = vpack.c.b16 %v1455, %v1451
    %v2664 = vpack.c.b16 %v1456, %v1452
    %v2665 = vpack.c.b16 %v1457, %v1453
    %v2666 = vpack.c.b16 %v1458, %v1454
    %v2667 = vpack.c.b16 %v1463, %v1459
    %v2668 = vpack.c.b16 %v1464, %v1460
    %v2669 = vpack.c.b16 %v1465, %v1461
    %v2670 = vpack.c.b16 %v1466, %v1462
    %v2671 = vpack.c.b16 %v1471, %v1467
    %v2672 = vpack.c.b16 %v1472, %v1468
    %v2673 = vpack.c.b16 %v1473, %v1469
    %v2674 = vpack.c.b16 %v1474, %v1470
    %v2675 = vpack.c.b16 %v1479, %v1475
    %v2676 = vpack.c.b16 %v1480, %v1476
    %v2677 = vpack.c.b16 %v1481, %v1477
    %v2678 = vpack.c.b16 %v1482, %v1478
    %v2679 = vpack.c.b16 %v1487, %v1483
    %v2680 = vpack.c.b16 %v1488, %v1484
    %v2681 = vpack.c.b16 %v1489, %v1485
    %v2682 = vpack.c.b16 %v1490, %v1486
    %v2683 = vpack.c.b16 %v1495, %v1491
    %v2684 = vpack.c.b16 %v1496, %v1492
    %v2685 = vpack.c.b16 %v1497, %v1493
    %v2686 = vpack.c.b16 %v1498, %v1494
    %v2687 = vpack.c.b16 %v1503, %v1499
    %v2688 = vpack.c.b16 %v1504, %v1500
    %v2689 = vpack.c.b16 %v1505, %v1501
    %v2690 = vpack.c.b16 %v1506, %v1502
    %v2691 = vpack.c.b16 %v1511, %v1507
    %v2692 = vpack.c.b16 %v1512, %v1508
    %v2693 = vpack.c.b16 %v1513, %v1509
    %v2694 = vpack.c.b16 %v1514, %v1510
    %v2695 = vpack.c.b16 %v1519, %v1515
    %v2696 = vpack.c.b16 %v1520, %v1516
    %v2697 = vpack.c.b16 %v1521, %v1517
    %v2698 = vpack.c.b16 %v1522, %v1518
    %v2699 = vpack.c.b16 %v1527, %v1523
    %v2700 = vpack.c.b16 %v1528, %v1524
    %v2701 = vpack.c.b16 %v1529, %v1525
    %v2702 = vpack.c.b16 %v1530, %v1526
    %v2703 = vpack.c.b16 %v1535, %v1531
    %v2704 = vpack.c.b16 %v1536, %v1532
    %v2705 = vpack.c.b16 %v1537, %v1533
    %v2706 = vpack.c.b16 %v1538, %v1534
    %v2707 = vpack.c.b16 %v1543, %v1539
    %v2708 = vpack.c.b16 %v1544, %v1540
    %v2709 = vpack.c.b16 %v1545, %v1541
    %v2710 = vpack.c.b16 %v1546, %v1542
    %v2711 = vpack.c.b16 %v1551, %v1547
    %v2712 = vpack.c.b16 %v1552, %v1548
    %v2713 = vpack.c.b16 %v1553, %v1549
    %v2714 = vpack.c.b16 %v1554, %v1550
    %v2715 = vpack.c.b16 %v1559, %v1555
    %v2716 = vpack.c.b16 %v1560, %v1556
    %v2717 = vpack.c.b16 %v1561, %v1557
    %v2718 = vpack.c.b16 %v1562, %v1558
    %v2719 = vpack.c.b16 %v1567, %v1563
    %v2720 = vpack.c.b16 %v1568, %v1564
    %v2721 = vpack.c.b16 %v1569, %v1565
    %v2722 = vpack.c.b16 %v1570, %v1566
    %v2723 = vpack.c.b16 %v1575, %v1571
    %v2724 = vpack.c.b16 %v1576, %v1572
    %v2725 = vpack.c.b16 %v1577, %v1573
    %v2726 = vpack.c.b16 %v1578, %v1574
    %v2727 = vpack.c.b16 %v1583, %v1579
    %v2728 = vpack.c.b16 %v1584, %v1580
    %v2729 = vpack.c.b16 %v1585, %v1581
    %v2730 = vpack.c.b16 %v1586, %v1582
    %v2731 = vpack.c.b16 %v1591, %v1587
    %v2732 = vpack.c.b16 %v1592, %v1588
    %v2733 = vpack.c.b16 %v1593, %v1589
    %v2734 = vpack.c.b16 %v1594, %v1590
    %v2735 = vpack.c.b16 %v1599, %v1595
    %v2736 = vpack.c.b16 %v1600, %v1596
    %v2737 = vpack.c.b16 %v1601, %v1597
    %v2738 = vpack.c.b16 %v1602, %v1598
    %v2739 = vpack.c.b16 %v1607, %v1603
    %v2740 = vpack.c.b16 %v1608, %v1604
    %v2741 = vpack.c.b16 %v1609, %v1605
    %v2742 = vpack.c.b16 %v1610, %v1606
    %v2743 = vpack.c.b16 %v1615, %v1611
    %v2744 = vpack.c.b16 %v1616, %v1612
    %v2745 = vpack.c.b16 %v1617, %v1613
    %v2746 = vpack.c.b16 %v1618, %v1614
    %v2747 = vpack.c.b16 %v1623, %v1619
    %v2748 = vpack.c.b16 %v1624, %v1620
    %v2749 = vpack.c.b16 %v1625, %v1621
    %v2750 = vpack.c.b16 %v1626, %v1622
    %v2751 = vpack.c.b16 %v1631, %v1627
    %v2752 = vpack.c.b16 %v1632, %v1628
    %v2753 = vpack.c.b16 %v1633, %v1629
    %v2754 = vpack.c.b16 %v1634, %v1630
    %v2755 = vpack.c.b16 %v1639, %v1635
    %v2756 = vpack.c.b16 %v1640, %v1636
    %v2757 = vpack.c.b16 %v1641, %v1637
    %v2758 = vpack.c.b16 %v1642, %v1638
    %v2759 = vpack.c.b16 %v1647, %v1643
    %v2760 = vpack.c.b16 %v1648, %v1644
    %v2761 = vpack.c.b16 %v1649, %v1645
    %v2762 = vpack.c.b16 %v1650, %v1646
    %v2763 = vpack.c.b16 %v1655, %v1651
    %v2764 = vpack.c.b16 %v1656, %v1652
    %v2765 = vpack.c.b16 %v1657, %v1653
    %v2766 = vpack.c.b16 %v1658, %v1654
    %v2767 = vpack.c.b16 %v1663, %v1659
    %v2768 = vpack.c.b16 %v1664, %v1660
    %v2769 = vpack.c.b16 %v1665, %v1661
    %v2770 = vpack.c.b16 %v1666, %v1662
    %v2771 = vpack.c.b16 %v1671, %v1667
    %v2772 = vpack.c.b16 %v1672, %v1668
    %v2773 = vpack.c.b16 %v1673, %v1669
    %v2774 = vpack.c.b16 %v1674, %v1670
    %v2775 = vpack.c.b16 %v1679, %v1675
    %v2776 = vpack.c.b16 %v1680, %v1676
    %v2777 = vpack.c.b16 %v1681, %v1677
    %v2778 = vpack.c.b16 %v1682, %v1678
    %v2779 = vpack.c.b16 %v1687, %v1683
    %v2780 = vpack.c.b16 %v1688, %v1684
    %v2781 = vpack.c.b16 %v1689, %v1685
    %v2782 = vpack.c.b16 %v1690, %v1686
    %v2783 = vpack.c.b16 %v1695, %v1691
    %v2784 = vpack.c.b16 %v1696, %v1692
    %v2785 = vpack.c.b16 %v1697, %v1693
    %v2786 = vpack.c.b16 %v1698, %v1694
    %v2787 = vpack.c.b16 %v1703, %v1699
    %v2788 = vpack.c.b16 %v1704, %v1700
    %v2789 = vpack.c.b16 %v1705, %v1701
    %v2790 = vpack.c.b16 %v1706, %v1702
    %v2791 = vpack.c.b16 %v1711, %v1707
    %v2792 = vpack.c.b16 %v1712, %v1708
    %v2793 = vpack.c.b16 %v1713, %v1709
    %v2794 = vpack.c.b16 %v1714, %v1710
    %v2795 = vpack.c.b16 %v1719, %v1715
    %v2796 = vpack.c.b16 %v1720, %v1716
    %v2797 = vpack.c.b16 %v1721, %v1717
    %v2798 = vpack.c.b16 %v1722, %v1718
    %v2799 = vpack.c.b16 %v1727, %v1723
    %v2800 = vpack.c.b16 %v1728, %v1724
    %v2801 = vpack.c.b16 %v1729, %v1725
    %v2802 = vpack.c.b16 %v1730, %v1726
    %v2803 = vpack.c.b16 %v1735, %v1731
    %v2804 = vpack.c.b16 %v1736, %v1732
    %v2805 = vpack.c.b16 %v1737, %v1733
    %v2806 = vpack.c.b16 %v1738, %v1734
    %v2807 = vpack.c.b16 %v1743, %v1739
    %v2808 = vpack.c.b16 %v1744, %v1740
    %v2809 = vpack.c.b16 %v1745, %v1741
    %v2810 = vpack.c.b16 %v1746, %v1742
    %v2811 = vpack.c.b16 %v1751, %v1747
    %v2812 = vpack.c.b16 %v1752, %v1748
    %v2813 = vpack.c.b16 %v1753, %v1749
    %v2814 = vpack.c.b16 %v1754, %v1750
    %v2815 = vpack.c.b16 %v1759, %v1755
    %v2816 = vpack.c.b16 %v1760, %v1756
    %v2817 = vpack.c.b16 %v1761, %v1757
    %v2818 = vpack.c.b16 %v1762, %v1758
    %v2819 = vpack.c.b16 %v1767, %v1763
    %v2820 = vpack.c.b16 %v1768, %v1764
    %v2821 = vpack.c.b16 %v1769, %v1765
    %v2822 = vpack.c.b16 %v1770, %v1766
    %v2823 = vpack.c.b16 %v1775, %v1771
    %v2824 = vpack.c.b16 %v1776, %v1772
    %v2825 = vpack.c.b16 %v1777, %v1773
    %v2826 = vpack.c.b16 %v1778, %v1774
    %v2827 = vpack.c.b16 %v1783, %v1779
    %v2828 = vpack.c.b16 %v1784, %v1780
    %v2829 = vpack.c.b16 %v1785, %v1781
    %v2830 = vpack.c.b16 %v1786, %v1782
    %v2831 = vpack.c.b16 %v1791, %v1787
    %v2832 = vpack.c.b16 %v1792, %v1788
    %v2833 = vpack.c.b16 %v1793, %v1789
    %v2834 = vpack.c.b16 %v1794, %v1790
    %v2835 = vpack.c.b16 %v1799, %v1795
    %v2836 = vpack.c.b16 %v1800, %v1796
    %v2837 = vpack.c.b16 %v1801, %v1797
    %v2838 = vpack.c.b16 %v1802, %v1798
    %v2839 = vpack.c.b16 %v1807, %v1803
    %v2840 = vpack.c.b16 %v1808, %v1804
    %v2841 = vpack.c.b16 %v1809, %v1805
    %v2842 = vpack.c.b16 %v1810, %v1806
    %v2843 = vpack.c.b16 %v1815, %v1811
    %v2844 = vpack.c.b16 %v1816, %v1812
    %v2845 = vpack.c.b16 %v1817, %v1813
    %v2846 = vpack.c.b16 %v1818, %v1814
    %v2847 = vpack.c.b16 %v1823, %v1819
    %v2848 = vpack.c.b16 %v1824, %v1820
    %v2849 = vpack.c.b16 %v1825, %v1821
    %v2850 = vpack.c.b16 %v1826, %v1822
    %v2851 = vpack.c.b16 %v1831, %v1827
    %v2852 = vpack.c.b16 %v1832, %v1828
    %v2853 = vpack.c.b16 %v1833, %v1829
    %v2854 = vpack.c.b16 %v1834, %v1830
    %v2855 = vpack.c.b16 %v1839, %v1835
    %v2856 = vpack.c.b16 %v1840, %v1836
    %v2857 = vpack.c.b16 %v1841, %v1837
    %v2858 = vpack.c.b16 %v1842, %v1838
    %v2859 = vpack.c.b16 %v1847, %v1843
    %v2860 = vpack.c.b16 %v1848, %v1844
    %v2861 = vpack.c.b16 %v1849, %v1845
    %v2862 = vpack.c.b16 %v1850, %v1846
    %v2863 = vpack.c.b16 %v1855, %v1851
    %v2864 = vpack.c.b16 %v1856, %v1852
    %v2865 = vpack.c.b16 %v1857, %v1853
    %v2866 = vpack.c.b16 %v1858, %v1854
    %v2867 = vpack.c.b16 %v1863, %v1859
    %v2868 = vpack.c.b16 %v1864, %v1860
    %v2869 = vpack.c.b16 %v1865, %v1861
    %v2870 = vpack.c.b16 %v1866, %v1862
    %v2871 = vpack.c.b16 %v1871, %v1867
    %v2872 = vpack.c.b16 %v1872, %v1868
    %v2873 = vpack.c.b16 %v1873, %v1869
    %v2874 = vpack.c.b16 %v1874, %v1870
    %v2875 = vpack.c.b16 %v1879, %v1875
    %v2876 = vpack.c.b16 %v1880, %v1876
    %v2877 = vpack.c.b16 %v1881, %v1877
    %v2878 = vpack.c.b16 %v1882, %v1878
    %v2879 = vpack.c.b16 %v1887, %v1883
    %v2880 = vpack.c.b16 %v1888, %v1884
    %v2881 = vpack.c.b16 %v1889, %v1885
    %v2882 = vpack.c.b16 %v1890, %v1886
    %v2883 = vpack.c.b16 %v1895, %v1891
    %v2884 = vpack.c.b16 %v1896, %v1892
    %v2885 = vpack.c.b16 %v1897, %v1893
    %v2886 = vpack.c.b16 %v1898, %v1894
    %v2887 = vpack.c.b16 %v1903, %v1899
    %v2888 = vpack.c.b16 %v1904, %v1900
    %v2889 = vpack.c.b16 %v1905, %v1901
    %v2890 = vpack.c.b16 %v1906, %v1902
    %v2891 = vpack.c.b16 %v1911, %v1907
    %v2892 = vpack.c.b16 %v1912, %v1908
    %v2893 = vpack.c.b16 %v1913, %v1909
    %v2894 = vpack.c.b16 %v1914, %v1910
    %v2895 = vpack.c.b16 %v1919, %v1915
    %v2896 = vpack.c.b16 %v1920, %v1916
    %v2897 = vpack.c.b16 %v1921, %v1917
    %v2898 = vpack.c.b16 %v1922, %v1918
    %v2899 = vpack.c.b16 %v1927, %v1923
    %v2900 = vpack.c.b16 %v1928, %v1924
    %v2901 = vpack.c.b16 %v1929, %v1925
    %v2902 = vpack.c.b16 %v1930, %v1926
    %v2903 = vpack.c.b16 %v1935, %v1931
    %v2904 = vpack.c.b16 %v1936, %v1932
    %v2905 = vpack.c.b16 %v1937, %v1933
    %v2906 = vpack.c.b16 %v1938, %v1934
    %v2907 = vpack.c.b16 %v1943, %v1939
    %v2908 = vpack.c.b16 %v1944, %v1940
    %v2909 = vpack.c.b16 %v1945, %v1941
    %v2910 = vpack.c.b16 %v1946, %v1942
    %v2911 = vpack.c.b16 %v1951, %v1947
    %v2912 = vpack.c.b16 %v1952, %v1948
    %v2913 = vpack.c.b16 %v1953, %v1949
    %v2914 = vpack.c.b16 %v1954, %v1950
    %v2915 = vpack.c.b16 %v1959, %v1955
    %v2916 = vpack.c.b16 %v1960, %v1956
    %v2917 = vpack.c.b16 %v1961, %v1957
    %v2918 = vpack.c.b16 %v1962, %v1958
    %v2919 = vpack.c.b16 %v1967, %v1963
    %v2920 = vpack.c.b16 %v1968, %v1964
    %v2921 = vpack.c.b16 %v1969, %v1965
    %v2922 = vpack.c.b16 %v1970, %v1966
    %v2923 = vpack.c.b16 %v1975, %v1971
    %v2924 = vpack.c.b16 %v1976, %v1972
    %v2925 = vpack.c.b16 %v1977, %v1973
    %v2926 = vpack.c.b16 %v1978, %v1974
    %v2927 = vpack.c.b16 %v1983, %v1979
    %v2928 = vpack.c.b16 %v1984, %v1980
    %v2929 = vpack.c.b16 %v1985, %v1981
    %v2930 = vpack.c.b16 %v1986, %v1982
    %v2931 = vpack.c.b16 %v1991, %v1987
    %v2932 = vpack.c.b16 %v1992, %v1988
    %v2933 = vpack.c.b16 %v1993, %v1989
    %v2934 = vpack.c.b16 %v1994, %v1990
    %v2935 = vpack.c.b16 %v1999, %v1995
    %v2936 = vpack.c.b16 %v2000, %v1996
    %v2937 = vpack.c.b16 %v2001, %v1997
    %v2938 = vpack.c.b16 %v2002, %v1998
    %v2939 = vpack.c.b16 %v2007, %v2003
    %v2940 = vpack.c.b16 %v2008, %v2004
    %v2941 = vpack.c.b16 %v2009, %v2005
    %v2942 = vpack.c.b16 %v2010, %v2006
    %v2943 = vpack.c.b16 %v2015, %v2011
    %v2944 = vpack.c.b16 %v2016, %v2012
    %v2945 = vpack.c.b16 %v2017, %v2013
    %v2946 = vpack.c.b16 %v2018, %v2014
    %v2947 = vpack.c.b16 %v2023, %v2019
    %v2948 = vpack.c.b16 %v2024, %v2020
    %v2949 = vpack.c.b16 %v2025, %v2021
    %v2950 = vpack.c.b16 %v2026, %v2022
    %v2951 = vpack.c.b16 %v2031, %v2027
    %v2952 = vpack.c.b16 %v2032, %v2028
    %v2953 = vpack.c.b16 %v2033, %v2029
    %v2954 = vpack.c.b16 %v2034, %v2030
    %v2955 = vpack.c.b16 %v2039, %v2035
    %v2956 = vpack.c.b16 %v2040, %v2036
    %v2957 = vpack.c.b16 %v2041, %v2037
    %v2958 = vpack.c.b16 %v2042, %v2038
    %v2959 = vpack.c.b16 %v2047, %v2043
    %v2960 = vpack.c.b16 %v2048, %v2044
    %v2961 = vpack.c.b16 %v2049, %v2045
    %v2962 = vpack.c.b16 %v2050, %v2046
    %v2963 = vpack.c.b16 %v2055, %v2051
    %v2964 = vpack.c.b16 %v2056, %v2052
    %v2965 = vpack.c.b16 %v2057, %v2053
    %v2966 = vpack.c.b16 %v2058, %v2054
    %v2967 = vpack.c.b16 %v2063, %v2059
    %v2968 = vpack.c.b16 %v2064, %v2060
    %v2969 = vpack.c.b16 %v2065, %v2061
    %v2970 = vpack.c.b16 %v2066, %v2062
    %v2971 = vpack.c.b16 %v2071, %v2067
    %v2972 = vpack.c.b16 %v2072, %v2068
    %v2973 = vpack.c.b16 %v2073, %v2069
    %v2974 = vpack.c.b16 %v2074, %v2070
    %v2975 = vpack.c.b16 %v2079, %v2075
    %v2976 = vpack.c.b16 %v2080, %v2076
    %v2977 = vpack.c.b16 %v2081, %v2077
    %v2978 = vpack.c.b16 %v2082, %v2078
    %v2979 = vpack.c.b16 %v2087, %v2083
    %v2980 = vpack.c.b16 %v2088, %v2084
    %v2981 = vpack.c.b16 %v2089, %v2085
    %v2982 = vpack.c.b16 %v2090, %v2086
    %v2983 = vpack.c.b16 %v2095, %v2091
    %v2984 = vpack.c.b16 %v2096, %v2092
    %v2985 = vpack.c.b16 %v2097, %v2093
    %v2986 = vpack.c.b16 %v2098, %v2094
    %v2987 = vpack.c.b16 %v2103, %v2099
    %v2988 = vpack.c.b16 %v2104, %v2100
    %v2989 = vpack.c.b16 %v2105, %v2101
    %v2990 = vpack.c.b16 %v2106, %v2102
    %v2991 = vpack.c.b16 %v2111, %v2107
    %v2992 = vpack.c.b16 %v2112, %v2108
    %v2993 = vpack.c.b16 %v2113, %v2109
    %v2994 = vpack.c.b16 %v2114, %v2110
    %v2995 = vpack.c.b16 %v2119, %v2115
    %v2996 = vpack.c.b16 %v2120, %v2116
    %v2997 = vpack.c.b16 %v2121, %v2117
    %v2998 = vpack.c.b16 %v2122, %v2118
    %v2999 = vpack.c.b16 %v2127, %v2123
    %v3000 = vpack.c.b16 %v2128, %v2124
    %v3001 = vpack.c.b16 %v2129, %v2125
    %v3002 = vpack.c.b16 %v2130, %v2126
    %v3003 = vpack.c.b16 %v2135, %v2131
    %v3004 = vpack.c.b16 %v2136, %v2132
    %v3005 = vpack.c.b16 %v2137, %v2133
    %v3006 = vpack.c.b16 %v2138, %v2134
    %v3007 = vpack.c.b16 %v2143, %v2139
    %v3008 = vpack.c.b16 %v2144, %v2140
    %v3009 = vpack.c.b16 %v2145, %v2141
    %v3010 = vpack.c.b16 %v2146, %v2142
    %v3011 = vpack.c.b16 %v2151, %v2147
    %v3012 = vpack.c.b16 %v2152, %v2148
    %v3013 = vpack.c.b16 %v2153, %v2149
    %v3014 = vpack.c.b16 %v2154, %v2150
    %v3015 = vpack.c.b16 %v2159, %v2155
    %v3016 = vpack.c.b16 %v2160, %v2156
    %v3017 = vpack.c.b16 %v2161, %v2157
    %v3018 = vpack.c.b16 %v2162, %v2158
    %v3019 = vpack.c.b16 %v2167, %v2163
    %v3020 = vpack.c.b16 %v2168, %v2164
    %v3021 = vpack.c.b16 %v2169, %v2165
    %v3022 = vpack.c.b16 %v2170, %v2166
    %v3023 = vpack.c.b16 %v2175, %v2171
    %v3024 = vpack.c.b16 %v2176, %v2172
    %v3025 = vpack.c.b16 %v2177, %v2173
    %v3026 = vpack.c.b16 %v2178, %v2174
    %v3027 = vpack.c.b16 %v2183, %v2179
    %v3028 = vpack.c.b16 %v2184, %v2180
    %v3029 = vpack.c.b16 %v2185, %v2181
    %v3030 = vpack.c.b16 %v2186, %v2182
    %v3031 = vpack.c.b16 %v2191, %v2187
    %v3032 = vpack.c.b16 %v2192, %v2188
    %v3033 = vpack.c.b16 %v2193, %v2189
    %v3034 = vpack.c.b16 %v2194, %v2190
    %v3035 = vpack.c.b16 %v2199, %v2195
    %v3036 = vpack.c.b16 %v2200, %v2196
    %v3037 = vpack.c.b16 %v2201, %v2197
    %v3038 = vpack.c.b16 %v2202, %v2198
    %v3039 = vpack.c.b16 %v2207, %v2203
    %v3040 = vpack.c.b16 %v2208, %v2204
    %v3041 = vpack.c.b16 %v2209, %v2205
    %v3042 = vpack.c.b16 %v2210, %v2206
    %v3043 = vpack.c.b16 %v2215, %v2211
    %v3044 = vpack.c.b16 %v2216, %v2212
    %v3045 = vpack.c.b16 %v2217, %v2213
    %v3046 = vpack.c.b16 %v2218, %v2214
    %v3047 = vpack.c.b16 %v2223, %v2219
    %v3048 = vpack.c.b16 %v2224, %v2220
    %v3049 = vpack.c.b16 %v2225, %v2221
    %v3050 = vpack.c.b16 %v2226, %v2222
    %v3051 = vpack.c.b16 %v2231, %v2227
    %v3052 = vpack.c.b16 %v2232, %v2228
    %v3053 = vpack.c.b16 %v2233, %v2229
    %v3054 = vpack.c.b16 %v2234, %v2230
    %v3055 = vpack.c.b16 %v2239, %v2235
    %v3056 = vpack.c.b16 %v2240, %v2236
    %v3057 = vpack.c.b16 %v2241, %v2237
    %v3058 = vpack.c.b16 %v2242, %v2238
    %v3059 = vpack.c.b16 %v2247, %v2243
    %v3060 = vpack.c.b16 %v2248, %v2244
    %v3061 = vpack.c.b16 %v2249, %v2245
    %v3062 = vpack.c.b16 %v2250, %v2246
    %v3063 = vpack.c.b16 %v2255, %v2251
    %v3064 = vpack.c.b16 %v2256, %v2252
    %v3065 = vpack.c.b16 %v2257, %v2253
    %v3066 = vpack.c.b16 %v2258, %v2254
    %v3067 = vpack.c.b16 %v2263, %v2259
    %v3068 = vpack.c.b16 %v2264, %v2260
    %v3069 = vpack.c.b16 %v2265, %v2261
    %v3070 = vpack.c.b16 %v2266, %v2262
    %v3071 = vpack.c.b16 %v2271, %v2267
    %v3072 = vpack.c.b16 %v2272, %v2268
    %v3073 = vpack.c.b16 %v2273, %v2269
    %v3074 = vpack.c.b16 %v2274, %v2270
    %v3075 = vpack.c.b16 %v2279, %v2275
    %v3076 = vpack.c.b16 %v2280, %v2276
    %v3077 = vpack.c.b16 %v2281, %v2277
    %v3078 = vpack.c.b16 %v2282, %v2278
    %v3079 = vpack.c.b16 %v2287, %v2283
    %v3080 = vpack.c.b16 %v2288, %v2284
    %v3081 = vpack.c.b16 %v2289, %v2285
    %v3082 = vpack.c.b16 %v2290, %v2286
    %v3083 = vpack.c.b16 %v2295, %v2291
    %v3084 = vpack.c.b16 %v2296, %v2292
    %v3085 = vpack.c.b16 %v2297, %v2293
    %v3086 = vpack.c.b16 %v2298, %v2294
    %v3087 = vpack.c.b16 %v2303, %v2299
    %v3088 = vpack.c.b16 %v2304, %v2300
    %v3089 = vpack.c.b16 %v2305, %v2301
    %v3090 = vpack.c.b16 %v2306, %v2302
    %v3091 = vpack.c.b16 %v2311, %v2307
    %v3092 = vpack.c.b16 %v2312, %v2308
    %v3093 = vpack.c.b16 %v2313, %v2309
    %v3094 = vpack.c.b16 %v2314, %v2310
    %v3095 = vpack.c.b16 %v2319, %v2315
    %v3096 = vpack.c.b16 %v2320, %v2316
    %v3097 = vpack.c.b16 %v2321, %v2317
    %v3098 = vpack.c.b16 %v2322, %v2318
    %v3099 = vpack.c.b16 %v2327, %v2323
    %v3100 = vpack.c.b16 %v2328, %v2324
    %v3101 = vpack.c.b16 %v2329, %v2325
    %v3102 = vpack.c.b16 %v2330, %v2326
    %v3103 = vpack.c.b16 %v2335, %v2331
    %v3104 = vpack.c.b16 %v2336, %v2332
    %v3105 = vpack.c.b16 %v2337, %v2333
    %v3106 = vpack.c.b16 %v2338, %v2334
    %v3107 = vpack.c.b16 %v2343, %v2339
    %v3108 = vpack.c.b16 %v2344, %v2340
    %v3109 = vpack.c.b16 %v2345, %v2341
    %v3110 = vpack.c.b16 %v2346, %v2342
    %v3111 = vpack.c.b16 %v2351, %v2347
    %v3112 = vpack.c.b16 %v2352, %v2348
    %v3113 = vpack.c.b16 %v2353, %v2349
    %v3114 = vpack.c.b16 %v2354, %v2350
    %v3115 = vpack.c.b16 %v2359, %v2355
    %v3116 = vpack.c.b16 %v2360, %v2356
    %v3117 = vpack.c.b16 %v2361, %v2357
    %v3118 = vpack.c.b16 %v2362, %v2358
    %v3119 = vpack.c.b16 %v2367, %v2363
    %v3120 = vpack.c.b16 %v2368, %v2364
    %v3121 = vpack.c.b16 %v2369, %v2365
    %v3122 = vpack.c.b16 %v2370, %v2366
    %v3123 = vpack.c.b16 %v2375, %v2371
    %v3124 = vpack.c.b16 %v2376, %v2372
    %v3125 = vpack.c.b16 %v2377, %v2373
    %v3126 = vpack.c.b16 %v2378, %v2374
    %v3127 = vpack.c.b16 %v2383, %v2379
    %v3128 = vpack.c.b16 %v2384, %v2380
    %v3129 = vpack.c.b16 %v2385, %v2381
    %v3130 = vpack.c.b16 %v2386, %v2382
    %v3131 = vpack.c.b16 %v2391, %v2387
    %v3132 = vpack.c.b16 %v2392, %v2388
    %v3133 = vpack.c.b16 %v2393, %v2389
    %v3134 = vpack.c.b16 %v2394, %v2390
    %v3135 = vpack.c.b16 %v2399, %v2395
    %v3136 = vpack.c.b16 %v2400, %v2396
    %v3137 = vpack.c.b16 %v2401, %v2397
    %v3138 = vpack.c.b16 %v2402, %v2398
    %v3139 = vpack.c.b16 %v2407, %v2403
    %v3140 = vpack.c.b16 %v2408, %v2404
    %v3141 = vpack.c.b16 %v2409, %v2405
    %v3142 = vpack.c.b16 %v2410, %v2406
    %v3143 = vpack.c.b16 %v2415, %v2411
    %v3144 = vpack.c.b16 %v2416, %v2412
    %v3145 = vpack.c.b16 %v2417, %v2413
    %v3146 = vpack.c.b16 %v2418, %v2414
    %v3147 = vpack.c.b16 %v2423, %v2419
    %v3148 = vpack.c.b16 %v2424, %v2420
    %v3149 = vpack.c.b16 %v2425, %v2421
    %v3150 = vpack.c.b16 %v2426, %v2422
    %v3151 = vpack.c.b16 %v2431, %v2427
    %v3152 = vpack.c.b16 %v2432, %v2428
    %v3153 = vpack.c.b16 %v2433, %v2429
    %v3154 = vpack.c.b16 %v2434, %v2430
    %v3155 = vpack.c.b16 %v2439, %v2435
    %v3156 = vpack.c.b16 %v2440, %v2436
    %v3157 = vpack.c.b16 %v2441, %v2437
    %v3158 = vpack.c.b16 %v2442, %v2438
    %v3159 = vpack.c.b16 %v2447, %v2443
    %v3160 = vpack.c.b16 %v2448, %v2444
    %v3161 = vpack.c.b16 %v2449, %v2445
    %v3162 = vpack.c.b16 %v2450, %v2446
    %v3163 = vpack.c.b16 %v2455, %v2451
    %v3164 = vpack.c.b16 %v2456, %v2452
    %v3165 = vpack.c.b16 %v2457, %v2453
    %v3166 = vpack.c.b16 %v2458, %v2454
    %v3167 = vpack.c.b16 %v2463, %v2459
    %v3168 = vpack.c.b16 %v2464, %v2460
    %v3169 = vpack.c.b16 %v2465, %v2461
    %v3170 = vpack.c.b16 %v2466, %v2462
    %v3171 = vpack.c.b16 %v2471, %v2467
    %v3172 = vpack.c.b16 %v2472, %v2468
    %v3173 = vpack.c.b16 %v2473, %v2469
    %v3174 = vpack.c.b16 %v2474, %v2470
    %v3175 = vpack.c.b16 %v2479, %v2475
    %v3176 = vpack.c.b16 %v2480, %v2476
    %v3177 = vpack.c.b16 %v2481, %v2477
    %v3178 = vpack.c.b16 %v2482, %v2478
    %v3179 = vpack.c.b16 %v2487, %v2483
    %v3180 = vpack.c.b16 %v2488, %v2484
    %v3181 = vpack.c.b16 %v2489, %v2485
    %v3182 = vpack.c.b16 %v2490, %v2486
    %v3183 = vpack.c.b16 %v2495, %v2491
    %v3184 = vpack.c.b16 %v2496, %v2492
    %v3185 = vpack.c.b16 %v2497, %v2493
    %v3186 = vpack.c.b16 %v2498, %v2494
    %v3187 = vpack.c.b16 %v2503, %v2499
    %v3188 = vpack.c.b16 %v2504, %v2500
    %v3189 = vpack.c.b16 %v2505, %v2501
    %v3190 = vpack.c.b16 %v2506, %v2502
    %v3191 = vpack.c.b16 %v2511, %v2507
    %v3192 = vpack.c.b16 %v2512, %v2508
    %v3193 = vpack.c.b16 %v2513, %v2509
    %v3194 = vpack.c.b16 %v2514, %v2510
    %v3195 = vpack.c.b16 %v2519, %v2515
    %v3196 = vpack.c.b16 %v2520, %v2516
    %v3197 = vpack.c.b16 %v2521, %v2517
    %v3198 = vpack.c.b16 %v2522, %v2518
    %v3199 = vpack.c.b16 %v2527, %v2523
    %v3200 = vpack.c.b16 %v2528, %v2524
    %v3201 = vpack.c.b16 %v2529, %v2525
    %v3202 = vpack.c.b16 %v2530, %v2526
    %v3203 = vpack.c.b16 %v2535, %v2531
    %v3204 = vpack.c.b16 %v2536, %v2532
    %v3205 = vpack.c.b16 %v2537, %v2533
    %v3206 = vpack.c.b16 %v2538, %v2534
    %v3207 = vpack.c.b16 %v2543, %v2539
    %v3208 = vpack.c.b16 %v2544, %v2540
    %v3209 = vpack.c.b16 %v2545, %v2541
    %v3210 = vpack.c.b16 %v2546, %v2542
    %v3211 = vpack.c.b16 %v2551, %v2547
    %v3212 = vpack.c.b16 %v2552, %v2548
    %v3213 = vpack.c.b16 %v2553, %v2549
    %v3214 = vpack.c.b16 %v2554, %v2550
    %v3215 = vpack.c.b16 %v2559, %v2555
    %v3216 = vpack.c.b16 %v2560, %v2556
    %v3217 = vpack.c.b16 %v2561, %v2557
    %v3218 = vpack.c.b16 %v2562, %v2558
    %v3219 = vpack.c.b16 %v2567, %v2563
    %v3220 = vpack.c.b16 %v2568, %v2564
    %v3221 = vpack.c.b16 %v2569, %v2565
    %v3222 = vpack.c.b16 %v2570, %v2566
    %v3223 = vpack.c.b16 %v2575, %v2571
    %v3224 = vpack.c.b16 %v2576, %v2572
    %v3225 = vpack.c.b16 %v2577, %v2573
    %v3226 = vpack.c.b16 %v2578, %v2574
    %v3227 = vpack.c.b16 %v2583, %v2579
    %v3228 = vpack.c.b16 %v2584, %v2580
    %v3229 = vpack.c.b16 %v2585, %v2581
    %v3230 = vpack.c.b16 %v2586, %v2582
    %v3231 = vpack.c.b16 %v2591, %v2587
    %v3232 = vpack.c.b16 %v2592, %v2588
    %v3233 = vpack.c.b16 %v2593, %v2589
    %v3234 = vpack.c.b16 %v2594, %v2590
    %v3235 = vpack.c.b16 %v2599, %v2595
    %v3236 = vpack.c.b16 %v2600, %v2596
    %v3237 = vpack.c.b16 %v2601, %v2597
    %v3238 = vpack.c.b16 %v2602, %v2598
    %v3239 = vpack.c.b16 %v2607, %v2603
    %v3240 = vpack.c.b16 %v2608, %v2604
    %v3241 = vpack.c.b16 %v2609, %v2605
    %v3242 = vpack.c.b16 %v2610, %v2606
    %v3243 = vpack.c.b16 %v2615, %v2611
    %v3244 = vpack.c.b16 %v2616, %v2612
    %v3245 = vpack.c.b16 %v2617, %v2613
    %v3246 = vpack.c.b16 %v2618, %v2614
    %v3247 = vpack.c.b16 %v2623, %v2619
    %v3248 = vpack.c.b16 %v2624, %v2620
    %v3249 = vpack.c.b16 %v2625, %v2621
    %v3250 = vpack.c.b16 %v2626, %v2622
    %v3251 = vpack.c.b16 %v2631, %v2627
    %v3252 = vpack.c.b16 %v2632, %v2628
    %v3253 = vpack.c.b16 %v2633, %v2629
    %v3254 = vpack.c.b16 %v2634, %v2630
    %v3255 = vpack.c.b16 %v2639, %v2635
    %v3256 = vpack.c.b16 %v2640, %v2636
    %v3257 = vpack.c.b16 %v2641, %v2637
    %v3258 = vpack.c.b16 %v2642, %v2638
    %v3259 = vpack.c.b16 %v2643, %v2643
    %v3260 = vpack.c.b16 %v2644, %v2644
    %v3261 = vpack.c.b16 %v2645, %v2645
    %v3262 = vpack.c.b16 %v2646, %v2646
    %vm3875 = vcmask 146432
    %v3877 = vsel %vm3875, %v785, 0
    %vm3879 = vcmask 1040384
    %v3881 = vsel %vm3879, %v3259, 0
    %v3884 = vsel %vm3879, %v3260, 0
    %v3887 = vsel %vm3879, %v3261, 0
    %v3890 = vsel %vm3879, %v3262, 0
    %3892 = vmatprep.subr.bf16.mxu0 %v2648
    %3893 = vmatpush1.bf16.msra.mxu0 %v2647
    %3894 = vmatprep.subr.bf16.mxu0 %v2652
    %3895 = vmatpush1.bf16.msra.mxu0 %v2651
    %3896 = vmatprep.subr.bf16.mxu0 %v2656
    %3897 = vmatpush1.bf16.msra.mxu0 %v2655
    %3898 = vmatprep.subr.bf16.mxu0 %v2660
    %3899 = vmatpush1.bf16.msra.mxu0 %v2659
    %3900 = vmatprep.subr.bf16.mxu0 %v2664
    %3901 = vmatpush1.bf16.msra.mxu0 %v2663
    %3902 = vmatprep.subr.bf16.mxu0 %v2668
    %3903 = vmatpush1.bf16.msra.mxu0 %v2667
    %3904 = vmatprep.subr.bf16.mxu0 %v2672
    %3905 = vmatpush1.bf16.msra.mxu0 %v2671
    %3906 = vmatprep.subr.bf16.mxu0 %v2676
    %3907 = vmatpush1.bf16.msra.mxu0 %v2675
    %3908 = vmatprep.subr.bf16.mxu0 %v2680
    %3909 = vmatpush1.bf16.msra.mxu0 %v2679
    %3910 = vmatprep.subr.bf16.mxu0 %v2684
    %3911 = vmatpush1.bf16.msra.mxu0 %v2683
    %3912 = vmatprep.subr.bf16.mxu0 %v2688
    %3913 = vmatpush1.bf16.msra.mxu0 %v2687
    %3914 = vmatprep.subr.bf16.mxu0 %v2692
    %3915 = vmatpush1.bf16.msra.mxu0 %v2691
    %3916 = vmatprep.subr.bf16.mxu0 %v2696
    %3917 = vmatpush1.bf16.msra.mxu0 %v2695
    %3918 = vmatprep.subr.bf16.mxu0 %v2700
    %3919 = vmatpush1.bf16.msra.mxu0 %v2699
    %3920 = vmatprep.subr.bf16.mxu0 %v2704
    %3921 = vmatpush1.bf16.msra.mxu0 %v2703
    %3922 = vmatprep.subr.bf16.mxu0 %v2708
    %3923 = vmatpush1.bf16.msra.mxu0 %v2707
    %3924 = vmatprep.mubr.bf16.mxu0 %v701
    %3925 = vmatmul.mubr.bf16.gmra.mrb[0].mxu0 %v687
    %v3926 = vpop.f32.mrb[0].mxu0
    %v3927 = vadd.f32 %v644, %v3926
    %v3928 = vpop.f32.mrb[0].mxu0
    %v3929 = vadd.f32 %v648, %v3928
    %v3930 = vpop.f32.mrb[0].mxu0
    %v3931 = vpop.f32.mrb[0].mxu0
    %3932 = vdwg.mxu0
    %3933 = vmatprep.subr.bf16.mxu0 %v2712
    %3934 = vmatpush1.bf16.msra.mxu0 %v2711
    %3935 = vmatprep.subr.bf16.mxu0 %v2716
    %3936 = vmatpush1.bf16.msra.mxu0 %v2715
    %3937 = vmatprep.subr.bf16.mxu0 %v2720
    %3938 = vmatpush1.bf16.msra.mxu0 %v2719
    %3939 = vmatprep.subr.bf16.mxu0 %v2724
    %3940 = vmatpush1.bf16.msra.mxu0 %v2723
    %3941 = vmatprep.subr.bf16.mxu0 %v2728
    %3942 = vmatpush1.bf16.msra.mxu0 %v2727
    %3943 = vmatprep.subr.bf16.mxu0 %v2732
    %3944 = vmatpush1.bf16.msra.mxu0 %v2731
    %3945 = vmatprep.subr.bf16.mxu0 %v2736
    %3946 = vmatpush1.bf16.msra.mxu0 %v2735
    %3947 = vmatprep.subr.bf16.mxu0 %v2740
    %3948 = vmatpush1.bf16.msra.mxu0 %v2739
    %3949 = vmatprep.subr.bf16.mxu0 %v2744
    %3950 = vmatpush1.bf16.msra.mxu0 %v2743
    %3951 = vmatprep.subr.bf16.mxu0 %v2748
    %3952 = vmatpush1.bf16.msra.mxu0 %v2747
    %3953 = vmatprep.subr.bf16.mxu0 %v2752
    %3954 = vmatpush1.bf16.msra.mxu0 %v2751
    %3955 = vmatprep.subr.bf16.mxu0 %v2756
    %3956 = vmatpush1.bf16.msra.mxu0 %v2755
    %3957 = vmatprep.subr.bf16.mxu0 %v2760
    %3958 = vmatpush1.bf16.msra.mxu0 %v2759
    %3959 = vmatprep.subr.bf16.mxu0 %v2764
    %3960 = vmatpush1.bf16.msra.mxu0 %v2763
    %3961 = vmatprep.subr.bf16.mxu0 %v2768
    %3962 = vmatpush1.bf16.msra.mxu0 %v2767
    %3963 = vmatprep.subr.bf16.mxu0 %v2772
    %3964 = vmatpush1.bf16.msra.mxu0 %v2771
    %3965 = vmatprep.mubr.bf16.mxu0 %v711
    %3966 = vmatmul.mubr.bf16.gmra.mrb[0].mxu0 %v709
    %v3967 = vpop.f32.mrb[0].mxu0
    %v3968 = vadd.f32 %v3927, %v3967
    %v3969 = vpop.f32.mrb[0].mxu0
    %v3970 = vadd.f32 %v3929, %v3969
    %v3971 = vpop.f32.mrb[0].mxu0
    %v3972 = vpop.f32.mrb[0].mxu0
    %3973 = vdwg.mxu0
    %3974 = vmatprep.subr.bf16.mxu0 %v2776
    %3975 = vmatpush1.bf16.msra.mxu0 %v2775
    %3976 = vmatprep.subr.bf16.mxu0 %v2780
    %3977 = vmatpush1.bf16.msra.mxu0 %v2779
    %3978 = vmatprep.subr.bf16.mxu0 %v2784
    %3979 = vmatpush1.bf16.msra.mxu0 %v2783
    %3980 = vmatprep.subr.bf16.mxu0 %v2788
    %3981 = vmatpush1.bf16.msra.mxu0 %v2787
    %3982 = vmatprep.subr.bf16.mxu0 %v2792
    %3983 = vmatpush1.bf16.msra.mxu0 %v2791
    %3984 = vmatprep.subr.bf16.mxu0 %v2796
    %3985 = vmatpush1.bf16.msra.mxu0 %v2795
    %3986 = vmatprep.subr.bf16.mxu0 %v2800
    %3987 = vmatpush1.bf16.msra.mxu0 %v2799
    %3988 = vmatprep.subr.bf16.mxu0 %v2804
    %3989 = vmatpush1.bf16.msra.mxu0 %v2803
    %3990 = vmatprep.subr.bf16.mxu0 %v2808
    %3991 = vmatpush1.bf16.msra.mxu0 %v2807
    %3992 = vmatprep.subr.bf16.mxu0 %v2812
    %3993 = vmatpush1.bf16.msra.mxu0 %v2811
    %3994 = vmatprep.subr.bf16.mxu0 %v2816
    %3995 = vmatpush1.bf16.msra.mxu0 %v2815
    %3996 = vmatprep.subr.bf16.mxu0 %v2820
    %3997 = vmatpush1.bf16.msra.mxu0 %v2819
    %3998 = vmatprep.subr.bf16.mxu0 %v2824
    %3999 = vmatpush1.bf16.msra.mxu0 %v2823
    %4000 = vmatprep.subr.bf16.mxu0 %v2828
    %4001 = vmatpush1.bf16.msra.mxu0 %v2827
    %4002 = vmatprep.subr.bf16.mxu0 %v2832
    %4003 = vmatpush1.bf16.msra.mxu0 %v2831
    %4004 = vmatprep.subr.bf16.mxu0 %v2836
    %4005 = vmatpush1.bf16.msra.mxu0 %v2835
    %4006 = vmatprep.mubr.bf16.mxu0 %v708
    %4007 = vmatmul.mubr.bf16.gmra.mrb[0].mxu0 %v694
    %v4008 = vpop.f32.mrb[0].mxu0
    %v4009 = vadd.f32 %v3968, %v4008
    %v4010 = vpop.f32.mrb[0].mxu0
    %v4011 = vadd.f32 %v3970, %v4010
    %v4012 = vpop.f32.mrb[0].mxu0
    %v4013 = vpop.f32.mrb[0].mxu0
    %4014 = vdwg.mxu0
    %4015 = vmatprep.subr.bf16.mxu0 %v2840
    %4016 = vmatpush1.bf16.msra.mxu0 %v2839
    %4017 = vmatprep.subr.bf16.mxu0 %v2844
    %4018 = vmatpush1.bf16.msra.mxu0 %v2843
    %4019 = vmatprep.subr.bf16.mxu0 %v2848
    %4020 = vmatpush1.bf16.msra.mxu0 %v2847
    %4021 = vmatprep.subr.bf16.mxu0 %v2852
    %4022 = vmatpush1.bf16.msra.mxu0 %v2851
    %4023 = vmatprep.subr.bf16.mxu0 %v2856
    %4024 = vmatpush1.bf16.msra.mxu0 %v2855
    %4025 = vmatprep.subr.bf16.mxu0 %v2860
    %4026 = vmatpush1.bf16.msra.mxu0 %v2859
    %4027 = vmatprep.subr.bf16.mxu0 %v2864
    %4028 = vmatpush1.bf16.msra.mxu0 %v2863
    %4029 = vmatprep.subr.bf16.mxu0 %v2868
    %4030 = vmatpush1.bf16.msra.mxu0 %v2867
    %4031 = vmatprep.subr.bf16.mxu0 %v2872
    %4032 = vmatpush1.bf16.msra.mxu0 %v2871
    %4033 = vmatprep.subr.bf16.mxu0 %v2876
    %4034 = vmatpush1.bf16.msra.mxu0 %v2875
    %4035 = vmatprep.subr.bf16.mxu0 %v2880
    %4036 = vmatpush1.bf16.msra.mxu0 %v2879
    %4037 = vmatprep.subr.bf16.mxu0 %v2884
    %4038 = vmatpush1.bf16.msra.mxu0 %v2883
    %4039 = vmatprep.subr.bf16.mxu0 %v2888
    %4040 = vmatpush1.bf16.msra.mxu0 %v2887
    %4041 = vmatprep.subr.bf16.mxu0 %v2892
    %4042 = vmatpush1.bf16.msra.mxu0 %v2891
    %4043 = vmatprep.subr.bf16.mxu0 %v2896
    %4044 = vmatpush1.bf16.msra.mxu0 %v2895
    %4045 = vmatprep.subr.bf16.mxu0 %v2900
    %4046 = vmatpush1.bf16.msra.mxu0 %v2899
    %4047 = vmatprep.mubr.bf16.mxu0 %v712
    %4048 = vmatmul.mubr.bf16.gmra.mrb[0].mxu0 %v710
    %v4049 = vpop.f32.mrb[0].mxu0
    %v4050 = vadd.f32 %v4009, %v4049
    %v4051 = vpop.f32.mrb[0].mxu0
    %v4052 = vadd.f32 %v4011, %v4051
    %v4053 = vpop.f32.mrb[0].mxu0
    %v4054 = vpop.f32.mrb[0].mxu0
    %4055 = vdwg.mxu0
    %4056 = vmatprep.subr.bf16.mxu0 %v2904
    %4057 = vmatpush1.bf16.msra.mxu0 %v2903
    %4058 = vmatprep.subr.bf16.mxu0 %v2908
    %4059 = vmatpush1.bf16.msra.mxu0 %v2907
    %4060 = vmatprep.subr.bf16.mxu0 %v2912
    %4061 = vmatpush1.bf16.msra.mxu0 %v2911
    %4062 = vmatprep.subr.bf16.mxu0 %v2916
    %4063 = vmatpush1.bf16.msra.mxu0 %v2915
    %4064 = vmatprep.subr.bf16.mxu0 %v2920
    %4065 = vmatpush1.bf16.msra.mxu0 %v2919
    %4066 = vmatprep.subr.bf16.mxu0 %v2924
    %4067 = vmatpush1.bf16.msra.mxu0 %v2923
    %4068 = vmatprep.subr.bf16.mxu0 %v2928
    %4069 = vmatpush1.bf16.msra.mxu0 %v2927
    %4070 = vmatprep.subr.bf16.mxu0 %v2932
    %4071 = vmatpush1.bf16.msra.mxu0 %v2931
    %4072 = vmatprep.subr.bf16.mxu0 %v2936
    %4073 = vmatpush1.bf16.msra.mxu0 %v2935
    %4074 = vmatprep.subr.bf16.mxu0 %v2940
    %4075 = vmatpush1.bf16.msra.mxu0 %v2939
    %4076 = vmatprep.subr.bf16.mxu0 %v2944
    %4077 = vmatpush1.bf16.msra.mxu0 %v2943
    %4078 = vmatprep.subr.bf16.mxu0 %v2948
    %4079 = vmatpush1.bf16.msra.mxu0 %v2947
    %4080 = vmatprep.subr.bf16.mxu0 %v2952
    %4081 = vmatpush1.bf16.msra.mxu0 %v2951
    %4082 = vmatprep.subr.bf16.mxu0 %v2956
    %4083 = vmatpush1.bf16.msra.mxu0 %v2955
    %4084 = vmatprep.subr.bf16.mxu0 %v2960
    %4085 = vmatpush1.bf16.msra.mxu0 %v2959
    %4086 = vmatprep.subr.bf16.mxu0 %v2964
    %4087 = vmatpush1.bf16.msra.mxu0 %v2963
    %4088 = vmatprep.mubr.bf16.mxu0 %v750
    %4089 = vmatmul.mubr.bf16.gmra.mrb[0].mxu0 %v736
    %v4090 = vpop.f32.mrb[0].mxu0
    %v4091 = vadd.f32 %v4050, %v4090
    %v4092 = vpop.f32.mrb[0].mxu0
    %v4093 = vadd.f32 %v4052, %v4092
    %v4094 = vpop.f32.mrb[0].mxu0
    %v4095 = vpop.f32.mrb[0].mxu0
    %4096 = vdwg.mxu0
    %4097 = vmatprep.subr.bf16.mxu0 %v2968
    %4098 = vmatpush1.bf16.msra.mxu0 %v2967
    %4099 = vmatprep.subr.bf16.mxu0 %v2972
    %4100 = vmatpush1.bf16.msra.mxu0 %v2971
    %4101 = vmatprep.subr.bf16.mxu0 %v2976
    %4102 = vmatpush1.bf16.msra.mxu0 %v2975
    %4103 = vmatprep.subr.bf16.mxu0 %v2980
    %4104 = vmatpush1.bf16.msra.mxu0 %v2979
    %4105 = vmatprep.subr.bf16.mxu0 %v2984
    %4106 = vmatpush1.bf16.msra.mxu0 %v2983
    %4107 = vmatprep.subr.bf16.mxu0 %v2988
    %4108 = vmatpush1.bf16.msra.mxu0 %v2987
    %4109 = vmatprep.subr.bf16.mxu0 %v2992
    %4110 = vmatpush1.bf16.msra.mxu0 %v2991
    %4111 = vmatprep.subr.bf16.mxu0 %v2996
    %4112 = vmatpush1.bf16.msra.mxu0 %v2995
    %4113 = vmatprep.subr.bf16.mxu0 %v3000
    %4114 = vmatpush1.bf16.msra.mxu0 %v2999
    %4115 = vmatprep.subr.bf16.mxu0 %v3004
    %4116 = vmatpush1.bf16.msra.mxu0 %v3003
    %4117 = vmatprep.subr.bf16.mxu0 %v3008
    %4118 = vmatpush1.bf16.msra.mxu0 %v3007
    %4119 = vmatprep.subr.bf16.mxu0 %v3012
    %4120 = vmatpush1.bf16.msra.mxu0 %v3011
    %4121 = vmatprep.subr.bf16.mxu0 %v3016
    %4122 = vmatpush1.bf16.msra.mxu0 %v3015
    %4123 = vmatprep.subr.bf16.mxu0 %v3020
    %4124 = vmatpush1.bf16.msra.mxu0 %v3019
    %4125 = vmatprep.subr.bf16.mxu0 %v3024
    %4126 = vmatpush1.bf16.msra.mxu0 %v3023
    %4127 = vmatprep.subr.bf16.mxu0 %v3028
    %4128 = vmatpush1.bf16.msra.mxu0 %v3027
    %4129 = vmatprep.mubr.bf16.mxu0 %v760
    %4130 = vmatmul.mubr.bf16.gmra.mrb[0].mxu0 %v758
    %v4131 = vpop.f32.mrb[0].mxu0
    %v4132 = vadd.f32 %v4091, %v4131
    %v4133 = vpop.f32.mrb[0].mxu0
    %v4134 = vadd.f32 %v4093, %v4133
    %v4135 = vpop.f32.mrb[0].mxu0
    %v4136 = vpop.f32.mrb[0].mxu0
    %4137 = vdwg.mxu0
    %4138 = vmatprep.subr.bf16.mxu0 %v3032
    %4139 = vmatpush1.bf16.msra.mxu0 %v3031
    %4140 = vmatprep.subr.bf16.mxu0 %v3036
    %4141 = vmatpush1.bf16.msra.mxu0 %v3035
    %4142 = vmatprep.subr.bf16.mxu0 %v3040
    %4143 = vmatpush1.bf16.msra.mxu0 %v3039
    %4144 = vmatprep.subr.bf16.mxu0 %v3044
    %4145 = vmatpush1.bf16.msra.mxu0 %v3043
    %4146 = vmatprep.subr.bf16.mxu0 %v3048
    %4147 = vmatpush1.bf16.msra.mxu0 %v3047
    %4148 = vmatprep.subr.bf16.mxu0 %v3052
    %4149 = vmatpush1.bf16.msra.mxu0 %v3051
    %4150 = vmatprep.subr.bf16.mxu0 %v3056
    %4151 = vmatpush1.bf16.msra.mxu0 %v3055
    %4152 = vmatprep.subr.bf16.mxu0 %v3060
    %4153 = vmatpush1.bf16.msra.mxu0 %v3059
    %4154 = vmatprep.subr.bf16.mxu0 %v3064
    %4155 = vmatpush1.bf16.msra.mxu0 %v3063
    %4156 = vmatprep.subr.bf16.mxu0 %v3068
    %4157 = vmatpush1.bf16.msra.mxu0 %v3067
    %4158 = vmatprep.subr.bf16.mxu0 %v3072
    %4159 = vmatpush1.bf16.msra.mxu0 %v3071
    %4160 = vmatprep.subr.bf16.mxu0 %v3076
    %4161 = vmatpush1.bf16.msra.mxu0 %v3075
    %4162 = vmatprep.subr.bf16.mxu0 %v3080
    %4163 = vmatpush1.bf16.msra.mxu0 %v3079
    %4164 = vmatprep.subr.bf16.mxu0 %v3084
    %4165 = vmatpush1.bf16.msra.mxu0 %v3083
    %4166 = vmatprep.subr.bf16.mxu0 %v3088
    %4167 = vmatpush1.bf16.msra.mxu0 %v3087
    %4168 = vmatprep.subr.bf16.mxu0 %v3092
    %4169 = vmatpush1.bf16.msra.mxu0 %v3091
    %4170 = vmatprep.mubr.bf16.mxu0 %v757
    %4171 = vmatmul.mubr.bf16.gmra.mrb[0].mxu0 %v743
    %v4172 = vpop.f32.mrb[0].mxu0
    %v4173 = vadd.f32 %v4132, %v4172
    %v4174 = vpop.f32.mrb[0].mxu0
    %v4175 = vadd.f32 %v4134, %v4174
    %v4176 = vpop.f32.mrb[0].mxu0
    %v4177 = vpop.f32.mrb[0].mxu0
    %4178 = vdwg.mxu0
    %4179 = vmatprep.subr.bf16.mxu0 %v3096
    %4180 = vmatpush1.bf16.msra.mxu0 %v3095
    %4181 = vmatprep.subr.bf16.mxu0 %v3100
    %4182 = vmatpush1.bf16.msra.mxu0 %v3099
    %4183 = vmatprep.subr.bf16.mxu0 %v3104
    %4184 = vmatpush1.bf16.msra.mxu0 %v3103
    %4185 = vmatprep.subr.bf16.mxu0 %v3108
    %4186 = vmatpush1.bf16.msra.mxu0 %v3107
    %4187 = vmatprep.subr.bf16.mxu0 %v3112
    %4188 = vmatpush1.bf16.msra.mxu0 %v3111
    %4189 = vmatprep.subr.bf16.mxu0 %v3116
    %4190 = vmatpush1.bf16.msra.mxu0 %v3115
    %4191 = vmatprep.subr.bf16.mxu0 %v3120
    %4192 = vmatpush1.bf16.msra.mxu0 %v3119
    %4193 = vmatprep.subr.bf16.mxu0 %v3124
    %4194 = vmatpush1.bf16.msra.mxu0 %v3123
    %4195 = vmatprep.subr.bf16.mxu0 %v3128
    %4196 = vmatpush1.bf16.msra.mxu0 %v3127
    %4197 = vmatprep.subr.bf16.mxu0 %v3132
    %4198 = vmatpush1.bf16.msra.mxu0 %v3131
    %4199 = vmatprep.subr.bf16.mxu0 %v3136
    %4200 = vmatpush1.bf16.msra.mxu0 %v3135
    %4201 = vmatprep.subr.bf16.mxu0 %v3140
    %4202 = vmatpush1.bf16.msra.mxu0 %v3139
    %4203 = vmatprep.subr.bf16.mxu0 %v3144
    %4204 = vmatpush1.bf16.msra.mxu0 %v3143
    %4205 = vmatprep.subr.bf16.mxu0 %v3148
    %4206 = vmatpush1.bf16.msra.mxu0 %v3147
    %4207 = vmatprep.subr.bf16.mxu0 %v3152
    %4208 = vmatpush1.bf16.msra.mxu0 %v3151
    %4209 = vmatprep.subr.bf16.mxu0 %v3156
    %4210 = vmatpush1.bf16.msra.mxu0 %v3155
    %4211 = vmatprep.mubr.bf16.mxu0 %v761
    %4212 = vmatmul.mubr.bf16.gmra.mrb[0].mxu0 %v759
    %v4213 = vpop.f32.mrb[0].mxu0
    %v4214 = vadd.f32 %v4173, %v4213
    %v4215 = vpop.f32.mrb[0].mxu0
    %v4216 = vadd.f32 %v4175, %v4215
    %v4217 = vpop.f32.mrb[0].mxu0
    %v4218 = vpop.f32.mrb[0].mxu0
    %4219 = vdwg.mxu0
    %4220 = vmatprep.subr.bf16.mxu0 %v3160
    %4221 = vmatpush1.bf16.msra.mxu0 %v3159
    %4222 = vmatprep.subr.bf16.mxu0 %v3164
    %4223 = vmatpush1.bf16.msra.mxu0 %v3163
    %4224 = vmatprep.subr.bf16.mxu0 %v3168
    %4225 = vmatpush1.bf16.msra.mxu0 %v3167
    %4226 = vmatprep.subr.bf16.mxu0 %v3172
    %4227 = vmatpush1.bf16.msra.mxu0 %v3171
    %4228 = vmatprep.subr.bf16.mxu0 %v3176
    %4229 = vmatpush1.bf16.msra.mxu0 %v3175
    %4230 = vmatprep.subr.bf16.mxu0 %v3180
    %4231 = vmatpush1.bf16.msra.mxu0 %v3179
    %4232 = vmatprep.subr.bf16.mxu0 %v3184
    %4233 = vmatpush1.bf16.msra.mxu0 %v3183
    %4234 = vmatprep.subr.bf16.mxu0 %v3188
    %4235 = vmatpush1.bf16.msra.mxu0 %v3187
    %4236 = vmatprep.subr.bf16.mxu0 %v3192
    %4237 = vmatpush1.bf16.msra.mxu0 %v3191
    %4238 = vmatprep.subr.bf16.mxu0 %v3196
    %4239 = vmatpush1.bf16.msra.mxu0 %v3195
    %4240 = vmatprep.subr.bf16.mxu0 %v3200
    %4241 = vmatpush1.bf16.msra.mxu0 %v3199
    %4242 = vmatprep.subr.bf16.mxu0 %v3204
    %4243 = vmatpush1.bf16.msra.mxu0 %v3203
    %4244 = vmatprep.subr.bf16.mxu0 %v3208
    %4245 = vmatpush1.bf16.msra.mxu0 %v3207
    %4246 = vmatprep.subr.bf16.mxu0 %v3212
    %4247 = vmatpush1.bf16.msra.mxu0 %v3211
    %4248 = vmatprep.subr.bf16.mxu0 %v3216
    %4249 = vmatpush1.bf16.msra.mxu0 %v3215
    %4250 = vmatprep.subr.bf16.mxu0 %v3220
    %4251 = vmatpush1.bf16.msra.mxu0 %v3219
    %4252 = vmatprep.mubr.bf16.mxu0 %v783
    %4253 = vmatmul.mubr.bf16.gmra.mrb[0].mxu0 %v776
    %v4254 = vpop.f32.mrb[0].mxu0
    %v4255 = vadd.f32 %v4214, %v4254
    %v4256 = vpop.f32.mrb[0].mxu0
    %v4257 = vadd.f32 %v4216, %v4256
    %v4258 = vpop.f32.mrb[0].mxu0
    %v4259 = vpop.f32.mrb[0].mxu0
    %4260 = vdwg.mxu0
    %4261 = vmatprep.subr.bf16.mxu0 %v3224
    %4262 = vmatpush1.bf16.msra.mxu0 %v3223
    %4263 = vmatprep.subr.bf16.mxu0 %v3228
    %4264 = vmatpush1.bf16.msra.mxu0 %v3227
    %4265 = vmatprep.subr.bf16.mxu0 %v3232
    %4266 = vmatpush1.bf16.msra.mxu0 %v3231
    %4267 = vmatprep.subr.bf16.mxu0 %v3236
    %4268 = vmatpush1.bf16.msra.mxu0 %v3235
    %4269 = vmatprep.subr.bf16.mxu0 %v3240
    %4270 = vmatpush1.bf16.msra.mxu0 %v3239
    %4271 = vmatprep.subr.bf16.mxu0 %v3244
    %4272 = vmatpush1.bf16.msra.mxu0 %v3243
    %4273 = vmatprep.subr.bf16.mxu0 %v3248
    %4274 = vmatpush1.bf16.msra.mxu0 %v3247
    %4275 = vmatprep.subr.bf16.mxu0 %v3252
    %4276 = vmatpush1.bf16.msra.mxu0 %v3251
    %4277 = vmatprep.subr.bf16.mxu0 %v3256
    %4278 = vmatpush1.bf16.msra.mxu0 %v3255
    %4279 = vmatprep.subr.bf16.mxu0 %v3884
    %4280 = vmatpush1.bf16.msra.mxu0 %v3881
    %4281 = vmatprep.subr.bf16.mxu0 0
    %4282 = vmatpush1.bf16.msra.mxu0 0
    %4283 = vmatprep.subr.bf16.mxu0 0
    %4284 = vmatpush1.bf16.msra.mxu0 0
    %4285 = vmatprep.subr.bf16.mxu0 0
    %4286 = vmatpush1.bf16.msra.mxu0 0
    %4287 = vmatprep.subr.bf16.mxu0 0
    %4288 = vmatpush1.bf16.msra.mxu0 0
    %4289 = vmatprep.subr.bf16.mxu0 0
    %4290 = vmatpush1.bf16.msra.mxu0 0
    %4291 = vmatprep.subr.bf16.mxu0 0
    %4292 = vmatpush1.bf16.msra.mxu0 0
    %4293 = vmatprep.mubr.bf16.mxu0 %v3877
    %4294 = vmatmul.mubr.bf16.gmra.mrb[0].mxu0 %v784
    %v4295 = vpop.f32.mrb[0].mxu0
    %v4296 = vadd.f32 %v4255, %v4295
    %v4297 = vpop.f32.mrb[0].mxu0
    %v4298 = vadd.f32 %v4257, %v4297
    %v4299 = vpop.f32.mrb[0].mxu0
    %v4300 = vpop.f32.mrb[0].mxu0
    %4301 = vdwg.mxu0
    %4302 = vmatprep.subr.bf16.mxu0 %v2650
    %4303 = vmatpush1.bf16.msra.mxu0 %v2649
    %4304 = vmatprep.subr.bf16.mxu0 %v2654
    %4305 = vmatpush1.bf16.msra.mxu0 %v2653
    %4306 = vmatprep.subr.bf16.mxu0 %v2658
    %4307 = vmatpush1.bf16.msra.mxu0 %v2657
    %4308 = vmatprep.subr.bf16.mxu0 %v2662
    %4309 = vmatpush1.bf16.msra.mxu0 %v2661
    %4310 = vmatprep.subr.bf16.mxu0 %v2666
    %4311 = vmatpush1.bf16.msra.mxu0 %v2665
    %4312 = vmatprep.subr.bf16.mxu0 %v2670
    %4313 = vmatpush1.bf16.msra.mxu0 %v2669
    %4314 = vmatprep.subr.bf16.mxu0 %v2674
    %4315 = vmatpush1.bf16.msra.mxu0 %v2673
    %4316 = vmatprep.subr.bf16.mxu0 %v2678
    %4317 = vmatpush1.bf16.msra.mxu0 %v2677
    %4318 = vmatprep.subr.bf16.mxu0 %v2682
    %4319 = vmatpush1.bf16.msra.mxu0 %v2681
    %4320 = vmatprep.subr.bf16.mxu0 %v2686
    %4321 = vmatpush1.bf16.msra.mxu0 %v2685
    %4322 = vmatprep.subr.bf16.mxu0 %v2690
    %4323 = vmatpush1.bf16.msra.mxu0 %v2689
    %4324 = vmatprep.subr.bf16.mxu0 %v2694
    %4325 = vmatpush1.bf16.msra.mxu0 %v2693
    %4326 = vmatprep.subr.bf16.mxu0 %v2698
    %4327 = vmatpush1.bf16.msra.mxu0 %v2697
    %4328 = vmatprep.subr.bf16.mxu0 %v2702
    %4329 = vmatpush1.bf16.msra.mxu0 %v2701
    %4330 = vmatprep.subr.bf16.mxu0 %v2706
    %4331 = vmatpush1.bf16.msra.mxu0 %v2705
    %4332 = vmatprep.subr.bf16.mxu0 %v2710
    %4333 = vmatpush1.bf16.msra.mxu0 %v2709
    %4334 = vmatprep.mubr.bf16.mxu0 %v701
    %4335 = vmatmul.mubr.bf16.gmra.mrb[0].mxu0 %v687
    %v4336 = vpop.f32.mrb[0].mxu0
    %v4337 = vadd.f32 %v652, %v4336
    %v4338 = vpop.f32.mrb[0].mxu0
    %v4339 = vadd.f32 %v656, %v4338
    %v4340 = vpop.f32.mrb[0].mxu0
    %v4341 = vpop.f32.mrb[0].mxu0
    %4342 = vdwg.mxu0
    %4343 = vmatprep.subr.bf16.mxu0 %v2714
    %4344 = vmatpush1.bf16.msra.mxu0 %v2713
    %4345 = vmatprep.subr.bf16.mxu0 %v2718
    %4346 = vmatpush1.bf16.msra.mxu0 %v2717
    %4347 = vmatprep.subr.bf16.mxu0 %v2722
    %4348 = vmatpush1.bf16.msra.mxu0 %v2721
    %4349 = vmatprep.subr.bf16.mxu0 %v2726
    %4350 = vmatpush1.bf16.msra.mxu0 %v2725
    %4351 = vmatprep.subr.bf16.mxu0 %v2730
    %4352 = vmatpush1.bf16.msra.mxu0 %v2729
    %4353 = vmatprep.subr.bf16.mxu0 %v2734
    %4354 = vmatpush1.bf16.msra.mxu0 %v2733
    %4355 = vmatprep.subr.bf16.mxu0 %v2738
    %4356 = vmatpush1.bf16.msra.mxu0 %v2737
    %4357 = vmatprep.subr.bf16.mxu0 %v2742
    %4358 = vmatpush1.bf16.msra.mxu0 %v2741
    %4359 = vmatprep.subr.bf16.mxu0 %v2746
    %4360 = vmatpush1.bf16.msra.mxu0 %v2745
    %4361 = vmatprep.subr.bf16.mxu0 %v2750
    %4362 = vmatpush1.bf16.msra.mxu0 %v2749
    %4363 = vmatprep.subr.bf16.mxu0 %v2754
    %4364 = vmatpush1.bf16.msra.mxu0 %v2753
    %4365 = vmatprep.subr.bf16.mxu0 %v2758
    %4366 = vmatpush1.bf16.msra.mxu0 %v2757
    %4367 = vmatprep.subr.bf16.mxu0 %v2762
    %4368 = vmatpush1.bf16.msra.mxu0 %v2761
    %4369 = vmatprep.subr.bf16.mxu0 %v2766
    %4370 = vmatpush1.bf16.msra.mxu0 %v2765
    %4371 = vmatprep.subr.bf16.mxu0 %v2770
    %4372 = vmatpush1.bf16.msra.mxu0 %v2769
    %4373 = vmatprep.subr.bf16.mxu0 %v2774
    %4374 = vmatpush1.bf16.msra.mxu0 %v2773
    %4375 = vmatprep.mubr.bf16.mxu0 %v711
    %4376 = vmatmul.mubr.bf16.gmra.mrb[0].mxu0 %v709
    %v4377 = vpop.f32.mrb[0].mxu0
    %v4378 = vadd.f32 %v4337, %v4377
    %v4379 = vpop.f32.mrb[0].mxu0
    %v4380 = vadd.f32 %v4339, %v4379
    %v4381 = vpop.f32.mrb[0].mxu0
    %v4382 = vpop.f32.mrb[0].mxu0
    %4383 = vdwg.mxu0
    %4384 = vmatprep.subr.bf16.mxu0 %v2778
    %4385 = vmatpush1.bf16.msra.mxu0 %v2777
    %4386 = vmatprep.subr.bf16.mxu0 %v2782
    %4387 = vmatpush1.bf16.msra.mxu0 %v2781
    %4388 = vmatprep.subr.bf16.mxu0 %v2786
    %4389 = vmatpush1.bf16.msra.mxu0 %v2785
    %4390 = vmatprep.subr.bf16.mxu0 %v2790
    %4391 = vmatpush1.bf16.msra.mxu0 %v2789
    %4392 = vmatprep.subr.bf16.mxu0 %v2794
    %4393 = vmatpush1.bf16.msra.mxu0 %v2793
    %4394 = vmatprep.subr.bf16.mxu0 %v2798
    %4395 = vmatpush1.bf16.msra.mxu0 %v2797
    %4396 = vmatprep.subr.bf16.mxu0 %v2802
    %4397 = vmatpush1.bf16.msra.mxu0 %v2801
    %4398 = vmatprep.subr.bf16.mxu0 %v2806
    %4399 = vmatpush1.bf16.msra.mxu0 %v2805
    %4400 = vmatprep.subr.bf16.mxu0 %v2810
    %4401 = vmatpush1.bf16.msra.mxu0 %v2809
    %4402 = vmatprep.subr.bf16.mxu0 %v2814
    %4403 = vmatpush1.bf16.msra.mxu0 %v2813
    %4404 = vmatprep.subr.bf16.mxu0 %v2818
    %4405 = vmatpush1.bf16.msra.mxu0 %v2817
    %4406 = vmatprep.subr.bf16.mxu0 %v2822
    %4407 = vmatpush1.bf16.msra.mxu0 %v2821
    %4408 = vmatprep.subr.bf16.mxu0 %v2826
    %4409 = vmatpush1.bf16.msra.mxu0 %v2825
    %4410 = vmatprep.subr.bf16.mxu0 %v2830
    %4411 = vmatpush1.bf16.msra.mxu0 %v2829
    %4412 = vmatprep.subr.bf16.mxu0 %v2834
    %4413 = vmatpush1.bf16.msra.mxu0 %v2833
    %4414 = vmatprep.subr.bf16.mxu0 %v2838
    %4415 = vmatpush1.bf16.msra.mxu0 %v2837
    %4416 = vmatprep.mubr.bf16.mxu0 %v708
    %4417 = vmatmul.mubr.bf16.gmra.mrb[0].mxu0 %v694
    %v4418 = vpop.f32.mrb[0].mxu0
    %v4419 = vadd.f32 %v4378, %v4418
    %v4420 = vpop.f32.mrb[0].mxu0
    %v4421 = vadd.f32 %v4380, %v4420
    %v4422 = vpop.f32.mrb[0].mxu0
    %v4423 = vpop.f32.mrb[0].mxu0
    %4424 = vdwg.mxu0
    %4425 = vmatprep.subr.bf16.mxu0 %v2842
    %4426 = vmatpush1.bf16.msra.mxu0 %v2841
    %4427 = vmatprep.subr.bf16.mxu0 %v2846
    %4428 = vmatpush1.bf16.msra.mxu0 %v2845
    %4429 = vmatprep.subr.bf16.mxu0 %v2850
    %4430 = vmatpush1.bf16.msra.mxu0 %v2849
    %4431 = vmatprep.subr.bf16.mxu0 %v2854
    %4432 = vmatpush1.bf16.msra.mxu0 %v2853
    %4433 = vmatprep.subr.bf16.mxu0 %v2858
    %4434 = vmatpush1.bf16.msra.mxu0 %v2857
    %4435 = vmatprep.subr.bf16.mxu0 %v2862
    %4436 = vmatpush1.bf16.msra.mxu0 %v2861
    %4437 = vmatprep.subr.bf16.mxu0 %v2866
    %4438 = vmatpush1.bf16.msra.mxu0 %v2865
    %4439 = vmatprep.subr.bf16.mxu0 %v2870
    %4440 = vmatpush1.bf16.msra.mxu0 %v2869
    %4441 = vmatprep.subr.bf16.mxu0 %v2874
    %4442 = vmatpush1.bf16.msra.mxu0 %v2873
    %4443 = vmatprep.subr.bf16.mxu0 %v2878
    %4444 = vmatpush1.bf16.msra.mxu0 %v2877
    %4445 = vmatprep.subr.bf16.mxu0 %v2882
    %4446 = vmatpush1.bf16.msra.mxu0 %v2881
    %4447 = vmatprep.subr.bf16.mxu0 %v2886
    %4448 = vmatpush1.bf16.msra.mxu0 %v2885
    %4449 = vmatprep.subr.bf16.mxu0 %v2890
    %4450 = vmatpush1.bf16.msra.mxu0 %v2889
    %4451 = vmatprep.subr.bf16.mxu0 %v2894
    %4452 = vmatpush1.bf16.msra.mxu0 %v2893
    %4453 = vmatprep.subr.bf16.mxu0 %v2898
    %4454 = vmatpush1.bf16.msra.mxu0 %v2897
    %4455 = vmatprep.subr.bf16.mxu0 %v2902
    %4456 = vmatpush1.bf16.msra.mxu0 %v2901
    %4457 = vmatprep.mubr.bf16.mxu0 %v712
    %4458 = vmatmul.mubr.bf16.gmra.mrb[0].mxu0 %v710
    %v4459 = vpop.f32.mrb[0].mxu0
    %v4460 = vadd.f32 %v4419, %v4459
    %v4461 = vpop.f32.mrb[0].mxu0
    %v4462 = vadd.f32 %v4421, %v4461
    %v4463 = vpop.f32.mrb[0].mxu0
    %v4464 = vpop.f32.mrb[0].mxu0
    %4465 = vdwg.mxu0
    %4466 = vmatprep.subr.bf16.mxu0 %v2906
    %4467 = vmatpush1.bf16.msra.mxu0 %v2905
    %4468 = vmatprep.subr.bf16.mxu0 %v2910
    %4469 = vmatpush1.bf16.msra.mxu0 %v2909
    %4470 = vmatprep.subr.bf16.mxu0 %v2914
    %4471 = vmatpush1.bf16.msra.mxu0 %v2913
    %4472 = vmatprep.subr.bf16.mxu0 %v2918
    %4473 = vmatpush1.bf16.msra.mxu0 %v2917
    %4474 = vmatprep.subr.bf16.mxu0 %v2922
    %4475 = vmatpush1.bf16.msra.mxu0 %v2921
    %4476 = vmatprep.subr.bf16.mxu0 %v2926
    %4477 = vmatpush1.bf16.msra.mxu0 %v2925
    %4478 = vmatprep.subr.bf16.mxu0 %v2930
    %4479 = vmatpush1.bf16.msra.mxu0 %v2929
    %4480 = vmatprep.subr.bf16.mxu0 %v2934
    %4481 = vmatpush1.bf16.msra.mxu0 %v2933
    %4482 = vmatprep.subr.bf16.mxu0 %v2938
    %4483 = vmatpush1.bf16.msra.mxu0 %v2937
    %4484 = vmatprep.subr.bf16.mxu0 %v2942
    %4485 = vmatpush1.bf16.msra.mxu0 %v2941
    %4486 = vmatprep.subr.bf16.mxu0 %v2946
    %4487 = vmatpush1.bf16.msra.mxu0 %v2945
    %4488 = vmatprep.subr.bf16.mxu0 %v2950
    %4489 = vmatpush1.bf16.msra.mxu0 %v2949
    %4490 = vmatprep.subr.bf16.mxu0 %v2954
    %4491 = vmatpush1.bf16.msra.mxu0 %v2953
    %4492 = vmatprep.subr.bf16.mxu0 %v2958
    %4493 = vmatpush1.bf16.msra.mxu0 %v2957
    %4494 = vmatprep.subr.bf16.mxu0 %v2962
    %4495 = vmatpush1.bf16.msra.mxu0 %v2961
    %4496 = vmatprep.subr.bf16.mxu0 %v2966
    %4497 = vmatpush1.bf16.msra.mxu0 %v2965
    %4498 = vmatprep.mubr.bf16.mxu0 %v750
    %4499 = vmatmul.mubr.bf16.gmra.mrb[0].mxu0 %v736
    %v4500 = vpop.f32.mrb[0].mxu0
    %v4501 = vadd.f32 %v4460, %v4500
    %v4502 = vpop.f32.mrb[0].mxu0
    %v4503 = vadd.f32 %v4462, %v4502
    %v4504 = vpop.f32.mrb[0].mxu0
    %v4505 = vpop.f32.mrb[0].mxu0
    %4506 = vdwg.mxu0
    %4507 = vmatprep.subr.bf16.mxu0 %v2970
    %4508 = vmatpush1.bf16.msra.mxu0 %v2969
    %4509 = vmatprep.subr.bf16.mxu0 %v2974
    %4510 = vmatpush1.bf16.msra.mxu0 %v2973
    %4511 = vmatprep.subr.bf16.mxu0 %v2978
    %4512 = vmatpush1.bf16.msra.mxu0 %v2977
    %4513 = vmatprep.subr.bf16.mxu0 %v2982
    %4514 = vmatpush1.bf16.msra.mxu0 %v2981
    %4515 = vmatprep.subr.bf16.mxu0 %v2986
    %4516 = vmatpush1.bf16.msra.mxu0 %v2985
    %4517 = vmatprep.subr.bf16.mxu0 %v2990
    %4518 = vmatpush1.bf16.msra.mxu0 %v2989
    %4519 = vmatprep.subr.bf16.mxu0 %v2994
    %4520 = vmatpush1.bf16.msra.mxu0 %v2993
    %4521 = vmatprep.subr.bf16.mxu0 %v2998
    %4522 = vmatpush1.bf16.msra.mxu0 %v2997
    %4523 = vmatprep.subr.bf16.mxu0 %v3002
    %4524 = vmatpush1.bf16.msra.mxu0 %v3001
    %4525 = vmatprep.subr.bf16.mxu0 %v3006
    %4526 = vmatpush1.bf16.msra.mxu0 %v3005
    %4527 = vmatprep.subr.bf16.mxu0 %v3010
    %4528 = vmatpush1.bf16.msra.mxu0 %v3009
    %4529 = vmatprep.subr.bf16.mxu0 %v3014
    %4530 = vmatpush1.bf16.msra.mxu0 %v3013
    %4531 = vmatprep.subr.bf16.mxu0 %v3018
    %4532 = vmatpush1.bf16.msra.mxu0 %v3017
    %4533 = vmatprep.subr.bf16.mxu0 %v3022
    %4534 = vmatpush1.bf16.msra.mxu0 %v3021
    %4535 = vmatprep.subr.bf16.mxu0 %v3026
    %4536 = vmatpush1.bf16.msra.mxu0 %v3025
    %4537 = vmatprep.subr.bf16.mxu0 %v3030
    %4538 = vmatpush1.bf16.msra.mxu0 %v3029
    %4539 = vmatprep.mubr.bf16.mxu0 %v760
    %4540 = vmatmul.mubr.bf16.gmra.mrb[0].mxu0 %v758
    %v4541 = vpop.f32.mrb[0].mxu0
    %v4542 = vadd.f32 %v4501, %v4541
    %v4543 = vpop.f32.mrb[0].mxu0
    %v4544 = vadd.f32 %v4503, %v4543
    %v4545 = vpop.f32.mrb[0].mxu0
    %v4546 = vpop.f32.mrb[0].mxu0
    %4547 = vdwg.mxu0
    %4548 = vmatprep.subr.bf16.mxu0 %v3034
    %4549 = vmatpush1.bf16.msra.mxu0 %v3033
    %4550 = vmatprep.subr.bf16.mxu0 %v3038
    %4551 = vmatpush1.bf16.msra.mxu0 %v3037
    %4552 = vmatprep.subr.bf16.mxu0 %v3042
    %4553 = vmatpush1.bf16.msra.mxu0 %v3041
    %4554 = vmatprep.subr.bf16.mxu0 %v3046
    %4555 = vmatpush1.bf16.msra.mxu0 %v3045
    %4556 = vmatprep.subr.bf16.mxu0 %v3050
    %4557 = vmatpush1.bf16.msra.mxu0 %v3049
    %4558 = vmatprep.subr.bf16.mxu0 %v3054
    %4559 = vmatpush1.bf16.msra.mxu0 %v3053
    %4560 = vmatprep.subr.bf16.mxu0 %v3058
    %4561 = vmatpush1.bf16.msra.mxu0 %v3057
    %4562 = vmatprep.subr.bf16.mxu0 %v3062
    %4563 = vmatpush1.bf16.msra.mxu0 %v3061
    %4564 = vmatprep.subr.bf16.mxu0 %v3066
    %4565 = vmatpush1.bf16.msra.mxu0 %v3065
    %4566 = vmatprep.subr.bf16.mxu0 %v3070
    %4567 = vmatpush1.bf16.msra.mxu0 %v3069
    %4568 = vmatprep.subr.bf16.mxu0 %v3074
    %4569 = vmatpush1.bf16.msra.mxu0 %v3073
    %4570 = vmatprep.subr.bf16.mxu0 %v3078
    %4571 = vmatpush1.bf16.msra.mxu0 %v3077
    %4572 = vmatprep.subr.bf16.mxu0 %v3082
    %4573 = vmatpush1.bf16.msra.mxu0 %v3081
    %4574 = vmatprep.subr.bf16.mxu0 %v3086
    %4575 = vmatpush1.bf16.msra.mxu0 %v3085
    %4576 = vmatprep.subr.bf16.mxu0 %v3090
    %4577 = vmatpush1.bf16.msra.mxu0 %v3089
    %4578 = vmatprep.subr.bf16.mxu0 %v3094
    %4579 = vmatpush1.bf16.msra.mxu0 %v3093
    %4580 = vmatprep.mubr.bf16.mxu0 %v757
    %4581 = vmatmul.mubr.bf16.gmra.mrb[0].mxu0 %v743
    %v4582 = vpop.f32.mrb[0].mxu0
    %v4583 = vadd.f32 %v4542, %v4582
    %v4584 = vpop.f32.mrb[0].mxu0
    %v4585 = vadd.f32 %v4544, %v4584
    %v4586 = vpop.f32.mrb[0].mxu0
    %v4587 = vpop.f32.mrb[0].mxu0
    %4588 = vdwg.mxu0
    %4589 = vmatprep.subr.bf16.mxu0 %v3098
    %4590 = vmatpush1.bf16.msra.mxu0 %v3097
    %4591 = vmatprep.subr.bf16.mxu0 %v3102
    %4592 = vmatpush1.bf16.msra.mxu0 %v3101
    %4593 = vmatprep.subr.bf16.mxu0 %v3106
    %4594 = vmatpush1.bf16.msra.mxu0 %v3105
    %4595 = vmatprep.subr.bf16.mxu0 %v3110
    %4596 = vmatpush1.bf16.msra.mxu0 %v3109
    %4597 = vmatprep.subr.bf16.mxu0 %v3114
    %4598 = vmatpush1.bf16.msra.mxu0 %v3113
    %4599 = vmatprep.subr.bf16.mxu0 %v3118
    %4600 = vmatpush1.bf16.msra.mxu0 %v3117
    %4601 = vmatprep.subr.bf16.mxu0 %v3122
    %4602 = vmatpush1.bf16.msra.mxu0 %v3121
    %4603 = vmatprep.subr.bf16.mxu0 %v3126
    %4604 = vmatpush1.bf16.msra.mxu0 %v3125
    %4605 = vmatprep.subr.bf16.mxu0 %v3130
    %4606 = vmatpush1.bf16.msra.mxu0 %v3129
    %4607 = vmatprep.subr.bf16.mxu0 %v3134
    %4608 = vmatpush1.bf16.msra.mxu0 %v3133
    %4609 = vmatprep.subr.bf16.mxu0 %v3138
    %4610 = vmatpush1.bf16.msra.mxu0 %v3137
    %4611 = vmatprep.subr.bf16.mxu0 %v3142
    %4612 = vmatpush1.bf16.msra.mxu0 %v3141
    %4613 = vmatprep.subr.bf16.mxu0 %v3146
    %4614 = vmatpush1.bf16.msra.mxu0 %v3145
    %4615 = vmatprep.subr.bf16.mxu0 %v3150
    %4616 = vmatpush1.bf16.msra.mxu0 %v3149
    %4617 = vmatprep.subr.bf16.mxu0 %v3154
    %4618 = vmatpush1.bf16.msra.mxu0 %v3153
    %4619 = vmatprep.subr.bf16.mxu0 %v3158
    %4620 = vmatpush1.bf16.msra.mxu0 %v3157
    %4621 = vmatprep.mubr.bf16.mxu0 %v761
    %4622 = vmatmul.mubr.bf16.gmra.mrb[0].mxu0 %v759
    %v4623 = vpop.f32.mrb[0].mxu0
    %v4624 = vadd.f32 %v4583, %v4623
    %v4625 = vpop.f32.mrb[0].mxu0
    %v4626 = vadd.f32 %v4585, %v4625
    %v4627 = vpop.f32.mrb[0].mxu0
    %v4628 = vpop.f32.mrb[0].mxu0
    %4629 = vdwg.mxu0
    %4630 = vmatprep.subr.bf16.mxu0 %v3162
    %4631 = vmatpush1.bf16.msra.mxu0 %v3161
    %4632 = vmatprep.subr.bf16.mxu0 %v3166
    %4633 = vmatpush1.bf16.msra.mxu0 %v3165
    %4634 = vmatprep.subr.bf16.mxu0 %v3170
    %4635 = vmatpush1.bf16.msra.mxu0 %v3169
    %4636 = vmatprep.subr.bf16.mxu0 %v3174
    %4637 = vmatpush1.bf16.msra.mxu0 %v3173
    %4638 = vmatprep.subr.bf16.mxu0 %v3178
    %4639 = vmatpush1.bf16.msra.mxu0 %v3177
    %4640 = vmatprep.subr.bf16.mxu0 %v3182
    %4641 = vmatpush1.bf16.msra.mxu0 %v3181
    %4642 = vmatprep.subr.bf16.mxu0 %v3186
    %4643 = vmatpush1.bf16.msra.mxu0 %v3185
    %4644 = vmatprep.subr.bf16.mxu0 %v3190
    %4645 = vmatpush1.bf16.msra.mxu0 %v3189
    %4646 = vmatprep.subr.bf16.mxu0 %v3194
    %4647 = vmatpush1.bf16.msra.mxu0 %v3193
    %4648 = vmatprep.subr.bf16.mxu0 %v3198
    %4649 = vmatpush1.bf16.msra.mxu0 %v3197
    %4650 = vmatprep.subr.bf16.mxu0 %v3202
    %4651 = vmatpush1.bf16.msra.mxu0 %v3201
    %4652 = vmatprep.subr.bf16.mxu0 %v3206
    %4653 = vmatpush1.bf16.msra.mxu0 %v3205
    %4654 = vmatprep.subr.bf16.mxu0 %v3210
    %4655 = vmatpush1.bf16.msra.mxu0 %v3209
    %4656 = vmatprep.subr.bf16.mxu0 %v3214
    %4657 = vmatpush1.bf16.msra.mxu0 %v3213
    %4658 = vmatprep.subr.bf16.mxu0 %v3218
    %4659 = vmatpush1.bf16.msra.mxu0 %v3217
    %4660 = vmatprep.subr.bf16.mxu0 %v3222
    %4661 = vmatpush1.bf16.msra.mxu0 %v3221
    %4662 = vmatprep.mubr.bf16.mxu0 %v783
    %4663 = vmatmul.mubr.bf16.gmra.mrb[0].mxu0 %v776
    %v4664 = vpop.f32.mrb[0].mxu0
    %v4665 = vadd.f32 %v4624, %v4664
    %v4666 = vpop.f32.mrb[0].mxu0
    %v4667 = vadd.f32 %v4626, %v4666
    %v4668 = vpop.f32.mrb[0].mxu0
    %v4669 = vpop.f32.mrb[0].mxu0
    %4670 = vdwg.mxu0
    %4671 = vmatprep.subr.bf16.mxu0 %v3226
    %4672 = vmatpush1.bf16.msra.mxu0 %v3225
    %4673 = vmatprep.subr.bf16.mxu0 %v3230
    %4674 = vmatpush1.bf16.msra.mxu0 %v3229
    %4675 = vmatprep.subr.bf16.mxu0 %v3234
    %4676 = vmatpush1.bf16.msra.mxu0 %v3233
    %4677 = vmatprep.subr.bf16.mxu0 %v3238
    %4678 = vmatpush1.bf16.msra.mxu0 %v3237
    %4679 = vmatprep.subr.bf16.mxu0 %v3242
    %4680 = vmatpush1.bf16.msra.mxu0 %v3241
    %4681 = vmatprep.subr.bf16.mxu0 %v3246
    %4682 = vmatpush1.bf16.msra.mxu0 %v3245
    %4683 = vmatprep.subr.bf16.mxu0 %v3250
    %4684 = vmatpush1.bf16.msra.mxu0 %v3249
    %4685 = vmatprep.subr.bf16.mxu0 %v3254
    %4686 = vmatpush1.bf16.msra.mxu0 %v3253
    %4687 = vmatprep.subr.bf16.mxu0 %v3258
    %4688 = vmatpush1.bf16.msra.mxu0 %v3257
    %4689 = vmatprep.subr.bf16.mxu0 %v3890
    %4690 = vmatpush1.bf16.msra.mxu0 %v3887
    %4691 = vmatprep.subr.bf16.mxu0 0
    %4692 = vmatpush1.bf16.msra.mxu0 0
    %4693 = vmatprep.subr.bf16.mxu0 0
    %4694 = vmatpush1.bf16.msra.mxu0 0
    %4695 = vmatprep.subr.bf16.mxu0 0
    %4696 = vmatpush1.bf16.msra.mxu0 0
    %4697 = vmatprep.subr.bf16.mxu0 0
    %4698 = vmatpush1.bf16.msra.mxu0 0
    %4699 = vmatprep.subr.bf16.mxu0 0
    %4700 = vmatpush1.bf16.msra.mxu0 0
    %4701 = vmatprep.subr.bf16.mxu0 0
    %4702 = vmatpush1.bf16.msra.mxu0 0
    %4703 = vmatprep.mubr.bf16.mxu0 %v3877
    %4704 = vmatmul.mubr.bf16.gmra.mrb[0].mxu0 %v784
    %v4705 = vpop.f32.mrb[0].mxu0
    %v4706 = vadd.f32 %v4665, %v4705
    %v4707 = vpop.f32.mrb[0].mxu0
    %v4708 = vadd.f32 %v4667, %v4707
    %v4709 = vpop.f32.mrb[0].mxu0
    %v4710 = vpop.f32.mrb[0].mxu0
    %4711 = vdwg.mxu0
    %v4712 = vmax.f32 %v4296, 0.0
    %v4713 = vmax.f32 %v4298, 0.0
    %v4714 = vmax.f32 %v4706, 0.0
    %v4715 = vmax.f32 %v4708, 0.0
    %v4716 = vpack.c.bf16 %v4712, %v4712
    %v4717 = vpack.c.bf16 %v4713, %v4713
    %v4718 = vpack.c.bf16 %v4714, %v4714
    %v4719 = vpack.c.bf16 %v4715, %v4715
    %v4720 = vld [vmem:[%s3] sm:$0xf]
    %v4721 = vld [vmem:[%s3 + $0x4] sm:$0xf]
    %v4722 = vld [vmem:[%s3 + $0x8] sm:$0xf]
    %v4723 = vld [vmem:[%s3 + $0xc] sm:$0xf]
    %v4724 = vld [vmem:[%s3 + $0x10] sm:$0xf]
    %v4725 = vld [vmem:[%s3 + $0x14] sm:$0xf]
    %v4726 = vld [vmem:[%s3 + $0x18] sm:$0xf]
    %v4727 = vld [vmem:[%s3 + $0x1c] sm:$0xf]
    %v4728 = vld [vmem:[%s3 + $0x20] sm:$0xf]
    %v4729 = vld [vmem:[%s3 + $0x24] sm:$0xf]
    %v4730 = vld [vmem:[%s3 + $0x28] sm:$0xf]
    %v4731 = vld [vmem:[%s3 + $0x2c] sm:$0xf]
    %v4732 = vld [vmem:[%s3 + $0x30] sm:$0xf]
    %v4733 = vld [vmem:[%s3 + $0x34] sm:$0xf]
    %v4734 = vld [vmem:[%s3 + $0x38] sm:$0xf]
    %v4735 = vld [vmem:[%s3 + $0x3c] sm:$0xf]
    %v4736 = vld [vmem:[%s3 + $0x40] sm:$0xf]
    %v4737 = vld [vmem:[%s3 + $0x44] sm:$0xf]
    %v4738 = vld [vmem:[%s3 + $0x48] sm:$0xf]
    %v4739 = vld [vmem:[%s3 + $0x4c] sm:$0xf]
    %v4740 = vld [vmem:[%s3 + $0x50] sm:$0xf]
    %v4741 = vld [vmem:[%s3 + $0x54] sm:$0xf]
    %v4742 = vld [vmem:[%s3 + $0x58] sm:$0xf]
    %v4743 = vld [vmem:[%s3 + $0x5c] sm:$0xf]
    %v4744 = vld [vmem:[%s3 + $0x60] sm:$0xf]
    %v4745 = vld [vmem:[%s3 + $0x64] sm:$0xf]
    %v4746 = vld [vmem:[%s3 + $0x68] sm:$0xf]
    %v4747 = vld [vmem:[%s3 + $0x6c] sm:$0xf]
    %v4748 = vld [vmem:[%s3 + $0x70] sm:$0xf]
    %v4749 = vld [vmem:[%s3 + $0x74] sm:$0xf]
    %v4750 = vld [vmem:[%s3 + $0x78] sm:$0xf]
    %v4751 = vld [vmem:[%s3 + $0x7c] sm:$0xf]
    %v4752 = vld [vmem:[%s3 + $0x80] sm:$0xf]
    %v4753 = vld [vmem:[%s3 + $0x84] sm:$0xf]
    %v4754 = vld [vmem:[%s3 + $0x88] sm:$0xf]
    %v4755 = vld [vmem:[%s3 + $0x8c] sm:$0xf]
    %v4756 = vld [vmem:[%s3 + $0x90] sm:$0xf]
    %v4757 = vld [vmem:[%s3 + $0x94] sm:$0xf]
    %v4758 = vld [vmem:[%s3 + $0x98] sm:$0xf]
    %v4759 = vld [vmem:[%s3 + $0x9c] sm:$0xf]
    %v4760 = vld [vmem:[%s3 + $0xa0] sm:$0xf]
    %v4761 = vld [vmem:[%s3 + $0xa4] sm:$0xf]
    %v4762 = vld [vmem:[%s3 + $0xa8] sm:$0xf]
    %v4763 = vld [vmem:[%s3 + $0xac] sm:$0xf]
    %v4764 = vld [vmem:[%s3 + $0xb0] sm:$0xf]
    %v4765 = vld [vmem:[%s3 + $0xb4] sm:$0xf]
    %v4766 = vld [vmem:[%s3 + $0xb8] sm:$0xf]
    %v4767 = vld [vmem:[%s3 + $0xbc] sm:$0xf]
    %v4768 = vld [vmem:[%s3 + $0xc0] sm:$0xf]
    %v4769 = vld [vmem:[%s3 + $0xc4] sm:$0xf]
    %v4770 = vld [vmem:[%s3 + $0xc8] sm:$0xf]
    %v4771 = vld [vmem:[%s3 + $0xcc] sm:$0xf]
    %v4772 = vld [vmem:[%s3 + $0xd0] sm:$0xf]
    %v4773 = vld [vmem:[%s3 + $0xd4] sm:$0xf]
    %v4774 = vld [vmem:[%s3 + $0xd8] sm:$0xf]
    %v4775 = vld [vmem:[%s3 + $0xdc] sm:$0xf]
    %v4776 = vld [vmem:[%s3 + $0xe0] sm:$0xf]
    %v4777 = vld [vmem:[%s3 + $0xe4] sm:$0xf]
    %v4778 = vld [vmem:[%s3 + $0xe8] sm:$0xf]
    %v4779 = vld [vmem:[%s3 + $0xec] sm:$0xf]
    %v4780 = vld [vmem:[%s3 + $0xf0] sm:$0xf]
    %v4781 = vld [vmem:[%s3 + $0xf4] sm:$0xf]
    %v4782 = vld [vmem:[%s3 + $0xf8] sm:$0xf]
    %v4783 = vld [vmem:[%s3 + $0xfc] sm:$0xf]
    %v4784 = vld [vmem:[%s4] sm:$0x1]
    %v4786 = vlaneseq
    %v4787 = vshrl.u32 %v4786, 7
    %v4788 = vsub.s32 0, %v4787
    %v4789 = vrot.slane %v4784, %v4788
    %v4855 = vunpack.c.l.b16 %v4720
    %v4856 = vunpack.c.l.b16 %v4721
    %v4857 = vunpack.c.l.b16 %v4722
    %v4858 = vunpack.c.l.b16 %v4723
    %v4859 = vunpack.c.l.b16 %v4724
    %v4860 = vunpack.c.l.b16 %v4725
    %v4861 = vunpack.c.l.b16 %v4726
    %v4862 = vunpack.c.l.b16 %v4727
    %v4863 = vunpack.c.l.b16 %v4728
    %v4864 = vunpack.c.l.b16 %v4729
    %v4865 = vunpack.c.l.b16 %v4730
    %v4866 = vunpack.c.l.b16 %v4731
    %v4867 = vunpack.c.l.b16 %v4732
    %v4868 = vunpack.c.l.b16 %v4733
    %v4869 = vunpack.c.l.b16 %v4734
    %v4870 = vunpack.c.l.b16 %v4735
    %v4871 = vunpack.c.l.b16 %v4736
    %v4872 = vunpack.c.l.b16 %v4737
    %v4873 = vunpack.c.l.b16 %v4738
    %v4874 = vunpack.c.l.b16 %v4739
    %v4875 = vunpack.c.l.b16 %v4740
    %v4876 = vunpack.c.l.b16 %v4741
    %v4877 = vunpack.c.l.b16 %v4742
    %v4878 = vunpack.c.l.b16 %v4743
    %v4879 = vunpack.c.l.b16 %v4744
    %v4880 = vunpack.c.l.b16 %v4745
    %v4881 = vunpack.c.l.b16 %v4746
    %v4882 = vunpack.c.l.b16 %v4747
    %v4883 = vunpack.c.l.b16 %v4748
    %v4884 = vunpack.c.l.b16 %v4749
    %v4885 = vunpack.c.l.b16 %v4750
    %v4886 = vunpack.c.l.b16 %v4751
    %v4887 = vunpack.c.l.b16 %v4752
    %v4888 = vunpack.c.l.b16 %v4753
    %v4889 = vunpack.c.l.b16 %v4754
    %v4890 = vunpack.c.l.b16 %v4755
    %v4891 = vunpack.c.l.b16 %v4756
    %v4892 = vunpack.c.l.b16 %v4757
    %v4893 = vunpack.c.l.b16 %v4758
    %v4894 = vunpack.c.l.b16 %v4759
    %v4895 = vunpack.c.l.b16 %v4760
    %v4896 = vunpack.c.l.b16 %v4761
    %v4897 = vunpack.c.l.b16 %v4762
    %v4898 = vunpack.c.l.b16 %v4763
    %v4899 = vunpack.c.l.b16 %v4764
    %v4900 = vunpack.c.l.b16 %v4765
    %v4901 = vunpack.c.l.b16 %v4766
    %v4902 = vunpack.c.l.b16 %v4767
    %v4903 = vunpack.c.l.b16 %v4768
    %v4904 = vunpack.c.l.b16 %v4769
    %v4905 = vunpack.c.l.b16 %v4770
    %v4906 = vunpack.c.l.b16 %v4771
    %v4907 = vunpack.c.l.b16 %v4772
    %v4908 = vunpack.c.l.b16 %v4773
    %v4909 = vunpack.c.l.b16 %v4774
    %v4910 = vunpack.c.l.b16 %v4775
    %v4911 = vunpack.c.l.b16 %v4776
    %v4912 = vunpack.c.l.b16 %v4777
    %v4913 = vunpack.c.l.b16 %v4778
    %v4914 = vunpack.c.l.b16 %v4779
    %v4915 = vunpack.c.l.b16 %v4780
    %v4916 = vunpack.c.l.b16 %v4781
    %v4917 = vunpack.c.l.b16 %v4782
    %v4918 = vunpack.c.l.b16 %v4783
    %v4919 = vpack.c.b16 %v4856, %v4855
    %v4920 = vpack.c.b16 %v4858, %v4857
    %v4921 = vpack.c.b16 %v4860, %v4859
    %v4922 = vpack.c.b16 %v4862, %v4861
    %v4923 = vpack.c.b16 %v4864, %v4863
    %v4924 = vpack.c.b16 %v4866, %v4865
    %v4925 = vpack.c.b16 %v4868, %v4867
    %v4926 = vpack.c.b16 %v4870, %v4869
    %v4927 = vpack.c.b16 %v4872, %v4871
    %v4928 = vpack.c.b16 %v4874, %v4873
    %v4929 = vpack.c.b16 %v4876, %v4875
    %v4930 = vpack.c.b16 %v4878, %v4877
    %v4931 = vpack.c.b16 %v4880, %v4879
    %v4932 = vpack.c.b16 %v4882, %v4881
    %v4933 = vpack.c.b16 %v4884, %v4883
    %v4934 = vpack.c.b16 %v4886, %v4885
    %v4935 = vpack.c.b16 %v4888, %v4887
    %v4936 = vpack.c.b16 %v4890, %v4889
    %v4937 = vpack.c.b16 %v4892, %v4891
    %v4938 = vpack.c.b16 %v4894, %v4893
    %v4939 = vpack.c.b16 %v4896, %v4895
    %v4940 = vpack.c.b16 %v4898, %v4897
    %v4941 = vpack.c.b16 %v4900, %v4899
    %v4942 = vpack.c.b16 %v4902, %v4901
    %v4943 = vpack.c.b16 %v4904, %v4903
    %v4944 = vpack.c.b16 %v4906, %v4905
    %v4945 = vpack.c.b16 %v4908, %v4907
    %v4946 = vpack.c.b16 %v4910, %v4909
    %v4947 = vpack.c.b16 %v4912, %v4911
    %v4948 = vpack.c.b16 %v4914, %v4913
    %v4949 = vpack.c.b16 %v4916, %v4915
    %v4950 = vpack.c.b16 %v4918, %v4917
    %4983 = vmatprep.subr.bf16.mxu0 0
    %4984 = vmatpush1.bf16.msra.mxu0 %v4919
    %4985 = vmatprep.subr.bf16.mxu0 0
    %4986 = vmatpush1.bf16.msra.mxu0 %v4920
    %4987 = vmatprep.subr.bf16.mxu0 0
    %4988 = vmatpush1.bf16.msra.mxu0 %v4921
    %4989 = vmatprep.subr.bf16.mxu0 0
    %4990 = vmatpush1.bf16.msra.mxu0 %v4922
    %4991 = vmatprep.subr.bf16.mxu0 0
    %4992 = vmatpush1.bf16.msra.mxu0 %v4923
    %4993 = vmatprep.subr.bf16.mxu0 0
    %4994 = vmatpush1.bf16.msra.mxu0 %v4924
    %4995 = vmatprep.subr.bf16.mxu0 0
    %4996 = vmatpush1.bf16.msra.mxu0 %v4925
    %4997 = vmatprep.subr.bf16.mxu0 0
    %4998 = vmatpush1.bf16.msra.mxu0 %v4926
    %4999 = vmatprep.subr.bf16.mxu0 0
    %5000 = vmatpush1.bf16.msra.mxu0 %v4927
    %5001 = vmatprep.subr.bf16.mxu0 0
    %5002 = vmatpush1.bf16.msra.mxu0 %v4928
    %5003 = vmatprep.subr.bf16.mxu0 0
    %5004 = vmatpush1.bf16.msra.mxu0 %v4929
    %5005 = vmatprep.subr.bf16.mxu0 0
    %5006 = vmatpush1.bf16.msra.mxu0 %v4930
    %5007 = vmatprep.subr.bf16.mxu0 0
    %5008 = vmatpush1.bf16.msra.mxu0 %v4931
    %5009 = vmatprep.subr.bf16.mxu0 0
    %5010 = vmatpush1.bf16.msra.mxu0 %v4932
    %5011 = vmatprep.subr.bf16.mxu0 0
    %5012 = vmatpush1.bf16.msra.mxu0 %v4933
    %5013 = vmatprep.subr.bf16.mxu0 0
    %5014 = vmatpush1.bf16.msra.mxu0 %v4934
    %5015 = vmatprep.mubr.bf16.mxu0 %v4717
    %5016 = vmatmul.mubr.bf16.gmra.mrb[0].mxu0 %v4716
    %v5017 = vpop.f32.mrb[0].mxu0
    %v5018 = vadd.f32 %v4789, %v5017
    %v5019 = vpop.f32.mrb[0].mxu0
    %v5020 = vpop.f32.mrb[0].mxu0
    %v5021 = vpop.f32.mrb[0].mxu0
    %5022 = vdwg.mxu0
    %5023 = vmatprep.subr.bf16.mxu0 0
    %5024 = vmatpush1.bf16.msra.mxu0 %v4935
    %5025 = vmatprep.subr.bf16.mxu0 0
    %5026 = vmatpush1.bf16.msra.mxu0 %v4936
    %5027 = vmatprep.subr.bf16.mxu0 0
    %5028 = vmatpush1.bf16.msra.mxu0 %v4937
    %5029 = vmatprep.subr.bf16.mxu0 0
    %5030 = vmatpush1.bf16.msra.mxu0 %v4938
    %5031 = vmatprep.subr.bf16.mxu0 0
    %5032 = vmatpush1.bf16.msra.mxu0 %v4939
    %5033 = vmatprep.subr.bf16.mxu0 0
    %5034 = vmatpush1.bf16.msra.mxu0 %v4940
    %5035 = vmatprep.subr.bf16.mxu0 0
    %5036 = vmatpush1.bf16.msra.mxu0 %v4941
    %5037 = vmatprep.subr.bf16.mxu0 0
    %5038 = vmatpush1.bf16.msra.mxu0 %v4942
    %5039 = vmatprep.subr.bf16.mxu0 0
    %5040 = vmatpush1.bf16.msra.mxu0 %v4943
    %5041 = vmatprep.subr.bf16.mxu0 0
    %5042 = vmatpush1.bf16.msra.mxu0 %v4944
    %5043 = vmatprep.subr.bf16.mxu0 0
    %5044 = vmatpush1.bf16.msra.mxu0 %v4945
    %5045 = vmatprep.subr.bf16.mxu0 0
    %5046 = vmatpush1.bf16.msra.mxu0 %v4946
    %5047 = vmatprep.subr.bf16.mxu0 0
    %5048 = vmatpush1.bf16.msra.mxu0 %v4947
    %5049 = vmatprep.subr.bf16.mxu0 0
    %5050 = vmatpush1.bf16.msra.mxu0 %v4948
    %5051 = vmatprep.subr.bf16.mxu0 0
    %5052 = vmatpush1.bf16.msra.mxu0 %v4949
    %5053 = vmatprep.subr.bf16.mxu0 0
    %5054 = vmatpush1.bf16.msra.mxu0 %v4950
    %5055 = vmatprep.mubr.bf16.mxu0 %v4719
    %5056 = vmatmul.mubr.bf16.gmra.mrb[0].mxu0 %v4718
    %v5057 = vpop.f32.mrb[0].mxu0
    %v5058 = vadd.f32 %v5018, %v5057
    %v5059 = vpop.f32.mrb[0].mxu0
    %v5060 = vpop.f32.mrb[0].mxu0
    %v5061 = vpop.f32.mrb[0].mxu0
    %5062 = vdwg.mxu0
    %5063 = vst [vmem:[#allocation2] sm:$0x3] %v5058
    // Predicated region
    $region22: #{lenet_forward.5} parent=1 // pred_check
      _
    $region23: #{lenet_forward.5} parent=1 // pred_check_branch
      %5065 = sbr.rel (0) target = $region25
    $region24: #{lenet_forward.5} parent=1 // pred_region
      %s5067 = ssub.s32 32, 32
      %5068 = vsyncadd [#allocation3], %s5067
      %s5070 = sshll.u32 [#allocation2], 4
      %s5071 = int_to_ptr.vmem [resolvable:$true] %s5070
      %5073 = dma.vmem_to_hbm [thread:$0]  %s5071, 32, %s5, [#allocation3]
    $region25: #{lenet_forward.5} parent=1 // pred_fallthru
      _
    // Predicated region
    $region26: #{lenet_forward.5} parent=1 // pred_check
      _
    $region27: #{lenet_forward.5} parent=1 // pred_check_branch
      %5075 = sbr.rel (0) target = $region29
    $region28: #{lenet_forward.5} parent=1 // pred_region
      %5076 = dma.done [#allocation3], 32
    $region29: #{lenet_forward.5} parent=1 // pred_fallthru
      _
    %5077 = vsyncpa [#allocation3], 1

</llo_original>
